<compile_context>
chip_gen: v6e
topology: v6e:2x2x1
jax: 0.10.0
libtpu: 0.0.40
codegen_flags: <defaults>
</compile_context>

<pallas_src>
import functools

import jax
import jax.numpy as jnp
from jax.experimental import pallas as pl
from jax.experimental.pallas import tpu as pltpu


def _round_up(x, m):
    return ((x + m - 1) // m) * m


def _pointer_attention_kernel(
    s_ref,         # (TB, D)      f32   s_t_hat tile
    enc_out_ref,   # (TB, Sp, D)  bf16  encoder_outputs tile
    enc_feat_ref,  # (TB, Sp, D)  bf16  encoder_feature tile (W_h * enc_out)
    mask_ref,      # (TB, Sp)     f32   encoder_mask (padding carries 0)
    cov_ref,       # (TB, Sp)     f32   coverage     (padding carries 0)
    ws_ref,        # (D, D)       f32   W_s.weight.T  (y = x @ ws + b)
    bs_ref,        # (1, D)       f32   W_s.bias
    wc_ref,        # (1, D)       f32   W_c.weight    (Linear(1 -> D), no bias)
    v_ref,         # (1, D)       f32   V.weight      (Linear(D -> 1), no bias)
    ctx_ref,       # (TB, D)      f32   out: h_context
    attn_ref,      # (TB, Sp)     f32   out: attn_weight (seq-padded)
    cov_out_ref,   # (TB, Sp)     f32   out: updated coverage (seq-padded)
    *,
    compute_dtype,
):
    f32 = jnp.float32

    # dec_fea = W_s(s_t_hat): small (TB, D) x (D, D) MXU matmul, f32 accumulate.
    dec_fea = jnp.dot(s_ref[...], ws_ref[...],
                      preferred_element_type=f32) + bs_ref[...]            # (TB, D)

    cov = cov_ref[...]                                                     # (TB, Sp) f32

    # --- elementwise att / tanh path in compute_dtype (bf16 on v6e/v7x) ----
    dec_c = dec_fea.astype(compute_dtype)                                  # (TB, D)
    cov_c = cov.astype(compute_dtype)                                      # (TB, Sp)
    wc_c = wc_ref[...].astype(compute_dtype)                               # (1, D)
    v_c = v_ref[...].astype(compute_dtype)                                 # (1, D)

    # att_features = encoder_feature + dec_fea (bcast over seq) + W_c(coverage)
    att = (enc_feat_ref[...].astype(compute_dtype)
           + dec_c[:, None, :]
           + cov_c[:, :, None] * wc_c[None, :, :])                         # (TB, Sp, D)
    e = jnp.tanh(att)                                                      # (TB, Sp, D)

    # scores = V(e): compute_dtype multiply, f32 accumulation over D -> (TB, Sp)
    scores = jnp.sum((e * v_c).astype(f32), axis=-1)

    # Fused masked softmax (identical to softmax -> mask -> renorm):
    #   softmax(s)*mask / sum(softmax(s)*mask) == exp(s-m)*mask / sum(exp(s-m)*mask)
    # Padded / masked positions carry mask == 0 and contribute nothing.
    m = jnp.max(scores, axis=1, keepdims=True)
    ex = jnp.exp(scores - m) * mask_ref[...]
    denom = jnp.sum(ex, axis=1, keepdims=True)
    # Exact divide: rows sum to 1 to f32 precision (no drift accumulated into
    # coverage).  Epsilon guard: fully-masked rows give attn == 0, not NaN.
    attn = ex / jnp.maximum(denom, jnp.float32(1e-30))                     # (TB, Sp)

    # h_context = bmm(attn, encoder_outputs): bf16 MXU inputs, f32 accumulate,
    # no f32 materialization of the dominant (TB, Sp, D) tensor.
    ctx = jnp.einsum(
        'bqs,bsd->bqd',
        attn.astype(enc_out_ref.dtype)[:, None, :],                        # (TB, 1, Sp)
        enc_out_ref[...],                                                  # (TB, Sp, D)
        preferred_element_type=f32)[:, 0, :]                               # (TB, D)

    ctx_ref[...] = ctx.astype(ctx_ref.dtype)
    attn_ref[...] = attn.astype(attn_ref.dtype)
    cov_out_ref[...] = (cov + attn).astype(cov_out_ref.dtype)


def prepare_encoder_streams(encoder_outputs, encoder_feature, *, batch_tile=8):
    """One-time (per source sequence) prep of the two dominant (B, S, D) streams.

    Call ONCE outside the decode loop and reuse the result for every decode
    step: pads batch/seq to TPU-friendly tiles and casts to bf16 so the pad +
    cast HBM traffic is not re-paid on every call.
    """
    bsz, seq, dim = encoder_outputs.shape
    tb = max(8, min(_round_up(int(batch_tile), 8), _round_up(bsz, 8)))
    b_pad = _round_up(bsz, tb)
    s_pad = _round_up(seq, 128)                 # lane-dense seq axis
    pad_b, pad_s = b_pad - bsz, s_pad - seq
    enc_out = jnp.pad(encoder_outputs.astype(jnp.bfloat16),
                      ((0, pad_b), (0, pad_s), (0, 0)))
    enc_feat = jnp.pad(
        encoder_feature.reshape(bsz, seq, dim).astype(jnp.bfloat16),
        ((0, pad_b), (0, pad_s), (0, 0)))
    return {
        "enc_out": enc_out, "enc_feat": enc_feat,
        "bsz": bsz, "seq": seq, "dim": dim,
        "tb": tb, "b_pad": b_pad, "s_pad": s_pad,
    }


def pointer_attention(s_t_hat, prepared, encoder_mask, coverage, params,
                      hidden_size, *, compute_dtype=jnp.bfloat16,
                      vmem_limit_bytes=64 * 1024 * 1024):
    """JAX wrapper matching PointerAttention.forward (is_coverage=True).

    `prepared` comes from prepare_encoder_streams() -- run once per source
    sequence, not per decode step.  On v5e pass compute_dtype=jnp.float32
    (no bf16 VPU/EUP there).
    """
    bsz, seq, dim = prepared["bsz"], prepared["seq"], prepared["dim"]
    assert dim == 2 * hidden_size
    tb, b_pad, s_pad = prepared["tb"], prepared["b_pad"], prepared["s_pad"]
    full_seq = encoder_mask.shape[1]
    pad_b, pad_s = b_pad - bsz, s_pad - seq

    # Per-step (small) operands only: pad seq to the lane-dense width and batch
    # to the tile.  Mask padding is 0 -> zero attention there; the epsilon
    # guard in the kernel keeps padded batch rows finite (sliced off below).
    s_hat = jnp.pad(s_t_hat.astype(jnp.float32), ((0, pad_b), (0, 0)))
    mask_s = jnp.pad(encoder_mask[:, :seq].astype(jnp.float32),
                     ((0, pad_b), (0, pad_s)))
    cov_s = jnp.pad(coverage[:, :seq].astype(jnp.float32),
                    ((0, pad_b), (0, pad_s)))

    n_blocks = b_pad // tb

    in_specs = [
        pl.BlockSpec((tb, dim),        lambda b: (b, 0)),      # s_t_hat
        pl.BlockSpec((tb, s_pad, dim), lambda b: (b, 0, 0)),   # encoder_outputs
        pl.BlockSpec((tb, s_pad, dim), lambda b: (b, 0, 0)),   # encoder_feature
        pl.BlockSpec((tb, s_pad),      lambda b: (b, 0)),      # mask
        pl.BlockSpec((tb, s_pad),      lambda b: (b, 0)),      # coverage
        pl.BlockSpec((dim, dim),       lambda b: (0, 0)),      # W_s.T   (constant)
        pl.BlockSpec((1, dim),         lambda b: (0, 0)),      # b_s     (constant)
        pl.BlockSpec((1, dim),         lambda b: (0, 0)),      # w_c     (constant)
        pl.BlockSpec((1, dim),         lambda b: (0, 0)),      # v       (constant)
    ]
    out_specs = (
        pl.BlockSpec((tb, dim),   lambda b: (b, 0)),           # h_context
        pl.BlockSpec((tb, s_pad), lambda b: (b, 0)),           # attn_weight
        pl.BlockSpec((tb, s_pad), lambda b: (b, 0)),           # coverage update
    )
    out_shapes = (
        jax.ShapeDtypeStruct((b_pad, dim), jnp.float32),
        jax.ShapeDtypeStruct((b_pad, s_pad), jnp.float32),
        jax.ShapeDtypeStruct((b_pad, s_pad), jnp.float32),
    )

    # Advisory cost estimate so XLA can schedule the kernel inside a decoder loop.
    flops = (2 * b_pad * dim * dim
             + 7 * b_pad * s_pad * dim
             + 6 * b_pad * s_pad)
    transcendentals = b_pad * s_pad * dim + b_pad * s_pad
    bytes_accessed = (2 * b_pad * s_pad * dim * 2                    # bf16 enc streams
                      + (b_pad * dim + dim * dim + 3 * dim) * 4      # f32 small inputs
                      + 2 * b_pad * s_pad * 4                        # mask + coverage in
                      + (b_pad * dim + 2 * b_pad * s_pad) * 4)       # outputs
    cost = pl.CostEstimate(flops=flops, transcendentals=transcendentals,
                           bytes_accessed=bytes_accessed)

    kernel = functools.partial(_pointer_attention_kernel,
                               compute_dtype=compute_dtype)

    h_context, attn_weight, cov_new = pl.pallas_call(
        kernel,
        out_shape=out_shapes,
        grid_spec=pltpu.PrefetchScalarGridSpec(
            num_scalar_prefetch=0,
            grid=(n_blocks,),
            in_specs=in_specs,
            out_specs=out_specs,
        ),
        compiler_params=pltpu.CompilerParams(
            dimension_semantics=("parallel",),
            vmem_limit_bytes=vmem_limit_bytes,
        ),
        cost_estimate=cost,
    )(s_hat, prepared["enc_out"], prepared["enc_feat"], mask_s, cov_s,
      params["W_s_T"], params["b_s"], params["w_c"], params["v"])

    # Strip padding / restore the module's output layout.
    h_context = h_context[:bsz]
    attn_weight = attn_weight[:bsz, :seq]
    cov_new = cov_new[:bsz, :seq]
    if seq < full_seq:   # matches torch.cat([coverage, zeros], dim=1)
        cov_new = jnp.pad(cov_new, ((0, 0), (0, full_seq - seq)))
    return h_context, attn_weight, cov_new


def pointer_attention_unprepared(s_t_hat, encoder_outputs, encoder_feature,
                                 encoder_mask, coverage, params, hidden_size,
                                 **kwargs):
    """Convenience wrapper mirroring the PyTorch forward signature (prep per call)."""
    prepared = prepare_encoder_streams(encoder_outputs, encoder_feature)
    return pointer_attention(s_t_hat, prepared, encoder_mask, coverage, params,
                             hidden_size, **kwargs)


def _reference(s_t_hat, encoder_outputs, encoder_feature, encoder_mask,
               coverage, params, hidden_size):
    """Pure-JAX f32 reference mirroring the PyTorch forward.

    Encoder streams are pre-rounded to bf16 (as the kernel stores them); the
    rest of the math is f32, so the comparison isolates the kernel's bf16
    compute path / reduction order.
    """
    bsz, seq, dim = encoder_outputs.shape
    enc_out = encoder_outputs.astype(jnp.bfloat16).astype(jnp.float32)
    enc_feat = encoder_feature.astype(jnp.bfloat16).astype(jnp.float32).reshape(bsz, seq, dim)

    dec_fea = s_t_hat @ params["W_s_T"] + params["b_s"]                      # (B, D)
    att = enc_feat + dec_fea[:, None, :]
    cov_s = coverage[:, :seq]
    att = att + cov_s[:, :, None] * params["w_c"][None, :, :]
    e = jnp.tanh(att)
    scores = jnp.sum(e * params["v"][None, :, :], axis=-1)                   # (B, S)
    soft = jax.nn.softmax(scores, axis=1) * encoder_mask[:, :seq]
    attn = soft / jnp.sum(soft, axis=1, keepdims=True)
    h_ctx = jnp.einsum('bs,bsd->bd', attn, enc_out)
    cov_new = cov_s + attn
    full_seq = encoder_mask.shape[1]
    if seq < full_seq:
        cov_new = jnp.pad(cov_new, ((0, 0), (0, full_seq - seq)))
    return h_ctx, attn, cov_new


if __name__ == "__main__":
    key = jax.random.PRNGKey(0)
    B, S, H = 2, 8, 16
    D = 2 * H
    S_FULL = 10   # encoder_mask / coverage carry a longer padded seq axis

    ks = jax.random.split(key, 10)
    s_t_hat = jax.random.normal(ks[0], (B, D), jnp.float32)
    encoder_outputs = jax.random.normal(ks[1], (B, S, D), jnp.float32)
    encoder_feature = jax.random.normal(ks[2], (B * S, D), jnp.float32)
    encoder_mask = (jax.random.uniform(ks[3], (B, S_FULL)) > 0.2).astype(jnp.float32)
    # guarantee at least one unmasked position in the first S slots per row
    encoder_mask = encoder_mask.at[:, 0].set(1.0)
    coverage = jax.random.uniform(ks[4], (B, S_FULL), jnp.float32)

    # deterministic parameter init (nn.Linear-like scales)
    params = {
        "W_s_T": jax.random.normal(ks[5], (D, D), jnp.float32) * (1.0 / jnp.sqrt(D)),
        "b_s":   jax.random.normal(ks[6], (1, D), jnp.float32) * 0.1,
        "w_c":   jax.random.normal(ks[7], (1, D), jnp.float32) * 0.5,   # Linear(1 -> D)
        "v":     jax.random.normal(ks[8], (1, D), jnp.float32) * (1.0 / jnp.sqrt(D)),
    }

    # One-time prep of the big encoder streams (outside the decode loop in real use).
    prepared = prepare_encoder_streams(encoder_outputs, encoder_feature)

    h_ctx, attn, cov_new = pointer_attention(
        s_t_hat, prepared, encoder_mask, coverage, params, H)
    jax.block_until_ready((h_ctx, attn, cov_new))

    h_ref, a_ref, c_ref = _reference(
        s_t_hat, encoder_outputs, encoder_feature, encoder_mask, coverage, params, H)

    assert h_ctx.shape == (B, D) and attn.shape == (B, S) and cov_new.shape == (B, S_FULL)
    # bf16 streams + bf16 compute path -> compare with a modest tolerance
    assert jnp.allclose(h_ctx, h_ref, atol=2e-2, rtol=2e-2), jnp.max(jnp.abs(h_ctx - h_ref))
    assert jnp.allclose(attn, a_ref, atol=2e-2, rtol=2e-2), jnp.max(jnp.abs(attn - a_ref))
    assert jnp.allclose(cov_new, c_ref, atol=2e-2, rtol=2e-2), jnp.max(jnp.abs(cov_new - c_ref))
    # exact divide in the kernel -> attention rows sum to 1 to f32 precision
    assert jnp.allclose(jnp.sum(attn, axis=1), jnp.ones((B,)), atol=1e-3)

    print("KERNEL_OK")
</pallas_src>

<mosaic_0001>
module attributes {stable_mosaic.version = 11 : i64} {
  func.func @_pointer_attention_kernel(%arg0: i32, %arg1: memref<8x32xf32, #tpu.memory_space<vmem>>, %arg2: memref<8x128x32xbf16, #tpu.memory_space<vmem>>, %arg3: memref<8x128x32xbf16, #tpu.memory_space<vmem>>, %arg4: memref<8x128xf32, #tpu.memory_space<vmem>>, %arg5: memref<8x128xf32, #tpu.memory_space<vmem>>, %arg6: memref<32x32xf32, #tpu.memory_space<vmem>>, %arg7: memref<1x32xf32, #tpu.memory_space<vmem>>, %arg8: memref<1x32xf32, #tpu.memory_space<vmem>>, %arg9: memref<1x32xf32, #tpu.memory_space<vmem>>, %arg10: memref<8x32xf32, #tpu.memory_space<vmem>>, %arg11: memref<8x128xf32, #tpu.memory_space<vmem>>, %arg12: memref<8x128xf32, #tpu.memory_space<vmem>>) attributes {dimension_semantics = [#tpu.dimension_semantics<parallel>], iteration_bounds = array<i64: 1>, scalar_prefetch = 0 : i64, scratch_operands = 0 : i64, tpu.core_type = #tpu.core_type<tc>, window_params = [{transform_indices = @transform_0, window_bounds = array<i64: 8, 32>}, {transform_indices = @transform_1, window_bounds = array<i64: 8, 128, 32>}, {transform_indices = @transform_2, window_bounds = array<i64: 8, 128, 32>}, {transform_indices = @transform_3, window_bounds = array<i64: 8, 128>}, {transform_indices = @transform_4, window_bounds = array<i64: 8, 128>}, {pipeline_mode = #tpu.pipeline_mode<synchronous>, transform_indices = @transform_5, window_bounds = array<i64: 32, 32>}, {pipeline_mode = #tpu.pipeline_mode<synchronous>, transform_indices = @transform_6, window_bounds = array<i64: 1, 32>}, {pipeline_mode = #tpu.pipeline_mode<synchronous>, transform_indices = @transform_7, window_bounds = array<i64: 1, 32>}, {pipeline_mode = #tpu.pipeline_mode<synchronous>, transform_indices = @transform_8, window_bounds = array<i64: 1, 32>}, {transform_indices = @transform_9, window_bounds = array<i64: 8, 32>}, {transform_indices = @transform_10, window_bounds = array<i64: 8, 128>}, {transform_indices = @transform_11, window_bounds = array<i64: 8, 128>}]} {
    %c0 = arith.constant 0 : index
    %c0_0 = arith.constant 0 : index
    %0 = vector.load %arg1[%c0, %c0_0] : memref<8x32xf32, #tpu.memory_space<vmem>>, vector<8x32xf32>
    %c0_1 = arith.constant 0 : index
    %c0_2 = arith.constant 0 : index
    %1 = vector.load %arg6[%c0_1, %c0_2] : memref<32x32xf32, #tpu.memory_space<vmem>>, vector<32x32xf32>
    %cst = arith.constant dense<0.000000e+00> : vector<8x32xf32>
    %2 = tpu.matmul %0, %1, %cst {dimension_numbers = #tpu.dot_dimension_numbers<[1], [0], [0], [1], [0, 0, 1, 1], [], []>} : vector<8x32xf32>, vector<32x32xf32>, vector<8x32xf32> -> vector<8x32xf32>
    %c0_3 = arith.constant 0 : index
    %c0_4 = arith.constant 0 : index
    %3 = vector.load %arg7[%c0_3, %c0_4] : memref<1x32xf32, #tpu.memory_space<vmem>>, vector<1x32xf32>
    %4 = vector.broadcast %3 : vector<1x32xf32> to vector<8x32xf32>
    %5 = arith.addf %2, %4 : vector<8x32xf32>
    %c0_5 = arith.constant 0 : index
    %c0_6 = arith.constant 0 : index
    %6 = vector.load %arg5[%c0_5, %c0_6] : memref<8x128xf32, #tpu.memory_space<vmem>>, vector<8x128xf32>
    %7 = arith.truncf %5 : vector<8x32xf32> to vector<8x32xbf16>
    %8 = arith.truncf %6 : vector<8x128xf32> to vector<8x128xbf16>
    %c0_7 = arith.constant 0 : index
    %c0_8 = arith.constant 0 : index
    %9 = vector.load %arg8[%c0_7, %c0_8] : memref<1x32xf32, #tpu.memory_space<vmem>>, vector<1x32xf32>
    %10 = arith.truncf %9 : vector<1x32xf32> to vector<1x32xbf16>
    %c0_9 = arith.constant 0 : index
    %c0_10 = arith.constant 0 : index
    %11 = vector.load %arg9[%c0_9, %c0_10] : memref<1x32xf32, #tpu.memory_space<vmem>>, vector<1x32xf32>
    %12 = arith.truncf %11 : vector<1x32xf32> to vector<1x32xbf16>
    %c0_11 = arith.constant 0 : index
    %c0_12 = arith.constant 0 : index
    %c0_13 = arith.constant 0 : index
    %13 = vector.load %arg3[%c0_11, %c0_12, %c0_13] : memref<8x128x32xbf16, #tpu.memory_space<vmem>>, vector<8x128x32xbf16>
    %14 = vector.shape_cast %7 : vector<8x32xbf16> to vector<8x1x32xbf16>
    %15 = vector.broadcast %14 : vector<8x1x32xbf16> to vector<8x128x32xbf16>
    %16 = arith.addf %13, %15 : vector<8x128x32xbf16>
    %17 = vector.shape_cast %8 : vector<8x128xbf16> to vector<8x128x1xbf16>
    %18 = vector.shape_cast %10 : vector<1x32xbf16> to vector<1x1x32xbf16>
    %19 = vector.broadcast %17 : vector<8x128x1xbf16> to vector<8x128x32xbf16>
    %20 = vector.broadcast %18 : vector<1x1x32xbf16> to vector<8x128x32xbf16>
    %21 = arith.mulf %19, %20 : vector<8x128x32xbf16>
    %22 = arith.addf %16, %21 : vector<8x128x32xbf16>
    %23 = math.tanh %22 : vector<8x128x32xbf16>
    %24 = vector.shape_cast %12 : vector<1x32xbf16> to vector<1x1x32xbf16>
    %25 = vector.broadcast %24 : vector<1x1x32xbf16> to vector<8x128x32xbf16>
    %26 = arith.mulf %23, %25 : vector<8x128x32xbf16>
    %27 = arith.extf %26 : vector<8x128x32xbf16> to vector<8x128x32xf32>
    %cst_14 = arith.constant dense<0.000000e+00> : vector<8x128xf32>
    %28 = vector.multi_reduction <add>, %27, %cst_14 [2] : vector<8x128x32xf32> to vector<8x128xf32>
    %cst_15 = arith.constant dense<0xFF800000> : vector<8xf32>
    %29 = vector.multi_reduction <maximumf>, %28, %cst_15 [1] : vector<8x128xf32> to vector<8xf32>
    %30 = vector.shape_cast %29 : vector<8xf32> to vector<8x1xf32>
    %31 = vector.broadcast %30 : vector<8x1xf32> to vector<8x128xf32>
    %32 = arith.subf %28, %31 : vector<8x128xf32>
    %33 = math.exp %32 : vector<8x128xf32>
    %c0_16 = arith.constant 0 : index
    %c0_17 = arith.constant 0 : index
    %34 = vector.load %arg4[%c0_16, %c0_17] : memref<8x128xf32, #tpu.memory_space<vmem>>, vector<8x128xf32>
    %35 = arith.mulf %33, %34 : vector<8x128xf32>
    %cst_18 = arith.constant dense<0.000000e+00> : vector<8xf32>
    %36 = vector.multi_reduction <add>, %35, %cst_18 [1] : vector<8x128xf32> to vector<8xf32>
    %37 = vector.shape_cast %36 : vector<8xf32> to vector<8x1xf32>
    %cst_19 = arith.constant 1.000000e-30 : f32
    %38 = vector.broadcast %cst_19 : f32 to vector<8x1xf32>
    %39 = arith.maximumf %37, %38 : vector<8x1xf32>
    %40 = vector.broadcast %39 : vector<8x1xf32> to vector<8x128xf32>
    %41 = arith.divf %35, %40 : vector<8x128xf32>
    %42 = arith.truncf %41 : vector<8x128xf32> to vector<8x128xbf16>
    %43 = vector.shape_cast %42 : vector<8x128xbf16> to vector<8x1x128xbf16>
    %c0_20 = arith.constant 0 : index
    %c0_21 = arith.constant 0 : index
    %c0_22 = arith.constant 0 : index
    %44 = vector.load %arg2[%c0_20, %c0_21, %c0_22] : memref<8x128x32xbf16, #tpu.memory_space<vmem>>, vector<8x128x32xbf16>
    "tpu.trace_start"() <{level = 10 : i32, message = "bqs,bsd->bqd"}> : () -> ()
    %cst_23 = arith.constant dense<0.000000e+00> : vector<8x1x32xf32>
    %45 = tpu.matmul %43, %44, %cst_23 {dimension_numbers = #tpu.dot_dimension_numbers<[2], [1], [1], [2], [0, 0, 0, 1, 1, 2], [0], [0]>} : vector<8x1x128xbf16>, vector<8x128x32xbf16>, vector<8x1x32xf32> -> vector<8x1x32xf32>
    "tpu.trace_stop"() : () -> ()
    %46 = vector.shape_cast %45 : vector<8x1x32xf32> to vector<8x32xf32>
    %c0_24 = arith.constant 0 : index
    %c0_25 = arith.constant 0 : index
    %47 = vector.load %arg10[%c0_24, %c0_25] : memref<8x32xf32, #tpu.memory_space<vmem>>, vector<8x32xf32>
    tpu.vector_store %arg10[%c0_24, %c0_25], %46 {strides = array<i32>} : memref<8x32xf32, #tpu.memory_space<vmem>>, vector<8x32xf32>,
    %c0_26 = arith.constant 0 : index
    %c0_27 = arith.constant 0 : index
    %48 = vector.load %arg11[%c0_26, %c0_27] : memref<8x128xf32, #tpu.memory_space<vmem>>, vector<8x128xf32>
    tpu.vector_store %arg11[%c0_26, %c0_27], %41 {strides = array<i32>} : memref<8x128xf32, #tpu.memory_space<vmem>>, vector<8x128xf32>,
    %49 = arith.addf %6, %41 : vector<8x128xf32>
    %c0_28 = arith.constant 0 : index
    %c0_29 = arith.constant 0 : index
    %50 = vector.load %arg12[%c0_28, %c0_29] : memref<8x128xf32, #tpu.memory_space<vmem>>, vector<8x128xf32>
    tpu.vector_store %arg12[%c0_28, %c0_29], %49 {strides = array<i32>} : memref<8x128xf32, #tpu.memory_space<vmem>>, vector<8x128xf32>,
    return
  }
  func.func @transform_0(%arg0: i32) -> (i32, i32) {
    %c0_i32 = arith.constant 0 : i32
    %c0_i32_0 = arith.constant 0 : i32
    return %arg0, %c0_i32 : i32, i32
  }
  func.func @transform_1(%arg0: i32) -> (i32, i32, i32) {
    %c0_i32 = arith.constant 0 : i32
    %c0_i32_0 = arith.constant 0 : i32
    %c0_i32_1 = arith.constant 0 : i32
    return %arg0, %c0_i32, %c0_i32_0 : i32, i32, i32
  }
  func.func @transform_2(%arg0: i32) -> (i32, i32, i32) {
    %c0_i32 = arith.constant 0 : i32
    %c0_i32_0 = arith.constant 0 : i32
    %c0_i32_1 = arith.constant 0 : i32
    return %arg0, %c0_i32, %c0_i32_0 : i32, i32, i32
  }
  func.func @transform_3(%arg0: i32) -> (i32, i32) {
    %c0_i32 = arith.constant 0 : i32
    %c0_i32_0 = arith.constant 0 : i32
    return %arg0, %c0_i32 : i32, i32
  }
  func.func @transform_4(%arg0: i32) -> (i32, i32) {
    %c0_i32 = arith.constant 0 : i32
    %c0_i32_0 = arith.constant 0 : i32
    return %arg0, %c0_i32 : i32, i32
  }
  func.func @transform_5(%arg0: i32) -> (i32, i32) {
    %c0_i32 = arith.constant 0 : i32
    %c0_i32_0 = arith.constant 0 : i32
    %c0_i32_1 = arith.constant 0 : i32
    return %c0_i32, %c0_i32_0 : i32, i32
  }
  func.func @transform_6(%arg0: i32) -> (i32, i32) {
    %c0_i32 = arith.constant 0 : i32
    %c0_i32_0 = arith.constant 0 : i32
    %c0_i32_1 = arith.constant 0 : i32
    return %c0_i32, %c0_i32_0 : i32, i32
  }
  func.func @transform_7(%arg0: i32) -> (i32, i32) {
    %c0_i32 = arith.constant 0 : i32
    %c0_i32_0 = arith.constant 0 : i32
    %c0_i32_1 = arith.constant 0 : i32
    return %c0_i32, %c0_i32_0 : i32, i32
  }
  func.func @transform_8(%arg0: i32) -> (i32, i32) {
    %c0_i32 = arith.constant 0 : i32
    %c0_i32_0 = arith.constant 0 : i32
    %c0_i32_1 = arith.constant 0 : i32
    return %c0_i32, %c0_i32_0 : i32, i32
  }
  func.func @transform_9(%arg0: i32) -> (i32, i32) {
    %c0_i32 = arith.constant 0 : i32
    %c0_i32_0 = arith.constant 0 : i32
    return %arg0, %c0_i32 : i32, i32
  }
  func.func @transform_10(%arg0: i32) -> (i32, i32) {
    %c0_i32 = arith.constant 0 : i32
    %c0_i32_0 = arith.constant 0 : i32
    return %arg0, %c0_i32 : i32, i32
  }
  func.func @transform_11(%arg0: i32) -> (i32, i32) {
    %c0_i32 = arith.constant 0 : i32
    %c0_i32_0 = arith.constant 0 : i32
    return %arg0, %c0_i32 : i32, i32
  }
}

</mosaic_0001>

<llo_original>
// kernel: tpu_custom_call.1
$region0: #{tpu_custom_call.1}
  #allocation0 [shape = 'u32[]', space=smem, size = 0x4, offset = 0x4, fixed_abs, tag = 'smem constant byte address 0x4 - core index']
  #allocation1 [shape = 'u32[144,128]{1,0:T(1,128)}', space=vmem, size = 0x12000, scoped, tag = 'internal scratch']
  %s0 = inlined_call_operand.vmem [shape: f32[8,32], index: 0, kind: input, shape index: {}]
  %s1 = inlined_call_operand.vmem [shape: bf16[8,128,32], index: 1, kind: input, shape index: {}]
  %s2 = inlined_call_operand.vmem [shape: bf16[8,128,32], index: 2, kind: input, shape index: {}]
  %s3 = inlined_call_operand.vmem [shape: f32[8,128], index: 3, kind: input, shape index: {}]
  %s4 = inlined_call_operand.vmem [shape: f32[8,128], index: 4, kind: input, shape index: {}]
  %s5 = inlined_call_operand.vmem [shape: f32[32,32], index: 5, kind: input, shape index: {}]
  %s6 = inlined_call_operand.vmem [shape: f32[1,32], index: 6, kind: input, shape index: {}]
  %s7 = inlined_call_operand.vmem [shape: f32[1,32], index: 7, kind: input, shape index: {}]
  %s8 = inlined_call_operand.vmem [shape: f32[1,32], index: 8, kind: input, shape index: {}]
  %s9 = inlined_call_operand.hbm [shape: f32[8,32], index: 9, kind: output, shape index: {0}]
  %s10 = inlined_call_operand.hbm [shape: f32[8,128], index: 10, kind: output, shape index: {1}]
  %s11 = inlined_call_operand.hbm [shape: f32[8,128], index: 11, kind: output, shape index: {2}]
  %12 = xla_tuple %s9, %s10, %s11
  %s13 = sld [smem:[#allocation0]]
  $region62: #{tpu_custom_call.1} parent=0
    _
  %s15 = ssub.s32 1, %s13
  %s16 = scalar_select 0, %s15, %s13
  $region1: #{tpu_custom_call.1} parent=0
    #allocation2 [shape = 'u8[4096]{0}', space=vmem, size = 0x1000, scoped, tag = 'output window, operand 0, single buffered']
    #allocation3 [shape = 's32[1]{0}', space=sflag, size = 0x4, scoped, tag = 'scoped memory for tpu_custom_call.1']
    #allocation4 [shape = 'u8[4096]{0}', space=vmem, size = 0x1000, scoped, tag = 'output window, operand 1, single buffered']
    #allocation5 [shape = 's32[1]{0}', space=sflag, size = 0x4, scoped, tag = 'scoped memory for tpu_custom_call.1']
    #allocation6 [shape = 'u8[4096]{0}', space=vmem, size = 0x1000, scoped, tag = 'output window, operand 2, single buffered']
    %17 = vsyncpa [#allocation3], 0
    %18 = vsyncpa [#allocation5], 0
    // Predicated region
    $region2: #{tpu_custom_call.1} parent=1 // pred_check
      _
    $region3: #{tpu_custom_call.1} parent=1 // pred_check_branch
      %20 = sbr.rel (0) target = $region5
    $region4: #{tpu_custom_call.1} parent=1 // pred_region
      _
    $region5: #{tpu_custom_call.1} parent=1 // pred_fallthru
      _
    // Predicated region
    $region6: #{tpu_custom_call.1} parent=1 // pred_check
      _
    $region7: #{tpu_custom_call.1} parent=1 // pred_check_branch
      %22 = sbr.rel (0) target = $region9
    $region8: #{tpu_custom_call.1} parent=1 // pred_region
      _
    $region9: #{tpu_custom_call.1} parent=1 // pred_fallthru
      _
    // Predicated region
    $region10: #{tpu_custom_call.1} parent=1 // pred_check
      _
    $region11: #{tpu_custom_call.1} parent=1 // pred_check_branch
      %24 = sbr.rel (0) target = $region13
    $region12: #{tpu_custom_call.1} parent=1 // pred_region
      _
    $region13: #{tpu_custom_call.1} parent=1 // pred_fallthru
      _
    // Predicated region
    $region14: #{tpu_custom_call.1} parent=1 // pred_check
      _
    $region15: #{tpu_custom_call.1} parent=1 // pred_check_branch
      %26 = sbr.rel (0) target = $region17
    $region16: #{tpu_custom_call.1} parent=1 // pred_region
      _
    $region17: #{tpu_custom_call.1} parent=1 // pred_fallthru
      _
    // Predicated region
    $region18: #{tpu_custom_call.1} parent=1 // pred_check
      _
    $region19: #{tpu_custom_call.1} parent=1 // pred_check_branch
      %28 = sbr.rel (0) target = $region21
    $region20: #{tpu_custom_call.1} parent=1 // pred_region
      _
    $region21: #{tpu_custom_call.1} parent=1 // pred_fallthru
      _
    // Predicated region
    $region22: #{tpu_custom_call.1} parent=1 // pred_check
      _
    $region23: #{tpu_custom_call.1} parent=1 // pred_check_branch
      %30 = sbr.rel (0) target = $region25
    $region24: #{tpu_custom_call.1} parent=1 // pred_region
      _
    $region25: #{tpu_custom_call.1} parent=1 // pred_fallthru
      _
    // Predicated region
    $region26: #{tpu_custom_call.1} parent=1 // pred_check
      _
    $region27: #{tpu_custom_call.1} parent=1 // pred_check_branch
      %32 = sbr.rel (0) target = $region29
    $region28: #{tpu_custom_call.1} parent=1 // pred_region
      _
    $region29: #{tpu_custom_call.1} parent=1 // pred_fallthru
      _
    // Predicated region
    $region30: #{tpu_custom_call.1} parent=1 // pred_check
      _
    $region31: #{tpu_custom_call.1} parent=1 // pred_check_branch
      %34 = sbr.rel (0) target = $region33
    $region32: #{tpu_custom_call.1} parent=1 // pred_region
      _
    $region33: #{tpu_custom_call.1} parent=1 // pred_fallthru
      _
    // Predicated region
    $region34: #{tpu_custom_call.1} parent=1 // pred_check
      _
    $region35: #{tpu_custom_call.1} parent=1 // pred_check_branch
      %36 = sbr.rel (0) target = $region37
    $region36: #{tpu_custom_call.1} parent=1 // pred_region
      _
    $region37: #{tpu_custom_call.1} parent=1 // pred_fallthru
      _
    %v38 = vld [vmem:[%s0] sm:$0xff]
    %v39 = vld [vmem:[%s5] sm:$0xff]
    %v40 = vld [vmem:[%s5 + $0x8] sm:$0xff]
    %v41 = vld [vmem:[%s5 + $0x10] sm:$0xff]
    %v42 = vld [vmem:[%s5 + $0x18] sm:$0xff]
    %v43 = vld [vmem:[%s6] sm:$0x1]
    %v45 = vlaneseq
    %v46 = vshrl.u32 %v45, 7
    %v47 = vsub.s32 0, %v46
    %v48 = vrot.slane %v43, %v47
    %vm50 = vcmask 261120
    %v52 = vsel %vm50, %v38, 0
    %54 = vmatprep.subr.mxu0 0.0
    %55 = vmatpush1.msra.mxu0 0.0
    %56 = vmatprep.subr.mxu0 0.0
    %57 = vmatpush1.msra.mxu0 0.0
    %58 = vmatprep.subr.mxu0 0.0
    %59 = vmatpush1.msra.mxu0 0.0
    %60 = vmatprep.subr.mxu0 0.0
    %61 = vmatpush1.msra.mxu0 0.0
    %62 = vmatprep.subr.mxu0 0.0
    %63 = vmatpush1.msra.mxu0 0.0
    %64 = vmatprep.subr.mxu0 0.0
    %65 = vmatpush1.msra.mxu0 0.0
    %66 = vmatprep.subr.mxu0 0.0
    %67 = vmatpush1.msra.mxu0 0.0
    %68 = vmatprep.subr.mxu0 0.0
    %69 = vmatpush1.msra.mxu0 0.0
    %70 = vmatprep.subr.mxu0 0.0
    %71 = vmatpush1.msra.mxu0 0.0
    %72 = vmatprep.subr.mxu0 0.0
    %73 = vmatpush1.msra.mxu0 0.0
    %74 = vmatprep.subr.mxu0 0.0
    %75 = vmatpush1.msra.mxu0 0.0
    %76 = vmatprep.subr.mxu0 0.0
    %77 = vmatpush1.msra.mxu0 0.0
    %78 = vmatprep.subr.mxu0 0.0
    %79 = vmatpush1.msra.mxu0 %v42
    %80 = vmatprep.subr.mxu0 0.0
    %81 = vmatpush1.msra.mxu0 %v41
    %82 = vmatprep.subr.mxu0 0.0
    %83 = vmatpush1.msra.mxu0 %v40
    %84 = vmatprep.subr.mxu0 0.0
    %85 = vmatpush1.msra.mxu0 %v39
    %86 = vmatprep.subr.mxu0 0.0
    %87 = vmatpush2.msra.mxu0 0.0
    %88 = vmatprep.subr.mxu0 0.0
    %89 = vmatpush2.msra.mxu0 0.0
    %90 = vmatprep.subr.mxu0 0.0
    %91 = vmatpush2.msra.mxu0 0.0
    %92 = vmatprep.subr.mxu0 0.0
    %93 = vmatpush2.msra.mxu0 0.0
    %94 = vmatprep.subr.mxu0 0.0
    %95 = vmatpush2.msra.mxu0 0.0
    %96 = vmatprep.subr.mxu0 0.0
    %97 = vmatpush2.msra.mxu0 0.0
    %98 = vmatprep.subr.mxu0 0.0
    %99 = vmatpush2.msra.mxu0 0.0
    %100 = vmatprep.subr.mxu0 0.0
    %101 = vmatpush2.msra.mxu0 0.0
    %102 = vmatprep.subr.mxu0 0.0
    %103 = vmatpush2.msra.mxu0 0.0
    %104 = vmatprep.subr.mxu0 0.0
    %105 = vmatpush2.msra.mxu0 0.0
    %106 = vmatprep.subr.mxu0 0.0
    %107 = vmatpush2.msra.mxu0 0.0
    %108 = vmatprep.subr.mxu0 0.0
    %109 = vmatpush2.msra.mxu0 0.0
    %110 = vmatprep.subr.mxu0 0.0
    %111 = vmatpush2.msra.mxu0 0.0
    %112 = vmatprep.subr.mxu0 0.0
    %113 = vmatpush2.msra.mxu0 0.0
    %114 = vmatprep.subr.mxu0 0.0
    %115 = vmatpush2.msra.mxu0 0.0
    %116 = vmatprep.subr.mxu0 0.0
    %117 = vmatpush2.msra.mxu0 0.0
    %118 = vmatprep.mubr.f32.mxu0 0.0
    %119 = vmatmul.mubr.f32.gmra.mxu0 %v52
    %v120 = vpop.f32.mrf.mxu0
    %v121 = vadd.f32 %v48, %v120
    %v122 = vpop.f32.mrf.mxu0
    %123 = vdwg.mxu0
    %v124 = vld [vmem:[%s4] sm:$0xff]
    %v125 = vpack.c.bf16 %v121, %v121
    %v126 = vpack.c.bf16 %v124, %v124
    %v127 = vld [vmem:[%s7] sm:$0x1]
    %v128 = vpack.c.bf16 %v127, %v127
    %v129 = vld [vmem:[%s8] sm:$0x1]
    %v130 = vpack.c.bf16 %v129, %v129
    %v131 = vld [vmem:[%s2] sm:$0xf]
    %v132 = vld [vmem:[%s2 + $0x4] sm:$0xf]
    %v133 = vld [vmem:[%s2 + $0x8] sm:$0xf]
    %v134 = vld [vmem:[%s2 + $0xc] sm:$0xf]
    %v135 = vld [vmem:[%s2 + $0x10] sm:$0xf]
    %v136 = vld [vmem:[%s2 + $0x14] sm:$0xf]
    %v137 = vld [vmem:[%s2 + $0x18] sm:$0xf]
    %v138 = vld [vmem:[%s2 + $0x1c] sm:$0xf]
    %v139 = vld [vmem:[%s2 + $0x20] sm:$0xf]
    %v140 = vld [vmem:[%s2 + $0x24] sm:$0xf]
    %v141 = vld [vmem:[%s2 + $0x28] sm:$0xf]
    %v142 = vld [vmem:[%s2 + $0x2c] sm:$0xf]
    %v143 = vld [vmem:[%s2 + $0x30] sm:$0xf]
    %v144 = vld [vmem:[%s2 + $0x34] sm:$0xf]
    %v145 = vld [vmem:[%s2 + $0x38] sm:$0xf]
    %v146 = vld [vmem:[%s2 + $0x3c] sm:$0xf]
    %v147 = vld [vmem:[%s2 + $0x40] sm:$0xf]
    %v148 = vld [vmem:[%s2 + $0x44] sm:$0xf]
    %v149 = vld [vmem:[%s2 + $0x48] sm:$0xf]
    %v150 = vld [vmem:[%s2 + $0x4c] sm:$0xf]
    %v151 = vld [vmem:[%s2 + $0x50] sm:$0xf]
    %v152 = vld [vmem:[%s2 + $0x54] sm:$0xf]
    %v153 = vld [vmem:[%s2 + $0x58] sm:$0xf]
    %v154 = vld [vmem:[%s2 + $0x5c] sm:$0xf]
    %v155 = vld [vmem:[%s2 + $0x60] sm:$0xf]
    %v156 = vld [vmem:[%s2 + $0x64] sm:$0xf]
    %v157 = vld [vmem:[%s2 + $0x68] sm:$0xf]
    %v158 = vld [vmem:[%s2 + $0x6c] sm:$0xf]
    %v159 = vld [vmem:[%s2 + $0x70] sm:$0xf]
    %v160 = vld [vmem:[%s2 + $0x74] sm:$0xf]
    %v161 = vld [vmem:[%s2 + $0x78] sm:$0xf]
    %v162 = vld [vmem:[%s2 + $0x7c] sm:$0xf]
    %v163 = vld [vmem:[%s2 + $0x80] sm:$0xf]
    %v164 = vld [vmem:[%s2 + $0x84] sm:$0xf]
    %v165 = vld [vmem:[%s2 + $0x88] sm:$0xf]
    %v166 = vld [vmem:[%s2 + $0x8c] sm:$0xf]
    %v167 = vld [vmem:[%s2 + $0x90] sm:$0xf]
    %v168 = vld [vmem:[%s2 + $0x94] sm:$0xf]
    %v169 = vld [vmem:[%s2 + $0x98] sm:$0xf]
    %v170 = vld [vmem:[%s2 + $0x9c] sm:$0xf]
    %v171 = vld [vmem:[%s2 + $0xa0] sm:$0xf]
    %v172 = vld [vmem:[%s2 + $0xa4] sm:$0xf]
    %v173 = vld [vmem:[%s2 + $0xa8] sm:$0xf]
    %v174 = vld [vmem:[%s2 + $0xac] sm:$0xf]
    %v175 = vld [vmem:[%s2 + $0xb0] sm:$0xf]
    %v176 = vld [vmem:[%s2 + $0xb4] sm:$0xf]
    %v177 = vld [vmem:[%s2 + $0xb8] sm:$0xf]
    %v178 = vld [vmem:[%s2 + $0xbc] sm:$0xf]
    %v179 = vld [vmem:[%s2 + $0xc0] sm:$0xf]
    %v180 = vld [vmem:[%s2 + $0xc4] sm:$0xf]
    %v181 = vld [vmem:[%s2 + $0xc8] sm:$0xf]
    %v182 = vld [vmem:[%s2 + $0xcc] sm:$0xf]
    %v183 = vld [vmem:[%s2 + $0xd0] sm:$0xf]
    %v184 = vld [vmem:[%s2 + $0xd4] sm:$0xf]
    %v185 = vld [vmem:[%s2 + $0xd8] sm:$0xf]
    %v186 = vld [vmem:[%s2 + $0xdc] sm:$0xf]
    %v187 = vld [vmem:[%s2 + $0xe0] sm:$0xf]
    %v188 = vld [vmem:[%s2 + $0xe4] sm:$0xf]
    %v189 = vld [vmem:[%s2 + $0xe8] sm:$0xf]
    %v190 = vld [vmem:[%s2 + $0xec] sm:$0xf]
    %v191 = vld [vmem:[%s2 + $0xf0] sm:$0xf]
    %v192 = vld [vmem:[%s2 + $0xf4] sm:$0xf]
    %v193 = vld [vmem:[%s2 + $0xf8] sm:$0xf]
    %v194 = vld [vmem:[%s2 + $0xfc] sm:$0xf]
    %v195 = vld [vmem:[%s2 + $0x100] sm:$0xf]
    %v196 = vld [vmem:[%s2 + $0x104] sm:$0xf]
    %v197 = vld [vmem:[%s2 + $0x108] sm:$0xf]
    %v198 = vld [vmem:[%s2 + $0x10c] sm:$0xf]
    %v199 = vld [vmem:[%s2 + $0x110] sm:$0xf]
    %v200 = vld [vmem:[%s2 + $0x114] sm:$0xf]
    %v201 = vld [vmem:[%s2 + $0x118] sm:$0xf]
    %v202 = vld [vmem:[%s2 + $0x11c] sm:$0xf]
    %v203 = vld [vmem:[%s2 + $0x120] sm:$0xf]
    %v204 = vld [vmem:[%s2 + $0x124] sm:$0xf]
    %v205 = vld [vmem:[%s2 + $0x128] sm:$0xf]
    %v206 = vld [vmem:[%s2 + $0x12c] sm:$0xf]
    %v207 = vld [vmem:[%s2 + $0x130] sm:$0xf]
    %v208 = vld [vmem:[%s2 + $0x134] sm:$0xf]
    %v209 = vld [vmem:[%s2 + $0x138] sm:$0xf]
    %v210 = vld [vmem:[%s2 + $0x13c] sm:$0xf]
    %v211 = vld [vmem:[%s2 + $0x140] sm:$0xf]
    %v212 = vld [vmem:[%s2 + $0x144] sm:$0xf]
    %v213 = vld [vmem:[%s2 + $0x148] sm:$0xf]
    %v214 = vld [vmem:[%s2 + $0x14c] sm:$0xf]
    %v215 = vld [vmem:[%s2 + $0x150] sm:$0xf]
    %v216 = vld [vmem:[%s2 + $0x154] sm:$0xf]
    %v217 = vld [vmem:[%s2 + $0x158] sm:$0xf]
    %v218 = vld [vmem:[%s2 + $0x15c] sm:$0xf]
    %v219 = vld [vmem:[%s2 + $0x160] sm:$0xf]
    %v220 = vld [vmem:[%s2 + $0x164] sm:$0xf]
    %v221 = vld [vmem:[%s2 + $0x168] sm:$0xf]
    %v222 = vld [vmem:[%s2 + $0x16c] sm:$0xf]
    %v223 = vld [vmem:[%s2 + $0x170] sm:$0xf]
    %v224 = vld [vmem:[%s2 + $0x174] sm:$0xf]
    %v225 = vld [vmem:[%s2 + $0x178] sm:$0xf]
    %v226 = vld [vmem:[%s2 + $0x17c] sm:$0xf]
    %v227 = vld [vmem:[%s2 + $0x180] sm:$0xf]
    %v228 = vld [vmem:[%s2 + $0x184] sm:$0xf]
    %v229 = vld [vmem:[%s2 + $0x188] sm:$0xf]
    %v230 = vld [vmem:[%s2 + $0x18c] sm:$0xf]
    %v231 = vld [vmem:[%s2 + $0x190] sm:$0xf]
    %v232 = vld [vmem:[%s2 + $0x194] sm:$0xf]
    %v233 = vld [vmem:[%s2 + $0x198] sm:$0xf]
    %v234 = vld [vmem:[%s2 + $0x19c] sm:$0xf]
    %v235 = vld [vmem:[%s2 + $0x1a0] sm:$0xf]
    %v236 = vld [vmem:[%s2 + $0x1a4] sm:$0xf]
    %v237 = vld [vmem:[%s2 + $0x1a8] sm:$0xf]
    %v238 = vld [vmem:[%s2 + $0x1ac] sm:$0xf]
    %v239 = vld [vmem:[%s2 + $0x1b0] sm:$0xf]
    %v240 = vld [vmem:[%s2 + $0x1b4] sm:$0xf]
    %v241 = vld [vmem:[%s2 + $0x1b8] sm:$0xf]
    %v242 = vld [vmem:[%s2 + $0x1bc] sm:$0xf]
    %v243 = vld [vmem:[%s2 + $0x1c0] sm:$0xf]
    %v244 = vld [vmem:[%s2 + $0x1c4] sm:$0xf]
    %v245 = vld [vmem:[%s2 + $0x1c8] sm:$0xf]
    %v246 = vld [vmem:[%s2 + $0x1cc] sm:$0xf]
    %v247 = vld [vmem:[%s2 + $0x1d0] sm:$0xf]
    %v248 = vld [vmem:[%s2 + $0x1d4] sm:$0xf]
    %v249 = vld [vmem:[%s2 + $0x1d8] sm:$0xf]
    %v250 = vld [vmem:[%s2 + $0x1dc] sm:$0xf]
    %v251 = vld [vmem:[%s2 + $0x1e0] sm:$0xf]
    %v252 = vld [vmem:[%s2 + $0x1e4] sm:$0xf]
    %v253 = vld [vmem:[%s2 + $0x1e8] sm:$0xf]
    %v254 = vld [vmem:[%s2 + $0x1ec] sm:$0xf]
    %v255 = vld [vmem:[%s2 + $0x1f0] sm:$0xf]
    %v256 = vld [vmem:[%s2 + $0x1f4] sm:$0xf]
    %v257 = vld [vmem:[%s2 + $0x1f8] sm:$0xf]
    %v258 = vld [vmem:[%s2 + $0x1fc] sm:$0xf]
    %v261 = vunpack.c.l.s4 1966171168
    %v262 = vunpack.c.0.s8 %v261
    %v263 = vlaneseq
    %v264 = vshrl.u32 %v263, 7
    %v265 = vsub.s32 %v262, %v264
    %v266 = vrot.slane %v125, %v265
    %v267 = vcombine.high %v266, %v266
    %v269 = vunpack.c.l.s4 1966171168
    %v270 = vunpack.c.0.s8 %v269
    %v271 = vlaneseq
    %v272 = vshrl.u32 %v271, 7
    %v273 = vsub.s32 %v270, %v272
    %v274 = vrot.slane %v266, %v273
    %v276 = vunpack.c.l.s4 1966171168
    %v277 = vunpack.c.0.s8 %v276
    %v278 = vlaneseq
    %v279 = vshrl.u32 %v278, 7
    %v280 = vsub.s32 %v277, %v279
    %v281 = vrot.slane %v267, %v280
    %v282 = vcombine.high %v274, %v274
    %v283 = vcombine.high %v281, %v281
    %v284 = vunpack.i.l.s16 %v274
    %v285 = vunpack.i.h.s16 %v274
    %v286 = vunpack.i.l.s16 %v281
    %v287 = vunpack.i.h.s16 %v281
    %v288 = vunpack.i.l.s16 %v282
    %v289 = vunpack.i.h.s16 %v282
    %v290 = vunpack.i.l.s16 %v283
    %v291 = vunpack.i.h.s16 %v283
    %v292 = vpack.i.b16 %v284, %v284
    %v293 = vpack.i.b16 %v285, %v285
    %v294 = vpack.i.b16 %v286, %v286
    %v295 = vpack.i.b16 %v287, %v287
    %v296 = vpack.i.b16 %v288, %v288
    %v297 = vpack.i.b16 %v289, %v289
    %v298 = vpack.i.b16 %v290, %v290
    %v299 = vpack.i.b16 %v291, %v291
    %v300 = vlaneseq
    %v301 = vshrl.u32 %v300, 7
    %v302 = vsub.s32 0, %v301
    %v303 = vrot.slane %v292, %v302
    %v304 = vlaneseq
    %v305 = vshrl.u32 %v304, 7
    %v306 = vsub.s32 0, %v305
    %v307 = vrot.slane %v293, %v306
    %v308 = vlaneseq
    %v309 = vshrl.u32 %v308, 7
    %v310 = vsub.s32 0, %v309
    %v311 = vrot.slane %v294, %v310
    %v312 = vlaneseq
    %v313 = vshrl.u32 %v312, 7
    %v314 = vsub.s32 0, %v313
    %v315 = vrot.slane %v295, %v314
    %v316 = vlaneseq
    %v317 = vshrl.u32 %v316, 7
    %v318 = vsub.s32 0, %v317
    %v319 = vrot.slane %v296, %v318
    %v320 = vlaneseq
    %v321 = vshrl.u32 %v320, 7
    %v322 = vsub.s32 0, %v321
    %v323 = vrot.slane %v297, %v322
    %v324 = vlaneseq
    %v325 = vshrl.u32 %v324, 7
    %v326 = vsub.s32 0, %v325
    %v327 = vrot.slane %v298, %v326
    %v328 = vlaneseq
    %v329 = vshrl.u32 %v328, 7
    %v330 = vsub.s32 0, %v329
    %v331 = vrot.slane %v299, %v330
    %v333 = vpack.i.b16 %v303, %v303
    %v335 = vlaneseq
    %v336 = vshrl.u32 %v335, 7
    %v337 = vsub.s32 0, %v336
    %v338 = vrot.slane %v333, %v337
    %v340 = vpack.i.b16 %v307, %v307
    %v342 = vlaneseq
    %v343 = vshrl.u32 %v342, 7
    %v344 = vsub.s32 0, %v343
    %v345 = vrot.slane %v340, %v344
    %v347 = vpack.i.b16 %v311, %v311
    %v349 = vlaneseq
    %v350 = vshrl.u32 %v349, 7
    %v351 = vsub.s32 0, %v350
    %v352 = vrot.slane %v347, %v351
    %v354 = vpack.i.b16 %v315, %v315
    %v356 = vlaneseq
    %v357 = vshrl.u32 %v356, 7
    %v358 = vsub.s32 0, %v357
    %v359 = vrot.slane %v354, %v358
    %v361 = vpack.i.b16 %v319, %v319
    %v363 = vlaneseq
    %v364 = vshrl.u32 %v363, 7
    %v365 = vsub.s32 0, %v364
    %v366 = vrot.slane %v361, %v365
    %v368 = vpack.i.b16 %v323, %v323
    %v370 = vlaneseq
    %v371 = vshrl.u32 %v370, 7
    %v372 = vsub.s32 0, %v371
    %v373 = vrot.slane %v368, %v372
    %v375 = vpack.i.b16 %v327, %v327
    %v377 = vlaneseq
    %v378 = vshrl.u32 %v377, 7
    %v379 = vsub.s32 0, %v378
    %v380 = vrot.slane %v375, %v379
    %v382 = vpack.i.b16 %v331, %v331
    %v384 = vlaneseq
    %v385 = vshrl.u32 %v384, 7
    %v386 = vsub.s32 0, %v385
    %v387 = vrot.slane %v382, %v386
    %v396 = vunpack.c.l.b16 %v338
    %v397 = vunpack.c.l.b16 %v345
    %v398 = vunpack.c.l.b16 %v352
    %v399 = vunpack.c.l.b16 %v359
    %v400 = vunpack.c.l.b16 %v366
    %v401 = vunpack.c.l.b16 %v373
    %v402 = vunpack.c.l.b16 %v380
    %v403 = vunpack.c.l.b16 %v387
    %v404 = vpack.c.b16 %v396, %v396
    %v405 = vpack.c.b16 %v397, %v397
    %v406 = vpack.c.b16 %v398, %v398
    %v407 = vpack.c.b16 %v399, %v399
    %v408 = vpack.c.b16 %v400, %v400
    %v409 = vpack.c.b16 %v401, %v401
    %v410 = vpack.c.b16 %v402, %v402
    %v411 = vpack.c.b16 %v403, %v403
    %v420 = vadd.bf16 %v131, %v404
    %v421 = vadd.bf16 %v132, %v404
    %v422 = vadd.bf16 %v133, %v404
    %v423 = vadd.bf16 %v134, %v404
    %v424 = vadd.bf16 %v135, %v404
    %v425 = vadd.bf16 %v136, %v404
    %v426 = vadd.bf16 %v137, %v404
    %v427 = vadd.bf16 %v138, %v404
    %v428 = vadd.bf16 %v139, %v404
    %v429 = vadd.bf16 %v140, %v404
    %v430 = vadd.bf16 %v141, %v404
    %v431 = vadd.bf16 %v142, %v404
    %v432 = vadd.bf16 %v143, %v404
    %v433 = vadd.bf16 %v144, %v404
    %v434 = vadd.bf16 %v145, %v404
    %v435 = vadd.bf16 %v146, %v404
    %v436 = vadd.bf16 %v147, %v405
    %v437 = vadd.bf16 %v148, %v405
    %v438 = vadd.bf16 %v149, %v405
    %v439 = vadd.bf16 %v150, %v405
    %v440 = vadd.bf16 %v151, %v405
    %v441 = vadd.bf16 %v152, %v405
    %v442 = vadd.bf16 %v153, %v405
    %v443 = vadd.bf16 %v154, %v405
    %v444 = vadd.bf16 %v155, %v405
    %v445 = vadd.bf16 %v156, %v405
    %v446 = vadd.bf16 %v157, %v405
    %v447 = vadd.bf16 %v158, %v405
    %v448 = vadd.bf16 %v159, %v405
    %v449 = vadd.bf16 %v160, %v405
    %v450 = vadd.bf16 %v161, %v405
    %v451 = vadd.bf16 %v162, %v405
    %v452 = vadd.bf16 %v163, %v406
    %v453 = vadd.bf16 %v164, %v406
    %v454 = vadd.bf16 %v165, %v406
    %v455 = vadd.bf16 %v166, %v406
    %v456 = vadd.bf16 %v167, %v406
    %v457 = vadd.bf16 %v168, %v406
    %v458 = vadd.bf16 %v169, %v406
    %v459 = vadd.bf16 %v170, %v406
    %v460 = vadd.bf16 %v171, %v406
    %v461 = vadd.bf16 %v172, %v406
    %v462 = vadd.bf16 %v173, %v406
    %v463 = vadd.bf16 %v174, %v406
    %v464 = vadd.bf16 %v175, %v406
    %v465 = vadd.bf16 %v176, %v406
    %v466 = vadd.bf16 %v177, %v406
    %v467 = vadd.bf16 %v178, %v406
    %v468 = vadd.bf16 %v179, %v407
    %v469 = vadd.bf16 %v180, %v407
    %v470 = vadd.bf16 %v181, %v407
    %v471 = vadd.bf16 %v182, %v407
    %v472 = vadd.bf16 %v183, %v407
    %v473 = vadd.bf16 %v184, %v407
    %v474 = vadd.bf16 %v185, %v407
    %v475 = vadd.bf16 %v186, %v407
    %v476 = vadd.bf16 %v187, %v407
    %v477 = vadd.bf16 %v188, %v407
    %v478 = vadd.bf16 %v189, %v407
    %v479 = vadd.bf16 %v190, %v407
    %v480 = vadd.bf16 %v191, %v407
    %v481 = vadd.bf16 %v192, %v407
    %v482 = vadd.bf16 %v193, %v407
    %v483 = vadd.bf16 %v194, %v407
    %v484 = vadd.bf16 %v195, %v408
    %v485 = vadd.bf16 %v196, %v408
    %v486 = vadd.bf16 %v197, %v408
    %v487 = vadd.bf16 %v198, %v408
    %v488 = vadd.bf16 %v199, %v408
    %v489 = vadd.bf16 %v200, %v408
    %v490 = vadd.bf16 %v201, %v408
    %v491 = vadd.bf16 %v202, %v408
    %v492 = vadd.bf16 %v203, %v408
    %v493 = vadd.bf16 %v204, %v408
    %v494 = vadd.bf16 %v205, %v408
    %v495 = vadd.bf16 %v206, %v408
    %v496 = vadd.bf16 %v207, %v408
    %v497 = vadd.bf16 %v208, %v408
    %v498 = vadd.bf16 %v209, %v408
    %v499 = vadd.bf16 %v210, %v408
    %v500 = vadd.bf16 %v211, %v409
    %v501 = vadd.bf16 %v212, %v409
    %v502 = vadd.bf16 %v213, %v409
    %v503 = vadd.bf16 %v214, %v409
    %v504 = vadd.bf16 %v215, %v409
    %v505 = vadd.bf16 %v216, %v409
    %v506 = vadd.bf16 %v217, %v409
    %v507 = vadd.bf16 %v218, %v409
    %v508 = vadd.bf16 %v219, %v409
    %v509 = vadd.bf16 %v220, %v409
    %v510 = vadd.bf16 %v221, %v409
    %v511 = vadd.bf16 %v222, %v409
    %v512 = vadd.bf16 %v223, %v409
    %v513 = vadd.bf16 %v224, %v409
    %v514 = vadd.bf16 %v225, %v409
    %v515 = vadd.bf16 %v226, %v409
    %v516 = vadd.bf16 %v227, %v410
    %v517 = vadd.bf16 %v228, %v410
    %v518 = vadd.bf16 %v229, %v410
    %v519 = vadd.bf16 %v230, %v410
    %v520 = vadd.bf16 %v231, %v410
    %v521 = vadd.bf16 %v232, %v410
    %v522 = vadd.bf16 %v233, %v410
    %v523 = vadd.bf16 %v234, %v410
    %v524 = vadd.bf16 %v235, %v410
    %v525 = vadd.bf16 %v236, %v410
    %v526 = vadd.bf16 %v237, %v410
    %v527 = vadd.bf16 %v238, %v410
    %v528 = vadd.bf16 %v239, %v410
    %v529 = vadd.bf16 %v240, %v410
    %v530 = vadd.bf16 %v241, %v410
    %v531 = vadd.bf16 %v242, %v410
    %v532 = vadd.bf16 %v243, %v411
    %v533 = vadd.bf16 %v244, %v411
    %v534 = vadd.bf16 %v245, %v411
    %v535 = vadd.bf16 %v246, %v411
    %v536 = vadd.bf16 %v247, %v411
    %v537 = vadd.bf16 %v248, %v411
    %v538 = vadd.bf16 %v249, %v411
    %v539 = vadd.bf16 %v250, %v411
    %v540 = vadd.bf16 %v251, %v411
    %v541 = vadd.bf16 %v252, %v411
    %v542 = vadd.bf16 %v253, %v411
    %v543 = vadd.bf16 %v254, %v411
    %v544 = vadd.bf16 %v255, %v411
    %v545 = vadd.bf16 %v256, %v411
    %v546 = vadd.bf16 %v257, %v411
    %v547 = vadd.bf16 %v258, %v411
    %v549 = vpack.i.b16 %v126, %v126
    %v551 = vlaneseq
    %v552 = vshrl.u32 %v551, 7
    %v553 = vsub.s32 0, %v552
    %v554 = vrot.slane %v549, %v553
    %556 = vbcast.lane.c.b16.xlu0 %v554, 256
    %v557 = vpop.permute.xlu0 %556
    %s559 = sor.u32 256, 16
    %560 = vbcast.lane.c.b16.xlu0 %v554, %s559
    %v561 = vpop.permute.xlu0 %560
    %s563 = sor.u32 256, 32
    %564 = vbcast.lane.c.b16.xlu0 %v554, %s563
    %v565 = vpop.permute.xlu0 %564
    %s567 = sor.u32 256, 48
    %568 = vbcast.lane.c.b16.xlu0 %v554, %s567
    %v569 = vpop.permute.xlu0 %568
    %s571 = sor.u32 256, 64
    %572 = vbcast.lane.c.b16.xlu0 %v554, %s571
    %v573 = vpop.permute.xlu0 %572
    %s575 = sor.u32 256, 80
    %576 = vbcast.lane.c.b16.xlu0 %v554, %s575
    %v577 = vpop.permute.xlu0 %576
    %s579 = sor.u32 256, 96
    %580 = vbcast.lane.c.b16.xlu0 %v554, %s579
    %v581 = vpop.permute.xlu0 %580
    %s583 = sor.u32 256, 112
    %584 = vbcast.lane.c.b16.xlu0 %v554, %s583
    %v585 = vpop.permute.xlu0 %584
    %v586 = vshrl.u32 %v126, 16
    %v587 = vpack.i.b16 %v586, %v586
    %v589 = vlaneseq
    %v590 = vshrl.u32 %v589, 7
    %v591 = vsub.s32 0, %v590
    %v592 = vrot.slane %v587, %v591
    %594 = vbcast.lane.c.b16.xlu0 %v592, 256
    %v595 = vpop.permute.xlu0 %594
    %s597 = sor.u32 256, 16
    %598 = vbcast.lane.c.b16.xlu0 %v592, %s597
    %v599 = vpop.permute.xlu0 %598
    %s601 = sor.u32 256, 32
    %602 = vbcast.lane.c.b16.xlu0 %v592, %s601
    %v603 = vpop.permute.xlu0 %602
    %s605 = sor.u32 256, 48
    %606 = vbcast.lane.c.b16.xlu0 %v592, %s605
    %v607 = vpop.permute.xlu0 %606
    %s609 = sor.u32 256, 64
    %610 = vbcast.lane.c.b16.xlu0 %v592, %s609
    %v611 = vpop.permute.xlu0 %610
    %s613 = sor.u32 256, 80
    %614 = vbcast.lane.c.b16.xlu0 %v592, %s613
    %v615 = vpop.permute.xlu0 %614
    %s617 = sor.u32 256, 96
    %618 = vbcast.lane.c.b16.xlu0 %v592, %s617
    %v619 = vpop.permute.xlu0 %618
    %s621 = sor.u32 256, 112
    %622 = vbcast.lane.c.b16.xlu0 %v592, %s621
    %v623 = vpop.permute.xlu0 %622
    %v624 = vlaneseq
    %v625 = vshrl.u32 %v624, 7
    %v626 = vsub.s32 1, %v625
    %v627 = vrot.slane %v549, %v626
    %629 = vbcast.lane.c.b16.xlu0 %v627, 256
    %v630 = vpop.permute.xlu0 %629
    %s632 = sor.u32 256, 16
    %633 = vbcast.lane.c.b16.xlu0 %v627, %s632
    %v634 = vpop.permute.xlu0 %633
    %s636 = sor.u32 256, 32
    %637 = vbcast.lane.c.b16.xlu0 %v627, %s636
    %v638 = vpop.permute.xlu0 %637
    %s640 = sor.u32 256, 48
    %641 = vbcast.lane.c.b16.xlu0 %v627, %s640
    %v642 = vpop.permute.xlu0 %641
    %s644 = sor.u32 256, 64
    %645 = vbcast.lane.c.b16.xlu0 %v627, %s644
    %v646 = vpop.permute.xlu0 %645
    %s648 = sor.u32 256, 80
    %649 = vbcast.lane.c.b16.xlu0 %v627, %s648
    %v650 = vpop.permute.xlu0 %649
    %s652 = sor.u32 256, 96
    %653 = vbcast.lane.c.b16.xlu0 %v627, %s652
    %v654 = vpop.permute.xlu0 %653
    %s656 = sor.u32 256, 112
    %657 = vbcast.lane.c.b16.xlu0 %v627, %s656
    %v658 = vpop.permute.xlu0 %657
    %v659 = vlaneseq
    %v660 = vshrl.u32 %v659, 7
    %v661 = vsub.s32 1, %v660
    %v662 = vrot.slane %v587, %v661
    %664 = vbcast.lane.c.b16.xlu0 %v662, 256
    %v665 = vpop.permute.xlu0 %664
    %s667 = sor.u32 256, 16
    %668 = vbcast.lane.c.b16.xlu0 %v662, %s667
    %v669 = vpop.permute.xlu0 %668
    %s671 = sor.u32 256, 32
    %672 = vbcast.lane.c.b16.xlu0 %v662, %s671
    %v673 = vpop.permute.xlu0 %672
    %s675 = sor.u32 256, 48
    %676 = vbcast.lane.c.b16.xlu0 %v662, %s675
    %v677 = vpop.permute.xlu0 %676
    %s679 = sor.u32 256, 64
    %680 = vbcast.lane.c.b16.xlu0 %v662, %s679
    %v681 = vpop.permute.xlu0 %680
    %s683 = sor.u32 256, 80
    %684 = vbcast.lane.c.b16.xlu0 %v662, %s683
    %v685 = vpop.permute.xlu0 %684
    %s687 = sor.u32 256, 96
    %688 = vbcast.lane.c.b16.xlu0 %v662, %s687
    %v689 = vpop.permute.xlu0 %688
    %s691 = sor.u32 256, 112
    %692 = vbcast.lane.c.b16.xlu0 %v662, %s691
    %v693 = vpop.permute.xlu0 %692
    %v694 = vlaneseq
    %v695 = vshrl.u32 %v694, 7
    %v696 = vsub.s32 2, %v695
    %v697 = vrot.slane %v549, %v696
    %699 = vbcast.lane.c.b16.xlu0 %v697, 256
    %v700 = vpop.permute.xlu0 %699
    %s702 = sor.u32 256, 16
    %703 = vbcast.lane.c.b16.xlu0 %v697, %s702
    %v704 = vpop.permute.xlu0 %703
    %s706 = sor.u32 256, 32
    %707 = vbcast.lane.c.b16.xlu0 %v697, %s706
    %v708 = vpop.permute.xlu0 %707
    %s710 = sor.u32 256, 48
    %711 = vbcast.lane.c.b16.xlu0 %v697, %s710
    %v712 = vpop.permute.xlu0 %711
    %s714 = sor.u32 256, 64
    %715 = vbcast.lane.c.b16.xlu0 %v697, %s714
    %v716 = vpop.permute.xlu0 %715
    %s718 = sor.u32 256, 80
    %719 = vbcast.lane.c.b16.xlu0 %v697, %s718
    %v720 = vpop.permute.xlu0 %719
    %s722 = sor.u32 256, 96
    %723 = vbcast.lane.c.b16.xlu0 %v697, %s722
    %v724 = vpop.permute.xlu0 %723
    %s726 = sor.u32 256, 112
    %727 = vbcast.lane.c.b16.xlu0 %v697, %s726
    %v728 = vpop.permute.xlu0 %727
    %v729 = vlaneseq
    %v730 = vshrl.u32 %v729, 7
    %v731 = vsub.s32 2, %v730
    %v732 = vrot.slane %v587, %v731
    %734 = vbcast.lane.c.b16.xlu0 %v732, 256
    %v735 = vpop.permute.xlu0 %734
    %s737 = sor.u32 256, 16
    %738 = vbcast.lane.c.b16.xlu0 %v732, %s737
    %v739 = vpop.permute.xlu0 %738
    %s741 = sor.u32 256, 32
    %742 = vbcast.lane.c.b16.xlu0 %v732, %s741
    %v743 = vpop.permute.xlu0 %742
    %s745 = sor.u32 256, 48
    %746 = vbcast.lane.c.b16.xlu0 %v732, %s745
    %v747 = vpop.permute.xlu0 %746
    %s749 = sor.u32 256, 64
    %750 = vbcast.lane.c.b16.xlu0 %v732, %s749
    %v751 = vpop.permute.xlu0 %750
    %s753 = sor.u32 256, 80
    %754 = vbcast.lane.c.b16.xlu0 %v732, %s753
    %v755 = vpop.permute.xlu0 %754
    %s757 = sor.u32 256, 96
    %758 = vbcast.lane.c.b16.xlu0 %v732, %s757
    %v759 = vpop.permute.xlu0 %758
    %s761 = sor.u32 256, 112
    %762 = vbcast.lane.c.b16.xlu0 %v732, %s761
    %v763 = vpop.permute.xlu0 %762
    %v764 = vlaneseq
    %v765 = vshrl.u32 %v764, 7
    %v766 = vsub.s32 3, %v765
    %v767 = vrot.slane %v549, %v766
    %769 = vbcast.lane.c.b16.xlu0 %v767, 256
    %v770 = vpop.permute.xlu0 %769
    %s772 = sor.u32 256, 16
    %773 = vbcast.lane.c.b16.xlu0 %v767, %s772
    %v774 = vpop.permute.xlu0 %773
    %s776 = sor.u32 256, 32
    %777 = vbcast.lane.c.b16.xlu0 %v767, %s776
    %v778 = vpop.permute.xlu0 %777
    %s780 = sor.u32 256, 48
    %781 = vbcast.lane.c.b16.xlu0 %v767, %s780
    %v782 = vpop.permute.xlu0 %781
    %s784 = sor.u32 256, 64
    %785 = vbcast.lane.c.b16.xlu0 %v767, %s784
    %v786 = vpop.permute.xlu0 %785
    %s788 = sor.u32 256, 80
    %789 = vbcast.lane.c.b16.xlu0 %v767, %s788
    %v790 = vpop.permute.xlu0 %789
    %s792 = sor.u32 256, 96
    %793 = vbcast.lane.c.b16.xlu0 %v767, %s792
    %v794 = vpop.permute.xlu0 %793
    %s796 = sor.u32 256, 112
    %797 = vbcast.lane.c.b16.xlu0 %v767, %s796
    %v798 = vpop.permute.xlu0 %797
    %v799 = vlaneseq
    %v800 = vshrl.u32 %v799, 7
    %v801 = vsub.s32 3, %v800
    %v802 = vrot.slane %v587, %v801
    %804 = vbcast.lane.c.b16.xlu0 %v802, 256
    %v805 = vpop.permute.xlu0 %804
    %s807 = sor.u32 256, 16
    %808 = vbcast.lane.c.b16.xlu0 %v802, %s807
    %v809 = vpop.permute.xlu0 %808
    %s811 = sor.u32 256, 32
    %812 = vbcast.lane.c.b16.xlu0 %v802, %s811
    %v813 = vpop.permute.xlu0 %812
    %s815 = sor.u32 256, 48
    %816 = vbcast.lane.c.b16.xlu0 %v802, %s815
    %v817 = vpop.permute.xlu0 %816
    %s819 = sor.u32 256, 64
    %820 = vbcast.lane.c.b16.xlu0 %v802, %s819
    %v821 = vpop.permute.xlu0 %820
    %s823 = sor.u32 256, 80
    %824 = vbcast.lane.c.b16.xlu0 %v802, %s823
    %v825 = vpop.permute.xlu0 %824
    %s827 = sor.u32 256, 96
    %828 = vbcast.lane.c.b16.xlu0 %v802, %s827
    %v829 = vpop.permute.xlu0 %828
    %s831 = sor.u32 256, 112
    %832 = vbcast.lane.c.b16.xlu0 %v802, %s831
    %v833 = vpop.permute.xlu0 %832
    %v835 = vpack.i.b16 %v128, %v128
    %v837 = vlaneseq
    %v838 = vshrl.u32 %v837, 7
    %v839 = vsub.s32 0, %v838
    %v840 = vrot.slane %v835, %v839
    %v841 = vmul.bf16 %v557, %v840
    %v842 = vmul.bf16 %v561, %v840
    %v843 = vmul.bf16 %v565, %v840
    %v844 = vmul.bf16 %v569, %v840
    %v845 = vmul.bf16 %v573, %v840
    %v846 = vmul.bf16 %v577, %v840
    %v847 = vmul.bf16 %v581, %v840
    %v848 = vmul.bf16 %v585, %v840
    %v849 = vmul.bf16 %v595, %v840
    %v850 = vmul.bf16 %v599, %v840
    %v851 = vmul.bf16 %v603, %v840
    %v852 = vmul.bf16 %v607, %v840
    %v853 = vmul.bf16 %v611, %v840
    %v854 = vmul.bf16 %v615, %v840
    %v855 = vmul.bf16 %v619, %v840
    %v856 = vmul.bf16 %v623, %v840
    %v857 = vmul.bf16 %v630, %v840
    %v858 = vmul.bf16 %v634, %v840
    %v859 = vmul.bf16 %v638, %v840
    %v860 = vmul.bf16 %v642, %v840
    %v861 = vmul.bf16 %v646, %v840
    %v862 = vmul.bf16 %v650, %v840
    %v863 = vmul.bf16 %v654, %v840
    %v864 = vmul.bf16 %v658, %v840
    %v865 = vmul.bf16 %v665, %v840
    %v866 = vmul.bf16 %v669, %v840
    %v867 = vmul.bf16 %v673, %v840
    %v868 = vmul.bf16 %v677, %v840
    %v869 = vmul.bf16 %v681, %v840
    %v870 = vmul.bf16 %v685, %v840
    %v871 = vmul.bf16 %v689, %v840
    %v872 = vmul.bf16 %v693, %v840
    %v873 = vmul.bf16 %v700, %v840
    %v874 = vmul.bf16 %v704, %v840
    %v875 = vmul.bf16 %v708, %v840
    %v876 = vmul.bf16 %v712, %v840
    %v877 = vmul.bf16 %v716, %v840
    %v878 = vmul.bf16 %v720, %v840
    %v879 = vmul.bf16 %v724, %v840
    %v880 = vmul.bf16 %v728, %v840
    %v881 = vmul.bf16 %v735, %v840
    %v882 = vmul.bf16 %v739, %v840
    %v883 = vmul.bf16 %v743, %v840
    %v884 = vmul.bf16 %v747, %v840
    %v885 = vmul.bf16 %v751, %v840
    %v886 = vmul.bf16 %v755, %v840
    %v887 = vmul.bf16 %v759, %v840
    %v888 = vmul.bf16 %v763, %v840
    %v889 = vmul.bf16 %v770, %v840
    %v890 = vmul.bf16 %v774, %v840
    %v891 = vmul.bf16 %v778, %v840
    %v892 = vmul.bf16 %v782, %v840
    %v893 = vmul.bf16 %v786, %v840
    %v894 = vmul.bf16 %v790, %v840
    %v895 = vmul.bf16 %v794, %v840
    %v896 = vmul.bf16 %v798, %v840
    %v897 = vmul.bf16 %v805, %v840
    %v898 = vmul.bf16 %v809, %v840
    %v899 = vmul.bf16 %v813, %v840
    %v900 = vmul.bf16 %v817, %v840
    %v901 = vmul.bf16 %v821, %v840
    %v902 = vmul.bf16 %v825, %v840
    %v903 = vmul.bf16 %v829, %v840
    %v904 = vmul.bf16 %v833, %v840
    %v969 = vunpack.c.l.b16 %v841
    %v970 = vunpack.c.h.b16 %v841
    %v971 = vunpack.c.l.b16 %v842
    %v972 = vunpack.c.h.b16 %v842
    %v973 = vunpack.c.l.b16 %v843
    %v974 = vunpack.c.h.b16 %v843
    %v975 = vunpack.c.l.b16 %v844
    %v976 = vunpack.c.h.b16 %v844
    %v977 = vunpack.c.l.b16 %v845
    %v978 = vunpack.c.h.b16 %v845
    %v979 = vunpack.c.l.b16 %v846
    %v980 = vunpack.c.h.b16 %v846
    %v981 = vunpack.c.l.b16 %v847
    %v982 = vunpack.c.h.b16 %v847
    %v983 = vunpack.c.l.b16 %v848
    %v984 = vunpack.c.h.b16 %v848
    %v985 = vunpack.c.l.b16 %v849
    %v986 = vunpack.c.h.b16 %v849
    %v987 = vunpack.c.l.b16 %v850
    %v988 = vunpack.c.h.b16 %v850
    %v989 = vunpack.c.l.b16 %v851
    %v990 = vunpack.c.h.b16 %v851
    %v991 = vunpack.c.l.b16 %v852
    %v992 = vunpack.c.h.b16 %v852
    %v993 = vunpack.c.l.b16 %v853
    %v994 = vunpack.c.h.b16 %v853
    %v995 = vunpack.c.l.b16 %v854
    %v996 = vunpack.c.h.b16 %v854
    %v997 = vunpack.c.l.b16 %v855
    %v998 = vunpack.c.h.b16 %v855
    %v999 = vunpack.c.l.b16 %v856
    %v1000 = vunpack.c.h.b16 %v856
    %v1001 = vunpack.c.l.b16 %v857
    %v1002 = vunpack.c.h.b16 %v857
    %v1003 = vunpack.c.l.b16 %v858
    %v1004 = vunpack.c.h.b16 %v858
    %v1005 = vunpack.c.l.b16 %v859
    %v1006 = vunpack.c.h.b16 %v859
    %v1007 = vunpack.c.l.b16 %v860
    %v1008 = vunpack.c.h.b16 %v860
    %v1009 = vunpack.c.l.b16 %v861
    %v1010 = vunpack.c.h.b16 %v861
    %v1011 = vunpack.c.l.b16 %v862
    %v1012 = vunpack.c.h.b16 %v862
    %v1013 = vunpack.c.l.b16 %v863
    %v1014 = vunpack.c.h.b16 %v863
    %v1015 = vunpack.c.l.b16 %v864
    %v1016 = vunpack.c.h.b16 %v864
    %v1017 = vunpack.c.l.b16 %v865
    %v1018 = vunpack.c.h.b16 %v865
    %v1019 = vunpack.c.l.b16 %v866
    %v1020 = vunpack.c.h.b16 %v866
    %v1021 = vunpack.c.l.b16 %v867
    %v1022 = vunpack.c.h.b16 %v867
    %v1023 = vunpack.c.l.b16 %v868
    %v1024 = vunpack.c.h.b16 %v868
    %v1025 = vunpack.c.l.b16 %v869
    %v1026 = vunpack.c.h.b16 %v869
    %v1027 = vunpack.c.l.b16 %v870
    %v1028 = vunpack.c.h.b16 %v870
    %v1029 = vunpack.c.l.b16 %v871
    %v1030 = vunpack.c.h.b16 %v871
    %v1031 = vunpack.c.l.b16 %v872
    %v1032 = vunpack.c.h.b16 %v872
    %v1033 = vunpack.c.l.b16 %v873
    %v1034 = vunpack.c.h.b16 %v873
    %v1035 = vunpack.c.l.b16 %v874
    %v1036 = vunpack.c.h.b16 %v874
    %v1037 = vunpack.c.l.b16 %v875
    %v1038 = vunpack.c.h.b16 %v875
    %v1039 = vunpack.c.l.b16 %v876
    %v1040 = vunpack.c.h.b16 %v876
    %v1041 = vunpack.c.l.b16 %v877
    %v1042 = vunpack.c.h.b16 %v877
    %v1043 = vunpack.c.l.b16 %v878
    %v1044 = vunpack.c.h.b16 %v878
    %v1045 = vunpack.c.l.b16 %v879
    %v1046 = vunpack.c.h.b16 %v879
    %v1047 = vunpack.c.l.b16 %v880
    %v1048 = vunpack.c.h.b16 %v880
    %v1049 = vunpack.c.l.b16 %v881
    %v1050 = vunpack.c.h.b16 %v881
    %v1051 = vunpack.c.l.b16 %v882
    %v1052 = vunpack.c.h.b16 %v882
    %v1053 = vunpack.c.l.b16 %v883
    %v1054 = vunpack.c.h.b16 %v883
    %v1055 = vunpack.c.l.b16 %v884
    %v1056 = vunpack.c.h.b16 %v884
    %v1057 = vunpack.c.l.b16 %v885
    %v1058 = vunpack.c.h.b16 %v885
    %v1059 = vunpack.c.l.b16 %v886
    %v1060 = vunpack.c.h.b16 %v886
    %v1061 = vunpack.c.l.b16 %v887
    %v1062 = vunpack.c.h.b16 %v887
    %v1063 = vunpack.c.l.b16 %v888
    %v1064 = vunpack.c.h.b16 %v888
    %v1065 = vunpack.c.l.b16 %v889
    %v1066 = vunpack.c.h.b16 %v889
    %v1067 = vunpack.c.l.b16 %v890
    %v1068 = vunpack.c.h.b16 %v890
    %v1069 = vunpack.c.l.b16 %v891
    %v1070 = vunpack.c.h.b16 %v891
    %v1071 = vunpack.c.l.b16 %v892
    %v1072 = vunpack.c.h.b16 %v892
    %v1073 = vunpack.c.l.b16 %v893
    %v1074 = vunpack.c.h.b16 %v893
    %v1075 = vunpack.c.l.b16 %v894
    %v1076 = vunpack.c.h.b16 %v894
    %v1077 = vunpack.c.l.b16 %v895
    %v1078 = vunpack.c.h.b16 %v895
    %v1079 = vunpack.c.l.b16 %v896
    %v1080 = vunpack.c.h.b16 %v896
    %v1081 = vunpack.c.l.b16 %v897
    %v1082 = vunpack.c.h.b16 %v897
    %v1083 = vunpack.c.l.b16 %v898
    %v1084 = vunpack.c.h.b16 %v898
    %v1085 = vunpack.c.l.b16 %v899
    %v1086 = vunpack.c.h.b16 %v899
    %v1087 = vunpack.c.l.b16 %v900
    %v1088 = vunpack.c.h.b16 %v900
    %v1089 = vunpack.c.l.b16 %v901
    %v1090 = vunpack.c.h.b16 %v901
    %v1091 = vunpack.c.l.b16 %v902
    %v1092 = vunpack.c.h.b16 %v902
    %v1093 = vunpack.c.l.b16 %v903
    %v1094 = vunpack.c.h.b16 %v903
    %v1095 = vunpack.c.l.b16 %v904
    %v1096 = vunpack.c.h.b16 %v904
    %v1097 = vpack.c.b16 %v969, %v969
    %v1098 = vpack.c.b16 %v970, %v970
    %v1099 = vpack.c.b16 %v971, %v971
    %v1100 = vpack.c.b16 %v972, %v972
    %v1101 = vpack.c.b16 %v973, %v973
    %v1102 = vpack.c.b16 %v974, %v974
    %v1103 = vpack.c.b16 %v975, %v975
    %v1104 = vpack.c.b16 %v976, %v976
    %v1105 = vpack.c.b16 %v977, %v977
    %v1106 = vpack.c.b16 %v978, %v978
    %v1107 = vpack.c.b16 %v979, %v979
    %v1108 = vpack.c.b16 %v980, %v980
    %v1109 = vpack.c.b16 %v981, %v981
    %v1110 = vpack.c.b16 %v982, %v982
    %v1111 = vpack.c.b16 %v983, %v983
    %v1112 = vpack.c.b16 %v984, %v984
    %v1113 = vpack.c.b16 %v985, %v985
    %v1114 = vpack.c.b16 %v986, %v986
    %v1115 = vpack.c.b16 %v987, %v987
    %v1116 = vpack.c.b16 %v988, %v988
    %v1117 = vpack.c.b16 %v989, %v989
    %v1118 = vpack.c.b16 %v990, %v990
    %v1119 = vpack.c.b16 %v991, %v991
    %v1120 = vpack.c.b16 %v992, %v992
    %v1121 = vpack.c.b16 %v993, %v993
    %v1122 = vpack.c.b16 %v994, %v994
    %v1123 = vpack.c.b16 %v995, %v995
    %v1124 = vpack.c.b16 %v996, %v996
    %v1125 = vpack.c.b16 %v997, %v997
    %v1126 = vpack.c.b16 %v998, %v998
    %v1127 = vpack.c.b16 %v999, %v999
    %v1128 = vpack.c.b16 %v1000, %v1000
    %v1129 = vpack.c.b16 %v1001, %v1001
    %v1130 = vpack.c.b16 %v1002, %v1002
    %v1131 = vpack.c.b16 %v1003, %v1003
    %v1132 = vpack.c.b16 %v1004, %v1004
    %v1133 = vpack.c.b16 %v1005, %v1005
    %v1134 = vpack.c.b16 %v1006, %v1006
    %v1135 = vpack.c.b16 %v1007, %v1007
    %v1136 = vpack.c.b16 %v1008, %v1008
    %v1137 = vpack.c.b16 %v1009, %v1009
    %v1138 = vpack.c.b16 %v1010, %v1010
    %v1139 = vpack.c.b16 %v1011, %v1011
    %v1140 = vpack.c.b16 %v1012, %v1012
    %v1141 = vpack.c.b16 %v1013, %v1013
    %v1142 = vpack.c.b16 %v1014, %v1014
    %v1143 = vpack.c.b16 %v1015, %v1015
    %v1144 = vpack.c.b16 %v1016, %v1016
    %v1145 = vpack.c.b16 %v1017, %v1017
    %v1146 = vpack.c.b16 %v1018, %v1018
    %v1147 = vpack.c.b16 %v1019, %v1019
    %v1148 = vpack.c.b16 %v1020, %v1020
    %v1149 = vpack.c.b16 %v1021, %v1021
    %v1150 = vpack.c.b16 %v1022, %v1022
    %v1151 = vpack.c.b16 %v1023, %v1023
    %v1152 = vpack.c.b16 %v1024, %v1024
    %v1153 = vpack.c.b16 %v1025, %v1025
    %v1154 = vpack.c.b16 %v1026, %v1026
    %v1155 = vpack.c.b16 %v1027, %v1027
    %v1156 = vpack.c.b16 %v1028, %v1028
    %v1157 = vpack.c.b16 %v1029, %v1029
    %v1158 = vpack.c.b16 %v1030, %v1030
    %v1159 = vpack.c.b16 %v1031, %v1031
    %v1160 = vpack.c.b16 %v1032, %v1032
    %v1161 = vpack.c.b16 %v1033, %v1033
    %v1162 = vpack.c.b16 %v1034, %v1034
    %v1163 = vpack.c.b16 %v1035, %v1035
    %v1164 = vpack.c.b16 %v1036, %v1036
    %v1165 = vpack.c.b16 %v1037, %v1037
    %v1166 = vpack.c.b16 %v1038, %v1038
    %v1167 = vpack.c.b16 %v1039, %v1039
    %v1168 = vpack.c.b16 %v1040, %v1040
    %v1169 = vpack.c.b16 %v1041, %v1041
    %v1170 = vpack.c.b16 %v1042, %v1042
    %v1171 = vpack.c.b16 %v1043, %v1043
    %v1172 = vpack.c.b16 %v1044, %v1044
    %v1173 = vpack.c.b16 %v1045, %v1045
    %v1174 = vpack.c.b16 %v1046, %v1046
    %v1175 = vpack.c.b16 %v1047, %v1047
    %v1176 = vpack.c.b16 %v1048, %v1048
    %v1177 = vpack.c.b16 %v1049, %v1049
    %v1178 = vpack.c.b16 %v1050, %v1050
    %v1179 = vpack.c.b16 %v1051, %v1051
    %v1180 = vpack.c.b16 %v1052, %v1052
    %v1181 = vpack.c.b16 %v1053, %v1053
    %v1182 = vpack.c.b16 %v1054, %v1054
    %v1183 = vpack.c.b16 %v1055, %v1055
    %v1184 = vpack.c.b16 %v1056, %v1056
    %v1185 = vpack.c.b16 %v1057, %v1057
    %v1186 = vpack.c.b16 %v1058, %v1058
    %v1187 = vpack.c.b16 %v1059, %v1059
    %v1188 = vpack.c.b16 %v1060, %v1060
    %v1189 = vpack.c.b16 %v1061, %v1061
    %v1190 = vpack.c.b16 %v1062, %v1062
    %v1191 = vpack.c.b16 %v1063, %v1063
    %v1192 = vpack.c.b16 %v1064, %v1064
    %v1193 = vpack.c.b16 %v1065, %v1065
    %v1194 = vpack.c.b16 %v1066, %v1066
    %v1195 = vpack.c.b16 %v1067, %v1067
    %v1196 = vpack.c.b16 %v1068, %v1068
    %v1197 = vpack.c.b16 %v1069, %v1069
    %v1198 = vpack.c.b16 %v1070, %v1070
    %v1199 = vpack.c.b16 %v1071, %v1071
    %v1200 = vpack.c.b16 %v1072, %v1072
    %v1201 = vpack.c.b16 %v1073, %v1073
    %v1202 = vpack.c.b16 %v1074, %v1074
    %v1203 = vpack.c.b16 %v1075, %v1075
    %v1204 = vpack.c.b16 %v1076, %v1076
    %v1205 = vpack.c.b16 %v1077, %v1077
    %v1206 = vpack.c.b16 %v1078, %v1078
    %v1207 = vpack.c.b16 %v1079, %v1079
    %v1208 = vpack.c.b16 %v1080, %v1080
    %v1209 = vpack.c.b16 %v1081, %v1081
    %v1210 = vpack.c.b16 %v1082, %v1082
    %v1211 = vpack.c.b16 %v1083, %v1083
    %v1212 = vpack.c.b16 %v1084, %v1084
    %v1213 = vpack.c.b16 %v1085, %v1085
    %v1214 = vpack.c.b16 %v1086, %v1086
    %v1215 = vpack.c.b16 %v1087, %v1087
    %v1216 = vpack.c.b16 %v1088, %v1088
    %v1217 = vpack.c.b16 %v1089, %v1089
    %v1218 = vpack.c.b16 %v1090, %v1090
    %v1219 = vpack.c.b16 %v1091, %v1091
    %v1220 = vpack.c.b16 %v1092, %v1092
    %v1221 = vpack.c.b16 %v1093, %v1093
    %v1222 = vpack.c.b16 %v1094, %v1094
    %v1223 = vpack.c.b16 %v1095, %v1095
    %v1224 = vpack.c.b16 %v1096, %v1096
    %v1353 = vadd.bf16 %v420, %v1097
    %v1354 = vadd.bf16 %v421, %v1098
    %v1355 = vadd.bf16 %v422, %v1099
    %v1356 = vadd.bf16 %v423, %v1100
    %v1357 = vadd.bf16 %v424, %v1101
    %v1358 = vadd.bf16 %v425, %v1102
    %v1359 = vadd.bf16 %v426, %v1103
    %v1360 = vadd.bf16 %v427, %v1104
    %v1361 = vadd.bf16 %v428, %v1105
    %v1362 = vadd.bf16 %v429, %v1106
    %v1363 = vadd.bf16 %v430, %v1107
    %v1364 = vadd.bf16 %v431, %v1108
    %v1365 = vadd.bf16 %v432, %v1109
    %v1366 = vadd.bf16 %v433, %v1110
    %v1367 = vadd.bf16 %v434, %v1111
    %v1368 = vadd.bf16 %v435, %v1112
    %v1369 = vadd.bf16 %v436, %v1113
    %v1370 = vadd.bf16 %v437, %v1114
    %v1371 = vadd.bf16 %v438, %v1115
    %v1372 = vadd.bf16 %v439, %v1116
    %v1373 = vadd.bf16 %v440, %v1117
    %v1374 = vadd.bf16 %v441, %v1118
    %v1375 = vadd.bf16 %v442, %v1119
    %v1376 = vadd.bf16 %v443, %v1120
    %v1377 = vadd.bf16 %v444, %v1121
    %v1378 = vadd.bf16 %v445, %v1122
    %v1379 = vadd.bf16 %v446, %v1123
    %v1380 = vadd.bf16 %v447, %v1124
    %v1381 = vadd.bf16 %v448, %v1125
    %v1382 = vadd.bf16 %v449, %v1126
    %v1383 = vadd.bf16 %v450, %v1127
    %v1384 = vadd.bf16 %v451, %v1128
    %v1385 = vadd.bf16 %v452, %v1129
    %v1386 = vadd.bf16 %v453, %v1130
    %v1387 = vadd.bf16 %v454, %v1131
    %v1388 = vadd.bf16 %v455, %v1132
    %v1389 = vadd.bf16 %v456, %v1133
    %v1390 = vadd.bf16 %v457, %v1134
    %v1391 = vadd.bf16 %v458, %v1135
    %v1392 = vadd.bf16 %v459, %v1136
    %v1393 = vadd.bf16 %v460, %v1137
    %v1394 = vadd.bf16 %v461, %v1138
    %v1395 = vadd.bf16 %v462, %v1139
    %v1396 = vadd.bf16 %v463, %v1140
    %v1397 = vadd.bf16 %v464, %v1141
    %v1398 = vadd.bf16 %v465, %v1142
    %v1399 = vadd.bf16 %v466, %v1143
    %v1400 = vadd.bf16 %v467, %v1144
    %v1401 = vadd.bf16 %v468, %v1145
    %v1402 = vadd.bf16 %v469, %v1146
    %v1403 = vadd.bf16 %v470, %v1147
    %v1404 = vadd.bf16 %v471, %v1148
    %v1405 = vadd.bf16 %v472, %v1149
    %v1406 = vadd.bf16 %v473, %v1150
    %v1407 = vadd.bf16 %v474, %v1151
    %v1408 = vadd.bf16 %v475, %v1152
    %v1409 = vadd.bf16 %v476, %v1153
    %v1410 = vadd.bf16 %v477, %v1154
    %v1411 = vadd.bf16 %v478, %v1155
    %v1412 = vadd.bf16 %v479, %v1156
    %v1413 = vadd.bf16 %v480, %v1157
    %v1414 = vadd.bf16 %v481, %v1158
    %v1415 = vadd.bf16 %v482, %v1159
    %v1416 = vadd.bf16 %v483, %v1160
    %v1417 = vadd.bf16 %v484, %v1161
    %v1418 = vadd.bf16 %v485, %v1162
    %v1419 = vadd.bf16 %v486, %v1163
    %v1420 = vadd.bf16 %v487, %v1164
    %v1421 = vadd.bf16 %v488, %v1165
    %v1422 = vadd.bf16 %v489, %v1166
    %v1423 = vadd.bf16 %v490, %v1167
    %v1424 = vadd.bf16 %v491, %v1168
    %v1425 = vadd.bf16 %v492, %v1169
    %v1426 = vadd.bf16 %v493, %v1170
    %v1427 = vadd.bf16 %v494, %v1171
    %v1428 = vadd.bf16 %v495, %v1172
    %v1429 = vadd.bf16 %v496, %v1173
    %v1430 = vadd.bf16 %v497, %v1174
    %v1431 = vadd.bf16 %v498, %v1175
    %v1432 = vadd.bf16 %v499, %v1176
    %v1433 = vadd.bf16 %v500, %v1177
    %v1434 = vadd.bf16 %v501, %v1178
    %v1435 = vadd.bf16 %v502, %v1179
    %v1436 = vadd.bf16 %v503, %v1180
    %v1437 = vadd.bf16 %v504, %v1181
    %v1438 = vadd.bf16 %v505, %v1182
    %v1439 = vadd.bf16 %v506, %v1183
    %v1440 = vadd.bf16 %v507, %v1184
    %v1441 = vadd.bf16 %v508, %v1185
    %v1442 = vadd.bf16 %v509, %v1186
    %v1443 = vadd.bf16 %v510, %v1187
    %v1444 = vadd.bf16 %v511, %v1188
    %v1445 = vadd.bf16 %v512, %v1189
    %v1446 = vadd.bf16 %v513, %v1190
    %v1447 = vadd.bf16 %v514, %v1191
    %v1448 = vadd.bf16 %v515, %v1192
    %v1449 = vadd.bf16 %v516, %v1193
    %v1450 = vadd.bf16 %v517, %v1194
    %v1451 = vadd.bf16 %v518, %v1195
    %v1452 = vadd.bf16 %v519, %v1196
    %v1453 = vadd.bf16 %v520, %v1197
    %v1454 = vadd.bf16 %v521, %v1198
    %v1455 = vadd.bf16 %v522, %v1199
    %v1456 = vadd.bf16 %v523, %v1200
    %v1457 = vadd.bf16 %v524, %v1201
    %v1458 = vadd.bf16 %v525, %v1202
    %v1459 = vadd.bf16 %v526, %v1203
    %v1460 = vadd.bf16 %v527, %v1204
    %v1461 = vadd.bf16 %v528, %v1205
    %v1462 = vadd.bf16 %v529, %v1206
    %v1463 = vadd.bf16 %v530, %v1207
    %v1464 = vadd.bf16 %v531, %v1208
    %v1465 = vadd.bf16 %v532, %v1209
    %v1466 = vadd.bf16 %v533, %v1210
    %v1467 = vadd.bf16 %v534, %v1211
    %v1468 = vadd.bf16 %v535, %v1212
    %v1469 = vadd.bf16 %v536, %v1213
    %v1470 = vadd.bf16 %v537, %v1214
    %v1471 = vadd.bf16 %v538, %v1215
    %v1472 = vadd.bf16 %v539, %v1216
    %v1473 = vadd.bf16 %v540, %v1217
    %v1474 = vadd.bf16 %v541, %v1218
    %v1475 = vadd.bf16 %v542, %v1219
    %v1476 = vadd.bf16 %v543, %v1220
    %v1477 = vadd.bf16 %v544, %v1221
    %v1478 = vadd.bf16 %v545, %v1222
    %v1479 = vadd.bf16 %v546, %v1223
    %v1480 = vadd.bf16 %v547, %v1224
    %v1481 = vtanh.bf16.pop %v1353
    %v1482 = vtanh.bf16.pop %v1354
    %v1483 = vtanh.bf16.pop %v1355
    %v1484 = vtanh.bf16.pop %v1356
    %v1485 = vtanh.bf16.pop %v1357
    %v1486 = vtanh.bf16.pop %v1358
    %v1487 = vtanh.bf16.pop %v1359
    %v1488 = vtanh.bf16.pop %v1360
    %v1489 = vtanh.bf16.pop %v1361
    %v1490 = vtanh.bf16.pop %v1362
    %v1491 = vtanh.bf16.pop %v1363
    %v1492 = vtanh.bf16.pop %v1364
    %v1493 = vtanh.bf16.pop %v1365
    %v1494 = vtanh.bf16.pop %v1366
    %v1495 = vtanh.bf16.pop %v1367
    %v1496 = vtanh.bf16.pop %v1368
    %v1497 = vtanh.bf16.pop %v1369
    %v1498 = vtanh.bf16.pop %v1370
    %v1499 = vtanh.bf16.pop %v1371
    %v1500 = vtanh.bf16.pop %v1372
    %v1501 = vtanh.bf16.pop %v1373
    %v1502 = vtanh.bf16.pop %v1374
    %v1503 = vtanh.bf16.pop %v1375
    %v1504 = vtanh.bf16.pop %v1376
    %v1505 = vtanh.bf16.pop %v1377
    %v1506 = vtanh.bf16.pop %v1378
    %v1507 = vtanh.bf16.pop %v1379
    %v1508 = vtanh.bf16.pop %v1380
    %v1509 = vtanh.bf16.pop %v1381
    %v1510 = vtanh.bf16.pop %v1382
    %v1511 = vtanh.bf16.pop %v1383
    %v1512 = vtanh.bf16.pop %v1384
    %v1513 = vtanh.bf16.pop %v1385
    %v1514 = vtanh.bf16.pop %v1386
    %v1515 = vtanh.bf16.pop %v1387
    %v1516 = vtanh.bf16.pop %v1388
    %v1517 = vtanh.bf16.pop %v1389
    %v1518 = vtanh.bf16.pop %v1390
    %v1519 = vtanh.bf16.pop %v1391
    %v1520 = vtanh.bf16.pop %v1392
    %v1521 = vtanh.bf16.pop %v1393
    %v1522 = vtanh.bf16.pop %v1394
    %v1523 = vtanh.bf16.pop %v1395
    %v1524 = vtanh.bf16.pop %v1396
    %v1525 = vtanh.bf16.pop %v1397
    %v1526 = vtanh.bf16.pop %v1398
    %v1527 = vtanh.bf16.pop %v1399
    %v1528 = vtanh.bf16.pop %v1400
    %v1529 = vtanh.bf16.pop %v1401
    %v1530 = vtanh.bf16.pop %v1402
    %v1531 = vtanh.bf16.pop %v1403
    %v1532 = vtanh.bf16.pop %v1404
    %v1533 = vtanh.bf16.pop %v1405
    %v1534 = vtanh.bf16.pop %v1406
    %v1535 = vtanh.bf16.pop %v1407
    %v1536 = vtanh.bf16.pop %v1408
    %v1537 = vtanh.bf16.pop %v1409
    %v1538 = vtanh.bf16.pop %v1410
    %v1539 = vtanh.bf16.pop %v1411
    %v1540 = vtanh.bf16.pop %v1412
    %v1541 = vtanh.bf16.pop %v1413
    %v1542 = vtanh.bf16.pop %v1414
    %v1543 = vtanh.bf16.pop %v1415
    %v1544 = vtanh.bf16.pop %v1416
    %v1545 = vtanh.bf16.pop %v1417
    %v1546 = vtanh.bf16.pop %v1418
    %v1547 = vtanh.bf16.pop %v1419
    %v1548 = vtanh.bf16.pop %v1420
    %v1549 = vtanh.bf16.pop %v1421
    %v1550 = vtanh.bf16.pop %v1422
    %v1551 = vtanh.bf16.pop %v1423
    %v1552 = vtanh.bf16.pop %v1424
    %v1553 = vtanh.bf16.pop %v1425
    %v1554 = vtanh.bf16.pop %v1426
    %v1555 = vtanh.bf16.pop %v1427
    %v1556 = vtanh.bf16.pop %v1428
    %v1557 = vtanh.bf16.pop %v1429
    %v1558 = vtanh.bf16.pop %v1430
    %v1559 = vtanh.bf16.pop %v1431
    %v1560 = vtanh.bf16.pop %v1432
    %v1561 = vtanh.bf16.pop %v1433
    %v1562 = vtanh.bf16.pop %v1434
    %v1563 = vtanh.bf16.pop %v1435
    %v1564 = vtanh.bf16.pop %v1436
    %v1565 = vtanh.bf16.pop %v1437
    %v1566 = vtanh.bf16.pop %v1438
    %v1567 = vtanh.bf16.pop %v1439
    %v1568 = vtanh.bf16.pop %v1440
    %v1569 = vtanh.bf16.pop %v1441
    %v1570 = vtanh.bf16.pop %v1442
    %v1571 = vtanh.bf16.pop %v1443
    %v1572 = vtanh.bf16.pop %v1444
    %v1573 = vtanh.bf16.pop %v1445
    %v1574 = vtanh.bf16.pop %v1446
    %v1575 = vtanh.bf16.pop %v1447
    %v1576 = vtanh.bf16.pop %v1448
    %v1577 = vtanh.bf16.pop %v1449
    %v1578 = vtanh.bf16.pop %v1450
    %v1579 = vtanh.bf16.pop %v1451
    %v1580 = vtanh.bf16.pop %v1452
    %v1581 = vtanh.bf16.pop %v1453
    %v1582 = vtanh.bf16.pop %v1454
    %v1583 = vtanh.bf16.pop %v1455
    %v1584 = vtanh.bf16.pop %v1456
    %v1585 = vtanh.bf16.pop %v1457
    %v1586 = vtanh.bf16.pop %v1458
    %v1587 = vtanh.bf16.pop %v1459
    %v1588 = vtanh.bf16.pop %v1460
    %v1589 = vtanh.bf16.pop %v1461
    %v1590 = vtanh.bf16.pop %v1462
    %v1591 = vtanh.bf16.pop %v1463
    %v1592 = vtanh.bf16.pop %v1464
    %v1593 = vtanh.bf16.pop %v1465
    %v1594 = vtanh.bf16.pop %v1466
    %v1595 = vtanh.bf16.pop %v1467
    %v1596 = vtanh.bf16.pop %v1468
    %v1597 = vtanh.bf16.pop %v1469
    %v1598 = vtanh.bf16.pop %v1470
    %v1599 = vtanh.bf16.pop %v1471
    %v1600 = vtanh.bf16.pop %v1472
    %v1601 = vtanh.bf16.pop %v1473
    %v1602 = vtanh.bf16.pop %v1474
    %v1603 = vtanh.bf16.pop %v1475
    %v1604 = vtanh.bf16.pop %v1476
    %v1605 = vtanh.bf16.pop %v1477
    %v1606 = vtanh.bf16.pop %v1478
    %v1607 = vtanh.bf16.pop %v1479
    %v1608 = vtanh.bf16.pop %v1480
    %v1610 = vpack.i.b16 %v130, %v130
    %v1612 = vlaneseq
    %v1613 = vshrl.u32 %v1612, 7
    %v1614 = vsub.s32 0, %v1613
    %v1615 = vrot.slane %v1610, %v1614
    %v1617 = vunpack.c.l.b16 %v1615
    %v1618 = vpack.c.b16 %v1617, %v1617
    %v1620 = vmul.bf16 %v1481, %v1618
    %v1621 = vmul.bf16 %v1482, %v1618
    %v1622 = vmul.bf16 %v1483, %v1618
    %v1623 = vmul.bf16 %v1484, %v1618
    %v1624 = vmul.bf16 %v1485, %v1618
    %v1625 = vmul.bf16 %v1486, %v1618
    %v1626 = vmul.bf16 %v1487, %v1618
    %v1627 = vmul.bf16 %v1488, %v1618
    %v1628 = vmul.bf16 %v1489, %v1618
    %v1629 = vmul.bf16 %v1490, %v1618
    %v1630 = vmul.bf16 %v1491, %v1618
    %v1631 = vmul.bf16 %v1492, %v1618
    %v1632 = vmul.bf16 %v1493, %v1618
    %v1633 = vmul.bf16 %v1494, %v1618
    %v1634 = vmul.bf16 %v1495, %v1618
    %v1635 = vmul.bf16 %v1496, %v1618
    %v1636 = vmul.bf16 %v1497, %v1618
    %v1637 = vmul.bf16 %v1498, %v1618
    %v1638 = vmul.bf16 %v1499, %v1618
    %v1639 = vmul.bf16 %v1500, %v1618
    %v1640 = vmul.bf16 %v1501, %v1618
    %v1641 = vmul.bf16 %v1502, %v1618
    %v1642 = vmul.bf16 %v1503, %v1618
    %v1643 = vmul.bf16 %v1504, %v1618
    %v1644 = vmul.bf16 %v1505, %v1618
    %v1645 = vmul.bf16 %v1506, %v1618
    %v1646 = vmul.bf16 %v1507, %v1618
    %v1647 = vmul.bf16 %v1508, %v1618
    %v1648 = vmul.bf16 %v1509, %v1618
    %v1649 = vmul.bf16 %v1510, %v1618
    %v1650 = vmul.bf16 %v1511, %v1618
    %v1651 = vmul.bf16 %v1512, %v1618
    %v1652 = vmul.bf16 %v1513, %v1618
    %v1653 = vmul.bf16 %v1514, %v1618
    %v1654 = vmul.bf16 %v1515, %v1618
    %v1655 = vmul.bf16 %v1516, %v1618
    %v1656 = vmul.bf16 %v1517, %v1618
    %v1657 = vmul.bf16 %v1518, %v1618
    %v1658 = vmul.bf16 %v1519, %v1618
    %v1659 = vmul.bf16 %v1520, %v1618
    %v1660 = vmul.bf16 %v1521, %v1618
    %v1661 = vmul.bf16 %v1522, %v1618
    %v1662 = vmul.bf16 %v1523, %v1618
    %v1663 = vmul.bf16 %v1524, %v1618
    %v1664 = vmul.bf16 %v1525, %v1618
    %v1665 = vmul.bf16 %v1526, %v1618
    %v1666 = vmul.bf16 %v1527, %v1618
    %v1667 = vmul.bf16 %v1528, %v1618
    %v1668 = vmul.bf16 %v1529, %v1618
    %v1669 = vmul.bf16 %v1530, %v1618
    %v1670 = vmul.bf16 %v1531, %v1618
    %v1671 = vmul.bf16 %v1532, %v1618
    %v1672 = vmul.bf16 %v1533, %v1618
    %v1673 = vmul.bf16 %v1534, %v1618
    %v1674 = vmul.bf16 %v1535, %v1618
    %v1675 = vmul.bf16 %v1536, %v1618
    %v1676 = vmul.bf16 %v1537, %v1618
    %v1677 = vmul.bf16 %v1538, %v1618
    %v1678 = vmul.bf16 %v1539, %v1618
    %v1679 = vmul.bf16 %v1540, %v1618
    %v1680 = vmul.bf16 %v1541, %v1618
    %v1681 = vmul.bf16 %v1542, %v1618
    %v1682 = vmul.bf16 %v1543, %v1618
    %v1683 = vmul.bf16 %v1544, %v1618
    %v1684 = vmul.bf16 %v1545, %v1618
    %v1685 = vmul.bf16 %v1546, %v1618
    %v1686 = vmul.bf16 %v1547, %v1618
    %v1687 = vmul.bf16 %v1548, %v1618
    %v1688 = vmul.bf16 %v1549, %v1618
    %v1689 = vmul.bf16 %v1550, %v1618
    %v1690 = vmul.bf16 %v1551, %v1618
    %v1691 = vmul.bf16 %v1552, %v1618
    %v1692 = vmul.bf16 %v1553, %v1618
    %v1693 = vmul.bf16 %v1554, %v1618
    %v1694 = vmul.bf16 %v1555, %v1618
    %v1695 = vmul.bf16 %v1556, %v1618
    %v1696 = vmul.bf16 %v1557, %v1618
    %v1697 = vmul.bf16 %v1558, %v1618
    %v1698 = vmul.bf16 %v1559, %v1618
    %v1699 = vmul.bf16 %v1560, %v1618
    %v1700 = vmul.bf16 %v1561, %v1618
    %v1701 = vmul.bf16 %v1562, %v1618
    %v1702 = vmul.bf16 %v1563, %v1618
    %v1703 = vmul.bf16 %v1564, %v1618
    %v1704 = vmul.bf16 %v1565, %v1618
    %v1705 = vmul.bf16 %v1566, %v1618
    %v1706 = vmul.bf16 %v1567, %v1618
    %v1707 = vmul.bf16 %v1568, %v1618
    %v1708 = vmul.bf16 %v1569, %v1618
    %v1709 = vmul.bf16 %v1570, %v1618
    %v1710 = vmul.bf16 %v1571, %v1618
    %v1711 = vmul.bf16 %v1572, %v1618
    %v1712 = vmul.bf16 %v1573, %v1618
    %v1713 = vmul.bf16 %v1574, %v1618
    %v1714 = vmul.bf16 %v1575, %v1618
    %v1715 = vmul.bf16 %v1576, %v1618
    %v1716 = vmul.bf16 %v1577, %v1618
    %v1717 = vmul.bf16 %v1578, %v1618
    %v1718 = vmul.bf16 %v1579, %v1618
    %v1719 = vmul.bf16 %v1580, %v1618
    %v1720 = vmul.bf16 %v1581, %v1618
    %v1721 = vmul.bf16 %v1582, %v1618
    %v1722 = vmul.bf16 %v1583, %v1618
    %v1723 = vmul.bf16 %v1584, %v1618
    %v1724 = vmul.bf16 %v1585, %v1618
    %v1725 = vmul.bf16 %v1586, %v1618
    %v1726 = vmul.bf16 %v1587, %v1618
    %v1727 = vmul.bf16 %v1588, %v1618
    %v1728 = vmul.bf16 %v1589, %v1618
    %v1729 = vmul.bf16 %v1590, %v1618
    %v1730 = vmul.bf16 %v1591, %v1618
    %v1731 = vmul.bf16 %v1592, %v1618
    %v1732 = vmul.bf16 %v1593, %v1618
    %v1733 = vmul.bf16 %v1594, %v1618
    %v1734 = vmul.bf16 %v1595, %v1618
    %v1735 = vmul.bf16 %v1596, %v1618
    %v1736 = vmul.bf16 %v1597, %v1618
    %v1737 = vmul.bf16 %v1598, %v1618
    %v1738 = vmul.bf16 %v1599, %v1618
    %v1739 = vmul.bf16 %v1600, %v1618
    %v1740 = vmul.bf16 %v1601, %v1618
    %v1741 = vmul.bf16 %v1602, %v1618
    %v1742 = vmul.bf16 %v1603, %v1618
    %v1743 = vmul.bf16 %v1604, %v1618
    %v1744 = vmul.bf16 %v1605, %v1618
    %v1745 = vmul.bf16 %v1606, %v1618
    %v1746 = vmul.bf16 %v1607, %v1618
    %v1747 = vmul.bf16 %v1608, %v1618
    %v1748 = vunpack.c.l.bf16 %v1620
    %v1749 = vunpack.c.l.bf16 %v1621
    %v1750 = vunpack.c.l.bf16 %v1622
    %v1751 = vunpack.c.l.bf16 %v1623
    %v1752 = vunpack.c.l.bf16 %v1624
    %v1753 = vunpack.c.l.bf16 %v1625
    %v1754 = vunpack.c.l.bf16 %v1626
    %v1755 = vunpack.c.l.bf16 %v1627
    %v1756 = vunpack.c.l.bf16 %v1628
    %v1757 = vunpack.c.l.bf16 %v1629
    %v1758 = vunpack.c.l.bf16 %v1630
    %v1759 = vunpack.c.l.bf16 %v1631
    %v1760 = vunpack.c.l.bf16 %v1632
    %v1761 = vunpack.c.l.bf16 %v1633
    %v1762 = vunpack.c.l.bf16 %v1634
    %v1763 = vunpack.c.l.bf16 %v1635
    %v1764 = vunpack.c.l.bf16 %v1636
    %v1765 = vunpack.c.l.bf16 %v1637
    %v1766 = vunpack.c.l.bf16 %v1638
    %v1767 = vunpack.c.l.bf16 %v1639
    %v1768 = vunpack.c.l.bf16 %v1640
    %v1769 = vunpack.c.l.bf16 %v1641
    %v1770 = vunpack.c.l.bf16 %v1642
    %v1771 = vunpack.c.l.bf16 %v1643
    %v1772 = vunpack.c.l.bf16 %v1644
    %v1773 = vunpack.c.l.bf16 %v1645
    %v1774 = vunpack.c.l.bf16 %v1646
    %v1775 = vunpack.c.l.bf16 %v1647
    %v1776 = vunpack.c.l.bf16 %v1648
    %v1777 = vunpack.c.l.bf16 %v1649
    %v1778 = vunpack.c.l.bf16 %v1650
    %v1779 = vunpack.c.l.bf16 %v1651
    %v1780 = vunpack.c.l.bf16 %v1652
    %v1781 = vunpack.c.l.bf16 %v1653
    %v1782 = vunpack.c.l.bf16 %v1654
    %v1783 = vunpack.c.l.bf16 %v1655
    %v1784 = vunpack.c.l.bf16 %v1656
    %v1785 = vunpack.c.l.bf16 %v1657
    %v1786 = vunpack.c.l.bf16 %v1658
    %v1787 = vunpack.c.l.bf16 %v1659
    %v1788 = vunpack.c.l.bf16 %v1660
    %v1789 = vunpack.c.l.bf16 %v1661
    %v1790 = vunpack.c.l.bf16 %v1662
    %v1791 = vunpack.c.l.bf16 %v1663
    %v1792 = vunpack.c.l.bf16 %v1664
    %v1793 = vunpack.c.l.bf16 %v1665
    %v1794 = vunpack.c.l.bf16 %v1666
    %v1795 = vunpack.c.l.bf16 %v1667
    %v1796 = vunpack.c.l.bf16 %v1668
    %v1797 = vunpack.c.l.bf16 %v1669
    %v1798 = vunpack.c.l.bf16 %v1670
    %v1799 = vunpack.c.l.bf16 %v1671
    %v1800 = vunpack.c.l.bf16 %v1672
    %v1801 = vunpack.c.l.bf16 %v1673
    %v1802 = vunpack.c.l.bf16 %v1674
    %v1803 = vunpack.c.l.bf16 %v1675
    %v1804 = vunpack.c.l.bf16 %v1676
    %v1805 = vunpack.c.l.bf16 %v1677
    %v1806 = vunpack.c.l.bf16 %v1678
    %v1807 = vunpack.c.l.bf16 %v1679
    %v1808 = vunpack.c.l.bf16 %v1680
    %v1809 = vunpack.c.l.bf16 %v1681
    %v1810 = vunpack.c.l.bf16 %v1682
    %v1811 = vunpack.c.l.bf16 %v1683
    %v1812 = vunpack.c.l.bf16 %v1684
    %v1813 = vunpack.c.l.bf16 %v1685
    %v1814 = vunpack.c.l.bf16 %v1686
    %v1815 = vunpack.c.l.bf16 %v1687
    %v1816 = vunpack.c.l.bf16 %v1688
    %v1817 = vunpack.c.l.bf16 %v1689
    %v1818 = vunpack.c.l.bf16 %v1690
    %v1819 = vunpack.c.l.bf16 %v1691
    %v1820 = vunpack.c.l.bf16 %v1692
    %v1821 = vunpack.c.l.bf16 %v1693
    %v1822 = vunpack.c.l.bf16 %v1694
    %v1823 = vunpack.c.l.bf16 %v1695
    %v1824 = vunpack.c.l.bf16 %v1696
    %v1825 = vunpack.c.l.bf16 %v1697
    %v1826 = vunpack.c.l.bf16 %v1698
    %v1827 = vunpack.c.l.bf16 %v1699
    %v1828 = vunpack.c.l.bf16 %v1700
    %v1829 = vunpack.c.l.bf16 %v1701
    %v1830 = vunpack.c.l.bf16 %v1702
    %v1831 = vunpack.c.l.bf16 %v1703
    %v1832 = vunpack.c.l.bf16 %v1704
    %v1833 = vunpack.c.l.bf16 %v1705
    %v1834 = vunpack.c.l.bf16 %v1706
    %v1835 = vunpack.c.l.bf16 %v1707
    %v1836 = vunpack.c.l.bf16 %v1708
    %v1837 = vunpack.c.l.bf16 %v1709
    %v1838 = vunpack.c.l.bf16 %v1710
    %v1839 = vunpack.c.l.bf16 %v1711
    %v1840 = vunpack.c.l.bf16 %v1712
    %v1841 = vunpack.c.l.bf16 %v1713
    %v1842 = vunpack.c.l.bf16 %v1714
    %v1843 = vunpack.c.l.bf16 %v1715
    %v1844 = vunpack.c.l.bf16 %v1716
    %v1845 = vunpack.c.l.bf16 %v1717
    %v1846 = vunpack.c.l.bf16 %v1718
    %v1847 = vunpack.c.l.bf16 %v1719
    %v1848 = vunpack.c.l.bf16 %v1720
    %v1849 = vunpack.c.l.bf16 %v1721
    %v1850 = vunpack.c.l.bf16 %v1722
    %v1851 = vunpack.c.l.bf16 %v1723
    %v1852 = vunpack.c.l.bf16 %v1724
    %v1853 = vunpack.c.l.bf16 %v1725
    %v1854 = vunpack.c.l.bf16 %v1726
    %v1855 = vunpack.c.l.bf16 %v1727
    %v1856 = vunpack.c.l.bf16 %v1728
    %v1857 = vunpack.c.l.bf16 %v1729
    %v1858 = vunpack.c.l.bf16 %v1730
    %v1859 = vunpack.c.l.bf16 %v1731
    %v1860 = vunpack.c.l.bf16 %v1732
    %v1861 = vunpack.c.l.bf16 %v1733
    %v1862 = vunpack.c.l.bf16 %v1734
    %v1863 = vunpack.c.l.bf16 %v1735
    %v1864 = vunpack.c.l.bf16 %v1736
    %v1865 = vunpack.c.l.bf16 %v1737
    %v1866 = vunpack.c.l.bf16 %v1738
    %v1867 = vunpack.c.l.bf16 %v1739
    %v1868 = vunpack.c.l.bf16 %v1740
    %v1869 = vunpack.c.l.bf16 %v1741
    %v1870 = vunpack.c.l.bf16 %v1742
    %v1871 = vunpack.c.l.bf16 %v1743
    %v1872 = vunpack.c.l.bf16 %v1744
    %v1873 = vunpack.c.l.bf16 %v1745
    %v1874 = vunpack.c.l.bf16 %v1746
    %v1875 = vunpack.c.l.bf16 %v1747
    %v1876 = vsel %vm50, %v1748, 0.0
    %1877 = vadd.xlane.f32.xlu0 %v1876
    %v1878 = vpop.xlane.xlu0 %1877
    %v1879 = vsel %vm50, %v1749, 0.0
    %1880 = vadd.xlane.f32.xlu0 %v1879
    %v1881 = vpop.xlane.xlu0 %1880
    %v1882 = vsel %vm50, %v1750, 0.0
    %1883 = vadd.xlane.f32.xlu0 %v1882
    %v1884 = vpop.xlane.xlu0 %1883
    %v1885 = vsel %vm50, %v1751, 0.0
    %1886 = vadd.xlane.f32.xlu0 %v1885
    %v1887 = vpop.xlane.xlu0 %1886
    %v1888 = vsel %vm50, %v1752, 0.0
    %1889 = vadd.xlane.f32.xlu0 %v1888
    %v1890 = vpop.xlane.xlu0 %1889
    %v1891 = vsel %vm50, %v1753, 0.0
    %1892 = vadd.xlane.f32.xlu0 %v1891
    %v1893 = vpop.xlane.xlu0 %1892
    %v1894 = vsel %vm50, %v1754, 0.0
    %1895 = vadd.xlane.f32.xlu0 %v1894
    %v1896 = vpop.xlane.xlu0 %1895
    %v1897 = vsel %vm50, %v1755, 0.0
    %1898 = vadd.xlane.f32.xlu0 %v1897
    %v1899 = vpop.xlane.xlu0 %1898
    %v1900 = vsel %vm50, %v1756, 0.0
    %1901 = vadd.xlane.f32.xlu0 %v1900
    %v1902 = vpop.xlane.xlu0 %1901
    %v1903 = vsel %vm50, %v1757, 0.0
    %1904 = vadd.xlane.f32.xlu0 %v1903
    %v1905 = vpop.xlane.xlu0 %1904
    %v1906 = vsel %vm50, %v1758, 0.0
    %1907 = vadd.xlane.f32.xlu0 %v1906
    %v1908 = vpop.xlane.xlu0 %1907
    %v1909 = vsel %vm50, %v1759, 0.0
    %1910 = vadd.xlane.f32.xlu0 %v1909
    %v1911 = vpop.xlane.xlu0 %1910
    %v1912 = vsel %vm50, %v1760, 0.0
    %1913 = vadd.xlane.f32.xlu0 %v1912
    %v1914 = vpop.xlane.xlu0 %1913
    %v1915 = vsel %vm50, %v1761, 0.0
    %1916 = vadd.xlane.f32.xlu0 %v1915
    %v1917 = vpop.xlane.xlu0 %1916
    %v1918 = vsel %vm50, %v1762, 0.0
    %1919 = vadd.xlane.f32.xlu0 %v1918
    %v1920 = vpop.xlane.xlu0 %1919
    %v1921 = vsel %vm50, %v1763, 0.0
    %1922 = vadd.xlane.f32.xlu0 %v1921
    %v1923 = vpop.xlane.xlu0 %1922
    %v1924 = vsel %vm50, %v1764, 0.0
    %1925 = vadd.xlane.f32.xlu0 %v1924
    %v1926 = vpop.xlane.xlu0 %1925
    %v1927 = vsel %vm50, %v1765, 0.0
    %1928 = vadd.xlane.f32.xlu0 %v1927
    %v1929 = vpop.xlane.xlu0 %1928
    %v1930 = vsel %vm50, %v1766, 0.0
    %1931 = vadd.xlane.f32.xlu0 %v1930
    %v1932 = vpop.xlane.xlu0 %1931
    %v1933 = vsel %vm50, %v1767, 0.0
    %1934 = vadd.xlane.f32.xlu0 %v1933
    %v1935 = vpop.xlane.xlu0 %1934
    %v1936 = vsel %vm50, %v1768, 0.0
    %1937 = vadd.xlane.f32.xlu0 %v1936
    %v1938 = vpop.xlane.xlu0 %1937
    %v1939 = vsel %vm50, %v1769, 0.0
    %1940 = vadd.xlane.f32.xlu0 %v1939
    %v1941 = vpop.xlane.xlu0 %1940
    %v1942 = vsel %vm50, %v1770, 0.0
    %1943 = vadd.xlane.f32.xlu0 %v1942
    %v1944 = vpop.xlane.xlu0 %1943
    %v1945 = vsel %vm50, %v1771, 0.0
    %1946 = vadd.xlane.f32.xlu0 %v1945
    %v1947 = vpop.xlane.xlu0 %1946
    %v1948 = vsel %vm50, %v1772, 0.0
    %1949 = vadd.xlane.f32.xlu0 %v1948
    %v1950 = vpop.xlane.xlu0 %1949
    %v1951 = vsel %vm50, %v1773, 0.0
    %1952 = vadd.xlane.f32.xlu0 %v1951
    %v1953 = vpop.xlane.xlu0 %1952
    %v1954 = vsel %vm50, %v1774, 0.0
    %1955 = vadd.xlane.f32.xlu0 %v1954
    %v1956 = vpop.xlane.xlu0 %1955
    %v1957 = vsel %vm50, %v1775, 0.0
    %1958 = vadd.xlane.f32.xlu0 %v1957
    %v1959 = vpop.xlane.xlu0 %1958
    %v1960 = vsel %vm50, %v1776, 0.0
    %1961 = vadd.xlane.f32.xlu0 %v1960
    %v1962 = vpop.xlane.xlu0 %1961
    %v1963 = vsel %vm50, %v1777, 0.0
    %1964 = vadd.xlane.f32.xlu0 %v1963
    %v1965 = vpop.xlane.xlu0 %1964
    %v1966 = vsel %vm50, %v1778, 0.0
    %1967 = vadd.xlane.f32.xlu0 %v1966
    %v1968 = vpop.xlane.xlu0 %1967
    %v1969 = vsel %vm50, %v1779, 0.0
    %1970 = vadd.xlane.f32.xlu0 %v1969
    %v1971 = vpop.xlane.xlu0 %1970
    %v1972 = vsel %vm50, %v1780, 0.0
    %1973 = vadd.xlane.f32.xlu0 %v1972
    %v1974 = vpop.xlane.xlu0 %1973
    %v1975 = vsel %vm50, %v1781, 0.0
    %1976 = vadd.xlane.f32.xlu0 %v1975
    %v1977 = vpop.xlane.xlu0 %1976
    %v1978 = vsel %vm50, %v1782, 0.0
    %1979 = vadd.xlane.f32.xlu0 %v1978
    %v1980 = vpop.xlane.xlu0 %1979
    %v1981 = vsel %vm50, %v1783, 0.0
    %1982 = vadd.xlane.f32.xlu0 %v1981
    %v1983 = vpop.xlane.xlu0 %1982
    %v1984 = vsel %vm50, %v1784, 0.0
    %1985 = vadd.xlane.f32.xlu0 %v1984
    %v1986 = vpop.xlane.xlu0 %1985
    %v1987 = vsel %vm50, %v1785, 0.0
    %1988 = vadd.xlane.f32.xlu0 %v1987
    %v1989 = vpop.xlane.xlu0 %1988
    %v1990 = vsel %vm50, %v1786, 0.0
    %1991 = vadd.xlane.f32.xlu0 %v1990
    %v1992 = vpop.xlane.xlu0 %1991
    %v1993 = vsel %vm50, %v1787, 0.0
    %1994 = vadd.xlane.f32.xlu0 %v1993
    %v1995 = vpop.xlane.xlu0 %1994
    %v1996 = vsel %vm50, %v1788, 0.0
    %1997 = vadd.xlane.f32.xlu0 %v1996
    %v1998 = vpop.xlane.xlu0 %1997
    %v1999 = vsel %vm50, %v1789, 0.0
    %2000 = vadd.xlane.f32.xlu0 %v1999
    %v2001 = vpop.xlane.xlu0 %2000
    %v2002 = vsel %vm50, %v1790, 0.0
    %2003 = vadd.xlane.f32.xlu0 %v2002
    %v2004 = vpop.xlane.xlu0 %2003
    %v2005 = vsel %vm50, %v1791, 0.0
    %2006 = vadd.xlane.f32.xlu0 %v2005
    %v2007 = vpop.xlane.xlu0 %2006
    %v2008 = vsel %vm50, %v1792, 0.0
    %2009 = vadd.xlane.f32.xlu0 %v2008
    %v2010 = vpop.xlane.xlu0 %2009
    %v2011 = vsel %vm50, %v1793, 0.0
    %2012 = vadd.xlane.f32.xlu0 %v2011
    %v2013 = vpop.xlane.xlu0 %2012
    %v2014 = vsel %vm50, %v1794, 0.0
    %2015 = vadd.xlane.f32.xlu0 %v2014
    %v2016 = vpop.xlane.xlu0 %2015
    %v2017 = vsel %vm50, %v1795, 0.0
    %2018 = vadd.xlane.f32.xlu0 %v2017
    %v2019 = vpop.xlane.xlu0 %2018
    %v2020 = vsel %vm50, %v1796, 0.0
    %2021 = vadd.xlane.f32.xlu0 %v2020
    %v2022 = vpop.xlane.xlu0 %2021
    %v2023 = vsel %vm50, %v1797, 0.0
    %2024 = vadd.xlane.f32.xlu0 %v2023
    %v2025 = vpop.xlane.xlu0 %2024
    %v2026 = vsel %vm50, %v1798, 0.0
    %2027 = vadd.xlane.f32.xlu0 %v2026
    %v2028 = vpop.xlane.xlu0 %2027
    %v2029 = vsel %vm50, %v1799, 0.0
    %2030 = vadd.xlane.f32.xlu0 %v2029
    %v2031 = vpop.xlane.xlu0 %2030
    %v2032 = vsel %vm50, %v1800, 0.0
    %2033 = vadd.xlane.f32.xlu0 %v2032
    %v2034 = vpop.xlane.xlu0 %2033
    %v2035 = vsel %vm50, %v1801, 0.0
    %2036 = vadd.xlane.f32.xlu0 %v2035
    %v2037 = vpop.xlane.xlu0 %2036
    %v2038 = vsel %vm50, %v1802, 0.0
    %2039 = vadd.xlane.f32.xlu0 %v2038
    %v2040 = vpop.xlane.xlu0 %2039
    %v2041 = vsel %vm50, %v1803, 0.0
    %2042 = vadd.xlane.f32.xlu0 %v2041
    %v2043 = vpop.xlane.xlu0 %2042
    %v2044 = vsel %vm50, %v1804, 0.0
    %2045 = vadd.xlane.f32.xlu0 %v2044
    %v2046 = vpop.xlane.xlu0 %2045
    %v2047 = vsel %vm50, %v1805, 0.0
    %2048 = vadd.xlane.f32.xlu0 %v2047
    %v2049 = vpop.xlane.xlu0 %2048
    %v2050 = vsel %vm50, %v1806, 0.0
    %2051 = vadd.xlane.f32.xlu0 %v2050
    %v2052 = vpop.xlane.xlu0 %2051
    %v2053 = vsel %vm50, %v1807, 0.0
    %2054 = vadd.xlane.f32.xlu0 %v2053
    %v2055 = vpop.xlane.xlu0 %2054
    %v2056 = vsel %vm50, %v1808, 0.0
    %2057 = vadd.xlane.f32.xlu0 %v2056
    %v2058 = vpop.xlane.xlu0 %2057
    %v2059 = vsel %vm50, %v1809, 0.0
    %2060 = vadd.xlane.f32.xlu0 %v2059
    %v2061 = vpop.xlane.xlu0 %2060
    %v2062 = vsel %vm50, %v1810, 0.0
    %2063 = vadd.xlane.f32.xlu0 %v2062
    %v2064 = vpop.xlane.xlu0 %2063
    %v2065 = vsel %vm50, %v1811, 0.0
    %2066 = vadd.xlane.f32.xlu0 %v2065
    %v2067 = vpop.xlane.xlu0 %2066
    %v2068 = vsel %vm50, %v1812, 0.0
    %2069 = vadd.xlane.f32.xlu0 %v2068
    %v2070 = vpop.xlane.xlu0 %2069
    %v2071 = vsel %vm50, %v1813, 0.0
    %2072 = vadd.xlane.f32.xlu0 %v2071
    %v2073 = vpop.xlane.xlu0 %2072
    %v2074 = vsel %vm50, %v1814, 0.0
    %2075 = vadd.xlane.f32.xlu0 %v2074
    %v2076 = vpop.xlane.xlu0 %2075
    %v2077 = vsel %vm50, %v1815, 0.0
    %2078 = vadd.xlane.f32.xlu0 %v2077
    %v2079 = vpop.xlane.xlu0 %2078
    %v2080 = vsel %vm50, %v1816, 0.0
    %2081 = vadd.xlane.f32.xlu0 %v2080
    %v2082 = vpop.xlane.xlu0 %2081
    %v2083 = vsel %vm50, %v1817, 0.0
    %2084 = vadd.xlane.f32.xlu0 %v2083
    %v2085 = vpop.xlane.xlu0 %2084
    %v2086 = vsel %vm50, %v1818, 0.0
    %2087 = vadd.xlane.f32.xlu0 %v2086
    %v2088 = vpop.xlane.xlu0 %2087
    %v2089 = vsel %vm50, %v1819, 0.0
    %2090 = vadd.xlane.f32.xlu0 %v2089
    %v2091 = vpop.xlane.xlu0 %2090
    %v2092 = vsel %vm50, %v1820, 0.0
    %2093 = vadd.xlane.f32.xlu0 %v2092
    %v2094 = vpop.xlane.xlu0 %2093
    %v2095 = vsel %vm50, %v1821, 0.0
    %2096 = vadd.xlane.f32.xlu0 %v2095
    %v2097 = vpop.xlane.xlu0 %2096
    %v2098 = vsel %vm50, %v1822, 0.0
    %2099 = vadd.xlane.f32.xlu0 %v2098
    %v2100 = vpop.xlane.xlu0 %2099
    %v2101 = vsel %vm50, %v1823, 0.0
    %2102 = vadd.xlane.f32.xlu0 %v2101
    %v2103 = vpop.xlane.xlu0 %2102
    %v2104 = vsel %vm50, %v1824, 0.0
    %2105 = vadd.xlane.f32.xlu0 %v2104
    %v2106 = vpop.xlane.xlu0 %2105
    %v2107 = vsel %vm50, %v1825, 0.0
    %2108 = vadd.xlane.f32.xlu0 %v2107
    %v2109 = vpop.xlane.xlu0 %2108
    %v2110 = vsel %vm50, %v1826, 0.0
    %2111 = vadd.xlane.f32.xlu0 %v2110
    %v2112 = vpop.xlane.xlu0 %2111
    %v2113 = vsel %vm50, %v1827, 0.0
    %2114 = vadd.xlane.f32.xlu0 %v2113
    %v2115 = vpop.xlane.xlu0 %2114
    %v2116 = vsel %vm50, %v1828, 0.0
    %2117 = vadd.xlane.f32.xlu0 %v2116
    %v2118 = vpop.xlane.xlu0 %2117
    %v2119 = vsel %vm50, %v1829, 0.0
    %2120 = vadd.xlane.f32.xlu0 %v2119
    %v2121 = vpop.xlane.xlu0 %2120
    %v2122 = vsel %vm50, %v1830, 0.0
    %2123 = vadd.xlane.f32.xlu0 %v2122
    %v2124 = vpop.xlane.xlu0 %2123
    %v2125 = vsel %vm50, %v1831, 0.0
    %2126 = vadd.xlane.f32.xlu0 %v2125
    %v2127 = vpop.xlane.xlu0 %2126
    %v2128 = vsel %vm50, %v1832, 0.0
    %2129 = vadd.xlane.f32.xlu0 %v2128
    %v2130 = vpop.xlane.xlu0 %2129
    %v2131 = vsel %vm50, %v1833, 0.0
    %2132 = vadd.xlane.f32.xlu0 %v2131
    %v2133 = vpop.xlane.xlu0 %2132
    %v2134 = vsel %vm50, %v1834, 0.0
    %2135 = vadd.xlane.f32.xlu0 %v2134
    %v2136 = vpop.xlane.xlu0 %2135
    %v2137 = vsel %vm50, %v1835, 0.0
    %2138 = vadd.xlane.f32.xlu0 %v2137
    %v2139 = vpop.xlane.xlu0 %2138
    %v2140 = vsel %vm50, %v1836, 0.0
    %2141 = vadd.xlane.f32.xlu0 %v2140
    %v2142 = vpop.xlane.xlu0 %2141
    %v2143 = vsel %vm50, %v1837, 0.0
    %2144 = vadd.xlane.f32.xlu0 %v2143
    %v2145 = vpop.xlane.xlu0 %2144
    %v2146 = vsel %vm50, %v1838, 0.0
    %2147 = vadd.xlane.f32.xlu0 %v2146
    %v2148 = vpop.xlane.xlu0 %2147
    %v2149 = vsel %vm50, %v1839, 0.0
    %2150 = vadd.xlane.f32.xlu0 %v2149
    %v2151 = vpop.xlane.xlu0 %2150
    %v2152 = vsel %vm50, %v1840, 0.0
    %2153 = vadd.xlane.f32.xlu0 %v2152
    %v2154 = vpop.xlane.xlu0 %2153
    %v2155 = vsel %vm50, %v1841, 0.0
    %2156 = vadd.xlane.f32.xlu0 %v2155
    %v2157 = vpop.xlane.xlu0 %2156
    %v2158 = vsel %vm50, %v1842, 0.0
    %2159 = vadd.xlane.f32.xlu0 %v2158
    %v2160 = vpop.xlane.xlu0 %2159
    %v2161 = vsel %vm50, %v1843, 0.0
    %2162 = vadd.xlane.f32.xlu0 %v2161
    %v2163 = vpop.xlane.xlu0 %2162
    %v2164 = vsel %vm50, %v1844, 0.0
    %2165 = vadd.xlane.f32.xlu0 %v2164
    %v2166 = vpop.xlane.xlu0 %2165
    %v2167 = vsel %vm50, %v1845, 0.0
    %2168 = vadd.xlane.f32.xlu0 %v2167
    %v2169 = vpop.xlane.xlu0 %2168
    %v2170 = vsel %vm50, %v1846, 0.0
    %2171 = vadd.xlane.f32.xlu0 %v2170
    %v2172 = vpop.xlane.xlu0 %2171
    %v2173 = vsel %vm50, %v1847, 0.0
    %2174 = vadd.xlane.f32.xlu0 %v2173
    %v2175 = vpop.xlane.xlu0 %2174
    %v2176 = vsel %vm50, %v1848, 0.0
    %2177 = vadd.xlane.f32.xlu0 %v2176
    %v2178 = vpop.xlane.xlu0 %2177
    %v2179 = vsel %vm50, %v1849, 0.0
    %2180 = vadd.xlane.f32.xlu0 %v2179
    %v2181 = vpop.xlane.xlu0 %2180
    %v2182 = vsel %vm50, %v1850, 0.0
    %2183 = vadd.xlane.f32.xlu0 %v2182
    %v2184 = vpop.xlane.xlu0 %2183
    %v2185 = vsel %vm50, %v1851, 0.0
    %2186 = vadd.xlane.f32.xlu0 %v2185
    %v2187 = vpop.xlane.xlu0 %2186
    %v2188 = vsel %vm50, %v1852, 0.0
    %2189 = vadd.xlane.f32.xlu0 %v2188
    %v2190 = vpop.xlane.xlu0 %2189
    %v2191 = vsel %vm50, %v1853, 0.0
    %2192 = vadd.xlane.f32.xlu0 %v2191
    %v2193 = vpop.xlane.xlu0 %2192
    %v2194 = vsel %vm50, %v1854, 0.0
    %2195 = vadd.xlane.f32.xlu0 %v2194
    %v2196 = vpop.xlane.xlu0 %2195
    %v2197 = vsel %vm50, %v1855, 0.0
    %2198 = vadd.xlane.f32.xlu0 %v2197
    %v2199 = vpop.xlane.xlu0 %2198
    %v2200 = vsel %vm50, %v1856, 0.0
    %2201 = vadd.xlane.f32.xlu0 %v2200
    %v2202 = vpop.xlane.xlu0 %2201
    %v2203 = vsel %vm50, %v1857, 0.0
    %2204 = vadd.xlane.f32.xlu0 %v2203
    %v2205 = vpop.xlane.xlu0 %2204
    %v2206 = vsel %vm50, %v1858, 0.0
    %2207 = vadd.xlane.f32.xlu0 %v2206
    %v2208 = vpop.xlane.xlu0 %2207
    %v2209 = vsel %vm50, %v1859, 0.0
    %2210 = vadd.xlane.f32.xlu0 %v2209
    %v2211 = vpop.xlane.xlu0 %2210
    %v2212 = vsel %vm50, %v1860, 0.0
    %2213 = vadd.xlane.f32.xlu0 %v2212
    %v2214 = vpop.xlane.xlu0 %2213
    %v2215 = vsel %vm50, %v1861, 0.0
    %2216 = vadd.xlane.f32.xlu0 %v2215
    %v2217 = vpop.xlane.xlu0 %2216
    %v2218 = vsel %vm50, %v1862, 0.0
    %2219 = vadd.xlane.f32.xlu0 %v2218
    %v2220 = vpop.xlane.xlu0 %2219
    %v2221 = vsel %vm50, %v1863, 0.0
    %2222 = vadd.xlane.f32.xlu0 %v2221
    %v2223 = vpop.xlane.xlu0 %2222
    %v2224 = vsel %vm50, %v1864, 0.0
    %2225 = vadd.xlane.f32.xlu0 %v2224
    %v2226 = vpop.xlane.xlu0 %2225
    %v2227 = vsel %vm50, %v1865, 0.0
    %2228 = vadd.xlane.f32.xlu0 %v2227
    %v2229 = vpop.xlane.xlu0 %2228
    %v2230 = vsel %vm50, %v1866, 0.0
    %2231 = vadd.xlane.f32.xlu0 %v2230
    %v2232 = vpop.xlane.xlu0 %2231
    %v2233 = vsel %vm50, %v1867, 0.0
    %2234 = vadd.xlane.f32.xlu0 %v2233
    %v2235 = vpop.xlane.xlu0 %2234
    %v2236 = vsel %vm50, %v1868, 0.0
    %2237 = vadd.xlane.f32.xlu0 %v2236
    %v2238 = vpop.xlane.xlu0 %2237
    %v2239 = vsel %vm50, %v1869, 0.0
    %2240 = vadd.xlane.f32.xlu0 %v2239
    %v2241 = vpop.xlane.xlu0 %2240
    %v2242 = vsel %vm50, %v1870, 0.0
    %2243 = vadd.xlane.f32.xlu0 %v2242
    %v2244 = vpop.xlane.xlu0 %2243
    %v2245 = vsel %vm50, %v1871, 0.0
    %2246 = vadd.xlane.f32.xlu0 %v2245
    %v2247 = vpop.xlane.xlu0 %2246
    %v2248 = vsel %vm50, %v1872, 0.0
    %2249 = vadd.xlane.f32.xlu0 %v2248
    %v2250 = vpop.xlane.xlu0 %2249
    %v2251 = vsel %vm50, %v1873, 0.0
    %2252 = vadd.xlane.f32.xlu0 %v2251
    %v2253 = vpop.xlane.xlu0 %2252
    %v2254 = vsel %vm50, %v1874, 0.0
    %2255 = vadd.xlane.f32.xlu0 %v2254
    %v2256 = vpop.xlane.xlu0 %2255
    %v2257 = vsel %vm50, %v1875, 0.0
    %2258 = vadd.xlane.f32.xlu0 %v2257
    %v2259 = vpop.xlane.xlu0 %2258
    %v2388 = vlaneseq
    %v2389 = vand.u32 %v2388, 127
    %v2390 = vlaneseq
    %v2391 = vshrl.u32 %v2390, 7
    %v2392 = vsub.s32 %v2389, %v2391
    %v2393 = vrot.slane %v1878, %v2392
    %v2394 = vadd.s32 %v2389, 4294967288
    %v2395 = vlaneseq
    %v2396 = vshrl.u32 %v2395, 7
    %v2397 = vsub.s32 %v2394, %v2396
    %v2398 = vrot.slane %v1881, %v2397
    %vm2399 = vcmask 130112
    %v2400 = vsel %vm2399, %v2398, %v2393
    %v2401 = vadd.s32 %v2389, 4294967280
    %v2402 = vlaneseq
    %v2403 = vshrl.u32 %v2402, 7
    %v2404 = vsub.s32 %v2401, %v2403
    %v2405 = vrot.slane %v1884, %v2404
    %vm2406 = vcmask 195712
    %v2407 = vsel %vm2406, %v2405, %v2400
    %v2408 = vadd.s32 %v2389, 4294967272
    %v2409 = vlaneseq
    %v2410 = vshrl.u32 %v2409, 7
    %v2411 = vsub.s32 %v2408, %v2410
    %v2412 = vrot.slane %v1887, %v2411
    %vm2413 = vcmask 261312
    %v2414 = vsel %vm2413, %v2412, %v2407
    %v2415 = vadd.s32 %v2389, 4294967264
    %v2416 = vlaneseq
    %v2417 = vshrl.u32 %v2416, 7
    %v2418 = vsub.s32 %v2415, %v2417
    %v2419 = vrot.slane %v1890, %v2418
    %vm2420 = vcmask 326912
    %v2421 = vsel %vm2420, %v2419, %v2414
    %v2422 = vadd.s32 %v2389, 4294967256
    %v2423 = vlaneseq
    %v2424 = vshrl.u32 %v2423, 7
    %v2425 = vsub.s32 %v2422, %v2424
    %v2426 = vrot.slane %v1893, %v2425
    %vm2427 = vcmask 392512
    %v2428 = vsel %vm2427, %v2426, %v2421
    %v2429 = vadd.s32 %v2389, 4294967248
    %v2430 = vlaneseq
    %v2431 = vshrl.u32 %v2430, 7
    %v2432 = vsub.s32 %v2429, %v2431
    %v2433 = vrot.slane %v1896, %v2432
    %vm2434 = vcmask 458112
    %v2435 = vsel %vm2434, %v2433, %v2428
    %v2436 = vadd.s32 %v2389, 4294967240
    %v2437 = vlaneseq
    %v2438 = vshrl.u32 %v2437, 7
    %v2439 = vsub.s32 %v2436, %v2438
    %v2440 = vrot.slane %v1899, %v2439
    %vm2441 = vcmask 523712
    %v2442 = vsel %vm2441, %v2440, %v2435
    %v2443 = vadd.s32 %v2389, 4294967232
    %v2444 = vlaneseq
    %v2445 = vshrl.u32 %v2444, 7
    %v2446 = vsub.s32 %v2443, %v2445
    %v2447 = vrot.slane %v1902, %v2446
    %vm2448 = vcmask 589312
    %v2449 = vsel %vm2448, %v2447, %v2442
    %v2450 = vadd.s32 %v2389, 4294967224
    %v2451 = vlaneseq
    %v2452 = vshrl.u32 %v2451, 7
    %v2453 = vsub.s32 %v2450, %v2452
    %v2454 = vrot.slane %v1905, %v2453
    %vm2455 = vcmask 654912
    %v2456 = vsel %vm2455, %v2454, %v2449
    %v2457 = vadd.s32 %v2389, 4294967216
    %v2458 = vlaneseq
    %v2459 = vshrl.u32 %v2458, 7
    %v2460 = vsub.s32 %v2457, %v2459
    %v2461 = vrot.slane %v1908, %v2460
    %vm2462 = vcmask 720512
    %v2463 = vsel %vm2462, %v2461, %v2456
    %v2464 = vadd.s32 %v2389, 4294967208
    %v2465 = vlaneseq
    %v2466 = vshrl.u32 %v2465, 7
    %v2467 = vsub.s32 %v2464, %v2466
    %v2468 = vrot.slane %v1911, %v2467
    %vm2469 = vcmask 786112
    %v2470 = vsel %vm2469, %v2468, %v2463
    %v2471 = vadd.s32 %v2389, 4294967200
    %v2472 = vlaneseq
    %v2473 = vshrl.u32 %v2472, 7
    %v2474 = vsub.s32 %v2471, %v2473
    %v2475 = vrot.slane %v1914, %v2474
    %vm2476 = vcmask 851712
    %v2477 = vsel %vm2476, %v2475, %v2470
    %v2478 = vadd.s32 %v2389, 4294967192
    %v2479 = vlaneseq
    %v2480 = vshrl.u32 %v2479, 7
    %v2481 = vsub.s32 %v2478, %v2480
    %v2482 = vrot.slane %v1917, %v2481
    %vm2483 = vcmask 917312
    %v2484 = vsel %vm2483, %v2482, %v2477
    %v2485 = vadd.s32 %v2389, 4294967184
    %v2486 = vlaneseq
    %v2487 = vshrl.u32 %v2486, 7
    %v2488 = vsub.s32 %v2485, %v2487
    %v2489 = vrot.slane %v1920, %v2488
    %vm2490 = vcmask 982912
    %v2491 = vsel %vm2490, %v2489, %v2484
    %v2492 = vadd.s32 %v2389, 4294967176
    %v2493 = vlaneseq
    %v2494 = vshrl.u32 %v2493, 7
    %v2495 = vsub.s32 %v2492, %v2494
    %v2496 = vrot.slane %v1923, %v2495
    %vm2497 = vcmask 1048512
    %v2498 = vsel %vm2497, %v2496, %v2491
    %v2499 = vlaneseq
    %v2500 = vshrl.u32 %v2499, 7
    %v2501 = vsub.s32 %v2389, %v2500
    %v2502 = vrot.slane %v1926, %v2501
    %v2503 = vlaneseq
    %v2504 = vshrl.u32 %v2503, 7
    %v2505 = vsub.s32 %v2394, %v2504
    %v2506 = vrot.slane %v1929, %v2505
    %v2507 = vsel %vm2399, %v2506, %v2502
    %v2508 = vlaneseq
    %v2509 = vshrl.u32 %v2508, 7
    %v2510 = vsub.s32 %v2401, %v2509
    %v2511 = vrot.slane %v1932, %v2510
    %v2512 = vsel %vm2406, %v2511, %v2507
    %v2513 = vlaneseq
    %v2514 = vshrl.u32 %v2513, 7
    %v2515 = vsub.s32 %v2408, %v2514
    %v2516 = vrot.slane %v1935, %v2515
    %v2517 = vsel %vm2413, %v2516, %v2512
    %v2518 = vlaneseq
    %v2519 = vshrl.u32 %v2518, 7
    %v2520 = vsub.s32 %v2415, %v2519
    %v2521 = vrot.slane %v1938, %v2520
    %v2522 = vsel %vm2420, %v2521, %v2517
    %v2523 = vlaneseq
    %v2524 = vshrl.u32 %v2523, 7
    %v2525 = vsub.s32 %v2422, %v2524
    %v2526 = vrot.slane %v1941, %v2525
    %v2527 = vsel %vm2427, %v2526, %v2522
    %v2528 = vlaneseq
    %v2529 = vshrl.u32 %v2528, 7
    %v2530 = vsub.s32 %v2429, %v2529
    %v2531 = vrot.slane %v1944, %v2530
    %v2532 = vsel %vm2434, %v2531, %v2527
    %v2533 = vlaneseq
    %v2534 = vshrl.u32 %v2533, 7
    %v2535 = vsub.s32 %v2436, %v2534
    %v2536 = vrot.slane %v1947, %v2535
    %v2537 = vsel %vm2441, %v2536, %v2532
    %v2538 = vlaneseq
    %v2539 = vshrl.u32 %v2538, 7
    %v2540 = vsub.s32 %v2443, %v2539
    %v2541 = vrot.slane %v1950, %v2540
    %v2542 = vsel %vm2448, %v2541, %v2537
    %v2543 = vlaneseq
    %v2544 = vshrl.u32 %v2543, 7
    %v2545 = vsub.s32 %v2450, %v2544
    %v2546 = vrot.slane %v1953, %v2545
    %v2547 = vsel %vm2455, %v2546, %v2542
    %v2548 = vlaneseq
    %v2549 = vshrl.u32 %v2548, 7
    %v2550 = vsub.s32 %v2457, %v2549
    %v2551 = vrot.slane %v1956, %v2550
    %v2552 = vsel %vm2462, %v2551, %v2547
    %v2553 = vlaneseq
    %v2554 = vshrl.u32 %v2553, 7
    %v2555 = vsub.s32 %v2464, %v2554
    %v2556 = vrot.slane %v1959, %v2555
    %v2557 = vsel %vm2469, %v2556, %v2552
    %v2558 = vlaneseq
    %v2559 = vshrl.u32 %v2558, 7
    %v2560 = vsub.s32 %v2471, %v2559
    %v2561 = vrot.slane %v1962, %v2560
    %v2562 = vsel %vm2476, %v2561, %v2557
    %v2563 = vlaneseq
    %v2564 = vshrl.u32 %v2563, 7
    %v2565 = vsub.s32 %v2478, %v2564
    %v2566 = vrot.slane %v1965, %v2565
    %v2567 = vsel %vm2483, %v2566, %v2562
    %v2568 = vlaneseq
    %v2569 = vshrl.u32 %v2568, 7
    %v2570 = vsub.s32 %v2485, %v2569
    %v2571 = vrot.slane %v1968, %v2570
    %v2572 = vsel %vm2490, %v2571, %v2567
    %v2573 = vlaneseq
    %v2574 = vshrl.u32 %v2573, 7
    %v2575 = vsub.s32 %v2492, %v2574
    %v2576 = vrot.slane %v1971, %v2575
    %v2577 = vsel %vm2497, %v2576, %v2572
    %v2578 = vlaneseq
    %v2579 = vshrl.u32 %v2578, 7
    %v2580 = vsub.s32 %v2389, %v2579
    %v2581 = vrot.slane %v1974, %v2580
    %v2582 = vlaneseq
    %v2583 = vshrl.u32 %v2582, 7
    %v2584 = vsub.s32 %v2394, %v2583
    %v2585 = vrot.slane %v1977, %v2584
    %v2586 = vsel %vm2399, %v2585, %v2581
    %v2587 = vlaneseq
    %v2588 = vshrl.u32 %v2587, 7
    %v2589 = vsub.s32 %v2401, %v2588
    %v2590 = vrot.slane %v1980, %v2589
    %v2591 = vsel %vm2406, %v2590, %v2586
    %v2592 = vlaneseq
    %v2593 = vshrl.u32 %v2592, 7
    %v2594 = vsub.s32 %v2408, %v2593
    %v2595 = vrot.slane %v1983, %v2594
    %v2596 = vsel %vm2413, %v2595, %v2591
    %v2597 = vlaneseq
    %v2598 = vshrl.u32 %v2597, 7
    %v2599 = vsub.s32 %v2415, %v2598
    %v2600 = vrot.slane %v1986, %v2599
    %v2601 = vsel %vm2420, %v2600, %v2596
    %v2602 = vlaneseq
    %v2603 = vshrl.u32 %v2602, 7
    %v2604 = vsub.s32 %v2422, %v2603
    %v2605 = vrot.slane %v1989, %v2604
    %v2606 = vsel %vm2427, %v2605, %v2601
    %v2607 = vlaneseq
    %v2608 = vshrl.u32 %v2607, 7
    %v2609 = vsub.s32 %v2429, %v2608
    %v2610 = vrot.slane %v1992, %v2609
    %v2611 = vsel %vm2434, %v2610, %v2606
    %v2612 = vlaneseq
    %v2613 = vshrl.u32 %v2612, 7
    %v2614 = vsub.s32 %v2436, %v2613
    %v2615 = vrot.slane %v1995, %v2614
    %v2616 = vsel %vm2441, %v2615, %v2611
    %v2617 = vlaneseq
    %v2618 = vshrl.u32 %v2617, 7
    %v2619 = vsub.s32 %v2443, %v2618
    %v2620 = vrot.slane %v1998, %v2619
    %v2621 = vsel %vm2448, %v2620, %v2616
    %v2622 = vlaneseq
    %v2623 = vshrl.u32 %v2622, 7
    %v2624 = vsub.s32 %v2450, %v2623
    %v2625 = vrot.slane %v2001, %v2624
    %v2626 = vsel %vm2455, %v2625, %v2621
    %v2627 = vlaneseq
    %v2628 = vshrl.u32 %v2627, 7
    %v2629 = vsub.s32 %v2457, %v2628
    %v2630 = vrot.slane %v2004, %v2629
    %v2631 = vsel %vm2462, %v2630, %v2626
    %v2632 = vlaneseq
    %v2633 = vshrl.u32 %v2632, 7
    %v2634 = vsub.s32 %v2464, %v2633
    %v2635 = vrot.slane %v2007, %v2634
    %v2636 = vsel %vm2469, %v2635, %v2631
    %v2637 = vlaneseq
    %v2638 = vshrl.u32 %v2637, 7
    %v2639 = vsub.s32 %v2471, %v2638
    %v2640 = vrot.slane %v2010, %v2639
    %v2641 = vsel %vm2476, %v2640, %v2636
    %v2642 = vlaneseq
    %v2643 = vshrl.u32 %v2642, 7
    %v2644 = vsub.s32 %v2478, %v2643
    %v2645 = vrot.slane %v2013, %v2644
    %v2646 = vsel %vm2483, %v2645, %v2641
    %v2647 = vlaneseq
    %v2648 = vshrl.u32 %v2647, 7
    %v2649 = vsub.s32 %v2485, %v2648
    %v2650 = vrot.slane %v2016, %v2649
    %v2651 = vsel %vm2490, %v2650, %v2646
    %v2652 = vlaneseq
    %v2653 = vshrl.u32 %v2652, 7
    %v2654 = vsub.s32 %v2492, %v2653
    %v2655 = vrot.slane %v2019, %v2654
    %v2656 = vsel %vm2497, %v2655, %v2651
    %v2657 = vlaneseq
    %v2658 = vshrl.u32 %v2657, 7
    %v2659 = vsub.s32 %v2389, %v2658
    %v2660 = vrot.slane %v2022, %v2659
    %v2661 = vlaneseq
    %v2662 = vshrl.u32 %v2661, 7
    %v2663 = vsub.s32 %v2394, %v2662
    %v2664 = vrot.slane %v2025, %v2663
    %v2665 = vsel %vm2399, %v2664, %v2660
    %v2666 = vlaneseq
    %v2667 = vshrl.u32 %v2666, 7
    %v2668 = vsub.s32 %v2401, %v2667
    %v2669 = vrot.slane %v2028, %v2668
    %v2670 = vsel %vm2406, %v2669, %v2665
    %v2671 = vlaneseq
    %v2672 = vshrl.u32 %v2671, 7
    %v2673 = vsub.s32 %v2408, %v2672
    %v2674 = vrot.slane %v2031, %v2673
    %v2675 = vsel %vm2413, %v2674, %v2670
    %v2676 = vlaneseq
    %v2677 = vshrl.u32 %v2676, 7
    %v2678 = vsub.s32 %v2415, %v2677
    %v2679 = vrot.slane %v2034, %v2678
    %v2680 = vsel %vm2420, %v2679, %v2675
    %v2681 = vlaneseq
    %v2682 = vshrl.u32 %v2681, 7
    %v2683 = vsub.s32 %v2422, %v2682
    %v2684 = vrot.slane %v2037, %v2683
    %v2685 = vsel %vm2427, %v2684, %v2680
    %v2686 = vlaneseq
    %v2687 = vshrl.u32 %v2686, 7
    %v2688 = vsub.s32 %v2429, %v2687
    %v2689 = vrot.slane %v2040, %v2688
    %v2690 = vsel %vm2434, %v2689, %v2685
    %v2691 = vlaneseq
    %v2692 = vshrl.u32 %v2691, 7
    %v2693 = vsub.s32 %v2436, %v2692
    %v2694 = vrot.slane %v2043, %v2693
    %v2695 = vsel %vm2441, %v2694, %v2690
    %v2696 = vlaneseq
    %v2697 = vshrl.u32 %v2696, 7
    %v2698 = vsub.s32 %v2443, %v2697
    %v2699 = vrot.slane %v2046, %v2698
    %v2700 = vsel %vm2448, %v2699, %v2695
    %v2701 = vlaneseq
    %v2702 = vshrl.u32 %v2701, 7
    %v2703 = vsub.s32 %v2450, %v2702
    %v2704 = vrot.slane %v2049, %v2703
    %v2705 = vsel %vm2455, %v2704, %v2700
    %v2706 = vlaneseq
    %v2707 = vshrl.u32 %v2706, 7
    %v2708 = vsub.s32 %v2457, %v2707
    %v2709 = vrot.slane %v2052, %v2708
    %v2710 = vsel %vm2462, %v2709, %v2705
    %v2711 = vlaneseq
    %v2712 = vshrl.u32 %v2711, 7
    %v2713 = vsub.s32 %v2464, %v2712
    %v2714 = vrot.slane %v2055, %v2713
    %v2715 = vsel %vm2469, %v2714, %v2710
    %v2716 = vlaneseq
    %v2717 = vshrl.u32 %v2716, 7
    %v2718 = vsub.s32 %v2471, %v2717
    %v2719 = vrot.slane %v2058, %v2718
    %v2720 = vsel %vm2476, %v2719, %v2715
    %v2721 = vlaneseq
    %v2722 = vshrl.u32 %v2721, 7
    %v2723 = vsub.s32 %v2478, %v2722
    %v2724 = vrot.slane %v2061, %v2723
    %v2725 = vsel %vm2483, %v2724, %v2720
    %v2726 = vlaneseq
    %v2727 = vshrl.u32 %v2726, 7
    %v2728 = vsub.s32 %v2485, %v2727
    %v2729 = vrot.slane %v2064, %v2728
    %v2730 = vsel %vm2490, %v2729, %v2725
    %v2731 = vlaneseq
    %v2732 = vshrl.u32 %v2731, 7
    %v2733 = vsub.s32 %v2492, %v2732
    %v2734 = vrot.slane %v2067, %v2733
    %v2735 = vsel %vm2497, %v2734, %v2730
    %v2736 = vlaneseq
    %v2737 = vshrl.u32 %v2736, 7
    %v2738 = vsub.s32 %v2389, %v2737
    %v2739 = vrot.slane %v2070, %v2738
    %v2740 = vlaneseq
    %v2741 = vshrl.u32 %v2740, 7
    %v2742 = vsub.s32 %v2394, %v2741
    %v2743 = vrot.slane %v2073, %v2742
    %v2744 = vsel %vm2399, %v2743, %v2739
    %v2745 = vlaneseq
    %v2746 = vshrl.u32 %v2745, 7
    %v2747 = vsub.s32 %v2401, %v2746
    %v2748 = vrot.slane %v2076, %v2747
    %v2749 = vsel %vm2406, %v2748, %v2744
    %v2750 = vlaneseq
    %v2751 = vshrl.u32 %v2750, 7
    %v2752 = vsub.s32 %v2408, %v2751
    %v2753 = vrot.slane %v2079, %v2752
    %v2754 = vsel %vm2413, %v2753, %v2749
    %v2755 = vlaneseq
    %v2756 = vshrl.u32 %v2755, 7
    %v2757 = vsub.s32 %v2415, %v2756
    %v2758 = vrot.slane %v2082, %v2757
    %v2759 = vsel %vm2420, %v2758, %v2754
    %v2760 = vlaneseq
    %v2761 = vshrl.u32 %v2760, 7
    %v2762 = vsub.s32 %v2422, %v2761
    %v2763 = vrot.slane %v2085, %v2762
    %v2764 = vsel %vm2427, %v2763, %v2759
    %v2765 = vlaneseq
    %v2766 = vshrl.u32 %v2765, 7
    %v2767 = vsub.s32 %v2429, %v2766
    %v2768 = vrot.slane %v2088, %v2767
    %v2769 = vsel %vm2434, %v2768, %v2764
    %v2770 = vlaneseq
    %v2771 = vshrl.u32 %v2770, 7
    %v2772 = vsub.s32 %v2436, %v2771
    %v2773 = vrot.slane %v2091, %v2772
    %v2774 = vsel %vm2441, %v2773, %v2769
    %v2775 = vlaneseq
    %v2776 = vshrl.u32 %v2775, 7
    %v2777 = vsub.s32 %v2443, %v2776
    %v2778 = vrot.slane %v2094, %v2777
    %v2779 = vsel %vm2448, %v2778, %v2774
    %v2780 = vlaneseq
    %v2781 = vshrl.u32 %v2780, 7
    %v2782 = vsub.s32 %v2450, %v2781
    %v2783 = vrot.slane %v2097, %v2782
    %v2784 = vsel %vm2455, %v2783, %v2779
    %v2785 = vlaneseq
    %v2786 = vshrl.u32 %v2785, 7
    %v2787 = vsub.s32 %v2457, %v2786
    %v2788 = vrot.slane %v2100, %v2787
    %v2789 = vsel %vm2462, %v2788, %v2784
    %v2790 = vlaneseq
    %v2791 = vshrl.u32 %v2790, 7
    %v2792 = vsub.s32 %v2464, %v2791
    %v2793 = vrot.slane %v2103, %v2792
    %v2794 = vsel %vm2469, %v2793, %v2789
    %v2795 = vlaneseq
    %v2796 = vshrl.u32 %v2795, 7
    %v2797 = vsub.s32 %v2471, %v2796
    %v2798 = vrot.slane %v2106, %v2797
    %v2799 = vsel %vm2476, %v2798, %v2794
    %v2800 = vlaneseq
    %v2801 = vshrl.u32 %v2800, 7
    %v2802 = vsub.s32 %v2478, %v2801
    %v2803 = vrot.slane %v2109, %v2802
    %v2804 = vsel %vm2483, %v2803, %v2799
    %v2805 = vlaneseq
    %v2806 = vshrl.u32 %v2805, 7
    %v2807 = vsub.s32 %v2485, %v2806
    %v2808 = vrot.slane %v2112, %v2807
    %v2809 = vsel %vm2490, %v2808, %v2804
    %v2810 = vlaneseq
    %v2811 = vshrl.u32 %v2810, 7
    %v2812 = vsub.s32 %v2492, %v2811
    %v2813 = vrot.slane %v2115, %v2812
    %v2814 = vsel %vm2497, %v2813, %v2809
    %v2815 = vlaneseq
    %v2816 = vshrl.u32 %v2815, 7
    %v2817 = vsub.s32 %v2389, %v2816
    %v2818 = vrot.slane %v2118, %v2817
    %v2819 = vlaneseq
    %v2820 = vshrl.u32 %v2819, 7
    %v2821 = vsub.s32 %v2394, %v2820
    %v2822 = vrot.slane %v2121, %v2821
    %v2823 = vsel %vm2399, %v2822, %v2818
    %v2824 = vlaneseq
    %v2825 = vshrl.u32 %v2824, 7
    %v2826 = vsub.s32 %v2401, %v2825
    %v2827 = vrot.slane %v2124, %v2826
    %v2828 = vsel %vm2406, %v2827, %v2823
    %v2829 = vlaneseq
    %v2830 = vshrl.u32 %v2829, 7
    %v2831 = vsub.s32 %v2408, %v2830
    %v2832 = vrot.slane %v2127, %v2831
    %v2833 = vsel %vm2413, %v2832, %v2828
    %v2834 = vlaneseq
    %v2835 = vshrl.u32 %v2834, 7
    %v2836 = vsub.s32 %v2415, %v2835
    %v2837 = vrot.slane %v2130, %v2836
    %v2838 = vsel %vm2420, %v2837, %v2833
    %v2839 = vlaneseq
    %v2840 = vshrl.u32 %v2839, 7
    %v2841 = vsub.s32 %v2422, %v2840
    %v2842 = vrot.slane %v2133, %v2841
    %v2843 = vsel %vm2427, %v2842, %v2838
    %v2844 = vlaneseq
    %v2845 = vshrl.u32 %v2844, 7
    %v2846 = vsub.s32 %v2429, %v2845
    %v2847 = vrot.slane %v2136, %v2846
    %v2848 = vsel %vm2434, %v2847, %v2843
    %v2849 = vlaneseq
    %v2850 = vshrl.u32 %v2849, 7
    %v2851 = vsub.s32 %v2436, %v2850
    %v2852 = vrot.slane %v2139, %v2851
    %v2853 = vsel %vm2441, %v2852, %v2848
    %v2854 = vlaneseq
    %v2855 = vshrl.u32 %v2854, 7
    %v2856 = vsub.s32 %v2443, %v2855
    %v2857 = vrot.slane %v2142, %v2856
    %v2858 = vsel %vm2448, %v2857, %v2853
    %v2859 = vlaneseq
    %v2860 = vshrl.u32 %v2859, 7
    %v2861 = vsub.s32 %v2450, %v2860
    %v2862 = vrot.slane %v2145, %v2861
    %v2863 = vsel %vm2455, %v2862, %v2858
    %v2864 = vlaneseq
    %v2865 = vshrl.u32 %v2864, 7
    %v2866 = vsub.s32 %v2457, %v2865
    %v2867 = vrot.slane %v2148, %v2866
    %v2868 = vsel %vm2462, %v2867, %v2863
    %v2869 = vlaneseq
    %v2870 = vshrl.u32 %v2869, 7
    %v2871 = vsub.s32 %v2464, %v2870
    %v2872 = vrot.slane %v2151, %v2871
    %v2873 = vsel %vm2469, %v2872, %v2868
    %v2874 = vlaneseq
    %v2875 = vshrl.u32 %v2874, 7
    %v2876 = vsub.s32 %v2471, %v2875
    %v2877 = vrot.slane %v2154, %v2876
    %v2878 = vsel %vm2476, %v2877, %v2873
    %v2879 = vlaneseq
    %v2880 = vshrl.u32 %v2879, 7
    %v2881 = vsub.s32 %v2478, %v2880
    %v2882 = vrot.slane %v2157, %v2881
    %v2883 = vsel %vm2483, %v2882, %v2878
    %v2884 = vlaneseq
    %v2885 = vshrl.u32 %v2884, 7
    %v2886 = vsub.s32 %v2485, %v2885
    %v2887 = vrot.slane %v2160, %v2886
    %v2888 = vsel %vm2490, %v2887, %v2883
    %v2889 = vlaneseq
    %v2890 = vshrl.u32 %v2889, 7
    %v2891 = vsub.s32 %v2492, %v2890
    %v2892 = vrot.slane %v2163, %v2891
    %v2893 = vsel %vm2497, %v2892, %v2888
    %v2894 = vlaneseq
    %v2895 = vshrl.u32 %v2894, 7
    %v2896 = vsub.s32 %v2389, %v2895
    %v2897 = vrot.slane %v2166, %v2896
    %v2898 = vlaneseq
    %v2899 = vshrl.u32 %v2898, 7
    %v2900 = vsub.s32 %v2394, %v2899
    %v2901 = vrot.slane %v2169, %v2900
    %v2902 = vsel %vm2399, %v2901, %v2897
    %v2903 = vlaneseq
    %v2904 = vshrl.u32 %v2903, 7
    %v2905 = vsub.s32 %v2401, %v2904
    %v2906 = vrot.slane %v2172, %v2905
    %v2907 = vsel %vm2406, %v2906, %v2902
    %v2908 = vlaneseq
    %v2909 = vshrl.u32 %v2908, 7
    %v2910 = vsub.s32 %v2408, %v2909
    %v2911 = vrot.slane %v2175, %v2910
    %v2912 = vsel %vm2413, %v2911, %v2907
    %v2913 = vlaneseq
    %v2914 = vshrl.u32 %v2913, 7
    %v2915 = vsub.s32 %v2415, %v2914
    %v2916 = vrot.slane %v2178, %v2915
    %v2917 = vsel %vm2420, %v2916, %v2912
    %v2918 = vlaneseq
    %v2919 = vshrl.u32 %v2918, 7
    %v2920 = vsub.s32 %v2422, %v2919
    %v2921 = vrot.slane %v2181, %v2920
    %v2922 = vsel %vm2427, %v2921, %v2917
    %v2923 = vlaneseq
    %v2924 = vshrl.u32 %v2923, 7
    %v2925 = vsub.s32 %v2429, %v2924
    %v2926 = vrot.slane %v2184, %v2925
    %v2927 = vsel %vm2434, %v2926, %v2922
    %v2928 = vlaneseq
    %v2929 = vshrl.u32 %v2928, 7
    %v2930 = vsub.s32 %v2436, %v2929
    %v2931 = vrot.slane %v2187, %v2930
    %v2932 = vsel %vm2441, %v2931, %v2927
    %v2933 = vlaneseq
    %v2934 = vshrl.u32 %v2933, 7
    %v2935 = vsub.s32 %v2443, %v2934
    %v2936 = vrot.slane %v2190, %v2935
    %v2937 = vsel %vm2448, %v2936, %v2932
    %v2938 = vlaneseq
    %v2939 = vshrl.u32 %v2938, 7
    %v2940 = vsub.s32 %v2450, %v2939
    %v2941 = vrot.slane %v2193, %v2940
    %v2942 = vsel %vm2455, %v2941, %v2937
    %v2943 = vlaneseq
    %v2944 = vshrl.u32 %v2943, 7
    %v2945 = vsub.s32 %v2457, %v2944
    %v2946 = vrot.slane %v2196, %v2945
    %v2947 = vsel %vm2462, %v2946, %v2942
    %v2948 = vlaneseq
    %v2949 = vshrl.u32 %v2948, 7
    %v2950 = vsub.s32 %v2464, %v2949
    %v2951 = vrot.slane %v2199, %v2950
    %v2952 = vsel %vm2469, %v2951, %v2947
    %v2953 = vlaneseq
    %v2954 = vshrl.u32 %v2953, 7
    %v2955 = vsub.s32 %v2471, %v2954
    %v2956 = vrot.slane %v2202, %v2955
    %v2957 = vsel %vm2476, %v2956, %v2952
    %v2958 = vlaneseq
    %v2959 = vshrl.u32 %v2958, 7
    %v2960 = vsub.s32 %v2478, %v2959
    %v2961 = vrot.slane %v2205, %v2960
    %v2962 = vsel %vm2483, %v2961, %v2957
    %v2963 = vlaneseq
    %v2964 = vshrl.u32 %v2963, 7
    %v2965 = vsub.s32 %v2485, %v2964
    %v2966 = vrot.slane %v2208, %v2965
    %v2967 = vsel %vm2490, %v2966, %v2962
    %v2968 = vlaneseq
    %v2969 = vshrl.u32 %v2968, 7
    %v2970 = vsub.s32 %v2492, %v2969
    %v2971 = vrot.slane %v2211, %v2970
    %v2972 = vsel %vm2497, %v2971, %v2967
    %v2973 = vlaneseq
    %v2974 = vshrl.u32 %v2973, 7
    %v2975 = vsub.s32 %v2389, %v2974
    %v2976 = vrot.slane %v2214, %v2975
    %v2977 = vlaneseq
    %v2978 = vshrl.u32 %v2977, 7
    %v2979 = vsub.s32 %v2394, %v2978
    %v2980 = vrot.slane %v2217, %v2979
    %v2981 = vsel %vm2399, %v2980, %v2976
    %v2982 = vlaneseq
    %v2983 = vshrl.u32 %v2982, 7
    %v2984 = vsub.s32 %v2401, %v2983
    %v2985 = vrot.slane %v2220, %v2984
    %v2986 = vsel %vm2406, %v2985, %v2981
    %v2987 = vlaneseq
    %v2988 = vshrl.u32 %v2987, 7
    %v2989 = vsub.s32 %v2408, %v2988
    %v2990 = vrot.slane %v2223, %v2989
    %v2991 = vsel %vm2413, %v2990, %v2986
    %v2992 = vlaneseq
    %v2993 = vshrl.u32 %v2992, 7
    %v2994 = vsub.s32 %v2415, %v2993
    %v2995 = vrot.slane %v2226, %v2994
    %v2996 = vsel %vm2420, %v2995, %v2991
    %v2997 = vlaneseq
    %v2998 = vshrl.u32 %v2997, 7
    %v2999 = vsub.s32 %v2422, %v2998
    %v3000 = vrot.slane %v2229, %v2999
    %v3001 = vsel %vm2427, %v3000, %v2996
    %v3002 = vlaneseq
    %v3003 = vshrl.u32 %v3002, 7
    %v3004 = vsub.s32 %v2429, %v3003
    %v3005 = vrot.slane %v2232, %v3004
    %v3006 = vsel %vm2434, %v3005, %v3001
    %v3007 = vlaneseq
    %v3008 = vshrl.u32 %v3007, 7
    %v3009 = vsub.s32 %v2436, %v3008
    %v3010 = vrot.slane %v2235, %v3009
    %v3011 = vsel %vm2441, %v3010, %v3006
    %v3012 = vlaneseq
    %v3013 = vshrl.u32 %v3012, 7
    %v3014 = vsub.s32 %v2443, %v3013
    %v3015 = vrot.slane %v2238, %v3014
    %v3016 = vsel %vm2448, %v3015, %v3011
    %v3017 = vlaneseq
    %v3018 = vshrl.u32 %v3017, 7
    %v3019 = vsub.s32 %v2450, %v3018
    %v3020 = vrot.slane %v2241, %v3019
    %v3021 = vsel %vm2455, %v3020, %v3016
    %v3022 = vlaneseq
    %v3023 = vshrl.u32 %v3022, 7
    %v3024 = vsub.s32 %v2457, %v3023
    %v3025 = vrot.slane %v2244, %v3024
    %v3026 = vsel %vm2462, %v3025, %v3021
    %v3027 = vlaneseq
    %v3028 = vshrl.u32 %v3027, 7
    %v3029 = vsub.s32 %v2464, %v3028
    %v3030 = vrot.slane %v2247, %v3029
    %v3031 = vsel %vm2469, %v3030, %v3026
    %v3032 = vlaneseq
    %v3033 = vshrl.u32 %v3032, 7
    %v3034 = vsub.s32 %v2471, %v3033
    %v3035 = vrot.slane %v2250, %v3034
    %v3036 = vsel %vm2476, %v3035, %v3031
    %v3037 = vlaneseq
    %v3038 = vshrl.u32 %v3037, 7
    %v3039 = vsub.s32 %v2478, %v3038
    %v3040 = vrot.slane %v2253, %v3039
    %v3041 = vsel %vm2483, %v3040, %v3036
    %v3042 = vlaneseq
    %v3043 = vshrl.u32 %v3042, 7
    %v3044 = vsub.s32 %v2485, %v3043
    %v3045 = vrot.slane %v2256, %v3044
    %v3046 = vsel %vm2490, %v3045, %v3041
    %v3047 = vlaneseq
    %v3048 = vshrl.u32 %v3047, 7
    %v3049 = vsub.s32 %v2492, %v3048
    %v3050 = vrot.slane %v2259, %v3049
    %v3051 = vsel %vm2497, %v3050, %v3046
    %vm3052 = vcmask 1041409
    %v3053 = vsel %vm3052, %v2577, %v2498
    %vm3054 = vcmask 1042434
    %v3055 = vsel %vm3054, %v2656, %v3053
    %vm3056 = vcmask 1043459
    %v3057 = vsel %vm3056, %v2735, %v3055
    %vm3058 = vcmask 1044484
    %v3059 = vsel %vm3058, %v2814, %v3057
    %vm3060 = vcmask 1045509
    %v3061 = vsel %vm3060, %v2893, %v3059
    %vm3062 = vcmask 1046534
    %v3063 = vsel %vm3062, %v2972, %v3061
    %vm3064 = vcmask 1047559
    %v3065 = vsel %vm3064, %v3051, %v3063
    %3067 = vmax.xlane.f32.xlu0 %v3065
    %v3068 = vpop.xlane.xlu0 %3067
    %v3070 = vlaneseq
    %v3071 = vshrl.u32 %v3070, 7
    %v3072 = vsub.s32 0, %v3071
    %v3073 = vrot.slane %v3068, %v3072
    %v3074 = vlaneseq
    %v3075 = vshrl.u32 %v3074, 7
    %v3076 = vsub.s32 1, %v3075
    %v3077 = vrot.slane %v3068, %v3076
    %v3078 = vlaneseq
    %v3079 = vshrl.u32 %v3078, 7
    %v3080 = vsub.s32 2, %v3079
    %v3081 = vrot.slane %v3068, %v3080
    %v3082 = vlaneseq
    %v3083 = vshrl.u32 %v3082, 7
    %v3084 = vsub.s32 3, %v3083
    %v3085 = vrot.slane %v3068, %v3084
    %v3086 = vlaneseq
    %v3087 = vshrl.u32 %v3086, 7
    %v3088 = vsub.s32 4, %v3087
    %v3089 = vrot.slane %v3068, %v3088
    %v3090 = vlaneseq
    %v3091 = vshrl.u32 %v3090, 7
    %v3092 = vsub.s32 5, %v3091
    %v3093 = vrot.slane %v3068, %v3092
    %v3094 = vlaneseq
    %v3095 = vshrl.u32 %v3094, 7
    %v3096 = vsub.s32 6, %v3095
    %v3097 = vrot.slane %v3068, %v3096
    %v3098 = vlaneseq
    %v3099 = vshrl.u32 %v3098, 7
    %v3100 = vsub.s32 7, %v3099
    %v3101 = vrot.slane %v3068, %v3100
    %v3110 = vsub.f32 %v1878, %v3073
    %v3111 = vsub.f32 %v1881, %v3073
    %v3112 = vsub.f32 %v1884, %v3073
    %v3113 = vsub.f32 %v1887, %v3073
    %v3114 = vsub.f32 %v1890, %v3073
    %v3115 = vsub.f32 %v1893, %v3073
    %v3116 = vsub.f32 %v1896, %v3073
    %v3117 = vsub.f32 %v1899, %v3073
    %v3118 = vsub.f32 %v1902, %v3073
    %v3119 = vsub.f32 %v1905, %v3073
    %v3120 = vsub.f32 %v1908, %v3073
    %v3121 = vsub.f32 %v1911, %v3073
    %v3122 = vsub.f32 %v1914, %v3073
    %v3123 = vsub.f32 %v1917, %v3073
    %v3124 = vsub.f32 %v1920, %v3073
    %v3125 = vsub.f32 %v1923, %v3073
    %v3126 = vsub.f32 %v1926, %v3077
    %v3127 = vsub.f32 %v1929, %v3077
    %v3128 = vsub.f32 %v1932, %v3077
    %v3129 = vsub.f32 %v1935, %v3077
    %v3130 = vsub.f32 %v1938, %v3077
    %v3131 = vsub.f32 %v1941, %v3077
    %v3132 = vsub.f32 %v1944, %v3077
    %v3133 = vsub.f32 %v1947, %v3077
    %v3134 = vsub.f32 %v1950, %v3077
    %v3135 = vsub.f32 %v1953, %v3077
    %v3136 = vsub.f32 %v1956, %v3077
    %v3137 = vsub.f32 %v1959, %v3077
    %v3138 = vsub.f32 %v1962, %v3077
    %v3139 = vsub.f32 %v1965, %v3077
    %v3140 = vsub.f32 %v1968, %v3077
    %v3141 = vsub.f32 %v1971, %v3077
    %v3142 = vsub.f32 %v1974, %v3081
    %v3143 = vsub.f32 %v1977, %v3081
    %v3144 = vsub.f32 %v1980, %v3081
    %v3145 = vsub.f32 %v1983, %v3081
    %v3146 = vsub.f32 %v1986, %v3081
    %v3147 = vsub.f32 %v1989, %v3081
    %v3148 = vsub.f32 %v1992, %v3081
    %v3149 = vsub.f32 %v1995, %v3081
    %v3150 = vsub.f32 %v1998, %v3081
    %v3151 = vsub.f32 %v2001, %v3081
    %v3152 = vsub.f32 %v2004, %v3081
    %v3153 = vsub.f32 %v2007, %v3081
    %v3154 = vsub.f32 %v2010, %v3081
    %v3155 = vsub.f32 %v2013, %v3081
    %v3156 = vsub.f32 %v2016, %v3081
    %v3157 = vsub.f32 %v2019, %v3081
    %v3158 = vsub.f32 %v2022, %v3085
    %v3159 = vsub.f32 %v2025, %v3085
    %v3160 = vsub.f32 %v2028, %v3085
    %v3161 = vsub.f32 %v2031, %v3085
    %v3162 = vsub.f32 %v2034, %v3085
    %v3163 = vsub.f32 %v2037, %v3085
    %v3164 = vsub.f32 %v2040, %v3085
    %v3165 = vsub.f32 %v2043, %v3085
    %v3166 = vsub.f32 %v2046, %v3085
    %v3167 = vsub.f32 %v2049, %v3085
    %v3168 = vsub.f32 %v2052, %v3085
    %v3169 = vsub.f32 %v2055, %v3085
    %v3170 = vsub.f32 %v2058, %v3085
    %v3171 = vsub.f32 %v2061, %v3085
    %v3172 = vsub.f32 %v2064, %v3085
    %v3173 = vsub.f32 %v2067, %v3085
    %v3174 = vsub.f32 %v2070, %v3089
    %v3175 = vsub.f32 %v2073, %v3089
    %v3176 = vsub.f32 %v2076, %v3089
    %v3177 = vsub.f32 %v2079, %v3089
    %v3178 = vsub.f32 %v2082, %v3089
    %v3179 = vsub.f32 %v2085, %v3089
    %v3180 = vsub.f32 %v2088, %v3089
    %v3181 = vsub.f32 %v2091, %v3089
    %v3182 = vsub.f32 %v2094, %v3089
    %v3183 = vsub.f32 %v2097, %v3089
    %v3184 = vsub.f32 %v2100, %v3089
    %v3185 = vsub.f32 %v2103, %v3089
    %v3186 = vsub.f32 %v2106, %v3089
    %v3187 = vsub.f32 %v2109, %v3089
    %v3188 = vsub.f32 %v2112, %v3089
    %v3189 = vsub.f32 %v2115, %v3089
    %v3190 = vsub.f32 %v2118, %v3093
    %v3191 = vsub.f32 %v2121, %v3093
    %v3192 = vsub.f32 %v2124, %v3093
    %v3193 = vsub.f32 %v2127, %v3093
    %v3194 = vsub.f32 %v2130, %v3093
    %v3195 = vsub.f32 %v2133, %v3093
    %v3196 = vsub.f32 %v2136, %v3093
    %v3197 = vsub.f32 %v2139, %v3093
    %v3198 = vsub.f32 %v2142, %v3093
    %v3199 = vsub.f32 %v2145, %v3093
    %v3200 = vsub.f32 %v2148, %v3093
    %v3201 = vsub.f32 %v2151, %v3093
    %v3202 = vsub.f32 %v2154, %v3093
    %v3203 = vsub.f32 %v2157, %v3093
    %v3204 = vsub.f32 %v2160, %v3093
    %v3205 = vsub.f32 %v2163, %v3093
    %v3206 = vsub.f32 %v2166, %v3097
    %v3207 = vsub.f32 %v2169, %v3097
    %v3208 = vsub.f32 %v2172, %v3097
    %v3209 = vsub.f32 %v2175, %v3097
    %v3210 = vsub.f32 %v2178, %v3097
    %v3211 = vsub.f32 %v2181, %v3097
    %v3212 = vsub.f32 %v2184, %v3097
    %v3213 = vsub.f32 %v2187, %v3097
    %v3214 = vsub.f32 %v2190, %v3097
    %v3215 = vsub.f32 %v2193, %v3097
    %v3216 = vsub.f32 %v2196, %v3097
    %v3217 = vsub.f32 %v2199, %v3097
    %v3218 = vsub.f32 %v2202, %v3097
    %v3219 = vsub.f32 %v2205, %v3097
    %v3220 = vsub.f32 %v2208, %v3097
    %v3221 = vsub.f32 %v2211, %v3097
    %v3222 = vsub.f32 %v2214, %v3101
    %v3223 = vsub.f32 %v2217, %v3101
    %v3224 = vsub.f32 %v2220, %v3101
    %v3225 = vsub.f32 %v2223, %v3101
    %v3226 = vsub.f32 %v2226, %v3101
    %v3227 = vsub.f32 %v2229, %v3101
    %v3228 = vsub.f32 %v2232, %v3101
    %v3229 = vsub.f32 %v2235, %v3101
    %v3230 = vsub.f32 %v2238, %v3101
    %v3231 = vsub.f32 %v2241, %v3101
    %v3232 = vsub.f32 %v2244, %v3101
    %v3233 = vsub.f32 %v2247, %v3101
    %v3234 = vsub.f32 %v2250, %v3101
    %v3235 = vsub.f32 %v2253, %v3101
    %v3236 = vsub.f32 %v2256, %v3101
    %v3237 = vsub.f32 %v2259, %v3101
    %v3238 = vmul.f32 %v3110, 1.442695
    %v3239 = vpow.pop %v3238
    %v3240 = vmul.f32 %v3111, 1.442695
    %v3241 = vpow.pop %v3240
    %v3242 = vmul.f32 %v3112, 1.442695
    %v3243 = vpow.pop %v3242
    %v3244 = vmul.f32 %v3113, 1.442695
    %v3245 = vpow.pop %v3244
    %v3246 = vmul.f32 %v3114, 1.442695
    %v3247 = vpow.pop %v3246
    %v3248 = vmul.f32 %v3115, 1.442695
    %v3249 = vpow.pop %v3248
    %v3250 = vmul.f32 %v3116, 1.442695
    %v3251 = vpow.pop %v3250
    %v3252 = vmul.f32 %v3117, 1.442695
    %v3253 = vpow.pop %v3252
    %v3254 = vmul.f32 %v3118, 1.442695
    %v3255 = vpow.pop %v3254
    %v3256 = vmul.f32 %v3119, 1.442695
    %v3257 = vpow.pop %v3256
    %v3258 = vmul.f32 %v3120, 1.442695
    %v3259 = vpow.pop %v3258
    %v3260 = vmul.f32 %v3121, 1.442695
    %v3261 = vpow.pop %v3260
    %v3262 = vmul.f32 %v3122, 1.442695
    %v3263 = vpow.pop %v3262
    %v3264 = vmul.f32 %v3123, 1.442695
    %v3265 = vpow.pop %v3264
    %v3266 = vmul.f32 %v3124, 1.442695
    %v3267 = vpow.pop %v3266
    %v3268 = vmul.f32 %v3125, 1.442695
    %v3269 = vpow.pop %v3268
    %v3270 = vmul.f32 %v3126, 1.442695
    %v3271 = vpow.pop %v3270
    %v3272 = vmul.f32 %v3127, 1.442695
    %v3273 = vpow.pop %v3272
    %v3274 = vmul.f32 %v3128, 1.442695
    %v3275 = vpow.pop %v3274
    %v3276 = vmul.f32 %v3129, 1.442695
    %v3277 = vpow.pop %v3276
    %v3278 = vmul.f32 %v3130, 1.442695
    %v3279 = vpow.pop %v3278
    %v3280 = vmul.f32 %v3131, 1.442695
    %v3281 = vpow.pop %v3280
    %v3282 = vmul.f32 %v3132, 1.442695
    %v3283 = vpow.pop %v3282
    %v3284 = vmul.f32 %v3133, 1.442695
    %v3285 = vpow.pop %v3284
    %v3286 = vmul.f32 %v3134, 1.442695
    %v3287 = vpow.pop %v3286
    %v3288 = vmul.f32 %v3135, 1.442695
    %v3289 = vpow.pop %v3288
    %v3290 = vmul.f32 %v3136, 1.442695
    %v3291 = vpow.pop %v3290
    %v3292 = vmul.f32 %v3137, 1.442695
    %v3293 = vpow.pop %v3292
    %v3294 = vmul.f32 %v3138, 1.442695
    %v3295 = vpow.pop %v3294
    %v3296 = vmul.f32 %v3139, 1.442695
    %v3297 = vpow.pop %v3296
    %v3298 = vmul.f32 %v3140, 1.442695
    %v3299 = vpow.pop %v3298
    %v3300 = vmul.f32 %v3141, 1.442695
    %v3301 = vpow.pop %v3300
    %v3302 = vmul.f32 %v3142, 1.442695
    %v3303 = vpow.pop %v3302
    %v3304 = vmul.f32 %v3143, 1.442695
    %v3305 = vpow.pop %v3304
    %v3306 = vmul.f32 %v3144, 1.442695
    %v3307 = vpow.pop %v3306
    %v3308 = vmul.f32 %v3145, 1.442695
    %v3309 = vpow.pop %v3308
    %v3310 = vmul.f32 %v3146, 1.442695
    %v3311 = vpow.pop %v3310
    %v3312 = vmul.f32 %v3147, 1.442695
    %v3313 = vpow.pop %v3312
    %v3314 = vmul.f32 %v3148, 1.442695
    %v3315 = vpow.pop %v3314
    %v3316 = vmul.f32 %v3149, 1.442695
    %v3317 = vpow.pop %v3316
    %v3318 = vmul.f32 %v3150, 1.442695
    %v3319 = vpow.pop %v3318
    %v3320 = vmul.f32 %v3151, 1.442695
    %v3321 = vpow.pop %v3320
    %v3322 = vmul.f32 %v3152, 1.442695
    %v3323 = vpow.pop %v3322
    %v3324 = vmul.f32 %v3153, 1.442695
    %v3325 = vpow.pop %v3324
    %v3326 = vmul.f32 %v3154, 1.442695
    %v3327 = vpow.pop %v3326
    %v3328 = vmul.f32 %v3155, 1.442695
    %v3329 = vpow.pop %v3328
    %v3330 = vmul.f32 %v3156, 1.442695
    %v3331 = vpow.pop %v3330
    %v3332 = vmul.f32 %v3157, 1.442695
    %v3333 = vpow.pop %v3332
    %v3334 = vmul.f32 %v3158, 1.442695
    %v3335 = vpow.pop %v3334
    %v3336 = vmul.f32 %v3159, 1.442695
    %v3337 = vpow.pop %v3336
    %v3338 = vmul.f32 %v3160, 1.442695
    %v3339 = vpow.pop %v3338
    %v3340 = vmul.f32 %v3161, 1.442695
    %v3341 = vpow.pop %v3340
    %v3342 = vmul.f32 %v3162, 1.442695
    %v3343 = vpow.pop %v3342
    %v3344 = vmul.f32 %v3163, 1.442695
    %v3345 = vpow.pop %v3344
    %v3346 = vmul.f32 %v3164, 1.442695
    %v3347 = vpow.pop %v3346
    %v3348 = vmul.f32 %v3165, 1.442695
    %v3349 = vpow.pop %v3348
    %v3350 = vmul.f32 %v3166, 1.442695
    %v3351 = vpow.pop %v3350
    %v3352 = vmul.f32 %v3167, 1.442695
    %v3353 = vpow.pop %v3352
    %v3354 = vmul.f32 %v3168, 1.442695
    %v3355 = vpow.pop %v3354
    %v3356 = vmul.f32 %v3169, 1.442695
    %v3357 = vpow.pop %v3356
    %v3358 = vmul.f32 %v3170, 1.442695
    %v3359 = vpow.pop %v3358
    %v3360 = vmul.f32 %v3171, 1.442695
    %v3361 = vpow.pop %v3360
    %v3362 = vmul.f32 %v3172, 1.442695
    %v3363 = vpow.pop %v3362
    %v3364 = vmul.f32 %v3173, 1.442695
    %v3365 = vpow.pop %v3364
    %v3366 = vmul.f32 %v3174, 1.442695
    %v3367 = vpow.pop %v3366
    %v3368 = vmul.f32 %v3175, 1.442695
    %v3369 = vpow.pop %v3368
    %v3370 = vmul.f32 %v3176, 1.442695
    %v3371 = vpow.pop %v3370
    %v3372 = vmul.f32 %v3177, 1.442695
    %v3373 = vpow.pop %v3372
    %v3374 = vmul.f32 %v3178, 1.442695
    %v3375 = vpow.pop %v3374
    %v3376 = vmul.f32 %v3179, 1.442695
    %v3377 = vpow.pop %v3376
    %v3378 = vmul.f32 %v3180, 1.442695
    %v3379 = vpow.pop %v3378
    %v3380 = vmul.f32 %v3181, 1.442695
    %v3381 = vpow.pop %v3380
    %v3382 = vmul.f32 %v3182, 1.442695
    %v3383 = vpow.pop %v3382
    %v3384 = vmul.f32 %v3183, 1.442695
    %v3385 = vpow.pop %v3384
    %v3386 = vmul.f32 %v3184, 1.442695
    %v3387 = vpow.pop %v3386
    %v3388 = vmul.f32 %v3185, 1.442695
    %v3389 = vpow.pop %v3388
    %v3390 = vmul.f32 %v3186, 1.442695
    %v3391 = vpow.pop %v3390
    %v3392 = vmul.f32 %v3187, 1.442695
    %v3393 = vpow.pop %v3392
    %v3394 = vmul.f32 %v3188, 1.442695
    %v3395 = vpow.pop %v3394
    %v3396 = vmul.f32 %v3189, 1.442695
    %v3397 = vpow.pop %v3396
    %v3398 = vmul.f32 %v3190, 1.442695
    %v3399 = vpow.pop %v3398
    %v3400 = vmul.f32 %v3191, 1.442695
    %v3401 = vpow.pop %v3400
    %v3402 = vmul.f32 %v3192, 1.442695
    %v3403 = vpow.pop %v3402
    %v3404 = vmul.f32 %v3193, 1.442695
    %v3405 = vpow.pop %v3404
    %v3406 = vmul.f32 %v3194, 1.442695
    %v3407 = vpow.pop %v3406
    %v3408 = vmul.f32 %v3195, 1.442695
    %v3409 = vpow.pop %v3408
    %v3410 = vmul.f32 %v3196, 1.442695
    %v3411 = vpow.pop %v3410
    %v3412 = vmul.f32 %v3197, 1.442695
    %v3413 = vpow.pop %v3412
    %v3414 = vmul.f32 %v3198, 1.442695
    %v3415 = vpow.pop %v3414
    %v3416 = vmul.f32 %v3199, 1.442695
    %v3417 = vpow.pop %v3416
    %v3418 = vmul.f32 %v3200, 1.442695
    %v3419 = vpow.pop %v3418
    %v3420 = vmul.f32 %v3201, 1.442695
    %v3421 = vpow.pop %v3420
    %v3422 = vmul.f32 %v3202, 1.442695
    %v3423 = vpow.pop %v3422
    %v3424 = vmul.f32 %v3203, 1.442695
    %v3425 = vpow.pop %v3424
    %v3426 = vmul.f32 %v3204, 1.442695
    %v3427 = vpow.pop %v3426
    %v3428 = vmul.f32 %v3205, 1.442695
    %v3429 = vpow.pop %v3428
    %v3430 = vmul.f32 %v3206, 1.442695
    %v3431 = vpow.pop %v3430
    %v3432 = vmul.f32 %v3207, 1.442695
    %v3433 = vpow.pop %v3432
    %v3434 = vmul.f32 %v3208, 1.442695
    %v3435 = vpow.pop %v3434
    %v3436 = vmul.f32 %v3209, 1.442695
    %v3437 = vpow.pop %v3436
    %v3438 = vmul.f32 %v3210, 1.442695
    %v3439 = vpow.pop %v3438
    %v3440 = vmul.f32 %v3211, 1.442695
    %v3441 = vpow.pop %v3440
    %v3442 = vmul.f32 %v3212, 1.442695
    %v3443 = vpow.pop %v3442
    %v3444 = vmul.f32 %v3213, 1.442695
    %v3445 = vpow.pop %v3444
    %v3446 = vmul.f32 %v3214, 1.442695
    %v3447 = vpow.pop %v3446
    %v3448 = vmul.f32 %v3215, 1.442695
    %v3449 = vpow.pop %v3448
    %v3450 = vmul.f32 %v3216, 1.442695
    %v3451 = vpow.pop %v3450
    %v3452 = vmul.f32 %v3217, 1.442695
    %v3453 = vpow.pop %v3452
    %v3454 = vmul.f32 %v3218, 1.442695
    %v3455 = vpow.pop %v3454
    %v3456 = vmul.f32 %v3219, 1.442695
    %v3457 = vpow.pop %v3456
    %v3458 = vmul.f32 %v3220, 1.442695
    %v3459 = vpow.pop %v3458
    %v3460 = vmul.f32 %v3221, 1.442695
    %v3461 = vpow.pop %v3460
    %v3462 = vmul.f32 %v3222, 1.442695
    %v3463 = vpow.pop %v3462
    %v3464 = vmul.f32 %v3223, 1.442695
    %v3465 = vpow.pop %v3464
    %v3466 = vmul.f32 %v3224, 1.442695
    %v3467 = vpow.pop %v3466
    %v3468 = vmul.f32 %v3225, 1.442695
    %v3469 = vpow.pop %v3468
    %v3470 = vmul.f32 %v3226, 1.442695
    %v3471 = vpow.pop %v3470
    %v3472 = vmul.f32 %v3227, 1.442695
    %v3473 = vpow.pop %v3472
    %v3474 = vmul.f32 %v3228, 1.442695
    %v3475 = vpow.pop %v3474
    %v3476 = vmul.f32 %v3229, 1.442695
    %v3477 = vpow.pop %v3476
    %v3478 = vmul.f32 %v3230, 1.442695
    %v3479 = vpow.pop %v3478
    %v3480 = vmul.f32 %v3231, 1.442695
    %v3481 = vpow.pop %v3480
    %v3482 = vmul.f32 %v3232, 1.442695
    %v3483 = vpow.pop %v3482
    %v3484 = vmul.f32 %v3233, 1.442695
    %v3485 = vpow.pop %v3484
    %v3486 = vmul.f32 %v3234, 1.442695
    %v3487 = vpow.pop %v3486
    %v3488 = vmul.f32 %v3235, 1.442695
    %v3489 = vpow.pop %v3488
    %v3490 = vmul.f32 %v3236, 1.442695
    %v3491 = vpow.pop %v3490
    %v3492 = vmul.f32 %v3237, 1.442695
    %v3493 = vpow.pop %v3492
    %v3494 = vld [vmem:[%s3] sm:$0xff]
    %v3496 = vlaneseq
    %v3497 = vshrl.u32 %v3496, 7
    %v3498 = vsub.s32 0, %v3497
    %v3499 = vrot.slane %v3494, %v3498
    %3501 = vbcast.lane.b32.xlu0 %v3499, 256
    %v3502 = vpop.permute.xlu0 %3501
    %s3504 = sor.u32 256, 8
    %3505 = vbcast.lane.b32.xlu0 %v3499, %s3504
    %v3506 = vpop.permute.xlu0 %3505
    %s3508 = sor.u32 256, 16
    %3509 = vbcast.lane.b32.xlu0 %v3499, %s3508
    %v3510 = vpop.permute.xlu0 %3509
    %s3512 = sor.u32 256, 24
    %3513 = vbcast.lane.b32.xlu0 %v3499, %s3512
    %v3514 = vpop.permute.xlu0 %3513
    %s3516 = sor.u32 256, 32
    %3517 = vbcast.lane.b32.xlu0 %v3499, %s3516
    %v3518 = vpop.permute.xlu0 %3517
    %s3520 = sor.u32 256, 40
    %3521 = vbcast.lane.b32.xlu0 %v3499, %s3520
    %v3522 = vpop.permute.xlu0 %3521
    %s3524 = sor.u32 256, 48
    %3525 = vbcast.lane.b32.xlu0 %v3499, %s3524
    %v3526 = vpop.permute.xlu0 %3525
    %s3528 = sor.u32 256, 56
    %3529 = vbcast.lane.b32.xlu0 %v3499, %s3528
    %v3530 = vpop.permute.xlu0 %3529
    %s3532 = sor.u32 256, 64
    %3533 = vbcast.lane.b32.xlu0 %v3499, %s3532
    %v3534 = vpop.permute.xlu0 %3533
    %s3536 = sor.u32 256, 72
    %3537 = vbcast.lane.b32.xlu0 %v3499, %s3536
    %v3538 = vpop.permute.xlu0 %3537
    %s3540 = sor.u32 256, 80
    %3541 = vbcast.lane.b32.xlu0 %v3499, %s3540
    %v3542 = vpop.permute.xlu0 %3541
    %s3544 = sor.u32 256, 88
    %3545 = vbcast.lane.b32.xlu0 %v3499, %s3544
    %v3546 = vpop.permute.xlu0 %3545
    %s3548 = sor.u32 256, 96
    %3549 = vbcast.lane.b32.xlu0 %v3499, %s3548
    %v3550 = vpop.permute.xlu0 %3549
    %s3552 = sor.u32 256, 104
    %3553 = vbcast.lane.b32.xlu0 %v3499, %s3552
    %v3554 = vpop.permute.xlu0 %3553
    %s3556 = sor.u32 256, 112
    %3557 = vbcast.lane.b32.xlu0 %v3499, %s3556
    %v3558 = vpop.permute.xlu0 %3557
    %s3560 = sor.u32 256, 120
    %3561 = vbcast.lane.b32.xlu0 %v3499, %s3560
    %v3562 = vpop.permute.xlu0 %3561
    %v3563 = vlaneseq
    %v3564 = vshrl.u32 %v3563, 7
    %v3565 = vsub.s32 1, %v3564
    %v3566 = vrot.slane %v3494, %v3565
    %3568 = vbcast.lane.b32.xlu0 %v3566, 256
    %v3569 = vpop.permute.xlu0 %3568
    %s3571 = sor.u32 256, 8
    %3572 = vbcast.lane.b32.xlu0 %v3566, %s3571
    %v3573 = vpop.permute.xlu0 %3572
    %s3575 = sor.u32 256, 16
    %3576 = vbcast.lane.b32.xlu0 %v3566, %s3575
    %v3577 = vpop.permute.xlu0 %3576
    %s3579 = sor.u32 256, 24
    %3580 = vbcast.lane.b32.xlu0 %v3566, %s3579
    %v3581 = vpop.permute.xlu0 %3580
    %s3583 = sor.u32 256, 32
    %3584 = vbcast.lane.b32.xlu0 %v3566, %s3583
    %v3585 = vpop.permute.xlu0 %3584
    %s3587 = sor.u32 256, 40
    %3588 = vbcast.lane.b32.xlu0 %v3566, %s3587
    %v3589 = vpop.permute.xlu0 %3588
    %s3591 = sor.u32 256, 48
    %3592 = vbcast.lane.b32.xlu0 %v3566, %s3591
    %v3593 = vpop.permute.xlu0 %3592
    %s3595 = sor.u32 256, 56
    %3596 = vbcast.lane.b32.xlu0 %v3566, %s3595
    %v3597 = vpop.permute.xlu0 %3596
    %s3599 = sor.u32 256, 64
    %3600 = vbcast.lane.b32.xlu0 %v3566, %s3599
    %v3601 = vpop.permute.xlu0 %3600
    %s3603 = sor.u32 256, 72
    %3604 = vbcast.lane.b32.xlu0 %v3566, %s3603
    %v3605 = vpop.permute.xlu0 %3604
    %s3607 = sor.u32 256, 80
    %3608 = vbcast.lane.b32.xlu0 %v3566, %s3607
    %v3609 = vpop.permute.xlu0 %3608
    %s3611 = sor.u32 256, 88
    %3612 = vbcast.lane.b32.xlu0 %v3566, %s3611
    %v3613 = vpop.permute.xlu0 %3612
    %s3615 = sor.u32 256, 96
    %3616 = vbcast.lane.b32.xlu0 %v3566, %s3615
    %v3617 = vpop.permute.xlu0 %3616
    %s3619 = sor.u32 256, 104
    %3620 = vbcast.lane.b32.xlu0 %v3566, %s3619
    %v3621 = vpop.permute.xlu0 %3620
    %s3623 = sor.u32 256, 112
    %3624 = vbcast.lane.b32.xlu0 %v3566, %s3623
    %v3625 = vpop.permute.xlu0 %3624
    %s3627 = sor.u32 256, 120
    %3628 = vbcast.lane.b32.xlu0 %v3566, %s3627
    %v3629 = vpop.permute.xlu0 %3628
    %v3630 = vlaneseq
    %v3631 = vshrl.u32 %v3630, 7
    %v3632 = vsub.s32 2, %v3631
    %v3633 = vrot.slane %v3494, %v3632
    %3635 = vbcast.lane.b32.xlu0 %v3633, 256
    %v3636 = vpop.permute.xlu0 %3635
    %s3638 = sor.u32 256, 8
    %3639 = vbcast.lane.b32.xlu0 %v3633, %s3638
    %v3640 = vpop.permute.xlu0 %3639
    %s3642 = sor.u32 256, 16
    %3643 = vbcast.lane.b32.xlu0 %v3633, %s3642
    %v3644 = vpop.permute.xlu0 %3643
    %s3646 = sor.u32 256, 24
    %3647 = vbcast.lane.b32.xlu0 %v3633, %s3646
    %v3648 = vpop.permute.xlu0 %3647
    %s3650 = sor.u32 256, 32
    %3651 = vbcast.lane.b32.xlu0 %v3633, %s3650
    %v3652 = vpop.permute.xlu0 %3651
    %s3654 = sor.u32 256, 40
    %3655 = vbcast.lane.b32.xlu0 %v3633, %s3654
    %v3656 = vpop.permute.xlu0 %3655
    %s3658 = sor.u32 256, 48
    %3659 = vbcast.lane.b32.xlu0 %v3633, %s3658
    %v3660 = vpop.permute.xlu0 %3659
    %s3662 = sor.u32 256, 56
    %3663 = vbcast.lane.b32.xlu0 %v3633, %s3662
    %v3664 = vpop.permute.xlu0 %3663
    %s3666 = sor.u32 256, 64
    %3667 = vbcast.lane.b32.xlu0 %v3633, %s3666
    %v3668 = vpop.permute.xlu0 %3667
    %s3670 = sor.u32 256, 72
    %3671 = vbcast.lane.b32.xlu0 %v3633, %s3670
    %v3672 = vpop.permute.xlu0 %3671
    %s3674 = sor.u32 256, 80
    %3675 = vbcast.lane.b32.xlu0 %v3633, %s3674
    %v3676 = vpop.permute.xlu0 %3675
    %s3678 = sor.u32 256, 88
    %3679 = vbcast.lane.b32.xlu0 %v3633, %s3678
    %v3680 = vpop.permute.xlu0 %3679
    %s3682 = sor.u32 256, 96
    %3683 = vbcast.lane.b32.xlu0 %v3633, %s3682
    %v3684 = vpop.permute.xlu0 %3683
    %s3686 = sor.u32 256, 104
    %3687 = vbcast.lane.b32.xlu0 %v3633, %s3686
    %v3688 = vpop.permute.xlu0 %3687
    %s3690 = sor.u32 256, 112
    %3691 = vbcast.lane.b32.xlu0 %v3633, %s3690
    %v3692 = vpop.permute.xlu0 %3691
    %s3694 = sor.u32 256, 120
    %3695 = vbcast.lane.b32.xlu0 %v3633, %s3694
    %v3696 = vpop.permute.xlu0 %3695
    %v3697 = vlaneseq
    %v3698 = vshrl.u32 %v3697, 7
    %v3699 = vsub.s32 3, %v3698
    %v3700 = vrot.slane %v3494, %v3699
    %3702 = vbcast.lane.b32.xlu0 %v3700, 256
    %v3703 = vpop.permute.xlu0 %3702
    %s3705 = sor.u32 256, 8
    %3706 = vbcast.lane.b32.xlu0 %v3700, %s3705
    %v3707 = vpop.permute.xlu0 %3706
    %s3709 = sor.u32 256, 16
    %3710 = vbcast.lane.b32.xlu0 %v3700, %s3709
    %v3711 = vpop.permute.xlu0 %3710
    %s3713 = sor.u32 256, 24
    %3714 = vbcast.lane.b32.xlu0 %v3700, %s3713
    %v3715 = vpop.permute.xlu0 %3714
    %s3717 = sor.u32 256, 32
    %3718 = vbcast.lane.b32.xlu0 %v3700, %s3717
    %v3719 = vpop.permute.xlu0 %3718
    %s3721 = sor.u32 256, 40
    %3722 = vbcast.lane.b32.xlu0 %v3700, %s3721
    %v3723 = vpop.permute.xlu0 %3722
    %s3725 = sor.u32 256, 48
    %3726 = vbcast.lane.b32.xlu0 %v3700, %s3725
    %v3727 = vpop.permute.xlu0 %3726
    %s3729 = sor.u32 256, 56
    %3730 = vbcast.lane.b32.xlu0 %v3700, %s3729
    %v3731 = vpop.permute.xlu0 %3730
    %s3733 = sor.u32 256, 64
    %3734 = vbcast.lane.b32.xlu0 %v3700, %s3733
    %v3735 = vpop.permute.xlu0 %3734
    %s3737 = sor.u32 256, 72
    %3738 = vbcast.lane.b32.xlu0 %v3700, %s3737
    %v3739 = vpop.permute.xlu0 %3738
    %s3741 = sor.u32 256, 80
    %3742 = vbcast.lane.b32.xlu0 %v3700, %s3741
    %v3743 = vpop.permute.xlu0 %3742
    %s3745 = sor.u32 256, 88
    %3746 = vbcast.lane.b32.xlu0 %v3700, %s3745
    %v3747 = vpop.permute.xlu0 %3746
    %s3749 = sor.u32 256, 96
    %3750 = vbcast.lane.b32.xlu0 %v3700, %s3749
    %v3751 = vpop.permute.xlu0 %3750
    %s3753 = sor.u32 256, 104
    %3754 = vbcast.lane.b32.xlu0 %v3700, %s3753
    %v3755 = vpop.permute.xlu0 %3754
    %s3757 = sor.u32 256, 112
    %3758 = vbcast.lane.b32.xlu0 %v3700, %s3757
    %v3759 = vpop.permute.xlu0 %3758
    %s3761 = sor.u32 256, 120
    %3762 = vbcast.lane.b32.xlu0 %v3700, %s3761
    %v3763 = vpop.permute.xlu0 %3762
    %v3764 = vlaneseq
    %v3765 = vshrl.u32 %v3764, 7
    %v3766 = vsub.s32 4, %v3765
    %v3767 = vrot.slane %v3494, %v3766
    %3769 = vbcast.lane.b32.xlu0 %v3767, 256
    %v3770 = vpop.permute.xlu0 %3769
    %s3772 = sor.u32 256, 8
    %3773 = vbcast.lane.b32.xlu0 %v3767, %s3772
    %v3774 = vpop.permute.xlu0 %3773
    %s3776 = sor.u32 256, 16
    %3777 = vbcast.lane.b32.xlu0 %v3767, %s3776
    %v3778 = vpop.permute.xlu0 %3777
    %s3780 = sor.u32 256, 24
    %3781 = vbcast.lane.b32.xlu0 %v3767, %s3780
    %v3782 = vpop.permute.xlu0 %3781
    %s3784 = sor.u32 256, 32
    %3785 = vbcast.lane.b32.xlu0 %v3767, %s3784
    %v3786 = vpop.permute.xlu0 %3785
    %s3788 = sor.u32 256, 40
    %3789 = vbcast.lane.b32.xlu0 %v3767, %s3788
    %v3790 = vpop.permute.xlu0 %3789
    %s3792 = sor.u32 256, 48
    %3793 = vbcast.lane.b32.xlu0 %v3767, %s3792
    %v3794 = vpop.permute.xlu0 %3793
    %s3796 = sor.u32 256, 56
    %3797 = vbcast.lane.b32.xlu0 %v3767, %s3796
    %v3798 = vpop.permute.xlu0 %3797
    %s3800 = sor.u32 256, 64
    %3801 = vbcast.lane.b32.xlu0 %v3767, %s3800
    %v3802 = vpop.permute.xlu0 %3801
    %s3804 = sor.u32 256, 72
    %3805 = vbcast.lane.b32.xlu0 %v3767, %s3804
    %v3806 = vpop.permute.xlu0 %3805
    %s3808 = sor.u32 256, 80
    %3809 = vbcast.lane.b32.xlu0 %v3767, %s3808
    %v3810 = vpop.permute.xlu0 %3809
    %s3812 = sor.u32 256, 88
    %3813 = vbcast.lane.b32.xlu0 %v3767, %s3812
    %v3814 = vpop.permute.xlu0 %3813
    %s3816 = sor.u32 256, 96
    %3817 = vbcast.lane.b32.xlu0 %v3767, %s3816
    %v3818 = vpop.permute.xlu0 %3817
    %s3820 = sor.u32 256, 104
    %3821 = vbcast.lane.b32.xlu0 %v3767, %s3820
    %v3822 = vpop.permute.xlu0 %3821
    %s3824 = sor.u32 256, 112
    %3825 = vbcast.lane.b32.xlu0 %v3767, %s3824
    %v3826 = vpop.permute.xlu0 %3825
    %s3828 = sor.u32 256, 120
    %3829 = vbcast.lane.b32.xlu0 %v3767, %s3828
    %v3830 = vpop.permute.xlu0 %3829
    %v3831 = vlaneseq
    %v3832 = vshrl.u32 %v3831, 7
    %v3833 = vsub.s32 5, %v3832
    %v3834 = vrot.slane %v3494, %v3833
    %3836 = vbcast.lane.b32.xlu0 %v3834, 256
    %v3837 = vpop.permute.xlu0 %3836
    %s3839 = sor.u32 256, 8
    %3840 = vbcast.lane.b32.xlu0 %v3834, %s3839
    %v3841 = vpop.permute.xlu0 %3840
    %s3843 = sor.u32 256, 16
    %3844 = vbcast.lane.b32.xlu0 %v3834, %s3843
    %v3845 = vpop.permute.xlu0 %3844
    %s3847 = sor.u32 256, 24
    %3848 = vbcast.lane.b32.xlu0 %v3834, %s3847
    %v3849 = vpop.permute.xlu0 %3848
    %s3851 = sor.u32 256, 32
    %3852 = vbcast.lane.b32.xlu0 %v3834, %s3851
    %v3853 = vpop.permute.xlu0 %3852
    %s3855 = sor.u32 256, 40
    %3856 = vbcast.lane.b32.xlu0 %v3834, %s3855
    %v3857 = vpop.permute.xlu0 %3856
    %s3859 = sor.u32 256, 48
    %3860 = vbcast.lane.b32.xlu0 %v3834, %s3859
    %v3861 = vpop.permute.xlu0 %3860
    %s3863 = sor.u32 256, 56
    %3864 = vbcast.lane.b32.xlu0 %v3834, %s3863
    %v3865 = vpop.permute.xlu0 %3864
    %s3867 = sor.u32 256, 64
    %3868 = vbcast.lane.b32.xlu0 %v3834, %s3867
    %v3869 = vpop.permute.xlu0 %3868
    %s3871 = sor.u32 256, 72
    %3872 = vbcast.lane.b32.xlu0 %v3834, %s3871
    %v3873 = vpop.permute.xlu0 %3872
    %s3875 = sor.u32 256, 80
    %3876 = vbcast.lane.b32.xlu0 %v3834, %s3875
    %v3877 = vpop.permute.xlu0 %3876
    %s3879 = sor.u32 256, 88
    %3880 = vbcast.lane.b32.xlu0 %v3834, %s3879
    %v3881 = vpop.permute.xlu0 %3880
    %s3883 = sor.u32 256, 96
    %3884 = vbcast.lane.b32.xlu0 %v3834, %s3883
    %v3885 = vpop.permute.xlu0 %3884
    %s3887 = sor.u32 256, 104
    %3888 = vbcast.lane.b32.xlu0 %v3834, %s3887
    %v3889 = vpop.permute.xlu0 %3888
    %s3891 = sor.u32 256, 112
    %3892 = vbcast.lane.b32.xlu0 %v3834, %s3891
    %v3893 = vpop.permute.xlu0 %3892
    %s3895 = sor.u32 256, 120
    %3896 = vbcast.lane.b32.xlu0 %v3834, %s3895
    %v3897 = vpop.permute.xlu0 %3896
    %v3898 = vlaneseq
    %v3899 = vshrl.u32 %v3898, 7
    %v3900 = vsub.s32 6, %v3899
    %v3901 = vrot.slane %v3494, %v3900
    %3903 = vbcast.lane.b32.xlu0 %v3901, 256
    %v3904 = vpop.permute.xlu0 %3903
    %s3906 = sor.u32 256, 8
    %3907 = vbcast.lane.b32.xlu0 %v3901, %s3906
    %v3908 = vpop.permute.xlu0 %3907
    %s3910 = sor.u32 256, 16
    %3911 = vbcast.lane.b32.xlu0 %v3901, %s3910
    %v3912 = vpop.permute.xlu0 %3911
    %s3914 = sor.u32 256, 24
    %3915 = vbcast.lane.b32.xlu0 %v3901, %s3914
    %v3916 = vpop.permute.xlu0 %3915
    %s3918 = sor.u32 256, 32
    %3919 = vbcast.lane.b32.xlu0 %v3901, %s3918
    %v3920 = vpop.permute.xlu0 %3919
    %s3922 = sor.u32 256, 40
    %3923 = vbcast.lane.b32.xlu0 %v3901, %s3922
    %v3924 = vpop.permute.xlu0 %3923
    %s3926 = sor.u32 256, 48
    %3927 = vbcast.lane.b32.xlu0 %v3901, %s3926
    %v3928 = vpop.permute.xlu0 %3927
    %s3930 = sor.u32 256, 56
    %3931 = vbcast.lane.b32.xlu0 %v3901, %s3930
    %v3932 = vpop.permute.xlu0 %3931
    %s3934 = sor.u32 256, 64
    %3935 = vbcast.lane.b32.xlu0 %v3901, %s3934
    %v3936 = vpop.permute.xlu0 %3935
    %s3938 = sor.u32 256, 72
    %3939 = vbcast.lane.b32.xlu0 %v3901, %s3938
    %v3940 = vpop.permute.xlu0 %3939
    %s3942 = sor.u32 256, 80
    %3943 = vbcast.lane.b32.xlu0 %v3901, %s3942
    %v3944 = vpop.permute.xlu0 %3943
    %s3946 = sor.u32 256, 88
    %3947 = vbcast.lane.b32.xlu0 %v3901, %s3946
    %v3948 = vpop.permute.xlu0 %3947
    %s3950 = sor.u32 256, 96
    %3951 = vbcast.lane.b32.xlu0 %v3901, %s3950
    %v3952 = vpop.permute.xlu0 %3951
    %s3954 = sor.u32 256, 104
    %3955 = vbcast.lane.b32.xlu0 %v3901, %s3954
    %v3956 = vpop.permute.xlu0 %3955
    %s3958 = sor.u32 256, 112
    %3959 = vbcast.lane.b32.xlu0 %v3901, %s3958
    %v3960 = vpop.permute.xlu0 %3959
    %s3962 = sor.u32 256, 120
    %3963 = vbcast.lane.b32.xlu0 %v3901, %s3962
    %v3964 = vpop.permute.xlu0 %3963
    %v3965 = vlaneseq
    %v3966 = vshrl.u32 %v3965, 7
    %v3967 = vsub.s32 7, %v3966
    %v3968 = vrot.slane %v3494, %v3967
    %3970 = vbcast.lane.b32.xlu0 %v3968, 256
    %v3971 = vpop.permute.xlu0 %3970
    %s3973 = sor.u32 256, 8
    %3974 = vbcast.lane.b32.xlu0 %v3968, %s3973
    %v3975 = vpop.permute.xlu0 %3974
    %s3977 = sor.u32 256, 16
    %3978 = vbcast.lane.b32.xlu0 %v3968, %s3977
    %v3979 = vpop.permute.xlu0 %3978
    %s3981 = sor.u32 256, 24
    %3982 = vbcast.lane.b32.xlu0 %v3968, %s3981
    %v3983 = vpop.permute.xlu0 %3982
    %s3985 = sor.u32 256, 32
    %3986 = vbcast.lane.b32.xlu0 %v3968, %s3985
    %v3987 = vpop.permute.xlu0 %3986
    %s3989 = sor.u32 256, 40
    %3990 = vbcast.lane.b32.xlu0 %v3968, %s3989
    %v3991 = vpop.permute.xlu0 %3990
    %s3993 = sor.u32 256, 48
    %3994 = vbcast.lane.b32.xlu0 %v3968, %s3993
    %v3995 = vpop.permute.xlu0 %3994
    %s3997 = sor.u32 256, 56
    %3998 = vbcast.lane.b32.xlu0 %v3968, %s3997
    %v3999 = vpop.permute.xlu0 %3998
    %s4001 = sor.u32 256, 64
    %4002 = vbcast.lane.b32.xlu0 %v3968, %s4001
    %v4003 = vpop.permute.xlu0 %4002
    %s4005 = sor.u32 256, 72
    %4006 = vbcast.lane.b32.xlu0 %v3968, %s4005
    %v4007 = vpop.permute.xlu0 %4006
    %s4009 = sor.u32 256, 80
    %4010 = vbcast.lane.b32.xlu0 %v3968, %s4009
    %v4011 = vpop.permute.xlu0 %4010
    %s4013 = sor.u32 256, 88
    %4014 = vbcast.lane.b32.xlu0 %v3968, %s4013
    %v4015 = vpop.permute.xlu0 %4014
    %s4017 = sor.u32 256, 96
    %4018 = vbcast.lane.b32.xlu0 %v3968, %s4017
    %v4019 = vpop.permute.xlu0 %4018
    %s4021 = sor.u32 256, 104
    %4022 = vbcast.lane.b32.xlu0 %v3968, %s4021
    %v4023 = vpop.permute.xlu0 %4022
    %s4025 = sor.u32 256, 112
    %4026 = vbcast.lane.b32.xlu0 %v3968, %s4025
    %v4027 = vpop.permute.xlu0 %4026
    %s4029 = sor.u32 256, 120
    %4030 = vbcast.lane.b32.xlu0 %v3968, %s4029
    %v4031 = vpop.permute.xlu0 %4030
    %v4160 = vmul.f32 %v3239, %v3502
    %v4161 = vmul.f32 %v3241, %v3506
    %v4162 = vmul.f32 %v3243, %v3510
    %v4163 = vmul.f32 %v3245, %v3514
    %v4164 = vmul.f32 %v3247, %v3518
    %v4165 = vmul.f32 %v3249, %v3522
    %v4166 = vmul.f32 %v3251, %v3526
    %v4167 = vmul.f32 %v3253, %v3530
    %v4168 = vmul.f32 %v3255, %v3534
    %v4169 = vmul.f32 %v3257, %v3538
    %v4170 = vmul.f32 %v3259, %v3542
    %v4171 = vmul.f32 %v3261, %v3546
    %v4172 = vmul.f32 %v3263, %v3550
    %v4173 = vmul.f32 %v3265, %v3554
    %v4174 = vmul.f32 %v3267, %v3558
    %v4175 = vmul.f32 %v3269, %v3562
    %v4176 = vmul.f32 %v3271, %v3569
    %v4177 = vmul.f32 %v3273, %v3573
    %v4178 = vmul.f32 %v3275, %v3577
    %v4179 = vmul.f32 %v3277, %v3581
    %v4180 = vmul.f32 %v3279, %v3585
    %v4181 = vmul.f32 %v3281, %v3589
    %v4182 = vmul.f32 %v3283, %v3593
    %v4183 = vmul.f32 %v3285, %v3597
    %v4184 = vmul.f32 %v3287, %v3601
    %v4185 = vmul.f32 %v3289, %v3605
    %v4186 = vmul.f32 %v3291, %v3609
    %v4187 = vmul.f32 %v3293, %v3613
    %v4188 = vmul.f32 %v3295, %v3617
    %v4189 = vmul.f32 %v3297, %v3621
    %v4190 = vmul.f32 %v3299, %v3625
    %v4191 = vmul.f32 %v3301, %v3629
    %v4192 = vmul.f32 %v3303, %v3636
    %v4193 = vmul.f32 %v3305, %v3640
    %v4194 = vmul.f32 %v3307, %v3644
    %v4195 = vmul.f32 %v3309, %v3648
    %v4196 = vmul.f32 %v3311, %v3652
    %v4197 = vmul.f32 %v3313, %v3656
    %v4198 = vmul.f32 %v3315, %v3660
    %v4199 = vmul.f32 %v3317, %v3664
    %v4200 = vmul.f32 %v3319, %v3668
    %v4201 = vmul.f32 %v3321, %v3672
    %v4202 = vmul.f32 %v3323, %v3676
    %v4203 = vmul.f32 %v3325, %v3680
    %v4204 = vmul.f32 %v3327, %v3684
    %v4205 = vmul.f32 %v3329, %v3688
    %v4206 = vmul.f32 %v3331, %v3692
    %v4207 = vmul.f32 %v3333, %v3696
    %v4208 = vmul.f32 %v3335, %v3703
    %v4209 = vmul.f32 %v3337, %v3707
    %v4210 = vmul.f32 %v3339, %v3711
    %v4211 = vmul.f32 %v3341, %v3715
    %v4212 = vmul.f32 %v3343, %v3719
    %v4213 = vmul.f32 %v3345, %v3723
    %v4214 = vmul.f32 %v3347, %v3727
    %v4215 = vmul.f32 %v3349, %v3731
    %v4216 = vmul.f32 %v3351, %v3735
    %v4217 = vmul.f32 %v3353, %v3739
    %v4218 = vmul.f32 %v3355, %v3743
    %v4219 = vmul.f32 %v3357, %v3747
    %v4220 = vmul.f32 %v3359, %v3751
    %v4221 = vmul.f32 %v3361, %v3755
    %v4222 = vmul.f32 %v3363, %v3759
    %v4223 = vmul.f32 %v3365, %v3763
    %v4224 = vmul.f32 %v3367, %v3770
    %v4225 = vmul.f32 %v3369, %v3774
    %v4226 = vmul.f32 %v3371, %v3778
    %v4227 = vmul.f32 %v3373, %v3782
    %v4228 = vmul.f32 %v3375, %v3786
    %v4229 = vmul.f32 %v3377, %v3790
    %v4230 = vmul.f32 %v3379, %v3794
    %v4231 = vmul.f32 %v3381, %v3798
    %v4232 = vmul.f32 %v3383, %v3802
    %v4233 = vmul.f32 %v3385, %v3806
    %v4234 = vmul.f32 %v3387, %v3810
    %v4235 = vmul.f32 %v3389, %v3814
    %v4236 = vmul.f32 %v3391, %v3818
    %v4237 = vmul.f32 %v3393, %v3822
    %v4238 = vmul.f32 %v3395, %v3826
    %v4239 = vmul.f32 %v3397, %v3830
    %v4240 = vmul.f32 %v3399, %v3837
    %v4241 = vmul.f32 %v3401, %v3841
    %v4242 = vmul.f32 %v3403, %v3845
    %v4243 = vmul.f32 %v3405, %v3849
    %v4244 = vmul.f32 %v3407, %v3853
    %v4245 = vmul.f32 %v3409, %v3857
    %v4246 = vmul.f32 %v3411, %v3861
    %v4247 = vmul.f32 %v3413, %v3865
    %v4248 = vmul.f32 %v3415, %v3869
    %v4249 = vmul.f32 %v3417, %v3873
    %v4250 = vmul.f32 %v3419, %v3877
    %v4251 = vmul.f32 %v3421, %v3881
    %v4252 = vmul.f32 %v3423, %v3885
    %v4253 = vmul.f32 %v3425, %v3889
    %v4254 = vmul.f32 %v3427, %v3893
    %v4255 = vmul.f32 %v3429, %v3897
    %v4256 = vmul.f32 %v3431, %v3904
    %v4257 = vmul.f32 %v3433, %v3908
    %v4258 = vmul.f32 %v3435, %v3912
    %v4259 = vmul.f32 %v3437, %v3916
    %v4260 = vmul.f32 %v3439, %v3920
    %v4261 = vmul.f32 %v3441, %v3924
    %v4262 = vmul.f32 %v3443, %v3928
    %v4263 = vmul.f32 %v3445, %v3932
    %v4264 = vmul.f32 %v3447, %v3936
    %v4265 = vmul.f32 %v3449, %v3940
    %v4266 = vmul.f32 %v3451, %v3944
    %v4267 = vmul.f32 %v3453, %v3948
    %v4268 = vmul.f32 %v3455, %v3952
    %v4269 = vmul.f32 %v3457, %v3956
    %v4270 = vmul.f32 %v3459, %v3960
    %v4271 = vmul.f32 %v3461, %v3964
    %v4272 = vmul.f32 %v3463, %v3971
    %v4273 = vmul.f32 %v3465, %v3975
    %v4274 = vmul.f32 %v3467, %v3979
    %v4275 = vmul.f32 %v3469, %v3983
    %v4276 = vmul.f32 %v3471, %v3987
    %v4277 = vmul.f32 %v3473, %v3991
    %v4278 = vmul.f32 %v3475, %v3995
    %v4279 = vmul.f32 %v3477, %v3999
    %v4280 = vmul.f32 %v3479, %v4003
    %v4281 = vmul.f32 %v3481, %v4007
    %v4282 = vmul.f32 %v3483, %v4011
    %v4283 = vmul.f32 %v3485, %v4015
    %v4284 = vmul.f32 %v3487, %v4019
    %v4285 = vmul.f32 %v3489, %v4023
    %v4286 = vmul.f32 %v3491, %v4027
    %v4287 = vmul.f32 %v3493, %v4031
    %4416 = vset.pattern.permute.xlu0 0
    %4417 = vperm.xlu0 %4416, %v4160
    %v4418 = vpop.permute.xlu0 %4417
    %4419 = vset.pattern.permute.xlu0 0
    %4420 = vperm.xlu0 %4419, %v4161
    %v4421 = vpop.permute.xlu0 %4420
    %4422 = vset.pattern.permute.xlu0 0
    %4423 = vperm.xlu0 %4422, %v4162
    %v4424 = vpop.permute.xlu0 %4423
    %4425 = vset.pattern.permute.xlu0 0
    %4426 = vperm.xlu0 %4425, %v4163
    %v4427 = vpop.permute.xlu0 %4426
    %4428 = vset.pattern.permute.xlu0 0
    %4429 = vperm.xlu0 %4428, %v4164
    %v4430 = vpop.permute.xlu0 %4429
    %4431 = vset.pattern.permute.xlu0 0
    %4432 = vperm.xlu0 %4431, %v4165
    %v4433 = vpop.permute.xlu0 %4432
    %4434 = vset.pattern.permute.xlu0 0
    %4435 = vperm.xlu0 %4434, %v4166
    %v4436 = vpop.permute.xlu0 %4435
    %4437 = vset.pattern.permute.xlu0 0
    %4438 = vperm.xlu0 %4437, %v4167
    %v4439 = vpop.permute.xlu0 %4438
    %4440 = vset.pattern.permute.xlu0 0
    %4441 = vperm.xlu0 %4440, %v4168
    %v4442 = vpop.permute.xlu0 %4441
    %4443 = vset.pattern.permute.xlu0 0
    %4444 = vperm.xlu0 %4443, %v4169
    %v4445 = vpop.permute.xlu0 %4444
    %4446 = vset.pattern.permute.xlu0 0
    %4447 = vperm.xlu0 %4446, %v4170
    %v4448 = vpop.permute.xlu0 %4447
    %4449 = vset.pattern.permute.xlu0 0
    %4450 = vperm.xlu0 %4449, %v4171
    %v4451 = vpop.permute.xlu0 %4450
    %4452 = vset.pattern.permute.xlu0 0
    %4453 = vperm.xlu0 %4452, %v4172
    %v4454 = vpop.permute.xlu0 %4453
    %4455 = vset.pattern.permute.xlu0 0
    %4456 = vperm.xlu0 %4455, %v4173
    %v4457 = vpop.permute.xlu0 %4456
    %4458 = vset.pattern.permute.xlu0 0
    %4459 = vperm.xlu0 %4458, %v4174
    %v4460 = vpop.permute.xlu0 %4459
    %4461 = vset.pattern.permute.xlu0 0
    %4462 = vperm.xlu0 %4461, %v4175
    %v4463 = vpop.permute.xlu0 %4462
    %4464 = vset.pattern.permute.xlu0 0
    %4465 = vperm.xlu0 %4464, %v4176
    %v4466 = vpop.permute.xlu0 %4465
    %4467 = vset.pattern.permute.xlu0 0
    %4468 = vperm.xlu0 %4467, %v4177
    %v4469 = vpop.permute.xlu0 %4468
    %4470 = vset.pattern.permute.xlu0 0
    %4471 = vperm.xlu0 %4470, %v4178
    %v4472 = vpop.permute.xlu0 %4471
    %4473 = vset.pattern.permute.xlu0 0
    %4474 = vperm.xlu0 %4473, %v4179
    %v4475 = vpop.permute.xlu0 %4474
    %4476 = vset.pattern.permute.xlu0 0
    %4477 = vperm.xlu0 %4476, %v4180
    %v4478 = vpop.permute.xlu0 %4477
    %4479 = vset.pattern.permute.xlu0 0
    %4480 = vperm.xlu0 %4479, %v4181
    %v4481 = vpop.permute.xlu0 %4480
    %4482 = vset.pattern.permute.xlu0 0
    %4483 = vperm.xlu0 %4482, %v4182
    %v4484 = vpop.permute.xlu0 %4483
    %4485 = vset.pattern.permute.xlu0 0
    %4486 = vperm.xlu0 %4485, %v4183
    %v4487 = vpop.permute.xlu0 %4486
    %4488 = vset.pattern.permute.xlu0 0
    %4489 = vperm.xlu0 %4488, %v4184
    %v4490 = vpop.permute.xlu0 %4489
    %4491 = vset.pattern.permute.xlu0 0
    %4492 = vperm.xlu0 %4491, %v4185
    %v4493 = vpop.permute.xlu0 %4492
    %4494 = vset.pattern.permute.xlu0 0
    %4495 = vperm.xlu0 %4494, %v4186
    %v4496 = vpop.permute.xlu0 %4495
    %4497 = vset.pattern.permute.xlu0 0
    %4498 = vperm.xlu0 %4497, %v4187
    %v4499 = vpop.permute.xlu0 %4498
    %4500 = vset.pattern.permute.xlu0 0
    %4501 = vperm.xlu0 %4500, %v4188
    %v4502 = vpop.permute.xlu0 %4501
    %4503 = vset.pattern.permute.xlu0 0
    %4504 = vperm.xlu0 %4503, %v4189
    %v4505 = vpop.permute.xlu0 %4504
    %4506 = vset.pattern.permute.xlu0 0
    %4507 = vperm.xlu0 %4506, %v4190
    %v4508 = vpop.permute.xlu0 %4507
    %4509 = vset.pattern.permute.xlu0 0
    %4510 = vperm.xlu0 %4509, %v4191
    %v4511 = vpop.permute.xlu0 %4510
    %4512 = vset.pattern.permute.xlu0 0
    %4513 = vperm.xlu0 %4512, %v4192
    %v4514 = vpop.permute.xlu0 %4513
    %4515 = vset.pattern.permute.xlu0 0
    %4516 = vperm.xlu0 %4515, %v4193
    %v4517 = vpop.permute.xlu0 %4516
    %4518 = vset.pattern.permute.xlu0 0
    %4519 = vperm.xlu0 %4518, %v4194
    %v4520 = vpop.permute.xlu0 %4519
    %4521 = vset.pattern.permute.xlu0 0
    %4522 = vperm.xlu0 %4521, %v4195
    %v4523 = vpop.permute.xlu0 %4522
    %4524 = vset.pattern.permute.xlu0 0
    %4525 = vperm.xlu0 %4524, %v4196
    %v4526 = vpop.permute.xlu0 %4525
    %4527 = vset.pattern.permute.xlu0 0
    %4528 = vperm.xlu0 %4527, %v4197
    %v4529 = vpop.permute.xlu0 %4528
    %4530 = vset.pattern.permute.xlu0 0
    %4531 = vperm.xlu0 %4530, %v4198
    %v4532 = vpop.permute.xlu0 %4531
    %4533 = vset.pattern.permute.xlu0 0
    %4534 = vperm.xlu0 %4533, %v4199
    %v4535 = vpop.permute.xlu0 %4534
    %4536 = vset.pattern.permute.xlu0 0
    %4537 = vperm.xlu0 %4536, %v4200
    %v4538 = vpop.permute.xlu0 %4537
    %4539 = vset.pattern.permute.xlu0 0
    %4540 = vperm.xlu0 %4539, %v4201
    %v4541 = vpop.permute.xlu0 %4540
    %4542 = vset.pattern.permute.xlu0 0
    %4543 = vperm.xlu0 %4542, %v4202
    %v4544 = vpop.permute.xlu0 %4543
    %4545 = vset.pattern.permute.xlu0 0
    %4546 = vperm.xlu0 %4545, %v4203
    %v4547 = vpop.permute.xlu0 %4546
    %4548 = vset.pattern.permute.xlu0 0
    %4549 = vperm.xlu0 %4548, %v4204
    %v4550 = vpop.permute.xlu0 %4549
    %4551 = vset.pattern.permute.xlu0 0
    %4552 = vperm.xlu0 %4551, %v4205
    %v4553 = vpop.permute.xlu0 %4552
    %4554 = vset.pattern.permute.xlu0 0
    %4555 = vperm.xlu0 %4554, %v4206
    %v4556 = vpop.permute.xlu0 %4555
    %4557 = vset.pattern.permute.xlu0 0
    %4558 = vperm.xlu0 %4557, %v4207
    %v4559 = vpop.permute.xlu0 %4558
    %4560 = vset.pattern.permute.xlu0 0
    %4561 = vperm.xlu0 %4560, %v4208
    %v4562 = vpop.permute.xlu0 %4561
    %4563 = vset.pattern.permute.xlu0 0
    %4564 = vperm.xlu0 %4563, %v4209
    %v4565 = vpop.permute.xlu0 %4564
    %4566 = vset.pattern.permute.xlu0 0
    %4567 = vperm.xlu0 %4566, %v4210
    %v4568 = vpop.permute.xlu0 %4567
    %4569 = vset.pattern.permute.xlu0 0
    %4570 = vperm.xlu0 %4569, %v4211
    %v4571 = vpop.permute.xlu0 %4570
    %4572 = vset.pattern.permute.xlu0 0
    %4573 = vperm.xlu0 %4572, %v4212
    %v4574 = vpop.permute.xlu0 %4573
    %4575 = vset.pattern.permute.xlu0 0
    %4576 = vperm.xlu0 %4575, %v4213
    %v4577 = vpop.permute.xlu0 %4576
    %4578 = vset.pattern.permute.xlu0 0
    %4579 = vperm.xlu0 %4578, %v4214
    %v4580 = vpop.permute.xlu0 %4579
    %4581 = vset.pattern.permute.xlu0 0
    %4582 = vperm.xlu0 %4581, %v4215
    %v4583 = vpop.permute.xlu0 %4582
    %4584 = vset.pattern.permute.xlu0 0
    %4585 = vperm.xlu0 %4584, %v4216
    %v4586 = vpop.permute.xlu0 %4585
    %4587 = vset.pattern.permute.xlu0 0
    %4588 = vperm.xlu0 %4587, %v4217
    %v4589 = vpop.permute.xlu0 %4588
    %4590 = vset.pattern.permute.xlu0 0
    %4591 = vperm.xlu0 %4590, %v4218
    %v4592 = vpop.permute.xlu0 %4591
    %4593 = vset.pattern.permute.xlu0 0
    %4594 = vperm.xlu0 %4593, %v4219
    %v4595 = vpop.permute.xlu0 %4594
    %4596 = vset.pattern.permute.xlu0 0
    %4597 = vperm.xlu0 %4596, %v4220
    %v4598 = vpop.permute.xlu0 %4597
    %4599 = vset.pattern.permute.xlu0 0
    %4600 = vperm.xlu0 %4599, %v4221
    %v4601 = vpop.permute.xlu0 %4600
    %4602 = vset.pattern.permute.xlu0 0
    %4603 = vperm.xlu0 %4602, %v4222
    %v4604 = vpop.permute.xlu0 %4603
    %4605 = vset.pattern.permute.xlu0 0
    %4606 = vperm.xlu0 %4605, %v4223
    %v4607 = vpop.permute.xlu0 %4606
    %4608 = vset.pattern.permute.xlu0 0
    %4609 = vperm.xlu0 %4608, %v4224
    %v4610 = vpop.permute.xlu0 %4609
    %4611 = vset.pattern.permute.xlu0 0
    %4612 = vperm.xlu0 %4611, %v4225
    %v4613 = vpop.permute.xlu0 %4612
    %4614 = vset.pattern.permute.xlu0 0
    %4615 = vperm.xlu0 %4614, %v4226
    %v4616 = vpop.permute.xlu0 %4615
    %4617 = vset.pattern.permute.xlu0 0
    %4618 = vperm.xlu0 %4617, %v4227
    %v4619 = vpop.permute.xlu0 %4618
    %4620 = vset.pattern.permute.xlu0 0
    %4621 = vperm.xlu0 %4620, %v4228
    %v4622 = vpop.permute.xlu0 %4621
    %4623 = vset.pattern.permute.xlu0 0
    %4624 = vperm.xlu0 %4623, %v4229
    %v4625 = vpop.permute.xlu0 %4624
    %4626 = vset.pattern.permute.xlu0 0
    %4627 = vperm.xlu0 %4626, %v4230
    %v4628 = vpop.permute.xlu0 %4627
    %4629 = vset.pattern.permute.xlu0 0
    %4630 = vperm.xlu0 %4629, %v4231
    %v4631 = vpop.permute.xlu0 %4630
    %4632 = vset.pattern.permute.xlu0 0
    %4633 = vperm.xlu0 %4632, %v4232
    %v4634 = vpop.permute.xlu0 %4633
    %4635 = vset.pattern.permute.xlu0 0
    %4636 = vperm.xlu0 %4635, %v4233
    %v4637 = vpop.permute.xlu0 %4636
    %4638 = vset.pattern.permute.xlu0 0
    %4639 = vperm.xlu0 %4638, %v4234
    %v4640 = vpop.permute.xlu0 %4639
    %4641 = vset.pattern.permute.xlu0 0
    %4642 = vperm.xlu0 %4641, %v4235
    %v4643 = vpop.permute.xlu0 %4642
    %4644 = vset.pattern.permute.xlu0 0
    %4645 = vperm.xlu0 %4644, %v4236
    %v4646 = vpop.permute.xlu0 %4645
    %4647 = vset.pattern.permute.xlu0 0
    %4648 = vperm.xlu0 %4647, %v4237
    %v4649 = vpop.permute.xlu0 %4648
    %4650 = vset.pattern.permute.xlu0 0
    %4651 = vperm.xlu0 %4650, %v4238
    %v4652 = vpop.permute.xlu0 %4651
    %4653 = vset.pattern.permute.xlu0 0
    %4654 = vperm.xlu0 %4653, %v4239
    %v4655 = vpop.permute.xlu0 %4654
    %4656 = vset.pattern.permute.xlu0 0
    %4657 = vperm.xlu0 %4656, %v4240
    %v4658 = vpop.permute.xlu0 %4657
    %4659 = vset.pattern.permute.xlu0 0
    %4660 = vperm.xlu0 %4659, %v4241
    %v4661 = vpop.permute.xlu0 %4660
    %4662 = vset.pattern.permute.xlu0 0
    %4663 = vperm.xlu0 %4662, %v4242
    %v4664 = vpop.permute.xlu0 %4663
    %4665 = vset.pattern.permute.xlu0 0
    %4666 = vperm.xlu0 %4665, %v4243
    %v4667 = vpop.permute.xlu0 %4666
    %4668 = vset.pattern.permute.xlu0 0
    %4669 = vperm.xlu0 %4668, %v4244
    %v4670 = vpop.permute.xlu0 %4669
    %4671 = vset.pattern.permute.xlu0 0
    %4672 = vperm.xlu0 %4671, %v4245
    %v4673 = vpop.permute.xlu0 %4672
    %4674 = vset.pattern.permute.xlu0 0
    %4675 = vperm.xlu0 %4674, %v4246
    %v4676 = vpop.permute.xlu0 %4675
    %4677 = vset.pattern.permute.xlu0 0
    %4678 = vperm.xlu0 %4677, %v4247
    %v4679 = vpop.permute.xlu0 %4678
    %4680 = vset.pattern.permute.xlu0 0
    %4681 = vperm.xlu0 %4680, %v4248
    %v4682 = vpop.permute.xlu0 %4681
    %4683 = vset.pattern.permute.xlu0 0
    %4684 = vperm.xlu0 %4683, %v4249
    %v4685 = vpop.permute.xlu0 %4684
    %4686 = vset.pattern.permute.xlu0 0
    %4687 = vperm.xlu0 %4686, %v4250
    %v4688 = vpop.permute.xlu0 %4687
    %4689 = vset.pattern.permute.xlu0 0
    %4690 = vperm.xlu0 %4689, %v4251
    %v4691 = vpop.permute.xlu0 %4690
    %4692 = vset.pattern.permute.xlu0 0
    %4693 = vperm.xlu0 %4692, %v4252
    %v4694 = vpop.permute.xlu0 %4693
    %4695 = vset.pattern.permute.xlu0 0
    %4696 = vperm.xlu0 %4695, %v4253
    %v4697 = vpop.permute.xlu0 %4696
    %4698 = vset.pattern.permute.xlu0 0
    %4699 = vperm.xlu0 %4698, %v4254
    %v4700 = vpop.permute.xlu0 %4699
    %4701 = vset.pattern.permute.xlu0 0
    %4702 = vperm.xlu0 %4701, %v4255
    %v4703 = vpop.permute.xlu0 %4702
    %4704 = vset.pattern.permute.xlu0 0
    %4705 = vperm.xlu0 %4704, %v4256
    %v4706 = vpop.permute.xlu0 %4705
    %4707 = vset.pattern.permute.xlu0 0
    %4708 = vperm.xlu0 %4707, %v4257
    %v4709 = vpop.permute.xlu0 %4708
    %4710 = vset.pattern.permute.xlu0 0
    %4711 = vperm.xlu0 %4710, %v4258
    %v4712 = vpop.permute.xlu0 %4711
    %4713 = vset.pattern.permute.xlu0 0
    %4714 = vperm.xlu0 %4713, %v4259
    %v4715 = vpop.permute.xlu0 %4714
    %4716 = vset.pattern.permute.xlu0 0
    %4717 = vperm.xlu0 %4716, %v4260
    %v4718 = vpop.permute.xlu0 %4717
    %4719 = vset.pattern.permute.xlu0 0
    %4720 = vperm.xlu0 %4719, %v4261
    %v4721 = vpop.permute.xlu0 %4720
    %4722 = vset.pattern.permute.xlu0 0
    %4723 = vperm.xlu0 %4722, %v4262
    %v4724 = vpop.permute.xlu0 %4723
    %4725 = vset.pattern.permute.xlu0 0
    %4726 = vperm.xlu0 %4725, %v4263
    %v4727 = vpop.permute.xlu0 %4726
    %4728 = vset.pattern.permute.xlu0 0
    %4729 = vperm.xlu0 %4728, %v4264
    %v4730 = vpop.permute.xlu0 %4729
    %4731 = vset.pattern.permute.xlu0 0
    %4732 = vperm.xlu0 %4731, %v4265
    %v4733 = vpop.permute.xlu0 %4732
    %4734 = vset.pattern.permute.xlu0 0
    %4735 = vperm.xlu0 %4734, %v4266
    %v4736 = vpop.permute.xlu0 %4735
    %4737 = vset.pattern.permute.xlu0 0
    %4738 = vperm.xlu0 %4737, %v4267
    %v4739 = vpop.permute.xlu0 %4738
    %4740 = vset.pattern.permute.xlu0 0
    %4741 = vperm.xlu0 %4740, %v4268
    %v4742 = vpop.permute.xlu0 %4741
    %4743 = vset.pattern.permute.xlu0 0
    %4744 = vperm.xlu0 %4743, %v4269
    %v4745 = vpop.permute.xlu0 %4744
    %4746 = vset.pattern.permute.xlu0 0
    %4747 = vperm.xlu0 %4746, %v4270
    %v4748 = vpop.permute.xlu0 %4747
    %4749 = vset.pattern.permute.xlu0 0
    %4750 = vperm.xlu0 %4749, %v4271
    %v4751 = vpop.permute.xlu0 %4750
    %4752 = vset.pattern.permute.xlu0 0
    %4753 = vperm.xlu0 %4752, %v4272
    %v4754 = vpop.permute.xlu0 %4753
    %4755 = vset.pattern.permute.xlu0 0
    %4756 = vperm.xlu0 %4755, %v4273
    %v4757 = vpop.permute.xlu0 %4756
    %4758 = vset.pattern.permute.xlu0 0
    %4759 = vperm.xlu0 %4758, %v4274
    %v4760 = vpop.permute.xlu0 %4759
    %4761 = vset.pattern.permute.xlu0 0
    %4762 = vperm.xlu0 %4761, %v4275
    %v4763 = vpop.permute.xlu0 %4762
    %4764 = vset.pattern.permute.xlu0 0
    %4765 = vperm.xlu0 %4764, %v4276
    %v4766 = vpop.permute.xlu0 %4765
    %4767 = vset.pattern.permute.xlu0 0
    %4768 = vperm.xlu0 %4767, %v4277
    %v4769 = vpop.permute.xlu0 %4768
    %4770 = vset.pattern.permute.xlu0 0
    %4771 = vperm.xlu0 %4770, %v4278
    %v4772 = vpop.permute.xlu0 %4771
    %4773 = vset.pattern.permute.xlu0 0
    %4774 = vperm.xlu0 %4773, %v4279
    %v4775 = vpop.permute.xlu0 %4774
    %4776 = vset.pattern.permute.xlu0 0
    %4777 = vperm.xlu0 %4776, %v4280
    %v4778 = vpop.permute.xlu0 %4777
    %4779 = vset.pattern.permute.xlu0 0
    %4780 = vperm.xlu0 %4779, %v4281
    %v4781 = vpop.permute.xlu0 %4780
    %4782 = vset.pattern.permute.xlu0 0
    %4783 = vperm.xlu0 %4782, %v4282
    %v4784 = vpop.permute.xlu0 %4783
    %4785 = vset.pattern.permute.xlu0 0
    %4786 = vperm.xlu0 %4785, %v4283
    %v4787 = vpop.permute.xlu0 %4786
    %4788 = vset.pattern.permute.xlu0 0
    %4789 = vperm.xlu0 %4788, %v4284
    %v4790 = vpop.permute.xlu0 %4789
    %4791 = vset.pattern.permute.xlu0 0
    %4792 = vperm.xlu0 %4791, %v4285
    %v4793 = vpop.permute.xlu0 %4792
    %4794 = vset.pattern.permute.xlu0 0
    %4795 = vperm.xlu0 %4794, %v4286
    %v4796 = vpop.permute.xlu0 %4795
    %4797 = vset.pattern.permute.xlu0 0
    %4798 = vperm.xlu0 %4797, %v4287
    %v4799 = vpop.permute.xlu0 %4798
    %v4800 = vlaneseq
    %v4801 = vshrl.u32 %v4800, 7
    %v4802 = vsub.s32 %v2389, %v4801
    %v4803 = vrot.slane %v4418, %v4802
    %v4804 = vlaneseq
    %v4805 = vshrl.u32 %v4804, 7
    %v4806 = vsub.s32 %v2394, %v4805
    %v4807 = vrot.slane %v4421, %v4806
    %v4808 = vsel %vm2399, %v4807, %v4803
    %v4809 = vlaneseq
    %v4810 = vshrl.u32 %v4809, 7
    %v4811 = vsub.s32 %v2401, %v4810
    %v4812 = vrot.slane %v4424, %v4811
    %v4813 = vsel %vm2406, %v4812, %v4808
    %v4814 = vlaneseq
    %v4815 = vshrl.u32 %v4814, 7
    %v4816 = vsub.s32 %v2408, %v4815
    %v4817 = vrot.slane %v4427, %v4816
    %v4818 = vsel %vm2413, %v4817, %v4813
    %v4819 = vlaneseq
    %v4820 = vshrl.u32 %v4819, 7
    %v4821 = vsub.s32 %v2415, %v4820
    %v4822 = vrot.slane %v4430, %v4821
    %v4823 = vsel %vm2420, %v4822, %v4818
    %v4824 = vlaneseq
    %v4825 = vshrl.u32 %v4824, 7
    %v4826 = vsub.s32 %v2422, %v4825
    %v4827 = vrot.slane %v4433, %v4826
    %v4828 = vsel %vm2427, %v4827, %v4823
    %v4829 = vlaneseq
    %v4830 = vshrl.u32 %v4829, 7
    %v4831 = vsub.s32 %v2429, %v4830
    %v4832 = vrot.slane %v4436, %v4831
    %v4833 = vsel %vm2434, %v4832, %v4828
    %v4834 = vlaneseq
    %v4835 = vshrl.u32 %v4834, 7
    %v4836 = vsub.s32 %v2436, %v4835
    %v4837 = vrot.slane %v4439, %v4836
    %v4838 = vsel %vm2441, %v4837, %v4833
    %v4839 = vlaneseq
    %v4840 = vshrl.u32 %v4839, 7
    %v4841 = vsub.s32 %v2443, %v4840
    %v4842 = vrot.slane %v4442, %v4841
    %v4843 = vsel %vm2448, %v4842, %v4838
    %v4844 = vlaneseq
    %v4845 = vshrl.u32 %v4844, 7
    %v4846 = vsub.s32 %v2450, %v4845
    %v4847 = vrot.slane %v4445, %v4846
    %v4848 = vsel %vm2455, %v4847, %v4843
    %v4849 = vlaneseq
    %v4850 = vshrl.u32 %v4849, 7
    %v4851 = vsub.s32 %v2457, %v4850
    %v4852 = vrot.slane %v4448, %v4851
    %v4853 = vsel %vm2462, %v4852, %v4848
    %v4854 = vlaneseq
    %v4855 = vshrl.u32 %v4854, 7
    %v4856 = vsub.s32 %v2464, %v4855
    %v4857 = vrot.slane %v4451, %v4856
    %v4858 = vsel %vm2469, %v4857, %v4853
    %v4859 = vlaneseq
    %v4860 = vshrl.u32 %v4859, 7
    %v4861 = vsub.s32 %v2471, %v4860
    %v4862 = vrot.slane %v4454, %v4861
    %v4863 = vsel %vm2476, %v4862, %v4858
    %v4864 = vlaneseq
    %v4865 = vshrl.u32 %v4864, 7
    %v4866 = vsub.s32 %v2478, %v4865
    %v4867 = vrot.slane %v4457, %v4866
    %v4868 = vsel %vm2483, %v4867, %v4863
    %v4869 = vlaneseq
    %v4870 = vshrl.u32 %v4869, 7
    %v4871 = vsub.s32 %v2485, %v4870
    %v4872 = vrot.slane %v4460, %v4871
    %v4873 = vsel %vm2490, %v4872, %v4868
    %v4874 = vlaneseq
    %v4875 = vshrl.u32 %v4874, 7
    %v4876 = vsub.s32 %v2492, %v4875
    %v4877 = vrot.slane %v4463, %v4876
    %v4878 = vsel %vm2497, %v4877, %v4873
    %v4879 = vlaneseq
    %v4880 = vshrl.u32 %v4879, 7
    %v4881 = vsub.s32 %v2389, %v4880
    %v4882 = vrot.slane %v4466, %v4881
    %v4883 = vlaneseq
    %v4884 = vshrl.u32 %v4883, 7
    %v4885 = vsub.s32 %v2394, %v4884
    %v4886 = vrot.slane %v4469, %v4885
    %v4887 = vsel %vm2399, %v4886, %v4882
    %v4888 = vlaneseq
    %v4889 = vshrl.u32 %v4888, 7
    %v4890 = vsub.s32 %v2401, %v4889
    %v4891 = vrot.slane %v4472, %v4890
    %v4892 = vsel %vm2406, %v4891, %v4887
    %v4893 = vlaneseq
    %v4894 = vshrl.u32 %v4893, 7
    %v4895 = vsub.s32 %v2408, %v4894
    %v4896 = vrot.slane %v4475, %v4895
    %v4897 = vsel %vm2413, %v4896, %v4892
    %v4898 = vlaneseq
    %v4899 = vshrl.u32 %v4898, 7
    %v4900 = vsub.s32 %v2415, %v4899
    %v4901 = vrot.slane %v4478, %v4900
    %v4902 = vsel %vm2420, %v4901, %v4897
    %v4903 = vlaneseq
    %v4904 = vshrl.u32 %v4903, 7
    %v4905 = vsub.s32 %v2422, %v4904
    %v4906 = vrot.slane %v4481, %v4905
    %v4907 = vsel %vm2427, %v4906, %v4902
    %v4908 = vlaneseq
    %v4909 = vshrl.u32 %v4908, 7
    %v4910 = vsub.s32 %v2429, %v4909
    %v4911 = vrot.slane %v4484, %v4910
    %v4912 = vsel %vm2434, %v4911, %v4907
    %v4913 = vlaneseq
    %v4914 = vshrl.u32 %v4913, 7
    %v4915 = vsub.s32 %v2436, %v4914
    %v4916 = vrot.slane %v4487, %v4915
    %v4917 = vsel %vm2441, %v4916, %v4912
    %v4918 = vlaneseq
    %v4919 = vshrl.u32 %v4918, 7
    %v4920 = vsub.s32 %v2443, %v4919
    %v4921 = vrot.slane %v4490, %v4920
    %v4922 = vsel %vm2448, %v4921, %v4917
    %v4923 = vlaneseq
    %v4924 = vshrl.u32 %v4923, 7
    %v4925 = vsub.s32 %v2450, %v4924
    %v4926 = vrot.slane %v4493, %v4925
    %v4927 = vsel %vm2455, %v4926, %v4922
    %v4928 = vlaneseq
    %v4929 = vshrl.u32 %v4928, 7
    %v4930 = vsub.s32 %v2457, %v4929
    %v4931 = vrot.slane %v4496, %v4930
    %v4932 = vsel %vm2462, %v4931, %v4927
    %v4933 = vlaneseq
    %v4934 = vshrl.u32 %v4933, 7
    %v4935 = vsub.s32 %v2464, %v4934
    %v4936 = vrot.slane %v4499, %v4935
    %v4937 = vsel %vm2469, %v4936, %v4932
    %v4938 = vlaneseq
    %v4939 = vshrl.u32 %v4938, 7
    %v4940 = vsub.s32 %v2471, %v4939
    %v4941 = vrot.slane %v4502, %v4940
    %v4942 = vsel %vm2476, %v4941, %v4937
    %v4943 = vlaneseq
    %v4944 = vshrl.u32 %v4943, 7
    %v4945 = vsub.s32 %v2478, %v4944
    %v4946 = vrot.slane %v4505, %v4945
    %v4947 = vsel %vm2483, %v4946, %v4942
    %v4948 = vlaneseq
    %v4949 = vshrl.u32 %v4948, 7
    %v4950 = vsub.s32 %v2485, %v4949
    %v4951 = vrot.slane %v4508, %v4950
    %v4952 = vsel %vm2490, %v4951, %v4947
    %v4953 = vlaneseq
    %v4954 = vshrl.u32 %v4953, 7
    %v4955 = vsub.s32 %v2492, %v4954
    %v4956 = vrot.slane %v4511, %v4955
    %v4957 = vsel %vm2497, %v4956, %v4952
    %v4958 = vlaneseq
    %v4959 = vshrl.u32 %v4958, 7
    %v4960 = vsub.s32 %v2389, %v4959
    %v4961 = vrot.slane %v4514, %v4960
    %v4962 = vlaneseq
    %v4963 = vshrl.u32 %v4962, 7
    %v4964 = vsub.s32 %v2394, %v4963
    %v4965 = vrot.slane %v4517, %v4964
    %v4966 = vsel %vm2399, %v4965, %v4961
    %v4967 = vlaneseq
    %v4968 = vshrl.u32 %v4967, 7
    %v4969 = vsub.s32 %v2401, %v4968
    %v4970 = vrot.slane %v4520, %v4969
    %v4971 = vsel %vm2406, %v4970, %v4966
    %v4972 = vlaneseq
    %v4973 = vshrl.u32 %v4972, 7
    %v4974 = vsub.s32 %v2408, %v4973
    %v4975 = vrot.slane %v4523, %v4974
    %v4976 = vsel %vm2413, %v4975, %v4971
    %v4977 = vlaneseq
    %v4978 = vshrl.u32 %v4977, 7
    %v4979 = vsub.s32 %v2415, %v4978
    %v4980 = vrot.slane %v4526, %v4979
    %v4981 = vsel %vm2420, %v4980, %v4976
    %v4982 = vlaneseq
    %v4983 = vshrl.u32 %v4982, 7
    %v4984 = vsub.s32 %v2422, %v4983
    %v4985 = vrot.slane %v4529, %v4984
    %v4986 = vsel %vm2427, %v4985, %v4981
    %v4987 = vlaneseq
    %v4988 = vshrl.u32 %v4987, 7
    %v4989 = vsub.s32 %v2429, %v4988
    %v4990 = vrot.slane %v4532, %v4989
    %v4991 = vsel %vm2434, %v4990, %v4986
    %v4992 = vlaneseq
    %v4993 = vshrl.u32 %v4992, 7
    %v4994 = vsub.s32 %v2436, %v4993
    %v4995 = vrot.slane %v4535, %v4994
    %v4996 = vsel %vm2441, %v4995, %v4991
    %v4997 = vlaneseq
    %v4998 = vshrl.u32 %v4997, 7
    %v4999 = vsub.s32 %v2443, %v4998
    %v5000 = vrot.slane %v4538, %v4999
    %v5001 = vsel %vm2448, %v5000, %v4996
    %v5002 = vlaneseq
    %v5003 = vshrl.u32 %v5002, 7
    %v5004 = vsub.s32 %v2450, %v5003
    %v5005 = vrot.slane %v4541, %v5004
    %v5006 = vsel %vm2455, %v5005, %v5001
    %v5007 = vlaneseq
    %v5008 = vshrl.u32 %v5007, 7
    %v5009 = vsub.s32 %v2457, %v5008
    %v5010 = vrot.slane %v4544, %v5009
    %v5011 = vsel %vm2462, %v5010, %v5006
    %v5012 = vlaneseq
    %v5013 = vshrl.u32 %v5012, 7
    %v5014 = vsub.s32 %v2464, %v5013
    %v5015 = vrot.slane %v4547, %v5014
    %v5016 = vsel %vm2469, %v5015, %v5011
    %v5017 = vlaneseq
    %v5018 = vshrl.u32 %v5017, 7
    %v5019 = vsub.s32 %v2471, %v5018
    %v5020 = vrot.slane %v4550, %v5019
    %v5021 = vsel %vm2476, %v5020, %v5016
    %v5022 = vlaneseq
    %v5023 = vshrl.u32 %v5022, 7
    %v5024 = vsub.s32 %v2478, %v5023
    %v5025 = vrot.slane %v4553, %v5024
    %v5026 = vsel %vm2483, %v5025, %v5021
    %v5027 = vlaneseq
    %v5028 = vshrl.u32 %v5027, 7
    %v5029 = vsub.s32 %v2485, %v5028
    %v5030 = vrot.slane %v4556, %v5029
    %v5031 = vsel %vm2490, %v5030, %v5026
    %v5032 = vlaneseq
    %v5033 = vshrl.u32 %v5032, 7
    %v5034 = vsub.s32 %v2492, %v5033
    %v5035 = vrot.slane %v4559, %v5034
    %v5036 = vsel %vm2497, %v5035, %v5031
    %v5037 = vlaneseq
    %v5038 = vshrl.u32 %v5037, 7
    %v5039 = vsub.s32 %v2389, %v5038
    %v5040 = vrot.slane %v4562, %v5039
    %v5041 = vlaneseq
    %v5042 = vshrl.u32 %v5041, 7
    %v5043 = vsub.s32 %v2394, %v5042
    %v5044 = vrot.slane %v4565, %v5043
    %v5045 = vsel %vm2399, %v5044, %v5040
    %v5046 = vlaneseq
    %v5047 = vshrl.u32 %v5046, 7
    %v5048 = vsub.s32 %v2401, %v5047
    %v5049 = vrot.slane %v4568, %v5048
    %v5050 = vsel %vm2406, %v5049, %v5045
    %v5051 = vlaneseq
    %v5052 = vshrl.u32 %v5051, 7
    %v5053 = vsub.s32 %v2408, %v5052
    %v5054 = vrot.slane %v4571, %v5053
    %v5055 = vsel %vm2413, %v5054, %v5050
    %v5056 = vlaneseq
    %v5057 = vshrl.u32 %v5056, 7
    %v5058 = vsub.s32 %v2415, %v5057
    %v5059 = vrot.slane %v4574, %v5058
    %v5060 = vsel %vm2420, %v5059, %v5055
    %v5061 = vlaneseq
    %v5062 = vshrl.u32 %v5061, 7
    %v5063 = vsub.s32 %v2422, %v5062
    %v5064 = vrot.slane %v4577, %v5063
    %v5065 = vsel %vm2427, %v5064, %v5060
    %v5066 = vlaneseq
    %v5067 = vshrl.u32 %v5066, 7
    %v5068 = vsub.s32 %v2429, %v5067
    %v5069 = vrot.slane %v4580, %v5068
    %v5070 = vsel %vm2434, %v5069, %v5065
    %v5071 = vlaneseq
    %v5072 = vshrl.u32 %v5071, 7
    %v5073 = vsub.s32 %v2436, %v5072
    %v5074 = vrot.slane %v4583, %v5073
    %v5075 = vsel %vm2441, %v5074, %v5070
    %v5076 = vlaneseq
    %v5077 = vshrl.u32 %v5076, 7
    %v5078 = vsub.s32 %v2443, %v5077
    %v5079 = vrot.slane %v4586, %v5078
    %v5080 = vsel %vm2448, %v5079, %v5075
    %v5081 = vlaneseq
    %v5082 = vshrl.u32 %v5081, 7
    %v5083 = vsub.s32 %v2450, %v5082
    %v5084 = vrot.slane %v4589, %v5083
    %v5085 = vsel %vm2455, %v5084, %v5080
    %v5086 = vlaneseq
    %v5087 = vshrl.u32 %v5086, 7
    %v5088 = vsub.s32 %v2457, %v5087
    %v5089 = vrot.slane %v4592, %v5088
    %v5090 = vsel %vm2462, %v5089, %v5085
    %v5091 = vlaneseq
    %v5092 = vshrl.u32 %v5091, 7
    %v5093 = vsub.s32 %v2464, %v5092
    %v5094 = vrot.slane %v4595, %v5093
    %v5095 = vsel %vm2469, %v5094, %v5090
    %v5096 = vlaneseq
    %v5097 = vshrl.u32 %v5096, 7
    %v5098 = vsub.s32 %v2471, %v5097
    %v5099 = vrot.slane %v4598, %v5098
    %v5100 = vsel %vm2476, %v5099, %v5095
    %v5101 = vlaneseq
    %v5102 = vshrl.u32 %v5101, 7
    %v5103 = vsub.s32 %v2478, %v5102
    %v5104 = vrot.slane %v4601, %v5103
    %v5105 = vsel %vm2483, %v5104, %v5100
    %v5106 = vlaneseq
    %v5107 = vshrl.u32 %v5106, 7
    %v5108 = vsub.s32 %v2485, %v5107
    %v5109 = vrot.slane %v4604, %v5108
    %v5110 = vsel %vm2490, %v5109, %v5105
    %v5111 = vlaneseq
    %v5112 = vshrl.u32 %v5111, 7
    %v5113 = vsub.s32 %v2492, %v5112
    %v5114 = vrot.slane %v4607, %v5113
    %v5115 = vsel %vm2497, %v5114, %v5110
    %v5116 = vlaneseq
    %v5117 = vshrl.u32 %v5116, 7
    %v5118 = vsub.s32 %v2389, %v5117
    %v5119 = vrot.slane %v4610, %v5118
    %v5120 = vlaneseq
    %v5121 = vshrl.u32 %v5120, 7
    %v5122 = vsub.s32 %v2394, %v5121
    %v5123 = vrot.slane %v4613, %v5122
    %v5124 = vsel %vm2399, %v5123, %v5119
    %v5125 = vlaneseq
    %v5126 = vshrl.u32 %v5125, 7
    %v5127 = vsub.s32 %v2401, %v5126
    %v5128 = vrot.slane %v4616, %v5127
    %v5129 = vsel %vm2406, %v5128, %v5124
    %v5130 = vlaneseq
    %v5131 = vshrl.u32 %v5130, 7
    %v5132 = vsub.s32 %v2408, %v5131
    %v5133 = vrot.slane %v4619, %v5132
    %v5134 = vsel %vm2413, %v5133, %v5129
    %v5135 = vlaneseq
    %v5136 = vshrl.u32 %v5135, 7
    %v5137 = vsub.s32 %v2415, %v5136
    %v5138 = vrot.slane %v4622, %v5137
    %v5139 = vsel %vm2420, %v5138, %v5134
    %v5140 = vlaneseq
    %v5141 = vshrl.u32 %v5140, 7
    %v5142 = vsub.s32 %v2422, %v5141
    %v5143 = vrot.slane %v4625, %v5142
    %v5144 = vsel %vm2427, %v5143, %v5139
    %v5145 = vlaneseq
    %v5146 = vshrl.u32 %v5145, 7
    %v5147 = vsub.s32 %v2429, %v5146
    %v5148 = vrot.slane %v4628, %v5147
    %v5149 = vsel %vm2434, %v5148, %v5144
    %v5150 = vlaneseq
    %v5151 = vshrl.u32 %v5150, 7
    %v5152 = vsub.s32 %v2436, %v5151
    %v5153 = vrot.slane %v4631, %v5152
    %v5154 = vsel %vm2441, %v5153, %v5149
    %v5155 = vlaneseq
    %v5156 = vshrl.u32 %v5155, 7
    %v5157 = vsub.s32 %v2443, %v5156
    %v5158 = vrot.slane %v4634, %v5157
    %v5159 = vsel %vm2448, %v5158, %v5154
    %v5160 = vlaneseq
    %v5161 = vshrl.u32 %v5160, 7
    %v5162 = vsub.s32 %v2450, %v5161
    %v5163 = vrot.slane %v4637, %v5162
    %v5164 = vsel %vm2455, %v5163, %v5159
    %v5165 = vlaneseq
    %v5166 = vshrl.u32 %v5165, 7
    %v5167 = vsub.s32 %v2457, %v5166
    %v5168 = vrot.slane %v4640, %v5167
    %v5169 = vsel %vm2462, %v5168, %v5164
    %v5170 = vlaneseq
    %v5171 = vshrl.u32 %v5170, 7
    %v5172 = vsub.s32 %v2464, %v5171
    %v5173 = vrot.slane %v4643, %v5172
    %v5174 = vsel %vm2469, %v5173, %v5169
    %v5175 = vlaneseq
    %v5176 = vshrl.u32 %v5175, 7
    %v5177 = vsub.s32 %v2471, %v5176
    %v5178 = vrot.slane %v4646, %v5177
    %v5179 = vsel %vm2476, %v5178, %v5174
    %v5180 = vlaneseq
    %v5181 = vshrl.u32 %v5180, 7
    %v5182 = vsub.s32 %v2478, %v5181
    %v5183 = vrot.slane %v4649, %v5182
    %v5184 = vsel %vm2483, %v5183, %v5179
    %v5185 = vlaneseq
    %v5186 = vshrl.u32 %v5185, 7
    %v5187 = vsub.s32 %v2485, %v5186
    %v5188 = vrot.slane %v4652, %v5187
    %v5189 = vsel %vm2490, %v5188, %v5184
    %v5190 = vlaneseq
    %v5191 = vshrl.u32 %v5190, 7
    %v5192 = vsub.s32 %v2492, %v5191
    %v5193 = vrot.slane %v4655, %v5192
    %v5194 = vsel %vm2497, %v5193, %v5189
    %v5195 = vlaneseq
    %v5196 = vshrl.u32 %v5195, 7
    %v5197 = vsub.s32 %v2389, %v5196
    %v5198 = vrot.slane %v4658, %v5197
    %v5199 = vlaneseq
    %v5200 = vshrl.u32 %v5199, 7
    %v5201 = vsub.s32 %v2394, %v5200
    %v5202 = vrot.slane %v4661, %v5201
    %v5203 = vsel %vm2399, %v5202, %v5198
    %v5204 = vlaneseq
    %v5205 = vshrl.u32 %v5204, 7
    %v5206 = vsub.s32 %v2401, %v5205
    %v5207 = vrot.slane %v4664, %v5206
    %v5208 = vsel %vm2406, %v5207, %v5203
    %v5209 = vlaneseq
    %v5210 = vshrl.u32 %v5209, 7
    %v5211 = vsub.s32 %v2408, %v5210
    %v5212 = vrot.slane %v4667, %v5211
    %v5213 = vsel %vm2413, %v5212, %v5208
    %v5214 = vlaneseq
    %v5215 = vshrl.u32 %v5214, 7
    %v5216 = vsub.s32 %v2415, %v5215
    %v5217 = vrot.slane %v4670, %v5216
    %v5218 = vsel %vm2420, %v5217, %v5213
    %v5219 = vlaneseq
    %v5220 = vshrl.u32 %v5219, 7
    %v5221 = vsub.s32 %v2422, %v5220
    %v5222 = vrot.slane %v4673, %v5221
    %v5223 = vsel %vm2427, %v5222, %v5218
    %v5224 = vlaneseq
    %v5225 = vshrl.u32 %v5224, 7
    %v5226 = vsub.s32 %v2429, %v5225
    %v5227 = vrot.slane %v4676, %v5226
    %v5228 = vsel %vm2434, %v5227, %v5223
    %v5229 = vlaneseq
    %v5230 = vshrl.u32 %v5229, 7
    %v5231 = vsub.s32 %v2436, %v5230
    %v5232 = vrot.slane %v4679, %v5231
    %v5233 = vsel %vm2441, %v5232, %v5228
    %v5234 = vlaneseq
    %v5235 = vshrl.u32 %v5234, 7
    %v5236 = vsub.s32 %v2443, %v5235
    %v5237 = vrot.slane %v4682, %v5236
    %v5238 = vsel %vm2448, %v5237, %v5233
    %v5239 = vlaneseq
    %v5240 = vshrl.u32 %v5239, 7
    %v5241 = vsub.s32 %v2450, %v5240
    %v5242 = vrot.slane %v4685, %v5241
    %v5243 = vsel %vm2455, %v5242, %v5238
    %v5244 = vlaneseq
    %v5245 = vshrl.u32 %v5244, 7
    %v5246 = vsub.s32 %v2457, %v5245
    %v5247 = vrot.slane %v4688, %v5246
    %v5248 = vsel %vm2462, %v5247, %v5243
    %v5249 = vlaneseq
    %v5250 = vshrl.u32 %v5249, 7
    %v5251 = vsub.s32 %v2464, %v5250
    %v5252 = vrot.slane %v4691, %v5251
    %v5253 = vsel %vm2469, %v5252, %v5248
    %v5254 = vlaneseq
    %v5255 = vshrl.u32 %v5254, 7
    %v5256 = vsub.s32 %v2471, %v5255
    %v5257 = vrot.slane %v4694, %v5256
    %v5258 = vsel %vm2476, %v5257, %v5253
    %v5259 = vlaneseq
    %v5260 = vshrl.u32 %v5259, 7
    %v5261 = vsub.s32 %v2478, %v5260
    %v5262 = vrot.slane %v4697, %v5261
    %v5263 = vsel %vm2483, %v5262, %v5258
    %v5264 = vlaneseq
    %v5265 = vshrl.u32 %v5264, 7
    %v5266 = vsub.s32 %v2485, %v5265
    %v5267 = vrot.slane %v4700, %v5266
    %v5268 = vsel %vm2490, %v5267, %v5263
    %v5269 = vlaneseq
    %v5270 = vshrl.u32 %v5269, 7
    %v5271 = vsub.s32 %v2492, %v5270
    %v5272 = vrot.slane %v4703, %v5271
    %v5273 = vsel %vm2497, %v5272, %v5268
    %v5274 = vlaneseq
    %v5275 = vshrl.u32 %v5274, 7
    %v5276 = vsub.s32 %v2389, %v5275
    %v5277 = vrot.slane %v4706, %v5276
    %v5278 = vlaneseq
    %v5279 = vshrl.u32 %v5278, 7
    %v5280 = vsub.s32 %v2394, %v5279
    %v5281 = vrot.slane %v4709, %v5280
    %v5282 = vsel %vm2399, %v5281, %v5277
    %v5283 = vlaneseq
    %v5284 = vshrl.u32 %v5283, 7
    %v5285 = vsub.s32 %v2401, %v5284
    %v5286 = vrot.slane %v4712, %v5285
    %v5287 = vsel %vm2406, %v5286, %v5282
    %v5288 = vlaneseq
    %v5289 = vshrl.u32 %v5288, 7
    %v5290 = vsub.s32 %v2408, %v5289
    %v5291 = vrot.slane %v4715, %v5290
    %v5292 = vsel %vm2413, %v5291, %v5287
    %v5293 = vlaneseq
    %v5294 = vshrl.u32 %v5293, 7
    %v5295 = vsub.s32 %v2415, %v5294
    %v5296 = vrot.slane %v4718, %v5295
    %v5297 = vsel %vm2420, %v5296, %v5292
    %v5298 = vlaneseq
    %v5299 = vshrl.u32 %v5298, 7
    %v5300 = vsub.s32 %v2422, %v5299
    %v5301 = vrot.slane %v4721, %v5300
    %v5302 = vsel %vm2427, %v5301, %v5297
    %v5303 = vlaneseq
    %v5304 = vshrl.u32 %v5303, 7
    %v5305 = vsub.s32 %v2429, %v5304
    %v5306 = vrot.slane %v4724, %v5305
    %v5307 = vsel %vm2434, %v5306, %v5302
    %v5308 = vlaneseq
    %v5309 = vshrl.u32 %v5308, 7
    %v5310 = vsub.s32 %v2436, %v5309
    %v5311 = vrot.slane %v4727, %v5310
    %v5312 = vsel %vm2441, %v5311, %v5307
    %v5313 = vlaneseq
    %v5314 = vshrl.u32 %v5313, 7
    %v5315 = vsub.s32 %v2443, %v5314
    %v5316 = vrot.slane %v4730, %v5315
    %v5317 = vsel %vm2448, %v5316, %v5312
    %v5318 = vlaneseq
    %v5319 = vshrl.u32 %v5318, 7
    %v5320 = vsub.s32 %v2450, %v5319
    %v5321 = vrot.slane %v4733, %v5320
    %v5322 = vsel %vm2455, %v5321, %v5317
    %v5323 = vlaneseq
    %v5324 = vshrl.u32 %v5323, 7
    %v5325 = vsub.s32 %v2457, %v5324
    %v5326 = vrot.slane %v4736, %v5325
    %v5327 = vsel %vm2462, %v5326, %v5322
    %v5328 = vlaneseq
    %v5329 = vshrl.u32 %v5328, 7
    %v5330 = vsub.s32 %v2464, %v5329
    %v5331 = vrot.slane %v4739, %v5330
    %v5332 = vsel %vm2469, %v5331, %v5327
    %v5333 = vlaneseq
    %v5334 = vshrl.u32 %v5333, 7
    %v5335 = vsub.s32 %v2471, %v5334
    %v5336 = vrot.slane %v4742, %v5335
    %v5337 = vsel %vm2476, %v5336, %v5332
    %v5338 = vlaneseq
    %v5339 = vshrl.u32 %v5338, 7
    %v5340 = vsub.s32 %v2478, %v5339
    %v5341 = vrot.slane %v4745, %v5340
    %v5342 = vsel %vm2483, %v5341, %v5337
    %v5343 = vlaneseq
    %v5344 = vshrl.u32 %v5343, 7
    %v5345 = vsub.s32 %v2485, %v5344
    %v5346 = vrot.slane %v4748, %v5345
    %v5347 = vsel %vm2490, %v5346, %v5342
    %v5348 = vlaneseq
    %v5349 = vshrl.u32 %v5348, 7
    %v5350 = vsub.s32 %v2492, %v5349
    %v5351 = vrot.slane %v4751, %v5350
    %v5352 = vsel %vm2497, %v5351, %v5347
    %v5353 = vlaneseq
    %v5354 = vshrl.u32 %v5353, 7
    %v5355 = vsub.s32 %v2389, %v5354
    %v5356 = vrot.slane %v4754, %v5355
    %v5357 = vlaneseq
    %v5358 = vshrl.u32 %v5357, 7
    %v5359 = vsub.s32 %v2394, %v5358
    %v5360 = vrot.slane %v4757, %v5359
    %v5361 = vsel %vm2399, %v5360, %v5356
    %v5362 = vlaneseq
    %v5363 = vshrl.u32 %v5362, 7
    %v5364 = vsub.s32 %v2401, %v5363
    %v5365 = vrot.slane %v4760, %v5364
    %v5366 = vsel %vm2406, %v5365, %v5361
    %v5367 = vlaneseq
    %v5368 = vshrl.u32 %v5367, 7
    %v5369 = vsub.s32 %v2408, %v5368
    %v5370 = vrot.slane %v4763, %v5369
    %v5371 = vsel %vm2413, %v5370, %v5366
    %v5372 = vlaneseq
    %v5373 = vshrl.u32 %v5372, 7
    %v5374 = vsub.s32 %v2415, %v5373
    %v5375 = vrot.slane %v4766, %v5374
    %v5376 = vsel %vm2420, %v5375, %v5371
    %v5377 = vlaneseq
    %v5378 = vshrl.u32 %v5377, 7
    %v5379 = vsub.s32 %v2422, %v5378
    %v5380 = vrot.slane %v4769, %v5379
    %v5381 = vsel %vm2427, %v5380, %v5376
    %v5382 = vlaneseq
    %v5383 = vshrl.u32 %v5382, 7
    %v5384 = vsub.s32 %v2429, %v5383
    %v5385 = vrot.slane %v4772, %v5384
    %v5386 = vsel %vm2434, %v5385, %v5381
    %v5387 = vlaneseq
    %v5388 = vshrl.u32 %v5387, 7
    %v5389 = vsub.s32 %v2436, %v5388
    %v5390 = vrot.slane %v4775, %v5389
    %v5391 = vsel %vm2441, %v5390, %v5386
    %v5392 = vlaneseq
    %v5393 = vshrl.u32 %v5392, 7
    %v5394 = vsub.s32 %v2443, %v5393
    %v5395 = vrot.slane %v4778, %v5394
    %v5396 = vsel %vm2448, %v5395, %v5391
    %v5397 = vlaneseq
    %v5398 = vshrl.u32 %v5397, 7
    %v5399 = vsub.s32 %v2450, %v5398
    %v5400 = vrot.slane %v4781, %v5399
    %v5401 = vsel %vm2455, %v5400, %v5396
    %v5402 = vlaneseq
    %v5403 = vshrl.u32 %v5402, 7
    %v5404 = vsub.s32 %v2457, %v5403
    %v5405 = vrot.slane %v4784, %v5404
    %v5406 = vsel %vm2462, %v5405, %v5401
    %v5407 = vlaneseq
    %v5408 = vshrl.u32 %v5407, 7
    %v5409 = vsub.s32 %v2464, %v5408
    %v5410 = vrot.slane %v4787, %v5409
    %v5411 = vsel %vm2469, %v5410, %v5406
    %v5412 = vlaneseq
    %v5413 = vshrl.u32 %v5412, 7
    %v5414 = vsub.s32 %v2471, %v5413
    %v5415 = vrot.slane %v4790, %v5414
    %v5416 = vsel %vm2476, %v5415, %v5411
    %v5417 = vlaneseq
    %v5418 = vshrl.u32 %v5417, 7
    %v5419 = vsub.s32 %v2478, %v5418
    %v5420 = vrot.slane %v4793, %v5419
    %v5421 = vsel %vm2483, %v5420, %v5416
    %v5422 = vlaneseq
    %v5423 = vshrl.u32 %v5422, 7
    %v5424 = vsub.s32 %v2485, %v5423
    %v5425 = vrot.slane %v4796, %v5424
    %v5426 = vsel %vm2490, %v5425, %v5421
    %v5427 = vlaneseq
    %v5428 = vshrl.u32 %v5427, 7
    %v5429 = vsub.s32 %v2492, %v5428
    %v5430 = vrot.slane %v4799, %v5429
    %v5431 = vsel %vm2497, %v5430, %v5426
    %v5432 = vsel %vm3052, %v4957, %v4878
    %v5433 = vsel %vm3054, %v5036, %v5432
    %v5434 = vsel %vm3056, %v5115, %v5433
    %v5435 = vsel %vm3058, %v5194, %v5434
    %v5436 = vsel %vm3060, %v5273, %v5435
    %v5437 = vsel %vm3062, %v5352, %v5436
    %v5438 = vsel %vm3064, %v5431, %v5437
    %5440 = vadd.xlane.f32.xlu0 %v5438
    %v5441 = vpop.xlane.xlu0 %5440
    %v5442 = vmax.f32 %v5441, 1e-30
    %v5444 = vlaneseq
    %v5445 = vshrl.u32 %v5444, 7
    %v5446 = vsub.s32 0, %v5445
    %v5447 = vrot.slane %v5442, %v5446
    %v5448 = vlaneseq
    %v5449 = vshrl.u32 %v5448, 7
    %v5450 = vsub.s32 1, %v5449
    %v5451 = vrot.slane %v5442, %v5450
    %v5452 = vlaneseq
    %v5453 = vshrl.u32 %v5452, 7
    %v5454 = vsub.s32 2, %v5453
    %v5455 = vrot.slane %v5442, %v5454
    %v5456 = vlaneseq
    %v5457 = vshrl.u32 %v5456, 7
    %v5458 = vsub.s32 3, %v5457
    %v5459 = vrot.slane %v5442, %v5458
    %v5460 = vlaneseq
    %v5461 = vshrl.u32 %v5460, 7
    %v5462 = vsub.s32 4, %v5461
    %v5463 = vrot.slane %v5442, %v5462
    %v5464 = vlaneseq
    %v5465 = vshrl.u32 %v5464, 7
    %v5466 = vsub.s32 5, %v5465
    %v5467 = vrot.slane %v5442, %v5466
    %v5468 = vlaneseq
    %v5469 = vshrl.u32 %v5468, 7
    %v5470 = vsub.s32 6, %v5469
    %v5471 = vrot.slane %v5442, %v5470
    %v5472 = vlaneseq
    %v5473 = vshrl.u32 %v5472, 7
    %v5474 = vsub.s32 7, %v5473
    %v5475 = vrot.slane %v5442, %v5474
    %v5484 = vrcp.pop %v5447
    %v5485 = vmul.f32 %v4160, %v5484
    %v5486 = vmul.f32 %v4161, %v5484
    %v5487 = vmul.f32 %v4162, %v5484
    %v5488 = vmul.f32 %v4163, %v5484
    %v5489 = vmul.f32 %v4164, %v5484
    %v5490 = vmul.f32 %v4165, %v5484
    %v5491 = vmul.f32 %v4166, %v5484
    %v5492 = vmul.f32 %v4167, %v5484
    %v5493 = vmul.f32 %v4168, %v5484
    %v5494 = vmul.f32 %v4169, %v5484
    %v5495 = vmul.f32 %v4170, %v5484
    %v5496 = vmul.f32 %v4171, %v5484
    %v5497 = vmul.f32 %v4172, %v5484
    %v5498 = vmul.f32 %v4173, %v5484
    %v5499 = vmul.f32 %v4174, %v5484
    %v5500 = vmul.f32 %v4175, %v5484
    %v5501 = vrcp.pop %v5451
    %v5502 = vmul.f32 %v4176, %v5501
    %v5503 = vmul.f32 %v4177, %v5501
    %v5504 = vmul.f32 %v4178, %v5501
    %v5505 = vmul.f32 %v4179, %v5501
    %v5506 = vmul.f32 %v4180, %v5501
    %v5507 = vmul.f32 %v4181, %v5501
    %v5508 = vmul.f32 %v4182, %v5501
    %v5509 = vmul.f32 %v4183, %v5501
    %v5510 = vmul.f32 %v4184, %v5501
    %v5511 = vmul.f32 %v4185, %v5501
    %v5512 = vmul.f32 %v4186, %v5501
    %v5513 = vmul.f32 %v4187, %v5501
    %v5514 = vmul.f32 %v4188, %v5501
    %v5515 = vmul.f32 %v4189, %v5501
    %v5516 = vmul.f32 %v4190, %v5501
    %v5517 = vmul.f32 %v4191, %v5501
    %v5518 = vrcp.pop %v5455
    %v5519 = vmul.f32 %v4192, %v5518
    %v5520 = vmul.f32 %v4193, %v5518
    %v5521 = vmul.f32 %v4194, %v5518
    %v5522 = vmul.f32 %v4195, %v5518
    %v5523 = vmul.f32 %v4196, %v5518
    %v5524 = vmul.f32 %v4197, %v5518
    %v5525 = vmul.f32 %v4198, %v5518
    %v5526 = vmul.f32 %v4199, %v5518
    %v5527 = vmul.f32 %v4200, %v5518
    %v5528 = vmul.f32 %v4201, %v5518
    %v5529 = vmul.f32 %v4202, %v5518
    %v5530 = vmul.f32 %v4203, %v5518
    %v5531 = vmul.f32 %v4204, %v5518
    %v5532 = vmul.f32 %v4205, %v5518
    %v5533 = vmul.f32 %v4206, %v5518
    %v5534 = vmul.f32 %v4207, %v5518
    %v5535 = vrcp.pop %v5459
    %v5536 = vmul.f32 %v4208, %v5535
    %v5537 = vmul.f32 %v4209, %v5535
    %v5538 = vmul.f32 %v4210, %v5535
    %v5539 = vmul.f32 %v4211, %v5535
    %v5540 = vmul.f32 %v4212, %v5535
    %v5541 = vmul.f32 %v4213, %v5535
    %v5542 = vmul.f32 %v4214, %v5535
    %v5543 = vmul.f32 %v4215, %v5535
    %v5544 = vmul.f32 %v4216, %v5535
    %v5545 = vmul.f32 %v4217, %v5535
    %v5546 = vmul.f32 %v4218, %v5535
    %v5547 = vmul.f32 %v4219, %v5535
    %v5548 = vmul.f32 %v4220, %v5535
    %v5549 = vmul.f32 %v4221, %v5535
    %v5550 = vmul.f32 %v4222, %v5535
    %v5551 = vmul.f32 %v4223, %v5535
    %v5552 = vrcp.pop %v5463
    %v5553 = vmul.f32 %v4224, %v5552
    %v5554 = vmul.f32 %v4225, %v5552
    %v5555 = vmul.f32 %v4226, %v5552
    %v5556 = vmul.f32 %v4227, %v5552
    %v5557 = vmul.f32 %v4228, %v5552
    %v5558 = vmul.f32 %v4229, %v5552
    %v5559 = vmul.f32 %v4230, %v5552
    %v5560 = vmul.f32 %v4231, %v5552
    %v5561 = vmul.f32 %v4232, %v5552
    %v5562 = vmul.f32 %v4233, %v5552
    %v5563 = vmul.f32 %v4234, %v5552
    %v5564 = vmul.f32 %v4235, %v5552
    %v5565 = vmul.f32 %v4236, %v5552
    %v5566 = vmul.f32 %v4237, %v5552
    %v5567 = vmul.f32 %v4238, %v5552
    %v5568 = vmul.f32 %v4239, %v5552
    %v5569 = vrcp.pop %v5467
    %v5570 = vmul.f32 %v4240, %v5569
    %v5571 = vmul.f32 %v4241, %v5569
    %v5572 = vmul.f32 %v4242, %v5569
    %v5573 = vmul.f32 %v4243, %v5569
    %v5574 = vmul.f32 %v4244, %v5569
    %v5575 = vmul.f32 %v4245, %v5569
    %v5576 = vmul.f32 %v4246, %v5569
    %v5577 = vmul.f32 %v4247, %v5569
    %v5578 = vmul.f32 %v4248, %v5569
    %v5579 = vmul.f32 %v4249, %v5569
    %v5580 = vmul.f32 %v4250, %v5569
    %v5581 = vmul.f32 %v4251, %v5569
    %v5582 = vmul.f32 %v4252, %v5569
    %v5583 = vmul.f32 %v4253, %v5569
    %v5584 = vmul.f32 %v4254, %v5569
    %v5585 = vmul.f32 %v4255, %v5569
    %v5586 = vrcp.pop %v5471
    %v5587 = vmul.f32 %v4256, %v5586
    %v5588 = vmul.f32 %v4257, %v5586
    %v5589 = vmul.f32 %v4258, %v5586
    %v5590 = vmul.f32 %v4259, %v5586
    %v5591 = vmul.f32 %v4260, %v5586
    %v5592 = vmul.f32 %v4261, %v5586
    %v5593 = vmul.f32 %v4262, %v5586
    %v5594 = vmul.f32 %v4263, %v5586
    %v5595 = vmul.f32 %v4264, %v5586
    %v5596 = vmul.f32 %v4265, %v5586
    %v5597 = vmul.f32 %v4266, %v5586
    %v5598 = vmul.f32 %v4267, %v5586
    %v5599 = vmul.f32 %v4268, %v5586
    %v5600 = vmul.f32 %v4269, %v5586
    %v5601 = vmul.f32 %v4270, %v5586
    %v5602 = vmul.f32 %v4271, %v5586
    %v5603 = vrcp.pop %v5475
    %v5604 = vmul.f32 %v4272, %v5603
    %v5605 = vmul.f32 %v4273, %v5603
    %v5606 = vmul.f32 %v4274, %v5603
    %v5607 = vmul.f32 %v4275, %v5603
    %v5608 = vmul.f32 %v4276, %v5603
    %v5609 = vmul.f32 %v4277, %v5603
    %v5610 = vmul.f32 %v4278, %v5603
    %v5611 = vmul.f32 %v4279, %v5603
    %v5612 = vmul.f32 %v4280, %v5603
    %v5613 = vmul.f32 %v4281, %v5603
    %v5614 = vmul.f32 %v4282, %v5603
    %v5615 = vmul.f32 %v4283, %v5603
    %v5616 = vmul.f32 %v4284, %v5603
    %v5617 = vmul.f32 %v4285, %v5603
    %v5618 = vmul.f32 %v4286, %v5603
    %v5619 = vmul.f32 %v4287, %v5603
    %v5620 = vpack.c.bf16 %v5486, %v5485
    %v5621 = vpack.c.bf16 %v5488, %v5487
    %v5622 = vpack.c.bf16 %v5490, %v5489
    %v5623 = vpack.c.bf16 %v5492, %v5491
    %v5624 = vpack.c.bf16 %v5494, %v5493
    %v5625 = vpack.c.bf16 %v5496, %v5495
    %v5626 = vpack.c.bf16 %v5498, %v5497
    %v5627 = vpack.c.bf16 %v5500, %v5499
    %v5628 = vpack.c.bf16 %v5503, %v5502
    %v5629 = vpack.c.bf16 %v5505, %v5504
    %v5630 = vpack.c.bf16 %v5507, %v5506
    %v5631 = vpack.c.bf16 %v5509, %v5508
    %v5632 = vpack.c.bf16 %v5511, %v5510
    %v5633 = vpack.c.bf16 %v5513, %v5512
    %v5634 = vpack.c.bf16 %v5515, %v5514
    %v5635 = vpack.c.bf16 %v5517, %v5516
    %v5636 = vpack.c.bf16 %v5520, %v5519
    %v5637 = vpack.c.bf16 %v5522, %v5521
    %v5638 = vpack.c.bf16 %v5524, %v5523
    %v5639 = vpack.c.bf16 %v5526, %v5525
    %v5640 = vpack.c.bf16 %v5528, %v5527
    %v5641 = vpack.c.bf16 %v5530, %v5529
    %v5642 = vpack.c.bf16 %v5532, %v5531
    %v5643 = vpack.c.bf16 %v5534, %v5533
    %v5644 = vpack.c.bf16 %v5537, %v5536
    %v5645 = vpack.c.bf16 %v5539, %v5538
    %v5646 = vpack.c.bf16 %v5541, %v5540
    %v5647 = vpack.c.bf16 %v5543, %v5542
    %v5648 = vpack.c.bf16 %v5545, %v5544
    %v5649 = vpack.c.bf16 %v5547, %v5546
    %v5650 = vpack.c.bf16 %v5549, %v5548
    %v5651 = vpack.c.bf16 %v5551, %v5550
    %v5652 = vpack.c.bf16 %v5554, %v5553
    %v5653 = vpack.c.bf16 %v5556, %v5555
    %v5654 = vpack.c.bf16 %v5558, %v5557
    %v5655 = vpack.c.bf16 %v5560, %v5559
    %v5656 = vpack.c.bf16 %v5562, %v5561
    %v5657 = vpack.c.bf16 %v5564, %v5563
    %v5658 = vpack.c.bf16 %v5566, %v5565
    %v5659 = vpack.c.bf16 %v5568, %v5567
    %v5660 = vpack.c.bf16 %v5571, %v5570
    %v5661 = vpack.c.bf16 %v5573, %v5572
    %v5662 = vpack.c.bf16 %v5575, %v5574
    %v5663 = vpack.c.bf16 %v5577, %v5576
    %v5664 = vpack.c.bf16 %v5579, %v5578
    %v5665 = vpack.c.bf16 %v5581, %v5580
    %v5666 = vpack.c.bf16 %v5583, %v5582
    %v5667 = vpack.c.bf16 %v5585, %v5584
    %v5668 = vpack.c.bf16 %v5588, %v5587
    %v5669 = vpack.c.bf16 %v5590, %v5589
    %v5670 = vpack.c.bf16 %v5592, %v5591
    %v5671 = vpack.c.bf16 %v5594, %v5593
    %v5672 = vpack.c.bf16 %v5596, %v5595
    %v5673 = vpack.c.bf16 %v5598, %v5597
    %v5674 = vpack.c.bf16 %v5600, %v5599
    %v5675 = vpack.c.bf16 %v5602, %v5601
    %v5676 = vpack.c.bf16 %v5605, %v5604
    %v5677 = vpack.c.bf16 %v5607, %v5606
    %v5678 = vpack.c.bf16 %v5609, %v5608
    %v5679 = vpack.c.bf16 %v5611, %v5610
    %v5680 = vpack.c.bf16 %v5613, %v5612
    %v5681 = vpack.c.bf16 %v5615, %v5614
    %v5682 = vpack.c.bf16 %v5617, %v5616
    %v5683 = vpack.c.bf16 %v5619, %v5618
    %v5684 = vld [vmem:[%s1] sm:$0xf]
    %v5685 = vld [vmem:[%s1 + $0x4] sm:$0xf]
    %v5686 = vld [vmem:[%s1 + $0x8] sm:$0xf]
    %v5687 = vld [vmem:[%s1 + $0xc] sm:$0xf]
    %v5688 = vld [vmem:[%s1 + $0x10] sm:$0xf]
    %v5689 = vld [vmem:[%s1 + $0x14] sm:$0xf]
    %v5690 = vld [vmem:[%s1 + $0x18] sm:$0xf]
    %v5691 = vld [vmem:[%s1 + $0x1c] sm:$0xf]
    %v5692 = vld [vmem:[%s1 + $0x20] sm:$0xf]
    %v5693 = vld [vmem:[%s1 + $0x24] sm:$0xf]
    %v5694 = vld [vmem:[%s1 + $0x28] sm:$0xf]
    %v5695 = vld [vmem:[%s1 + $0x2c] sm:$0xf]
    %v5696 = vld [vmem:[%s1 + $0x30] sm:$0xf]
    %v5697 = vld [vmem:[%s1 + $0x34] sm:$0xf]
    %v5698 = vld [vmem:[%s1 + $0x38] sm:$0xf]
    %v5699 = vld [vmem:[%s1 + $0x3c] sm:$0xf]
    %v5700 = vld [vmem:[%s1 + $0x40] sm:$0xf]
    %v5701 = vld [vmem:[%s1 + $0x44] sm:$0xf]
    %v5702 = vld [vmem:[%s1 + $0x48] sm:$0xf]
    %v5703 = vld [vmem:[%s1 + $0x4c] sm:$0xf]
    %v5704 = vld [vmem:[%s1 + $0x50] sm:$0xf]
    %v5705 = vld [vmem:[%s1 + $0x54] sm:$0xf]
    %v5706 = vld [vmem:[%s1 + $0x58] sm:$0xf]
    %v5707 = vld [vmem:[%s1 + $0x5c] sm:$0xf]
    %v5708 = vld [vmem:[%s1 + $0x60] sm:$0xf]
    %v5709 = vld [vmem:[%s1 + $0x64] sm:$0xf]
    %v5710 = vld [vmem:[%s1 + $0x68] sm:$0xf]
    %v5711 = vld [vmem:[%s1 + $0x6c] sm:$0xf]
    %v5712 = vld [vmem:[%s1 + $0x70] sm:$0xf]
    %v5713 = vld [vmem:[%s1 + $0x74] sm:$0xf]
    %v5714 = vld [vmem:[%s1 + $0x78] sm:$0xf]
    %v5715 = vld [vmem:[%s1 + $0x7c] sm:$0xf]
    %v5716 = vld [vmem:[%s1 + $0x80] sm:$0xf]
    %v5717 = vld [vmem:[%s1 + $0x84] sm:$0xf]
    %v5718 = vld [vmem:[%s1 + $0x88] sm:$0xf]
    %v5719 = vld [vmem:[%s1 + $0x8c] sm:$0xf]
    %v5720 = vld [vmem:[%s1 + $0x90] sm:$0xf]
    %v5721 = vld [vmem:[%s1 + $0x94] sm:$0xf]
    %v5722 = vld [vmem:[%s1 + $0x98] sm:$0xf]
    %v5723 = vld [vmem:[%s1 + $0x9c] sm:$0xf]
    %v5724 = vld [vmem:[%s1 + $0xa0] sm:$0xf]
    %v5725 = vld [vmem:[%s1 + $0xa4] sm:$0xf]
    %v5726 = vld [vmem:[%s1 + $0xa8] sm:$0xf]
    %v5727 = vld [vmem:[%s1 + $0xac] sm:$0xf]
    %v5728 = vld [vmem:[%s1 + $0xb0] sm:$0xf]
    %v5729 = vld [vmem:[%s1 + $0xb4] sm:$0xf]
    %v5730 = vld [vmem:[%s1 + $0xb8] sm:$0xf]
    %v5731 = vld [vmem:[%s1 + $0xbc] sm:$0xf]
    %v5732 = vld [vmem:[%s1 + $0xc0] sm:$0xf]
    %v5733 = vld [vmem:[%s1 + $0xc4] sm:$0xf]
    %v5734 = vld [vmem:[%s1 + $0xc8] sm:$0xf]
    %v5735 = vld [vmem:[%s1 + $0xcc] sm:$0xf]
    %v5736 = vld [vmem:[%s1 + $0xd0] sm:$0xf]
    %v5737 = vld [vmem:[%s1 + $0xd4] sm:$0xf]
    %v5738 = vld [vmem:[%s1 + $0xd8] sm:$0xf]
    %v5739 = vld [vmem:[%s1 + $0xdc] sm:$0xf]
    %v5740 = vld [vmem:[%s1 + $0xe0] sm:$0xf]
    %v5741 = vld [vmem:[%s1 + $0xe4] sm:$0xf]
    %v5742 = vld [vmem:[%s1 + $0xe8] sm:$0xf]
    %v5743 = vld [vmem:[%s1 + $0xec] sm:$0xf]
    %v5744 = vld [vmem:[%s1 + $0xf0] sm:$0xf]
    %v5745 = vld [vmem:[%s1 + $0xf4] sm:$0xf]
    %v5746 = vld [vmem:[%s1 + $0xf8] sm:$0xf]
    %v5747 = vld [vmem:[%s1 + $0xfc] sm:$0xf]
    %v5748 = vld [vmem:[%s1 + $0x100] sm:$0xf]
    %v5749 = vld [vmem:[%s1 + $0x104] sm:$0xf]
    %v5750 = vld [vmem:[%s1 + $0x108] sm:$0xf]
    %v5751 = vld [vmem:[%s1 + $0x10c] sm:$0xf]
    %v5752 = vld [vmem:[%s1 + $0x110] sm:$0xf]
    %v5753 = vld [vmem:[%s1 + $0x114] sm:$0xf]
    %v5754 = vld [vmem:[%s1 + $0x118] sm:$0xf]
    %v5755 = vld [vmem:[%s1 + $0x11c] sm:$0xf]
    %v5756 = vld [vmem:[%s1 + $0x120] sm:$0xf]
    %v5757 = vld [vmem:[%s1 + $0x124] sm:$0xf]
    %v5758 = vld [vmem:[%s1 + $0x128] sm:$0xf]
    %v5759 = vld [vmem:[%s1 + $0x12c] sm:$0xf]
    %v5760 = vld [vmem:[%s1 + $0x130] sm:$0xf]
    %v5761 = vld [vmem:[%s1 + $0x134] sm:$0xf]
    %v5762 = vld [vmem:[%s1 + $0x138] sm:$0xf]
    %v5763 = vld [vmem:[%s1 + $0x13c] sm:$0xf]
    %v5764 = vld [vmem:[%s1 + $0x140] sm:$0xf]
    %v5765 = vld [vmem:[%s1 + $0x144] sm:$0xf]
    %v5766 = vld [vmem:[%s1 + $0x148] sm:$0xf]
    %v5767 = vld [vmem:[%s1 + $0x14c] sm:$0xf]
    %v5768 = vld [vmem:[%s1 + $0x150] sm:$0xf]
    %v5769 = vld [vmem:[%s1 + $0x154] sm:$0xf]
    %v5770 = vld [vmem:[%s1 + $0x158] sm:$0xf]
    %v5771 = vld [vmem:[%s1 + $0x15c] sm:$0xf]
    %v5772 = vld [vmem:[%s1 + $0x160] sm:$0xf]
    %v5773 = vld [vmem:[%s1 + $0x164] sm:$0xf]
    %v5774 = vld [vmem:[%s1 + $0x168] sm:$0xf]
    %v5775 = vld [vmem:[%s1 + $0x16c] sm:$0xf]
    %v5776 = vld [vmem:[%s1 + $0x170] sm:$0xf]
    %v5777 = vld [vmem:[%s1 + $0x174] sm:$0xf]
    %v5778 = vld [vmem:[%s1 + $0x178] sm:$0xf]
    %v5779 = vld [vmem:[%s1 + $0x17c] sm:$0xf]
    %v5780 = vld [vmem:[%s1 + $0x180] sm:$0xf]
    %v5781 = vld [vmem:[%s1 + $0x184] sm:$0xf]
    %v5782 = vld [vmem:[%s1 + $0x188] sm:$0xf]
    %v5783 = vld [vmem:[%s1 + $0x18c] sm:$0xf]
    %v5784 = vld [vmem:[%s1 + $0x190] sm:$0xf]
    %v5785 = vld [vmem:[%s1 + $0x194] sm:$0xf]
    %v5786 = vld [vmem:[%s1 + $0x198] sm:$0xf]
    %v5787 = vld [vmem:[%s1 + $0x19c] sm:$0xf]
    %v5788 = vld [vmem:[%s1 + $0x1a0] sm:$0xf]
    %v5789 = vld [vmem:[%s1 + $0x1a4] sm:$0xf]
    %v5790 = vld [vmem:[%s1 + $0x1a8] sm:$0xf]
    %v5791 = vld [vmem:[%s1 + $0x1ac] sm:$0xf]
    %v5792 = vld [vmem:[%s1 + $0x1b0] sm:$0xf]
    %v5793 = vld [vmem:[%s1 + $0x1b4] sm:$0xf]
    %v5794 = vld [vmem:[%s1 + $0x1b8] sm:$0xf]
    %v5795 = vld [vmem:[%s1 + $0x1bc] sm:$0xf]
    %v5796 = vld [vmem:[%s1 + $0x1c0] sm:$0xf]
    %v5797 = vld [vmem:[%s1 + $0x1c4] sm:$0xf]
    %v5798 = vld [vmem:[%s1 + $0x1c8] sm:$0xf]
    %v5799 = vld [vmem:[%s1 + $0x1cc] sm:$0xf]
    %v5800 = vld [vmem:[%s1 + $0x1d0] sm:$0xf]
    %v5801 = vld [vmem:[%s1 + $0x1d4] sm:$0xf]
    %v5802 = vld [vmem:[%s1 + $0x1d8] sm:$0xf]
    %v5803 = vld [vmem:[%s1 + $0x1dc] sm:$0xf]
    %v5804 = vld [vmem:[%s1 + $0x1e0] sm:$0xf]
    %v5805 = vld [vmem:[%s1 + $0x1e4] sm:$0xf]
    %v5806 = vld [vmem:[%s1 + $0x1e8] sm:$0xf]
    %v5807 = vld [vmem:[%s1 + $0x1ec] sm:$0xf]
    %v5808 = vld [vmem:[%s1 + $0x1f0] sm:$0xf]
    %v5809 = vld [vmem:[%s1 + $0x1f4] sm:$0xf]
    %v5810 = vld [vmem:[%s1 + $0x1f8] sm:$0xf]
    %v5811 = vld [vmem:[%s1 + $0x1fc] sm:$0xf]
    %v5820 = vunpack.c.l.b16 %v5620
    %v5821 = vunpack.c.h.b16 %v5620
    %v5822 = vunpack.c.l.b16 %v5621
    %v5823 = vunpack.c.h.b16 %v5621
    %v5824 = vunpack.c.l.b16 %v5622
    %v5825 = vunpack.c.h.b16 %v5622
    %v5826 = vunpack.c.l.b16 %v5623
    %v5827 = vunpack.c.h.b16 %v5623
    %v5828 = vunpack.c.l.b16 %v5624
    %v5829 = vunpack.c.h.b16 %v5624
    %v5830 = vunpack.c.l.b16 %v5625
    %v5831 = vunpack.c.h.b16 %v5625
    %v5832 = vunpack.c.l.b16 %v5626
    %v5833 = vunpack.c.h.b16 %v5626
    %v5834 = vunpack.c.l.b16 %v5627
    %v5835 = vunpack.c.h.b16 %v5627
    %5836 = vset.pattern.permute.xlu0 0
    %5837 = vperm.xlu0 %5836, %v5820
    %v5838 = vpop.permute.xlu0 %5837
    %5839 = vset.pattern.permute.xlu0 0
    %5840 = vperm.xlu0 %5839, %v5821
    %v5841 = vpop.permute.xlu0 %5840
    %5842 = vset.pattern.permute.xlu0 0
    %5843 = vperm.xlu0 %5842, %v5822
    %v5844 = vpop.permute.xlu0 %5843
    %5845 = vset.pattern.permute.xlu0 0
    %5846 = vperm.xlu0 %5845, %v5823
    %v5847 = vpop.permute.xlu0 %5846
    %5848 = vset.pattern.permute.xlu0 0
    %5849 = vperm.xlu0 %5848, %v5824
    %v5850 = vpop.permute.xlu0 %5849
    %5851 = vset.pattern.permute.xlu0 0
    %5852 = vperm.xlu0 %5851, %v5825
    %v5853 = vpop.permute.xlu0 %5852
    %5854 = vset.pattern.permute.xlu0 0
    %5855 = vperm.xlu0 %5854, %v5826
    %v5856 = vpop.permute.xlu0 %5855
    %5857 = vset.pattern.permute.xlu0 0
    %5858 = vperm.xlu0 %5857, %v5827
    %v5859 = vpop.permute.xlu0 %5858
    %5860 = vset.pattern.permute.xlu0 0
    %5861 = vperm.xlu0 %5860, %v5828
    %v5862 = vpop.permute.xlu0 %5861
    %5863 = vset.pattern.permute.xlu0 0
    %5864 = vperm.xlu0 %5863, %v5829
    %v5865 = vpop.permute.xlu0 %5864
    %5866 = vset.pattern.permute.xlu0 0
    %5867 = vperm.xlu0 %5866, %v5830
    %v5868 = vpop.permute.xlu0 %5867
    %5869 = vset.pattern.permute.xlu0 0
    %5870 = vperm.xlu0 %5869, %v5831
    %v5871 = vpop.permute.xlu0 %5870
    %5872 = vset.pattern.permute.xlu0 0
    %5873 = vperm.xlu0 %5872, %v5832
    %v5874 = vpop.permute.xlu0 %5873
    %5875 = vset.pattern.permute.xlu0 0
    %5876 = vperm.xlu0 %5875, %v5833
    %v5877 = vpop.permute.xlu0 %5876
    %5878 = vset.pattern.permute.xlu0 0
    %5879 = vperm.xlu0 %5878, %v5834
    %v5880 = vpop.permute.xlu0 %5879
    %5881 = vset.pattern.permute.xlu0 0
    %5882 = vperm.xlu0 %5881, %v5835
    %v5883 = vpop.permute.xlu0 %5882
    %v5884 = vlaneseq
    %v5885 = vshrl.u32 %v5884, 7
    %v5886 = vsub.s32 %v2389, %v5885
    %v5887 = vrot.slane %v5838, %v5886
    %v5888 = vlaneseq
    %v5889 = vshrl.u32 %v5888, 7
    %v5890 = vsub.s32 %v2394, %v5889
    %v5891 = vrot.slane %v5841, %v5890
    %v5892 = vsel %vm2399, %v5891, %v5887
    %v5893 = vlaneseq
    %v5894 = vshrl.u32 %v5893, 7
    %v5895 = vsub.s32 %v2401, %v5894
    %v5896 = vrot.slane %v5844, %v5895
    %v5897 = vsel %vm2406, %v5896, %v5892
    %v5898 = vlaneseq
    %v5899 = vshrl.u32 %v5898, 7
    %v5900 = vsub.s32 %v2408, %v5899
    %v5901 = vrot.slane %v5847, %v5900
    %v5902 = vsel %vm2413, %v5901, %v5897
    %v5903 = vlaneseq
    %v5904 = vshrl.u32 %v5903, 7
    %v5905 = vsub.s32 %v2415, %v5904
    %v5906 = vrot.slane %v5850, %v5905
    %v5907 = vsel %vm2420, %v5906, %v5902
    %v5908 = vlaneseq
    %v5909 = vshrl.u32 %v5908, 7
    %v5910 = vsub.s32 %v2422, %v5909
    %v5911 = vrot.slane %v5853, %v5910
    %v5912 = vsel %vm2427, %v5911, %v5907
    %v5913 = vlaneseq
    %v5914 = vshrl.u32 %v5913, 7
    %v5915 = vsub.s32 %v2429, %v5914
    %v5916 = vrot.slane %v5856, %v5915
    %v5917 = vsel %vm2434, %v5916, %v5912
    %v5918 = vlaneseq
    %v5919 = vshrl.u32 %v5918, 7
    %v5920 = vsub.s32 %v2436, %v5919
    %v5921 = vrot.slane %v5859, %v5920
    %v5922 = vsel %vm2441, %v5921, %v5917
    %v5923 = vlaneseq
    %v5924 = vshrl.u32 %v5923, 7
    %v5925 = vsub.s32 %v2443, %v5924
    %v5926 = vrot.slane %v5862, %v5925
    %v5927 = vsel %vm2448, %v5926, %v5922
    %v5928 = vlaneseq
    %v5929 = vshrl.u32 %v5928, 7
    %v5930 = vsub.s32 %v2450, %v5929
    %v5931 = vrot.slane %v5865, %v5930
    %v5932 = vsel %vm2455, %v5931, %v5927
    %v5933 = vlaneseq
    %v5934 = vshrl.u32 %v5933, 7
    %v5935 = vsub.s32 %v2457, %v5934
    %v5936 = vrot.slane %v5868, %v5935
    %v5937 = vsel %vm2462, %v5936, %v5932
    %v5938 = vlaneseq
    %v5939 = vshrl.u32 %v5938, 7
    %v5940 = vsub.s32 %v2464, %v5939
    %v5941 = vrot.slane %v5871, %v5940
    %v5942 = vsel %vm2469, %v5941, %v5937
    %v5943 = vlaneseq
    %v5944 = vshrl.u32 %v5943, 7
    %v5945 = vsub.s32 %v2471, %v5944
    %v5946 = vrot.slane %v5874, %v5945
    %v5947 = vsel %vm2476, %v5946, %v5942
    %v5948 = vlaneseq
    %v5949 = vshrl.u32 %v5948, 7
    %v5950 = vsub.s32 %v2478, %v5949
    %v5951 = vrot.slane %v5877, %v5950
    %v5952 = vsel %vm2483, %v5951, %v5947
    %v5953 = vlaneseq
    %v5954 = vshrl.u32 %v5953, 7
    %v5955 = vsub.s32 %v2485, %v5954
    %v5956 = vrot.slane %v5880, %v5955
    %v5957 = vsel %vm2490, %v5956, %v5952
    %v5958 = vlaneseq
    %v5959 = vshrl.u32 %v5958, 7
    %v5960 = vsub.s32 %v2492, %v5959
    %v5961 = vrot.slane %v5883, %v5960
    %v5962 = vsel %vm2497, %v5961, %v5957
    %v5963 = vpack.c.b16 %v5962, %v5962
    %v5981 = vunpack.c.l.b16 %v5684
    %v5982 = vunpack.c.l.b16 %v5685
    %v5983 = vunpack.c.l.b16 %v5686
    %v5984 = vunpack.c.l.b16 %v5687
    %v5985 = vunpack.c.l.b16 %v5688
    %v5986 = vunpack.c.l.b16 %v5689
    %v5987 = vunpack.c.l.b16 %v5690
    %v5988 = vunpack.c.l.b16 %v5691
    %v5989 = vunpack.c.l.b16 %v5692
    %v5990 = vunpack.c.l.b16 %v5693
    %v5991 = vunpack.c.l.b16 %v5694
    %v5992 = vunpack.c.l.b16 %v5695
    %v5993 = vunpack.c.l.b16 %v5696
    %v5994 = vunpack.c.l.b16 %v5697
    %v5995 = vunpack.c.l.b16 %v5698
    %v5996 = vunpack.c.l.b16 %v5699
    %v5997 = vpack.c.b16 %v5982, %v5981
    %v5998 = vpack.c.b16 %v5984, %v5983
    %v5999 = vpack.c.b16 %v5986, %v5985
    %v6000 = vpack.c.b16 %v5988, %v5987
    %v6001 = vpack.c.b16 %v5990, %v5989
    %v6002 = vpack.c.b16 %v5992, %v5991
    %v6003 = vpack.c.b16 %v5994, %v5993
    %v6004 = vpack.c.b16 %v5996, %v5995
    %6013 = vmatprep.subr.bf16.mxu0 0
    %6014 = vmatpush1.bf16.msra.mxu0 %v6004
    %6015 = vmatprep.subr.bf16.mxu0 0
    %6016 = vmatpush1.bf16.msra.mxu0 %v6003
    %6017 = vmatprep.subr.bf16.mxu0 0
    %6018 = vmatpush1.bf16.msra.mxu0 %v6002
    %6019 = vmatprep.subr.bf16.mxu0 0
    %6020 = vmatpush1.bf16.msra.mxu0 %v6001
    %6021 = vmatprep.subr.bf16.mxu0 0
    %6022 = vmatpush1.bf16.msra.mxu0 %v6000
    %6023 = vmatprep.subr.bf16.mxu0 0
    %6024 = vmatpush1.bf16.msra.mxu0 %v5999
    %6025 = vmatprep.subr.bf16.mxu0 0
    %6026 = vmatpush1.bf16.msra.mxu0 %v5998
    %6027 = vmatprep.subr.bf16.mxu0 0
    %6028 = vmatpush1.bf16.msra.mxu0 %v5997
    %6029 = vmatprep.subr.bf16.mxu0 0
    %6030 = vmatpush2.bf16.msra.mxu0 0
    %6031 = vmatprep.subr.bf16.mxu0 0
    %6032 = vmatpush2.bf16.msra.mxu0 0
    %6033 = vmatprep.subr.bf16.mxu0 0
    %6034 = vmatpush2.bf16.msra.mxu0 0
    %6035 = vmatprep.subr.bf16.mxu0 0
    %6036 = vmatpush2.bf16.msra.mxu0 0
    %6037 = vmatprep.subr.bf16.mxu0 0
    %6038 = vmatpush2.bf16.msra.mxu0 0
    %6039 = vmatprep.subr.bf16.mxu0 0
    %6040 = vmatpush2.bf16.msra.mxu0 0
    %6041 = vmatprep.subr.bf16.mxu0 0
    %6042 = vmatpush2.bf16.msra.mxu0 0
    %6043 = vmatprep.subr.bf16.mxu0 0
    %6044 = vmatpush2.bf16.msra.mxu0 0
    %6045 = vmatprep.mubr.bf16.mxu0 0
    %6046 = vmatmul.mubr.bf16.gmra.mxu0 %v5963
    %v6047 = vpop.f32.mrf.mxu0
    %v6048 = vadd.f32 0.0, %v6047
    %v6049 = vpop.f32.mrf.mxu0
    %v6050 = vpop.f32.mrf.mxu0
    %v6051 = vpop.f32.mrf.mxu0
    %6052 = vdwg.mxu0
    %v6061 = vunpack.c.l.b16 %v5628
    %v6062 = vunpack.c.h.b16 %v5628
    %v6063 = vunpack.c.l.b16 %v5629
    %v6064 = vunpack.c.h.b16 %v5629
    %v6065 = vunpack.c.l.b16 %v5630
    %v6066 = vunpack.c.h.b16 %v5630
    %v6067 = vunpack.c.l.b16 %v5631
    %v6068 = vunpack.c.h.b16 %v5631
    %v6069 = vunpack.c.l.b16 %v5632
    %v6070 = vunpack.c.h.b16 %v5632
    %v6071 = vunpack.c.l.b16 %v5633
    %v6072 = vunpack.c.h.b16 %v5633
    %v6073 = vunpack.c.l.b16 %v5634
    %v6074 = vunpack.c.h.b16 %v5634
    %v6075 = vunpack.c.l.b16 %v5635
    %v6076 = vunpack.c.h.b16 %v5635
    %6077 = vset.pattern.permute.xlu0 0
    %6078 = vperm.xlu0 %6077, %v6061
    %v6079 = vpop.permute.xlu0 %6078
    %6080 = vset.pattern.permute.xlu0 0
    %6081 = vperm.xlu0 %6080, %v6062
    %v6082 = vpop.permute.xlu0 %6081
    %6083 = vset.pattern.permute.xlu0 0
    %6084 = vperm.xlu0 %6083, %v6063
    %v6085 = vpop.permute.xlu0 %6084
    %6086 = vset.pattern.permute.xlu0 0
    %6087 = vperm.xlu0 %6086, %v6064
    %v6088 = vpop.permute.xlu0 %6087
    %6089 = vset.pattern.permute.xlu0 0
    %6090 = vperm.xlu0 %6089, %v6065
    %v6091 = vpop.permute.xlu0 %6090
    %6092 = vset.pattern.permute.xlu0 0
    %6093 = vperm.xlu0 %6092, %v6066
    %v6094 = vpop.permute.xlu0 %6093
    %6095 = vset.pattern.permute.xlu0 0
    %6096 = vperm.xlu0 %6095, %v6067
    %v6097 = vpop.permute.xlu0 %6096
    %6098 = vset.pattern.permute.xlu0 0
    %6099 = vperm.xlu0 %6098, %v6068
    %v6100 = vpop.permute.xlu0 %6099
    %6101 = vset.pattern.permute.xlu0 0
    %6102 = vperm.xlu0 %6101, %v6069
    %v6103 = vpop.permute.xlu0 %6102
    %6104 = vset.pattern.permute.xlu0 0
    %6105 = vperm.xlu0 %6104, %v6070
    %v6106 = vpop.permute.xlu0 %6105
    %6107 = vset.pattern.permute.xlu0 0
    %6108 = vperm.xlu0 %6107, %v6071
    %v6109 = vpop.permute.xlu0 %6108
    %6110 = vset.pattern.permute.xlu0 0
    %6111 = vperm.xlu0 %6110, %v6072
    %v6112 = vpop.permute.xlu0 %6111
    %6113 = vset.pattern.permute.xlu0 0
    %6114 = vperm.xlu0 %6113, %v6073
    %v6115 = vpop.permute.xlu0 %6114
    %6116 = vset.pattern.permute.xlu0 0
    %6117 = vperm.xlu0 %6116, %v6074
    %v6118 = vpop.permute.xlu0 %6117
    %6119 = vset.pattern.permute.xlu0 0
    %6120 = vperm.xlu0 %6119, %v6075
    %v6121 = vpop.permute.xlu0 %6120
    %6122 = vset.pattern.permute.xlu0 0
    %6123 = vperm.xlu0 %6122, %v6076
    %v6124 = vpop.permute.xlu0 %6123
    %v6125 = vlaneseq
    %v6126 = vshrl.u32 %v6125, 7
    %v6127 = vsub.s32 %v2389, %v6126
    %v6128 = vrot.slane %v6079, %v6127
    %v6129 = vlaneseq
    %v6130 = vshrl.u32 %v6129, 7
    %v6131 = vsub.s32 %v2394, %v6130
    %v6132 = vrot.slane %v6082, %v6131
    %v6133 = vsel %vm2399, %v6132, %v6128
    %v6134 = vlaneseq
    %v6135 = vshrl.u32 %v6134, 7
    %v6136 = vsub.s32 %v2401, %v6135
    %v6137 = vrot.slane %v6085, %v6136
    %v6138 = vsel %vm2406, %v6137, %v6133
    %v6139 = vlaneseq
    %v6140 = vshrl.u32 %v6139, 7
    %v6141 = vsub.s32 %v2408, %v6140
    %v6142 = vrot.slane %v6088, %v6141
    %v6143 = vsel %vm2413, %v6142, %v6138
    %v6144 = vlaneseq
    %v6145 = vshrl.u32 %v6144, 7
    %v6146 = vsub.s32 %v2415, %v6145
    %v6147 = vrot.slane %v6091, %v6146
    %v6148 = vsel %vm2420, %v6147, %v6143
    %v6149 = vlaneseq
    %v6150 = vshrl.u32 %v6149, 7
    %v6151 = vsub.s32 %v2422, %v6150
    %v6152 = vrot.slane %v6094, %v6151
    %v6153 = vsel %vm2427, %v6152, %v6148
    %v6154 = vlaneseq
    %v6155 = vshrl.u32 %v6154, 7
    %v6156 = vsub.s32 %v2429, %v6155
    %v6157 = vrot.slane %v6097, %v6156
    %v6158 = vsel %vm2434, %v6157, %v6153
    %v6159 = vlaneseq
    %v6160 = vshrl.u32 %v6159, 7
    %v6161 = vsub.s32 %v2436, %v6160
    %v6162 = vrot.slane %v6100, %v6161
    %v6163 = vsel %vm2441, %v6162, %v6158
    %v6164 = vlaneseq
    %v6165 = vshrl.u32 %v6164, 7
    %v6166 = vsub.s32 %v2443, %v6165
    %v6167 = vrot.slane %v6103, %v6166
    %v6168 = vsel %vm2448, %v6167, %v6163
    %v6169 = vlaneseq
    %v6170 = vshrl.u32 %v6169, 7
    %v6171 = vsub.s32 %v2450, %v6170
    %v6172 = vrot.slane %v6106, %v6171
    %v6173 = vsel %vm2455, %v6172, %v6168
    %v6174 = vlaneseq
    %v6175 = vshrl.u32 %v6174, 7
    %v6176 = vsub.s32 %v2457, %v6175
    %v6177 = vrot.slane %v6109, %v6176
    %v6178 = vsel %vm2462, %v6177, %v6173
    %v6179 = vlaneseq
    %v6180 = vshrl.u32 %v6179, 7
    %v6181 = vsub.s32 %v2464, %v6180
    %v6182 = vrot.slane %v6112, %v6181
    %v6183 = vsel %vm2469, %v6182, %v6178
    %v6184 = vlaneseq
    %v6185 = vshrl.u32 %v6184, 7
    %v6186 = vsub.s32 %v2471, %v6185
    %v6187 = vrot.slane %v6115, %v6186
    %v6188 = vsel %vm2476, %v6187, %v6183
    %v6189 = vlaneseq
    %v6190 = vshrl.u32 %v6189, 7
    %v6191 = vsub.s32 %v2478, %v6190
    %v6192 = vrot.slane %v6118, %v6191
    %v6193 = vsel %vm2483, %v6192, %v6188
    %v6194 = vlaneseq
    %v6195 = vshrl.u32 %v6194, 7
    %v6196 = vsub.s32 %v2485, %v6195
    %v6197 = vrot.slane %v6121, %v6196
    %v6198 = vsel %vm2490, %v6197, %v6193
    %v6199 = vlaneseq
    %v6200 = vshrl.u32 %v6199, 7
    %v6201 = vsub.s32 %v2492, %v6200
    %v6202 = vrot.slane %v6124, %v6201
    %v6203 = vsel %vm2497, %v6202, %v6198
    %v6204 = vpack.c.b16 %v6203, %v6203
    %v6222 = vunpack.c.l.b16 %v5700
    %v6223 = vunpack.c.l.b16 %v5701
    %v6224 = vunpack.c.l.b16 %v5702
    %v6225 = vunpack.c.l.b16 %v5703
    %v6226 = vunpack.c.l.b16 %v5704
    %v6227 = vunpack.c.l.b16 %v5705
    %v6228 = vunpack.c.l.b16 %v5706
    %v6229 = vunpack.c.l.b16 %v5707
    %v6230 = vunpack.c.l.b16 %v5708
    %v6231 = vunpack.c.l.b16 %v5709
    %v6232 = vunpack.c.l.b16 %v5710
    %v6233 = vunpack.c.l.b16 %v5711
    %v6234 = vunpack.c.l.b16 %v5712
    %v6235 = vunpack.c.l.b16 %v5713
    %v6236 = vunpack.c.l.b16 %v5714
    %v6237 = vunpack.c.l.b16 %v5715
    %v6238 = vpack.c.b16 %v6223, %v6222
    %v6239 = vpack.c.b16 %v6225, %v6224
    %v6240 = vpack.c.b16 %v6227, %v6226
    %v6241 = vpack.c.b16 %v6229, %v6228
    %v6242 = vpack.c.b16 %v6231, %v6230
    %v6243 = vpack.c.b16 %v6233, %v6232
    %v6244 = vpack.c.b16 %v6235, %v6234
    %v6245 = vpack.c.b16 %v6237, %v6236
    %6254 = vmatprep.subr.bf16.mxu0 0
    %6255 = vmatpush1.bf16.msra.mxu0 %v6245
    %6256 = vmatprep.subr.bf16.mxu0 0
    %6257 = vmatpush1.bf16.msra.mxu0 %v6244
    %6258 = vmatprep.subr.bf16.mxu0 0
    %6259 = vmatpush1.bf16.msra.mxu0 %v6243
    %6260 = vmatprep.subr.bf16.mxu0 0
    %6261 = vmatpush1.bf16.msra.mxu0 %v6242
    %6262 = vmatprep.subr.bf16.mxu0 0
    %6263 = vmatpush1.bf16.msra.mxu0 %v6241
    %6264 = vmatprep.subr.bf16.mxu0 0
    %6265 = vmatpush1.bf16.msra.mxu0 %v6240
    %6266 = vmatprep.subr.bf16.mxu0 0
    %6267 = vmatpush1.bf16.msra.mxu0 %v6239
    %6268 = vmatprep.subr.bf16.mxu0 0
    %6269 = vmatpush1.bf16.msra.mxu0 %v6238
    %6270 = vmatprep.subr.bf16.mxu0 0
    %6271 = vmatpush2.bf16.msra.mxu0 0
    %6272 = vmatprep.subr.bf16.mxu0 0
    %6273 = vmatpush2.bf16.msra.mxu0 0
    %6274 = vmatprep.subr.bf16.mxu0 0
    %6275 = vmatpush2.bf16.msra.mxu0 0
    %6276 = vmatprep.subr.bf16.mxu0 0
    %6277 = vmatpush2.bf16.msra.mxu0 0
    %6278 = vmatprep.subr.bf16.mxu0 0
    %6279 = vmatpush2.bf16.msra.mxu0 0
    %6280 = vmatprep.subr.bf16.mxu0 0
    %6281 = vmatpush2.bf16.msra.mxu0 0
    %6282 = vmatprep.subr.bf16.mxu0 0
    %6283 = vmatpush2.bf16.msra.mxu0 0
    %6284 = vmatprep.subr.bf16.mxu0 0
    %6285 = vmatpush2.bf16.msra.mxu0 0
    %6286 = vmatprep.mubr.bf16.mxu0 0
    %6287 = vmatmul.mubr.bf16.gmra.mxu0 %v6204
    %v6288 = vpop.f32.mrf.mxu0
    %v6289 = vadd.f32 0.0, %v6288
    %v6290 = vpop.f32.mrf.mxu0
    %v6291 = vpop.f32.mrf.mxu0
    %v6292 = vpop.f32.mrf.mxu0
    %6293 = vdwg.mxu0
    %v6302 = vunpack.c.l.b16 %v5636
    %v6303 = vunpack.c.h.b16 %v5636
    %v6304 = vunpack.c.l.b16 %v5637
    %v6305 = vunpack.c.h.b16 %v5637
    %v6306 = vunpack.c.l.b16 %v5638
    %v6307 = vunpack.c.h.b16 %v5638
    %v6308 = vunpack.c.l.b16 %v5639
    %v6309 = vunpack.c.h.b16 %v5639
    %v6310 = vunpack.c.l.b16 %v5640
    %v6311 = vunpack.c.h.b16 %v5640
    %v6312 = vunpack.c.l.b16 %v5641
    %v6313 = vunpack.c.h.b16 %v5641
    %v6314 = vunpack.c.l.b16 %v5642
    %v6315 = vunpack.c.h.b16 %v5642
    %v6316 = vunpack.c.l.b16 %v5643
    %v6317 = vunpack.c.h.b16 %v5643
    %6318 = vset.pattern.permute.xlu0 0
    %6319 = vperm.xlu0 %6318, %v6302
    %v6320 = vpop.permute.xlu0 %6319
    %6321 = vset.pattern.permute.xlu0 0
    %6322 = vperm.xlu0 %6321, %v6303
    %v6323 = vpop.permute.xlu0 %6322
    %6324 = vset.pattern.permute.xlu0 0
    %6325 = vperm.xlu0 %6324, %v6304
    %v6326 = vpop.permute.xlu0 %6325
    %6327 = vset.pattern.permute.xlu0 0
    %6328 = vperm.xlu0 %6327, %v6305
    %v6329 = vpop.permute.xlu0 %6328
    %6330 = vset.pattern.permute.xlu0 0
    %6331 = vperm.xlu0 %6330, %v6306
    %v6332 = vpop.permute.xlu0 %6331
    %6333 = vset.pattern.permute.xlu0 0
    %6334 = vperm.xlu0 %6333, %v6307
    %v6335 = vpop.permute.xlu0 %6334
    %6336 = vset.pattern.permute.xlu0 0
    %6337 = vperm.xlu0 %6336, %v6308
    %v6338 = vpop.permute.xlu0 %6337
    %6339 = vset.pattern.permute.xlu0 0
    %6340 = vperm.xlu0 %6339, %v6309
    %v6341 = vpop.permute.xlu0 %6340
    %6342 = vset.pattern.permute.xlu0 0
    %6343 = vperm.xlu0 %6342, %v6310
    %v6344 = vpop.permute.xlu0 %6343
    %6345 = vset.pattern.permute.xlu0 0
    %6346 = vperm.xlu0 %6345, %v6311
    %v6347 = vpop.permute.xlu0 %6346
    %6348 = vset.pattern.permute.xlu0 0
    %6349 = vperm.xlu0 %6348, %v6312
    %v6350 = vpop.permute.xlu0 %6349
    %6351 = vset.pattern.permute.xlu0 0
    %6352 = vperm.xlu0 %6351, %v6313
    %v6353 = vpop.permute.xlu0 %6352
    %6354 = vset.pattern.permute.xlu0 0
    %6355 = vperm.xlu0 %6354, %v6314
    %v6356 = vpop.permute.xlu0 %6355
    %6357 = vset.pattern.permute.xlu0 0
    %6358 = vperm.xlu0 %6357, %v6315
    %v6359 = vpop.permute.xlu0 %6358
    %6360 = vset.pattern.permute.xlu0 0
    %6361 = vperm.xlu0 %6360, %v6316
    %v6362 = vpop.permute.xlu0 %6361
    %6363 = vset.pattern.permute.xlu0 0
    %6364 = vperm.xlu0 %6363, %v6317
    %v6365 = vpop.permute.xlu0 %6364
    %v6366 = vlaneseq
    %v6367 = vshrl.u32 %v6366, 7
    %v6368 = vsub.s32 %v2389, %v6367
    %v6369 = vrot.slane %v6320, %v6368
    %v6370 = vlaneseq
    %v6371 = vshrl.u32 %v6370, 7
    %v6372 = vsub.s32 %v2394, %v6371
    %v6373 = vrot.slane %v6323, %v6372
    %v6374 = vsel %vm2399, %v6373, %v6369
    %v6375 = vlaneseq
    %v6376 = vshrl.u32 %v6375, 7
    %v6377 = vsub.s32 %v2401, %v6376
    %v6378 = vrot.slane %v6326, %v6377
    %v6379 = vsel %vm2406, %v6378, %v6374
    %v6380 = vlaneseq
    %v6381 = vshrl.u32 %v6380, 7
    %v6382 = vsub.s32 %v2408, %v6381
    %v6383 = vrot.slane %v6329, %v6382
    %v6384 = vsel %vm2413, %v6383, %v6379
    %v6385 = vlaneseq
    %v6386 = vshrl.u32 %v6385, 7
    %v6387 = vsub.s32 %v2415, %v6386
    %v6388 = vrot.slane %v6332, %v6387
    %v6389 = vsel %vm2420, %v6388, %v6384
    %v6390 = vlaneseq
    %v6391 = vshrl.u32 %v6390, 7
    %v6392 = vsub.s32 %v2422, %v6391
    %v6393 = vrot.slane %v6335, %v6392
    %v6394 = vsel %vm2427, %v6393, %v6389
    %v6395 = vlaneseq
    %v6396 = vshrl.u32 %v6395, 7
    %v6397 = vsub.s32 %v2429, %v6396
    %v6398 = vrot.slane %v6338, %v6397
    %v6399 = vsel %vm2434, %v6398, %v6394
    %v6400 = vlaneseq
    %v6401 = vshrl.u32 %v6400, 7
    %v6402 = vsub.s32 %v2436, %v6401
    %v6403 = vrot.slane %v6341, %v6402
    %v6404 = vsel %vm2441, %v6403, %v6399
    %v6405 = vlaneseq
    %v6406 = vshrl.u32 %v6405, 7
    %v6407 = vsub.s32 %v2443, %v6406
    %v6408 = vrot.slane %v6344, %v6407
    %v6409 = vsel %vm2448, %v6408, %v6404
    %v6410 = vlaneseq
    %v6411 = vshrl.u32 %v6410, 7
    %v6412 = vsub.s32 %v2450, %v6411
    %v6413 = vrot.slane %v6347, %v6412
    %v6414 = vsel %vm2455, %v6413, %v6409
    %v6415 = vlaneseq
    %v6416 = vshrl.u32 %v6415, 7
    %v6417 = vsub.s32 %v2457, %v6416
    %v6418 = vrot.slane %v6350, %v6417
    %v6419 = vsel %vm2462, %v6418, %v6414
    %v6420 = vlaneseq
    %v6421 = vshrl.u32 %v6420, 7
    %v6422 = vsub.s32 %v2464, %v6421
    %v6423 = vrot.slane %v6353, %v6422
    %v6424 = vsel %vm2469, %v6423, %v6419
    %v6425 = vlaneseq
    %v6426 = vshrl.u32 %v6425, 7
    %v6427 = vsub.s32 %v2471, %v6426
    %v6428 = vrot.slane %v6356, %v6427
    %v6429 = vsel %vm2476, %v6428, %v6424
    %v6430 = vlaneseq
    %v6431 = vshrl.u32 %v6430, 7
    %v6432 = vsub.s32 %v2478, %v6431
    %v6433 = vrot.slane %v6359, %v6432
    %v6434 = vsel %vm2483, %v6433, %v6429
    %v6435 = vlaneseq
    %v6436 = vshrl.u32 %v6435, 7
    %v6437 = vsub.s32 %v2485, %v6436
    %v6438 = vrot.slane %v6362, %v6437
    %v6439 = vsel %vm2490, %v6438, %v6434
    %v6440 = vlaneseq
    %v6441 = vshrl.u32 %v6440, 7
    %v6442 = vsub.s32 %v2492, %v6441
    %v6443 = vrot.slane %v6365, %v6442
    %v6444 = vsel %vm2497, %v6443, %v6439
    %v6445 = vpack.c.b16 %v6444, %v6444
    %v6463 = vunpack.c.l.b16 %v5716
    %v6464 = vunpack.c.l.b16 %v5717
    %v6465 = vunpack.c.l.b16 %v5718
    %v6466 = vunpack.c.l.b16 %v5719
    %v6467 = vunpack.c.l.b16 %v5720
    %v6468 = vunpack.c.l.b16 %v5721
    %v6469 = vunpack.c.l.b16 %v5722
    %v6470 = vunpack.c.l.b16 %v5723
    %v6471 = vunpack.c.l.b16 %v5724
    %v6472 = vunpack.c.l.b16 %v5725
    %v6473 = vunpack.c.l.b16 %v5726
    %v6474 = vunpack.c.l.b16 %v5727
    %v6475 = vunpack.c.l.b16 %v5728
    %v6476 = vunpack.c.l.b16 %v5729
    %v6477 = vunpack.c.l.b16 %v5730
    %v6478 = vunpack.c.l.b16 %v5731
    %v6479 = vpack.c.b16 %v6464, %v6463
    %v6480 = vpack.c.b16 %v6466, %v6465
    %v6481 = vpack.c.b16 %v6468, %v6467
    %v6482 = vpack.c.b16 %v6470, %v6469
    %v6483 = vpack.c.b16 %v6472, %v6471
    %v6484 = vpack.c.b16 %v6474, %v6473
    %v6485 = vpack.c.b16 %v6476, %v6475
    %v6486 = vpack.c.b16 %v6478, %v6477
    %6495 = vmatprep.subr.bf16.mxu0 0
    %6496 = vmatpush1.bf16.msra.mxu0 %v6486
    %6497 = vmatprep.subr.bf16.mxu0 0
    %6498 = vmatpush1.bf16.msra.mxu0 %v6485
    %6499 = vmatprep.subr.bf16.mxu0 0
    %6500 = vmatpush1.bf16.msra.mxu0 %v6484
    %6501 = vmatprep.subr.bf16.mxu0 0
    %6502 = vmatpush1.bf16.msra.mxu0 %v6483
    %6503 = vmatprep.subr.bf16.mxu0 0
    %6504 = vmatpush1.bf16.msra.mxu0 %v6482
    %6505 = vmatprep.subr.bf16.mxu0 0
    %6506 = vmatpush1.bf16.msra.mxu0 %v6481
    %6507 = vmatprep.subr.bf16.mxu0 0
    %6508 = vmatpush1.bf16.msra.mxu0 %v6480
    %6509 = vmatprep.subr.bf16.mxu0 0
    %6510 = vmatpush1.bf16.msra.mxu0 %v6479
    %6511 = vmatprep.subr.bf16.mxu0 0
    %6512 = vmatpush2.bf16.msra.mxu0 0
    %6513 = vmatprep.subr.bf16.mxu0 0
    %6514 = vmatpush2.bf16.msra.mxu0 0
    %6515 = vmatprep.subr.bf16.mxu0 0
    %6516 = vmatpush2.bf16.msra.mxu0 0
    %6517 = vmatprep.subr.bf16.mxu0 0
    %6518 = vmatpush2.bf16.msra.mxu0 0
    %6519 = vmatprep.subr.bf16.mxu0 0
    %6520 = vmatpush2.bf16.msra.mxu0 0
    %6521 = vmatprep.subr.bf16.mxu0 0
    %6522 = vmatpush2.bf16.msra.mxu0 0
    %6523 = vmatprep.subr.bf16.mxu0 0
    %6524 = vmatpush2.bf16.msra.mxu0 0
    %6525 = vmatprep.subr.bf16.mxu0 0
    %6526 = vmatpush2.bf16.msra.mxu0 0
    %6527 = vmatprep.mubr.bf16.mxu0 0
    %6528 = vmatmul.mubr.bf16.gmra.mxu0 %v6445
    %v6529 = vpop.f32.mrf.mxu0
    %v6530 = vadd.f32 0.0, %v6529
    %v6531 = vpop.f32.mrf.mxu0
    %v6532 = vpop.f32.mrf.mxu0
    %v6533 = vpop.f32.mrf.mxu0
    %6534 = vdwg.mxu0
    %v6543 = vunpack.c.l.b16 %v5644
    %v6544 = vunpack.c.h.b16 %v5644
    %v6545 = vunpack.c.l.b16 %v5645
    %v6546 = vunpack.c.h.b16 %v5645
    %v6547 = vunpack.c.l.b16 %v5646
    %v6548 = vunpack.c.h.b16 %v5646
    %v6549 = vunpack.c.l.b16 %v5647
    %v6550 = vunpack.c.h.b16 %v5647
    %v6551 = vunpack.c.l.b16 %v5648
    %v6552 = vunpack.c.h.b16 %v5648
    %v6553 = vunpack.c.l.b16 %v5649
    %v6554 = vunpack.c.h.b16 %v5649
    %v6555 = vunpack.c.l.b16 %v5650
    %v6556 = vunpack.c.h.b16 %v5650
    %v6557 = vunpack.c.l.b16 %v5651
    %v6558 = vunpack.c.h.b16 %v5651
    %6559 = vset.pattern.permute.xlu0 0
    %6560 = vperm.xlu0 %6559, %v6543
    %v6561 = vpop.permute.xlu0 %6560
    %6562 = vset.pattern.permute.xlu0 0
    %6563 = vperm.xlu0 %6562, %v6544
    %v6564 = vpop.permute.xlu0 %6563
    %6565 = vset.pattern.permute.xlu0 0
    %6566 = vperm.xlu0 %6565, %v6545
    %v6567 = vpop.permute.xlu0 %6566
    %6568 = vset.pattern.permute.xlu0 0
    %6569 = vperm.xlu0 %6568, %v6546
    %v6570 = vpop.permute.xlu0 %6569
    %6571 = vset.pattern.permute.xlu0 0
    %6572 = vperm.xlu0 %6571, %v6547
    %v6573 = vpop.permute.xlu0 %6572
    %6574 = vset.pattern.permute.xlu0 0
    %6575 = vperm.xlu0 %6574, %v6548
    %v6576 = vpop.permute.xlu0 %6575
    %6577 = vset.pattern.permute.xlu0 0
    %6578 = vperm.xlu0 %6577, %v6549
    %v6579 = vpop.permute.xlu0 %6578
    %6580 = vset.pattern.permute.xlu0 0
    %6581 = vperm.xlu0 %6580, %v6550
    %v6582 = vpop.permute.xlu0 %6581
    %6583 = vset.pattern.permute.xlu0 0
    %6584 = vperm.xlu0 %6583, %v6551
    %v6585 = vpop.permute.xlu0 %6584
    %6586 = vset.pattern.permute.xlu0 0
    %6587 = vperm.xlu0 %6586, %v6552
    %v6588 = vpop.permute.xlu0 %6587
    %6589 = vset.pattern.permute.xlu0 0
    %6590 = vperm.xlu0 %6589, %v6553
    %v6591 = vpop.permute.xlu0 %6590
    %6592 = vset.pattern.permute.xlu0 0
    %6593 = vperm.xlu0 %6592, %v6554
    %v6594 = vpop.permute.xlu0 %6593
    %6595 = vset.pattern.permute.xlu0 0
    %6596 = vperm.xlu0 %6595, %v6555
    %v6597 = vpop.permute.xlu0 %6596
    %6598 = vset.pattern.permute.xlu0 0
    %6599 = vperm.xlu0 %6598, %v6556
    %v6600 = vpop.permute.xlu0 %6599
    %6601 = vset.pattern.permute.xlu0 0
    %6602 = vperm.xlu0 %6601, %v6557
    %v6603 = vpop.permute.xlu0 %6602
    %6604 = vset.pattern.permute.xlu0 0
    %6605 = vperm.xlu0 %6604, %v6558
    %v6606 = vpop.permute.xlu0 %6605
    %v6607 = vlaneseq
    %v6608 = vshrl.u32 %v6607, 7
    %v6609 = vsub.s32 %v2389, %v6608
    %v6610 = vrot.slane %v6561, %v6609
    %v6611 = vlaneseq
    %v6612 = vshrl.u32 %v6611, 7
    %v6613 = vsub.s32 %v2394, %v6612
    %v6614 = vrot.slane %v6564, %v6613
    %v6615 = vsel %vm2399, %v6614, %v6610
    %v6616 = vlaneseq
    %v6617 = vshrl.u32 %v6616, 7
    %v6618 = vsub.s32 %v2401, %v6617
    %v6619 = vrot.slane %v6567, %v6618
    %v6620 = vsel %vm2406, %v6619, %v6615
    %v6621 = vlaneseq
    %v6622 = vshrl.u32 %v6621, 7
    %v6623 = vsub.s32 %v2408, %v6622
    %v6624 = vrot.slane %v6570, %v6623
    %v6625 = vsel %vm2413, %v6624, %v6620
    %v6626 = vlaneseq
    %v6627 = vshrl.u32 %v6626, 7
    %v6628 = vsub.s32 %v2415, %v6627
    %v6629 = vrot.slane %v6573, %v6628
    %v6630 = vsel %vm2420, %v6629, %v6625
    %v6631 = vlaneseq
    %v6632 = vshrl.u32 %v6631, 7
    %v6633 = vsub.s32 %v2422, %v6632
    %v6634 = vrot.slane %v6576, %v6633
    %v6635 = vsel %vm2427, %v6634, %v6630
    %v6636 = vlaneseq
    %v6637 = vshrl.u32 %v6636, 7
    %v6638 = vsub.s32 %v2429, %v6637
    %v6639 = vrot.slane %v6579, %v6638
    %v6640 = vsel %vm2434, %v6639, %v6635
    %v6641 = vlaneseq
    %v6642 = vshrl.u32 %v6641, 7
    %v6643 = vsub.s32 %v2436, %v6642
    %v6644 = vrot.slane %v6582, %v6643
    %v6645 = vsel %vm2441, %v6644, %v6640
    %v6646 = vlaneseq
    %v6647 = vshrl.u32 %v6646, 7
    %v6648 = vsub.s32 %v2443, %v6647
    %v6649 = vrot.slane %v6585, %v6648
    %v6650 = vsel %vm2448, %v6649, %v6645
    %v6651 = vlaneseq
    %v6652 = vshrl.u32 %v6651, 7
    %v6653 = vsub.s32 %v2450, %v6652
    %v6654 = vrot.slane %v6588, %v6653
    %v6655 = vsel %vm2455, %v6654, %v6650
    %v6656 = vlaneseq
    %v6657 = vshrl.u32 %v6656, 7
    %v6658 = vsub.s32 %v2457, %v6657
    %v6659 = vrot.slane %v6591, %v6658
    %v6660 = vsel %vm2462, %v6659, %v6655
    %v6661 = vlaneseq
    %v6662 = vshrl.u32 %v6661, 7
    %v6663 = vsub.s32 %v2464, %v6662
    %v6664 = vrot.slane %v6594, %v6663
    %v6665 = vsel %vm2469, %v6664, %v6660
    %v6666 = vlaneseq
    %v6667 = vshrl.u32 %v6666, 7
    %v6668 = vsub.s32 %v2471, %v6667
    %v6669 = vrot.slane %v6597, %v6668
    %v6670 = vsel %vm2476, %v6669, %v6665
    %v6671 = vlaneseq
    %v6672 = vshrl.u32 %v6671, 7
    %v6673 = vsub.s32 %v2478, %v6672
    %v6674 = vrot.slane %v6600, %v6673
    %v6675 = vsel %vm2483, %v6674, %v6670
    %v6676 = vlaneseq
    %v6677 = vshrl.u32 %v6676, 7
    %v6678 = vsub.s32 %v2485, %v6677
    %v6679 = vrot.slane %v6603, %v6678
    %v6680 = vsel %vm2490, %v6679, %v6675
    %v6681 = vlaneseq
    %v6682 = vshrl.u32 %v6681, 7
    %v6683 = vsub.s32 %v2492, %v6682
    %v6684 = vrot.slane %v6606, %v6683
    %v6685 = vsel %vm2497, %v6684, %v6680
    %v6686 = vpack.c.b16 %v6685, %v6685
    %v6704 = vunpack.c.l.b16 %v5732
    %v6705 = vunpack.c.l.b16 %v5733
    %v6706 = vunpack.c.l.b16 %v5734
    %v6707 = vunpack.c.l.b16 %v5735
    %v6708 = vunpack.c.l.b16 %v5736
    %v6709 = vunpack.c.l.b16 %v5737
    %v6710 = vunpack.c.l.b16 %v5738
    %v6711 = vunpack.c.l.b16 %v5739
    %v6712 = vunpack.c.l.b16 %v5740
    %v6713 = vunpack.c.l.b16 %v5741
    %v6714 = vunpack.c.l.b16 %v5742
    %v6715 = vunpack.c.l.b16 %v5743
    %v6716 = vunpack.c.l.b16 %v5744
    %v6717 = vunpack.c.l.b16 %v5745
    %v6718 = vunpack.c.l.b16 %v5746
    %v6719 = vunpack.c.l.b16 %v5747
    %v6720 = vpack.c.b16 %v6705, %v6704
    %v6721 = vpack.c.b16 %v6707, %v6706
    %v6722 = vpack.c.b16 %v6709, %v6708
    %v6723 = vpack.c.b16 %v6711, %v6710
    %v6724 = vpack.c.b16 %v6713, %v6712
    %v6725 = vpack.c.b16 %v6715, %v6714
    %v6726 = vpack.c.b16 %v6717, %v6716
    %v6727 = vpack.c.b16 %v6719, %v6718
    %6736 = vmatprep.subr.bf16.mxu0 0
    %6737 = vmatpush1.bf16.msra.mxu0 %v6727
    %6738 = vmatprep.subr.bf16.mxu0 0
    %6739 = vmatpush1.bf16.msra.mxu0 %v6726
    %6740 = vmatprep.subr.bf16.mxu0 0
    %6741 = vmatpush1.bf16.msra.mxu0 %v6725
    %6742 = vmatprep.subr.bf16.mxu0 0
    %6743 = vmatpush1.bf16.msra.mxu0 %v6724
    %6744 = vmatprep.subr.bf16.mxu0 0
    %6745 = vmatpush1.bf16.msra.mxu0 %v6723
    %6746 = vmatprep.subr.bf16.mxu0 0
    %6747 = vmatpush1.bf16.msra.mxu0 %v6722
    %6748 = vmatprep.subr.bf16.mxu0 0
    %6749 = vmatpush1.bf16.msra.mxu0 %v6721
    %6750 = vmatprep.subr.bf16.mxu0 0
    %6751 = vmatpush1.bf16.msra.mxu0 %v6720
    %6752 = vmatprep.subr.bf16.mxu0 0
    %6753 = vmatpush2.bf16.msra.mxu0 0
    %6754 = vmatprep.subr.bf16.mxu0 0
    %6755 = vmatpush2.bf16.msra.mxu0 0
    %6756 = vmatprep.subr.bf16.mxu0 0
    %6757 = vmatpush2.bf16.msra.mxu0 0
    %6758 = vmatprep.subr.bf16.mxu0 0
    %6759 = vmatpush2.bf16.msra.mxu0 0
    %6760 = vmatprep.subr.bf16.mxu0 0
    %6761 = vmatpush2.bf16.msra.mxu0 0
    %6762 = vmatprep.subr.bf16.mxu0 0
    %6763 = vmatpush2.bf16.msra.mxu0 0
    %6764 = vmatprep.subr.bf16.mxu0 0
    %6765 = vmatpush2.bf16.msra.mxu0 0
    %6766 = vmatprep.subr.bf16.mxu0 0
    %6767 = vmatpush2.bf16.msra.mxu0 0
    %6768 = vmatprep.mubr.bf16.mxu0 0
    %6769 = vmatmul.mubr.bf16.gmra.mxu0 %v6686
    %v6770 = vpop.f32.mrf.mxu0
    %v6771 = vadd.f32 0.0, %v6770
    %v6772 = vpop.f32.mrf.mxu0
    %v6773 = vpop.f32.mrf.mxu0
    %v6774 = vpop.f32.mrf.mxu0
    %6775 = vdwg.mxu0
    %v6784 = vunpack.c.l.b16 %v5652
    %v6785 = vunpack.c.h.b16 %v5652
    %v6786 = vunpack.c.l.b16 %v5653
    %v6787 = vunpack.c.h.b16 %v5653
    %v6788 = vunpack.c.l.b16 %v5654
    %v6789 = vunpack.c.h.b16 %v5654
    %v6790 = vunpack.c.l.b16 %v5655
    %v6791 = vunpack.c.h.b16 %v5655
    %v6792 = vunpack.c.l.b16 %v5656
    %v6793 = vunpack.c.h.b16 %v5656
    %v6794 = vunpack.c.l.b16 %v5657
    %v6795 = vunpack.c.h.b16 %v5657
    %v6796 = vunpack.c.l.b16 %v5658
    %v6797 = vunpack.c.h.b16 %v5658
    %v6798 = vunpack.c.l.b16 %v5659
    %v6799 = vunpack.c.h.b16 %v5659
    %6800 = vset.pattern.permute.xlu0 0
    %6801 = vperm.xlu0 %6800, %v6784
    %v6802 = vpop.permute.xlu0 %6801
    %6803 = vset.pattern.permute.xlu0 0
    %6804 = vperm.xlu0 %6803, %v6785
    %v6805 = vpop.permute.xlu0 %6804
    %6806 = vset.pattern.permute.xlu0 0
    %6807 = vperm.xlu0 %6806, %v6786
    %v6808 = vpop.permute.xlu0 %6807
    %6809 = vset.pattern.permute.xlu0 0
    %6810 = vperm.xlu0 %6809, %v6787
    %v6811 = vpop.permute.xlu0 %6810
    %6812 = vset.pattern.permute.xlu0 0
    %6813 = vperm.xlu0 %6812, %v6788
    %v6814 = vpop.permute.xlu0 %6813
    %6815 = vset.pattern.permute.xlu0 0
    %6816 = vperm.xlu0 %6815, %v6789
    %v6817 = vpop.permute.xlu0 %6816
    %6818 = vset.pattern.permute.xlu0 0
    %6819 = vperm.xlu0 %6818, %v6790
    %v6820 = vpop.permute.xlu0 %6819
    %6821 = vset.pattern.permute.xlu0 0
    %6822 = vperm.xlu0 %6821, %v6791
    %v6823 = vpop.permute.xlu0 %6822
    %6824 = vset.pattern.permute.xlu0 0
    %6825 = vperm.xlu0 %6824, %v6792
    %v6826 = vpop.permute.xlu0 %6825
    %6827 = vset.pattern.permute.xlu0 0
    %6828 = vperm.xlu0 %6827, %v6793
    %v6829 = vpop.permute.xlu0 %6828
    %6830 = vset.pattern.permute.xlu0 0
    %6831 = vperm.xlu0 %6830, %v6794
    %v6832 = vpop.permute.xlu0 %6831
    %6833 = vset.pattern.permute.xlu0 0
    %6834 = vperm.xlu0 %6833, %v6795
    %v6835 = vpop.permute.xlu0 %6834
    %6836 = vset.pattern.permute.xlu0 0
    %6837 = vperm.xlu0 %6836, %v6796
    %v6838 = vpop.permute.xlu0 %6837
    %6839 = vset.pattern.permute.xlu0 0
    %6840 = vperm.xlu0 %6839, %v6797
    %v6841 = vpop.permute.xlu0 %6840
    %6842 = vset.pattern.permute.xlu0 0
    %6843 = vperm.xlu0 %6842, %v6798
    %v6844 = vpop.permute.xlu0 %6843
    %6845 = vset.pattern.permute.xlu0 0
    %6846 = vperm.xlu0 %6845, %v6799
    %v6847 = vpop.permute.xlu0 %6846
    %v6848 = vlaneseq
    %v6849 = vshrl.u32 %v6848, 7
    %v6850 = vsub.s32 %v2389, %v6849
    %v6851 = vrot.slane %v6802, %v6850
    %v6852 = vlaneseq
    %v6853 = vshrl.u32 %v6852, 7
    %v6854 = vsub.s32 %v2394, %v6853
    %v6855 = vrot.slane %v6805, %v6854
    %v6856 = vsel %vm2399, %v6855, %v6851
    %v6857 = vlaneseq
    %v6858 = vshrl.u32 %v6857, 7
    %v6859 = vsub.s32 %v2401, %v6858
    %v6860 = vrot.slane %v6808, %v6859
    %v6861 = vsel %vm2406, %v6860, %v6856
    %v6862 = vlaneseq
    %v6863 = vshrl.u32 %v6862, 7
    %v6864 = vsub.s32 %v2408, %v6863
    %v6865 = vrot.slane %v6811, %v6864
    %v6866 = vsel %vm2413, %v6865, %v6861
    %v6867 = vlaneseq
    %v6868 = vshrl.u32 %v6867, 7
    %v6869 = vsub.s32 %v2415, %v6868
    %v6870 = vrot.slane %v6814, %v6869
    %v6871 = vsel %vm2420, %v6870, %v6866
    %v6872 = vlaneseq
    %v6873 = vshrl.u32 %v6872, 7
    %v6874 = vsub.s32 %v2422, %v6873
    %v6875 = vrot.slane %v6817, %v6874
    %v6876 = vsel %vm2427, %v6875, %v6871
    %v6877 = vlaneseq
    %v6878 = vshrl.u32 %v6877, 7
    %v6879 = vsub.s32 %v2429, %v6878
    %v6880 = vrot.slane %v6820, %v6879
    %v6881 = vsel %vm2434, %v6880, %v6876
    %v6882 = vlaneseq
    %v6883 = vshrl.u32 %v6882, 7
    %v6884 = vsub.s32 %v2436, %v6883
    %v6885 = vrot.slane %v6823, %v6884
    %v6886 = vsel %vm2441, %v6885, %v6881
    %v6887 = vlaneseq
    %v6888 = vshrl.u32 %v6887, 7
    %v6889 = vsub.s32 %v2443, %v6888
    %v6890 = vrot.slane %v6826, %v6889
    %v6891 = vsel %vm2448, %v6890, %v6886
    %v6892 = vlaneseq
    %v6893 = vshrl.u32 %v6892, 7
    %v6894 = vsub.s32 %v2450, %v6893
    %v6895 = vrot.slane %v6829, %v6894
    %v6896 = vsel %vm2455, %v6895, %v6891
    %v6897 = vlaneseq
    %v6898 = vshrl.u32 %v6897, 7
    %v6899 = vsub.s32 %v2457, %v6898
    %v6900 = vrot.slane %v6832, %v6899
    %v6901 = vsel %vm2462, %v6900, %v6896
    %v6902 = vlaneseq
    %v6903 = vshrl.u32 %v6902, 7
    %v6904 = vsub.s32 %v2464, %v6903
    %v6905 = vrot.slane %v6835, %v6904
    %v6906 = vsel %vm2469, %v6905, %v6901
    %v6907 = vlaneseq
    %v6908 = vshrl.u32 %v6907, 7
    %v6909 = vsub.s32 %v2471, %v6908
    %v6910 = vrot.slane %v6838, %v6909
    %v6911 = vsel %vm2476, %v6910, %v6906
    %v6912 = vlaneseq
    %v6913 = vshrl.u32 %v6912, 7
    %v6914 = vsub.s32 %v2478, %v6913
    %v6915 = vrot.slane %v6841, %v6914
    %v6916 = vsel %vm2483, %v6915, %v6911
    %v6917 = vlaneseq
    %v6918 = vshrl.u32 %v6917, 7
    %v6919 = vsub.s32 %v2485, %v6918
    %v6920 = vrot.slane %v6844, %v6919
    %v6921 = vsel %vm2490, %v6920, %v6916
    %v6922 = vlaneseq
    %v6923 = vshrl.u32 %v6922, 7
    %v6924 = vsub.s32 %v2492, %v6923
    %v6925 = vrot.slane %v6847, %v6924
    %v6926 = vsel %vm2497, %v6925, %v6921
    %v6927 = vpack.c.b16 %v6926, %v6926
    %v6945 = vunpack.c.l.b16 %v5748
    %v6946 = vunpack.c.l.b16 %v5749
    %v6947 = vunpack.c.l.b16 %v5750
    %v6948 = vunpack.c.l.b16 %v5751
    %v6949 = vunpack.c.l.b16 %v5752
    %v6950 = vunpack.c.l.b16 %v5753
    %v6951 = vunpack.c.l.b16 %v5754
    %v6952 = vunpack.c.l.b16 %v5755
    %v6953 = vunpack.c.l.b16 %v5756
    %v6954 = vunpack.c.l.b16 %v5757
    %v6955 = vunpack.c.l.b16 %v5758
    %v6956 = vunpack.c.l.b16 %v5759
    %v6957 = vunpack.c.l.b16 %v5760
    %v6958 = vunpack.c.l.b16 %v5761
    %v6959 = vunpack.c.l.b16 %v5762
    %v6960 = vunpack.c.l.b16 %v5763
    %v6961 = vpack.c.b16 %v6946, %v6945
    %v6962 = vpack.c.b16 %v6948, %v6947
    %v6963 = vpack.c.b16 %v6950, %v6949
    %v6964 = vpack.c.b16 %v6952, %v6951
    %v6965 = vpack.c.b16 %v6954, %v6953
    %v6966 = vpack.c.b16 %v6956, %v6955
    %v6967 = vpack.c.b16 %v6958, %v6957
    %v6968 = vpack.c.b16 %v6960, %v6959
    %6977 = vmatprep.subr.bf16.mxu0 0
    %6978 = vmatpush1.bf16.msra.mxu0 %v6968
    %6979 = vmatprep.subr.bf16.mxu0 0
    %6980 = vmatpush1.bf16.msra.mxu0 %v6967
    %6981 = vmatprep.subr.bf16.mxu0 0
    %6982 = vmatpush1.bf16.msra.mxu0 %v6966
    %6983 = vmatprep.subr.bf16.mxu0 0
    %6984 = vmatpush1.bf16.msra.mxu0 %v6965
    %6985 = vmatprep.subr.bf16.mxu0 0
    %6986 = vmatpush1.bf16.msra.mxu0 %v6964
    %6987 = vmatprep.subr.bf16.mxu0 0
    %6988 = vmatpush1.bf16.msra.mxu0 %v6963
    %6989 = vmatprep.subr.bf16.mxu0 0
    %6990 = vmatpush1.bf16.msra.mxu0 %v6962
    %6991 = vmatprep.subr.bf16.mxu0 0
    %6992 = vmatpush1.bf16.msra.mxu0 %v6961
    %6993 = vmatprep.subr.bf16.mxu0 0
    %6994 = vmatpush2.bf16.msra.mxu0 0
    %6995 = vmatprep.subr.bf16.mxu0 0
    %6996 = vmatpush2.bf16.msra.mxu0 0
    %6997 = vmatprep.subr.bf16.mxu0 0
    %6998 = vmatpush2.bf16.msra.mxu0 0
    %6999 = vmatprep.subr.bf16.mxu0 0
    %7000 = vmatpush2.bf16.msra.mxu0 0
    %7001 = vmatprep.subr.bf16.mxu0 0
    %7002 = vmatpush2.bf16.msra.mxu0 0
    %7003 = vmatprep.subr.bf16.mxu0 0
    %7004 = vmatpush2.bf16.msra.mxu0 0
    %7005 = vmatprep.subr.bf16.mxu0 0
    %7006 = vmatpush2.bf16.msra.mxu0 0
    %7007 = vmatprep.subr.bf16.mxu0 0
    %7008 = vmatpush2.bf16.msra.mxu0 0
    %7009 = vmatprep.mubr.bf16.mxu0 0
    %7010 = vmatmul.mubr.bf16.gmra.mxu0 %v6927
    %v7011 = vpop.f32.mrf.mxu0
    %v7012 = vadd.f32 0.0, %v7011
    %v7013 = vpop.f32.mrf.mxu0
    %v7014 = vpop.f32.mrf.mxu0
    %v7015 = vpop.f32.mrf.mxu0
    %7016 = vdwg.mxu0
    %v7025 = vunpack.c.l.b16 %v5660
    %v7026 = vunpack.c.h.b16 %v5660
    %v7027 = vunpack.c.l.b16 %v5661
    %v7028 = vunpack.c.h.b16 %v5661
    %v7029 = vunpack.c.l.b16 %v5662
    %v7030 = vunpack.c.h.b16 %v5662
    %v7031 = vunpack.c.l.b16 %v5663
    %v7032 = vunpack.c.h.b16 %v5663
    %v7033 = vunpack.c.l.b16 %v5664
    %v7034 = vunpack.c.h.b16 %v5664
    %v7035 = vunpack.c.l.b16 %v5665
    %v7036 = vunpack.c.h.b16 %v5665
    %v7037 = vunpack.c.l.b16 %v5666
    %v7038 = vunpack.c.h.b16 %v5666
    %v7039 = vunpack.c.l.b16 %v5667
    %v7040 = vunpack.c.h.b16 %v5667
    %7041 = vset.pattern.permute.xlu0 0
    %7042 = vperm.xlu0 %7041, %v7025
    %v7043 = vpop.permute.xlu0 %7042
    %7044 = vset.pattern.permute.xlu0 0
    %7045 = vperm.xlu0 %7044, %v7026
    %v7046 = vpop.permute.xlu0 %7045
    %7047 = vset.pattern.permute.xlu0 0
    %7048 = vperm.xlu0 %7047, %v7027
    %v7049 = vpop.permute.xlu0 %7048
    %7050 = vset.pattern.permute.xlu0 0
    %7051 = vperm.xlu0 %7050, %v7028
    %v7052 = vpop.permute.xlu0 %7051
    %7053 = vset.pattern.permute.xlu0 0
    %7054 = vperm.xlu0 %7053, %v7029
    %v7055 = vpop.permute.xlu0 %7054
    %7056 = vset.pattern.permute.xlu0 0
    %7057 = vperm.xlu0 %7056, %v7030
    %v7058 = vpop.permute.xlu0 %7057
    %7059 = vset.pattern.permute.xlu0 0
    %7060 = vperm.xlu0 %7059, %v7031
    %v7061 = vpop.permute.xlu0 %7060
    %7062 = vset.pattern.permute.xlu0 0
    %7063 = vperm.xlu0 %7062, %v7032
    %v7064 = vpop.permute.xlu0 %7063
    %7065 = vset.pattern.permute.xlu0 0
    %7066 = vperm.xlu0 %7065, %v7033
    %v7067 = vpop.permute.xlu0 %7066
    %7068 = vset.pattern.permute.xlu0 0
    %7069 = vperm.xlu0 %7068, %v7034
    %v7070 = vpop.permute.xlu0 %7069
    %7071 = vset.pattern.permute.xlu0 0
    %7072 = vperm.xlu0 %7071, %v7035
    %v7073 = vpop.permute.xlu0 %7072
    %7074 = vset.pattern.permute.xlu0 0
    %7075 = vperm.xlu0 %7074, %v7036
    %v7076 = vpop.permute.xlu0 %7075
    %7077 = vset.pattern.permute.xlu0 0
    %7078 = vperm.xlu0 %7077, %v7037
    %v7079 = vpop.permute.xlu0 %7078
    %7080 = vset.pattern.permute.xlu0 0
    %7081 = vperm.xlu0 %7080, %v7038
    %v7082 = vpop.permute.xlu0 %7081
    %7083 = vset.pattern.permute.xlu0 0
    %7084 = vperm.xlu0 %7083, %v7039
    %v7085 = vpop.permute.xlu0 %7084
    %7086 = vset.pattern.permute.xlu0 0
    %7087 = vperm.xlu0 %7086, %v7040
    %v7088 = vpop.permute.xlu0 %7087
    %v7089 = vlaneseq
    %v7090 = vshrl.u32 %v7089, 7
    %v7091 = vsub.s32 %v2389, %v7090
    %v7092 = vrot.slane %v7043, %v7091
    %v7093 = vlaneseq
    %v7094 = vshrl.u32 %v7093, 7
    %v7095 = vsub.s32 %v2394, %v7094
    %v7096 = vrot.slane %v7046, %v7095
    %v7097 = vsel %vm2399, %v7096, %v7092
    %v7098 = vlaneseq
    %v7099 = vshrl.u32 %v7098, 7
    %v7100 = vsub.s32 %v2401, %v7099
    %v7101 = vrot.slane %v7049, %v7100
    %v7102 = vsel %vm2406, %v7101, %v7097
    %v7103 = vlaneseq
    %v7104 = vshrl.u32 %v7103, 7
    %v7105 = vsub.s32 %v2408, %v7104
    %v7106 = vrot.slane %v7052, %v7105
    %v7107 = vsel %vm2413, %v7106, %v7102
    %v7108 = vlaneseq
    %v7109 = vshrl.u32 %v7108, 7
    %v7110 = vsub.s32 %v2415, %v7109
    %v7111 = vrot.slane %v7055, %v7110
    %v7112 = vsel %vm2420, %v7111, %v7107
    %v7113 = vlaneseq
    %v7114 = vshrl.u32 %v7113, 7
    %v7115 = vsub.s32 %v2422, %v7114
    %v7116 = vrot.slane %v7058, %v7115
    %v7117 = vsel %vm2427, %v7116, %v7112
    %v7118 = vlaneseq
    %v7119 = vshrl.u32 %v7118, 7
    %v7120 = vsub.s32 %v2429, %v7119
    %v7121 = vrot.slane %v7061, %v7120
    %v7122 = vsel %vm2434, %v7121, %v7117
    %v7123 = vlaneseq
    %v7124 = vshrl.u32 %v7123, 7
    %v7125 = vsub.s32 %v2436, %v7124
    %v7126 = vrot.slane %v7064, %v7125
    %v7127 = vsel %vm2441, %v7126, %v7122
    %v7128 = vlaneseq
    %v7129 = vshrl.u32 %v7128, 7
    %v7130 = vsub.s32 %v2443, %v7129
    %v7131 = vrot.slane %v7067, %v7130
    %v7132 = vsel %vm2448, %v7131, %v7127
    %v7133 = vlaneseq
    %v7134 = vshrl.u32 %v7133, 7
    %v7135 = vsub.s32 %v2450, %v7134
    %v7136 = vrot.slane %v7070, %v7135
    %v7137 = vsel %vm2455, %v7136, %v7132
    %v7138 = vlaneseq
    %v7139 = vshrl.u32 %v7138, 7
    %v7140 = vsub.s32 %v2457, %v7139
    %v7141 = vrot.slane %v7073, %v7140
    %v7142 = vsel %vm2462, %v7141, %v7137
    %v7143 = vlaneseq
    %v7144 = vshrl.u32 %v7143, 7
    %v7145 = vsub.s32 %v2464, %v7144
    %v7146 = vrot.slane %v7076, %v7145
    %v7147 = vsel %vm2469, %v7146, %v7142
    %v7148 = vlaneseq
    %v7149 = vshrl.u32 %v7148, 7
    %v7150 = vsub.s32 %v2471, %v7149
    %v7151 = vrot.slane %v7079, %v7150
    %v7152 = vsel %vm2476, %v7151, %v7147
    %v7153 = vlaneseq
    %v7154 = vshrl.u32 %v7153, 7
    %v7155 = vsub.s32 %v2478, %v7154
    %v7156 = vrot.slane %v7082, %v7155
    %v7157 = vsel %vm2483, %v7156, %v7152
    %v7158 = vlaneseq
    %v7159 = vshrl.u32 %v7158, 7
    %v7160 = vsub.s32 %v2485, %v7159
    %v7161 = vrot.slane %v7085, %v7160
    %v7162 = vsel %vm2490, %v7161, %v7157
    %v7163 = vlaneseq
    %v7164 = vshrl.u32 %v7163, 7
    %v7165 = vsub.s32 %v2492, %v7164
    %v7166 = vrot.slane %v7088, %v7165
    %v7167 = vsel %vm2497, %v7166, %v7162
    %v7168 = vpack.c.b16 %v7167, %v7167
    %v7186 = vunpack.c.l.b16 %v5764
    %v7187 = vunpack.c.l.b16 %v5765
    %v7188 = vunpack.c.l.b16 %v5766
    %v7189 = vunpack.c.l.b16 %v5767
    %v7190 = vunpack.c.l.b16 %v5768
    %v7191 = vunpack.c.l.b16 %v5769
    %v7192 = vunpack.c.l.b16 %v5770
    %v7193 = vunpack.c.l.b16 %v5771
    %v7194 = vunpack.c.l.b16 %v5772
    %v7195 = vunpack.c.l.b16 %v5773
    %v7196 = vunpack.c.l.b16 %v5774
    %v7197 = vunpack.c.l.b16 %v5775
    %v7198 = vunpack.c.l.b16 %v5776
    %v7199 = vunpack.c.l.b16 %v5777
    %v7200 = vunpack.c.l.b16 %v5778
    %v7201 = vunpack.c.l.b16 %v5779
    %v7202 = vpack.c.b16 %v7187, %v7186
    %v7203 = vpack.c.b16 %v7189, %v7188
    %v7204 = vpack.c.b16 %v7191, %v7190
    %v7205 = vpack.c.b16 %v7193, %v7192
    %v7206 = vpack.c.b16 %v7195, %v7194
    %v7207 = vpack.c.b16 %v7197, %v7196
    %v7208 = vpack.c.b16 %v7199, %v7198
    %v7209 = vpack.c.b16 %v7201, %v7200
    %7218 = vmatprep.subr.bf16.mxu0 0
    %7219 = vmatpush1.bf16.msra.mxu0 %v7209
    %7220 = vmatprep.subr.bf16.mxu0 0
    %7221 = vmatpush1.bf16.msra.mxu0 %v7208
    %7222 = vmatprep.subr.bf16.mxu0 0
    %7223 = vmatpush1.bf16.msra.mxu0 %v7207
    %7224 = vmatprep.subr.bf16.mxu0 0
    %7225 = vmatpush1.bf16.msra.mxu0 %v7206
    %7226 = vmatprep.subr.bf16.mxu0 0
    %7227 = vmatpush1.bf16.msra.mxu0 %v7205
    %7228 = vmatprep.subr.bf16.mxu0 0
    %7229 = vmatpush1.bf16.msra.mxu0 %v7204
    %7230 = vmatprep.subr.bf16.mxu0 0
    %7231 = vmatpush1.bf16.msra.mxu0 %v7203
    %7232 = vmatprep.subr.bf16.mxu0 0
    %7233 = vmatpush1.bf16.msra.mxu0 %v7202
    %7234 = vmatprep.subr.bf16.mxu0 0
    %7235 = vmatpush2.bf16.msra.mxu0 0
    %7236 = vmatprep.subr.bf16.mxu0 0
    %7237 = vmatpush2.bf16.msra.mxu0 0
    %7238 = vmatprep.subr.bf16.mxu0 0
    %7239 = vmatpush2.bf16.msra.mxu0 0
    %7240 = vmatprep.subr.bf16.mxu0 0
    %7241 = vmatpush2.bf16.msra.mxu0 0
    %7242 = vmatprep.subr.bf16.mxu0 0
    %7243 = vmatpush2.bf16.msra.mxu0 0
    %7244 = vmatprep.subr.bf16.mxu0 0
    %7245 = vmatpush2.bf16.msra.mxu0 0
    %7246 = vmatprep.subr.bf16.mxu0 0
    %7247 = vmatpush2.bf16.msra.mxu0 0
    %7248 = vmatprep.subr.bf16.mxu0 0
    %7249 = vmatpush2.bf16.msra.mxu0 0
    %7250 = vmatprep.mubr.bf16.mxu0 0
    %7251 = vmatmul.mubr.bf16.gmra.mxu0 %v7168
    %v7252 = vpop.f32.mrf.mxu0
    %v7253 = vadd.f32 0.0, %v7252
    %v7254 = vpop.f32.mrf.mxu0
    %v7255 = vpop.f32.mrf.mxu0
    %v7256 = vpop.f32.mrf.mxu0
    %7257 = vdwg.mxu0
    %v7266 = vunpack.c.l.b16 %v5668
    %v7267 = vunpack.c.h.b16 %v5668
    %v7268 = vunpack.c.l.b16 %v5669
    %v7269 = vunpack.c.h.b16 %v5669
    %v7270 = vunpack.c.l.b16 %v5670
    %v7271 = vunpack.c.h.b16 %v5670
    %v7272 = vunpack.c.l.b16 %v5671
    %v7273 = vunpack.c.h.b16 %v5671
    %v7274 = vunpack.c.l.b16 %v5672
    %v7275 = vunpack.c.h.b16 %v5672
    %v7276 = vunpack.c.l.b16 %v5673
    %v7277 = vunpack.c.h.b16 %v5673
    %v7278 = vunpack.c.l.b16 %v5674
    %v7279 = vunpack.c.h.b16 %v5674
    %v7280 = vunpack.c.l.b16 %v5675
    %v7281 = vunpack.c.h.b16 %v5675
    %7282 = vset.pattern.permute.xlu0 0
    %7283 = vperm.xlu0 %7282, %v7266
    %v7284 = vpop.permute.xlu0 %7283
    %7285 = vset.pattern.permute.xlu0 0
    %7286 = vperm.xlu0 %7285, %v7267
    %v7287 = vpop.permute.xlu0 %7286
    %7288 = vset.pattern.permute.xlu0 0
    %7289 = vperm.xlu0 %7288, %v7268
    %v7290 = vpop.permute.xlu0 %7289
    %7291 = vset.pattern.permute.xlu0 0
    %7292 = vperm.xlu0 %7291, %v7269
    %v7293 = vpop.permute.xlu0 %7292
    %7294 = vset.pattern.permute.xlu0 0
    %7295 = vperm.xlu0 %7294, %v7270
    %v7296 = vpop.permute.xlu0 %7295
    %7297 = vset.pattern.permute.xlu0 0
    %7298 = vperm.xlu0 %7297, %v7271
    %v7299 = vpop.permute.xlu0 %7298
    %7300 = vset.pattern.permute.xlu0 0
    %7301 = vperm.xlu0 %7300, %v7272
    %v7302 = vpop.permute.xlu0 %7301
    %7303 = vset.pattern.permute.xlu0 0
    %7304 = vperm.xlu0 %7303, %v7273
    %v7305 = vpop.permute.xlu0 %7304
    %7306 = vset.pattern.permute.xlu0 0
    %7307 = vperm.xlu0 %7306, %v7274
    %v7308 = vpop.permute.xlu0 %7307
    %7309 = vset.pattern.permute.xlu0 0
    %7310 = vperm.xlu0 %7309, %v7275
    %v7311 = vpop.permute.xlu0 %7310
    %7312 = vset.pattern.permute.xlu0 0
    %7313 = vperm.xlu0 %7312, %v7276
    %v7314 = vpop.permute.xlu0 %7313
    %7315 = vset.pattern.permute.xlu0 0
    %7316 = vperm.xlu0 %7315, %v7277
    %v7317 = vpop.permute.xlu0 %7316
    %7318 = vset.pattern.permute.xlu0 0
    %7319 = vperm.xlu0 %7318, %v7278
    %v7320 = vpop.permute.xlu0 %7319
    %7321 = vset.pattern.permute.xlu0 0
    %7322 = vperm.xlu0 %7321, %v7279
    %v7323 = vpop.permute.xlu0 %7322
    %7324 = vset.pattern.permute.xlu0 0
    %7325 = vperm.xlu0 %7324, %v7280
    %v7326 = vpop.permute.xlu0 %7325
    %7327 = vset.pattern.permute.xlu0 0
    %7328 = vperm.xlu0 %7327, %v7281
    %v7329 = vpop.permute.xlu0 %7328
    %v7330 = vlaneseq
    %v7331 = vshrl.u32 %v7330, 7
    %v7332 = vsub.s32 %v2389, %v7331
    %v7333 = vrot.slane %v7284, %v7332
    %v7334 = vlaneseq
    %v7335 = vshrl.u32 %v7334, 7
    %v7336 = vsub.s32 %v2394, %v7335
    %v7337 = vrot.slane %v7287, %v7336
    %v7338 = vsel %vm2399, %v7337, %v7333
    %v7339 = vlaneseq
    %v7340 = vshrl.u32 %v7339, 7
    %v7341 = vsub.s32 %v2401, %v7340
    %v7342 = vrot.slane %v7290, %v7341
    %v7343 = vsel %vm2406, %v7342, %v7338
    %v7344 = vlaneseq
    %v7345 = vshrl.u32 %v7344, 7
    %v7346 = vsub.s32 %v2408, %v7345
    %v7347 = vrot.slane %v7293, %v7346
    %v7348 = vsel %vm2413, %v7347, %v7343
    %v7349 = vlaneseq
    %v7350 = vshrl.u32 %v7349, 7
    %v7351 = vsub.s32 %v2415, %v7350
    %v7352 = vrot.slane %v7296, %v7351
    %v7353 = vsel %vm2420, %v7352, %v7348
    %v7354 = vlaneseq
    %v7355 = vshrl.u32 %v7354, 7
    %v7356 = vsub.s32 %v2422, %v7355
    %v7357 = vrot.slane %v7299, %v7356
    %v7358 = vsel %vm2427, %v7357, %v7353
    %v7359 = vlaneseq
    %v7360 = vshrl.u32 %v7359, 7
    %v7361 = vsub.s32 %v2429, %v7360
    %v7362 = vrot.slane %v7302, %v7361
    %v7363 = vsel %vm2434, %v7362, %v7358
    %v7364 = vlaneseq
    %v7365 = vshrl.u32 %v7364, 7
    %v7366 = vsub.s32 %v2436, %v7365
    %v7367 = vrot.slane %v7305, %v7366
    %v7368 = vsel %vm2441, %v7367, %v7363
    %v7369 = vlaneseq
    %v7370 = vshrl.u32 %v7369, 7
    %v7371 = vsub.s32 %v2443, %v7370
    %v7372 = vrot.slane %v7308, %v7371
    %v7373 = vsel %vm2448, %v7372, %v7368
    %v7374 = vlaneseq
    %v7375 = vshrl.u32 %v7374, 7
    %v7376 = vsub.s32 %v2450, %v7375
    %v7377 = vrot.slane %v7311, %v7376
    %v7378 = vsel %vm2455, %v7377, %v7373
    %v7379 = vlaneseq
    %v7380 = vshrl.u32 %v7379, 7
    %v7381 = vsub.s32 %v2457, %v7380
    %v7382 = vrot.slane %v7314, %v7381
    %v7383 = vsel %vm2462, %v7382, %v7378
    %v7384 = vlaneseq
    %v7385 = vshrl.u32 %v7384, 7
    %v7386 = vsub.s32 %v2464, %v7385
    %v7387 = vrot.slane %v7317, %v7386
    %v7388 = vsel %vm2469, %v7387, %v7383
    %v7389 = vlaneseq
    %v7390 = vshrl.u32 %v7389, 7
    %v7391 = vsub.s32 %v2471, %v7390
    %v7392 = vrot.slane %v7320, %v7391
    %v7393 = vsel %vm2476, %v7392, %v7388
    %v7394 = vlaneseq
    %v7395 = vshrl.u32 %v7394, 7
    %v7396 = vsub.s32 %v2478, %v7395
    %v7397 = vrot.slane %v7323, %v7396
    %v7398 = vsel %vm2483, %v7397, %v7393
    %v7399 = vlaneseq
    %v7400 = vshrl.u32 %v7399, 7
    %v7401 = vsub.s32 %v2485, %v7400
    %v7402 = vrot.slane %v7326, %v7401
    %v7403 = vsel %vm2490, %v7402, %v7398
    %v7404 = vlaneseq
    %v7405 = vshrl.u32 %v7404, 7
    %v7406 = vsub.s32 %v2492, %v7405
    %v7407 = vrot.slane %v7329, %v7406
    %v7408 = vsel %vm2497, %v7407, %v7403
    %v7409 = vpack.c.b16 %v7408, %v7408
    %v7427 = vunpack.c.l.b16 %v5780
    %v7428 = vunpack.c.l.b16 %v5781
    %v7429 = vunpack.c.l.b16 %v5782
    %v7430 = vunpack.c.l.b16 %v5783
    %v7431 = vunpack.c.l.b16 %v5784
    %v7432 = vunpack.c.l.b16 %v5785
    %v7433 = vunpack.c.l.b16 %v5786
    %v7434 = vunpack.c.l.b16 %v5787
    %v7435 = vunpack.c.l.b16 %v5788
    %v7436 = vunpack.c.l.b16 %v5789
    %v7437 = vunpack.c.l.b16 %v5790
    %v7438 = vunpack.c.l.b16 %v5791
    %v7439 = vunpack.c.l.b16 %v5792
    %v7440 = vunpack.c.l.b16 %v5793
    %v7441 = vunpack.c.l.b16 %v5794
    %v7442 = vunpack.c.l.b16 %v5795
    %v7443 = vpack.c.b16 %v7428, %v7427
    %v7444 = vpack.c.b16 %v7430, %v7429
    %v7445 = vpack.c.b16 %v7432, %v7431
    %v7446 = vpack.c.b16 %v7434, %v7433
    %v7447 = vpack.c.b16 %v7436, %v7435
    %v7448 = vpack.c.b16 %v7438, %v7437
    %v7449 = vpack.c.b16 %v7440, %v7439
    %v7450 = vpack.c.b16 %v7442, %v7441
    %7459 = vmatprep.subr.bf16.mxu0 0
    %7460 = vmatpush1.bf16.msra.mxu0 %v7450
    %7461 = vmatprep.subr.bf16.mxu0 0
    %7462 = vmatpush1.bf16.msra.mxu0 %v7449
    %7463 = vmatprep.subr.bf16.mxu0 0
    %7464 = vmatpush1.bf16.msra.mxu0 %v7448
    %7465 = vmatprep.subr.bf16.mxu0 0
    %7466 = vmatpush1.bf16.msra.mxu0 %v7447
    %7467 = vmatprep.subr.bf16.mxu0 0
    %7468 = vmatpush1.bf16.msra.mxu0 %v7446
    %7469 = vmatprep.subr.bf16.mxu0 0
    %7470 = vmatpush1.bf16.msra.mxu0 %v7445
    %7471 = vmatprep.subr.bf16.mxu0 0
    %7472 = vmatpush1.bf16.msra.mxu0 %v7444
    %7473 = vmatprep.subr.bf16.mxu0 0
    %7474 = vmatpush1.bf16.msra.mxu0 %v7443
    %7475 = vmatprep.subr.bf16.mxu0 0
    %7476 = vmatpush2.bf16.msra.mxu0 0
    %7477 = vmatprep.subr.bf16.mxu0 0
    %7478 = vmatpush2.bf16.msra.mxu0 0
    %7479 = vmatprep.subr.bf16.mxu0 0
    %7480 = vmatpush2.bf16.msra.mxu0 0
    %7481 = vmatprep.subr.bf16.mxu0 0
    %7482 = vmatpush2.bf16.msra.mxu0 0
    %7483 = vmatprep.subr.bf16.mxu0 0
    %7484 = vmatpush2.bf16.msra.mxu0 0
    %7485 = vmatprep.subr.bf16.mxu0 0
    %7486 = vmatpush2.bf16.msra.mxu0 0
    %7487 = vmatprep.subr.bf16.mxu0 0
    %7488 = vmatpush2.bf16.msra.mxu0 0
    %7489 = vmatprep.subr.bf16.mxu0 0
    %7490 = vmatpush2.bf16.msra.mxu0 0
    %7491 = vmatprep.mubr.bf16.mxu0 0
    %7492 = vmatmul.mubr.bf16.gmra.mxu0 %v7409
    %v7493 = vpop.f32.mrf.mxu0
    %v7494 = vadd.f32 0.0, %v7493
    %v7495 = vpop.f32.mrf.mxu0
    %v7496 = vpop.f32.mrf.mxu0
    %v7497 = vpop.f32.mrf.mxu0
    %7498 = vdwg.mxu0
    %v7507 = vunpack.c.l.b16 %v5676
    %v7508 = vunpack.c.h.b16 %v5676
    %v7509 = vunpack.c.l.b16 %v5677
    %v7510 = vunpack.c.h.b16 %v5677
    %v7511 = vunpack.c.l.b16 %v5678
    %v7512 = vunpack.c.h.b16 %v5678
    %v7513 = vunpack.c.l.b16 %v5679
    %v7514 = vunpack.c.h.b16 %v5679
    %v7515 = vunpack.c.l.b16 %v5680
    %v7516 = vunpack.c.h.b16 %v5680
    %v7517 = vunpack.c.l.b16 %v5681
    %v7518 = vunpack.c.h.b16 %v5681
    %v7519 = vunpack.c.l.b16 %v5682
    %v7520 = vunpack.c.h.b16 %v5682
    %v7521 = vunpack.c.l.b16 %v5683
    %v7522 = vunpack.c.h.b16 %v5683
    %7523 = vset.pattern.permute.xlu0 0
    %7524 = vperm.xlu0 %7523, %v7507
    %v7525 = vpop.permute.xlu0 %7524
    %7526 = vset.pattern.permute.xlu0 0
    %7527 = vperm.xlu0 %7526, %v7508
    %v7528 = vpop.permute.xlu0 %7527
    %7529 = vset.pattern.permute.xlu0 0
    %7530 = vperm.xlu0 %7529, %v7509
    %v7531 = vpop.permute.xlu0 %7530
    %7532 = vset.pattern.permute.xlu0 0
    %7533 = vperm.xlu0 %7532, %v7510
    %v7534 = vpop.permute.xlu0 %7533
    %7535 = vset.pattern.permute.xlu0 0
    %7536 = vperm.xlu0 %7535, %v7511
    %v7537 = vpop.permute.xlu0 %7536
    %7538 = vset.pattern.permute.xlu0 0
    %7539 = vperm.xlu0 %7538, %v7512
    %v7540 = vpop.permute.xlu0 %7539
    %7541 = vset.pattern.permute.xlu0 0
    %7542 = vperm.xlu0 %7541, %v7513
    %v7543 = vpop.permute.xlu0 %7542
    %7544 = vset.pattern.permute.xlu0 0
    %7545 = vperm.xlu0 %7544, %v7514
    %v7546 = vpop.permute.xlu0 %7545
    %7547 = vset.pattern.permute.xlu0 0
    %7548 = vperm.xlu0 %7547, %v7515
    %v7549 = vpop.permute.xlu0 %7548
    %7550 = vset.pattern.permute.xlu0 0
    %7551 = vperm.xlu0 %7550, %v7516
    %v7552 = vpop.permute.xlu0 %7551
    %7553 = vset.pattern.permute.xlu0 0
    %7554 = vperm.xlu0 %7553, %v7517
    %v7555 = vpop.permute.xlu0 %7554
    %7556 = vset.pattern.permute.xlu0 0
    %7557 = vperm.xlu0 %7556, %v7518
    %v7558 = vpop.permute.xlu0 %7557
    %7559 = vset.pattern.permute.xlu0 0
    %7560 = vperm.xlu0 %7559, %v7519
    %v7561 = vpop.permute.xlu0 %7560
    %7562 = vset.pattern.permute.xlu0 0
    %7563 = vperm.xlu0 %7562, %v7520
    %v7564 = vpop.permute.xlu0 %7563
    %7565 = vset.pattern.permute.xlu0 0
    %7566 = vperm.xlu0 %7565, %v7521
    %v7567 = vpop.permute.xlu0 %7566
    %7568 = vset.pattern.permute.xlu0 0
    %7569 = vperm.xlu0 %7568, %v7522
    %v7570 = vpop.permute.xlu0 %7569
    %v7571 = vlaneseq
    %v7572 = vshrl.u32 %v7571, 7
    %v7573 = vsub.s32 %v2389, %v7572
    %v7574 = vrot.slane %v7525, %v7573
    %v7575 = vlaneseq
    %v7576 = vshrl.u32 %v7575, 7
    %v7577 = vsub.s32 %v2394, %v7576
    %v7578 = vrot.slane %v7528, %v7577
    %v7579 = vsel %vm2399, %v7578, %v7574
    %v7580 = vlaneseq
    %v7581 = vshrl.u32 %v7580, 7
    %v7582 = vsub.s32 %v2401, %v7581
    %v7583 = vrot.slane %v7531, %v7582
    %v7584 = vsel %vm2406, %v7583, %v7579
    %v7585 = vlaneseq
    %v7586 = vshrl.u32 %v7585, 7
    %v7587 = vsub.s32 %v2408, %v7586
    %v7588 = vrot.slane %v7534, %v7587
    %v7589 = vsel %vm2413, %v7588, %v7584
    %v7590 = vlaneseq
    %v7591 = vshrl.u32 %v7590, 7
    %v7592 = vsub.s32 %v2415, %v7591
    %v7593 = vrot.slane %v7537, %v7592
    %v7594 = vsel %vm2420, %v7593, %v7589
    %v7595 = vlaneseq
    %v7596 = vshrl.u32 %v7595, 7
    %v7597 = vsub.s32 %v2422, %v7596
    %v7598 = vrot.slane %v7540, %v7597
    %v7599 = vsel %vm2427, %v7598, %v7594
    %v7600 = vlaneseq
    %v7601 = vshrl.u32 %v7600, 7
    %v7602 = vsub.s32 %v2429, %v7601
    %v7603 = vrot.slane %v7543, %v7602
    %v7604 = vsel %vm2434, %v7603, %v7599
    %v7605 = vlaneseq
    %v7606 = vshrl.u32 %v7605, 7
    %v7607 = vsub.s32 %v2436, %v7606
    %v7608 = vrot.slane %v7546, %v7607
    %v7609 = vsel %vm2441, %v7608, %v7604
    %v7610 = vlaneseq
    %v7611 = vshrl.u32 %v7610, 7
    %v7612 = vsub.s32 %v2443, %v7611
    %v7613 = vrot.slane %v7549, %v7612
    %v7614 = vsel %vm2448, %v7613, %v7609
    %v7615 = vlaneseq
    %v7616 = vshrl.u32 %v7615, 7
    %v7617 = vsub.s32 %v2450, %v7616
    %v7618 = vrot.slane %v7552, %v7617
    %v7619 = vsel %vm2455, %v7618, %v7614
    %v7620 = vlaneseq
    %v7621 = vshrl.u32 %v7620, 7
    %v7622 = vsub.s32 %v2457, %v7621
    %v7623 = vrot.slane %v7555, %v7622
    %v7624 = vsel %vm2462, %v7623, %v7619
    %v7625 = vlaneseq
    %v7626 = vshrl.u32 %v7625, 7
    %v7627 = vsub.s32 %v2464, %v7626
    %v7628 = vrot.slane %v7558, %v7627
    %v7629 = vsel %vm2469, %v7628, %v7624
    %v7630 = vlaneseq
    %v7631 = vshrl.u32 %v7630, 7
    %v7632 = vsub.s32 %v2471, %v7631
    %v7633 = vrot.slane %v7561, %v7632
    %v7634 = vsel %vm2476, %v7633, %v7629
    %v7635 = vlaneseq
    %v7636 = vshrl.u32 %v7635, 7
    %v7637 = vsub.s32 %v2478, %v7636
    %v7638 = vrot.slane %v7564, %v7637
    %v7639 = vsel %vm2483, %v7638, %v7634
    %v7640 = vlaneseq
    %v7641 = vshrl.u32 %v7640, 7
    %v7642 = vsub.s32 %v2485, %v7641
    %v7643 = vrot.slane %v7567, %v7642
    %v7644 = vsel %vm2490, %v7643, %v7639
    %v7645 = vlaneseq
    %v7646 = vshrl.u32 %v7645, 7
    %v7647 = vsub.s32 %v2492, %v7646
    %v7648 = vrot.slane %v7570, %v7647
    %v7649 = vsel %vm2497, %v7648, %v7644
    %v7650 = vpack.c.b16 %v7649, %v7649
    %v7668 = vunpack.c.l.b16 %v5796
    %v7669 = vunpack.c.l.b16 %v5797
    %v7670 = vunpack.c.l.b16 %v5798
    %v7671 = vunpack.c.l.b16 %v5799
    %v7672 = vunpack.c.l.b16 %v5800
    %v7673 = vunpack.c.l.b16 %v5801
    %v7674 = vunpack.c.l.b16 %v5802
    %v7675 = vunpack.c.l.b16 %v5803
    %v7676 = vunpack.c.l.b16 %v5804
    %v7677 = vunpack.c.l.b16 %v5805
    %v7678 = vunpack.c.l.b16 %v5806
    %v7679 = vunpack.c.l.b16 %v5807
    %v7680 = vunpack.c.l.b16 %v5808
    %v7681 = vunpack.c.l.b16 %v5809
    %v7682 = vunpack.c.l.b16 %v5810
    %v7683 = vunpack.c.l.b16 %v5811
    %v7684 = vpack.c.b16 %v7669, %v7668
    %v7685 = vpack.c.b16 %v7671, %v7670
    %v7686 = vpack.c.b16 %v7673, %v7672
    %v7687 = vpack.c.b16 %v7675, %v7674
    %v7688 = vpack.c.b16 %v7677, %v7676
    %v7689 = vpack.c.b16 %v7679, %v7678
    %v7690 = vpack.c.b16 %v7681, %v7680
    %v7691 = vpack.c.b16 %v7683, %v7682
    %7700 = vmatprep.subr.bf16.mxu0 0
    %7701 = vmatpush1.bf16.msra.mxu0 %v7691
    %7702 = vmatprep.subr.bf16.mxu0 0
    %7703 = vmatpush1.bf16.msra.mxu0 %v7690
    %7704 = vmatprep.subr.bf16.mxu0 0
    %7705 = vmatpush1.bf16.msra.mxu0 %v7689
    %7706 = vmatprep.subr.bf16.mxu0 0
    %7707 = vmatpush1.bf16.msra.mxu0 %v7688
    %7708 = vmatprep.subr.bf16.mxu0 0
    %7709 = vmatpush1.bf16.msra.mxu0 %v7687
    %7710 = vmatprep.subr.bf16.mxu0 0
    %7711 = vmatpush1.bf16.msra.mxu0 %v7686
    %7712 = vmatprep.subr.bf16.mxu0 0
    %7713 = vmatpush1.bf16.msra.mxu0 %v7685
    %7714 = vmatprep.subr.bf16.mxu0 0
    %7715 = vmatpush1.bf16.msra.mxu0 %v7684
    %7716 = vmatprep.subr.bf16.mxu0 0
    %7717 = vmatpush2.bf16.msra.mxu0 0
    %7718 = vmatprep.subr.bf16.mxu0 0
    %7719 = vmatpush2.bf16.msra.mxu0 0
    %7720 = vmatprep.subr.bf16.mxu0 0
    %7721 = vmatpush2.bf16.msra.mxu0 0
    %7722 = vmatprep.subr.bf16.mxu0 0
    %7723 = vmatpush2.bf16.msra.mxu0 0
    %7724 = vmatprep.subr.bf16.mxu0 0
    %7725 = vmatpush2.bf16.msra.mxu0 0
    %7726 = vmatprep.subr.bf16.mxu0 0
    %7727 = vmatpush2.bf16.msra.mxu0 0
    %7728 = vmatprep.subr.bf16.mxu0 0
    %7729 = vmatpush2.bf16.msra.mxu0 0
    %7730 = vmatprep.subr.bf16.mxu0 0
    %7731 = vmatpush2.bf16.msra.mxu0 0
    %7732 = vmatprep.mubr.bf16.mxu0 0
    %7733 = vmatmul.mubr.bf16.gmra.mxu0 %v7650
    %v7734 = vpop.f32.mrf.mxu0
    %v7735 = vadd.f32 0.0, %v7734
    %v7736 = vpop.f32.mrf.mxu0
    %v7737 = vpop.f32.mrf.mxu0
    %v7738 = vpop.f32.mrf.mxu0
    %7739 = vdwg.mxu0
    %v7748 = vrot.slane %v6289, 7
    %v7749 = vsel %vm3052, %v7748, %v6048
    %v7750 = vrot.slane %v6530, 6
    %v7751 = vsel %vm3054, %v7750, %v7749
    %v7752 = vrot.slane %v6771, 5
    %v7753 = vsel %vm3056, %v7752, %v7751
    %v7754 = vrot.slane %v7012, 4
    %v7755 = vsel %vm3058, %v7754, %v7753
    %v7756 = vrot.slane %v7253, 3
    %v7757 = vsel %vm3060, %v7756, %v7755
    %v7758 = vrot.slane %v7494, 2
    %v7759 = vsel %vm3062, %v7758, %v7757
    %v7760 = vrot.slane %v7735, 1
    %v7761 = vsel %vm3064, %v7760, %v7759
    %7763 = vst.msk [vmem:[#allocation2] sm:$0xff] %vm50, %v7761
    %7892 = vset.pattern.permute.xlu0 0
    %7893 = vperm.xlu0 %7892, %v5485
    %v7894 = vpop.permute.xlu0 %7893
    %7895 = vset.pattern.permute.xlu0 0
    %7896 = vperm.xlu0 %7895, %v5486
    %v7897 = vpop.permute.xlu0 %7896
    %7898 = vset.pattern.permute.xlu0 0
    %7899 = vperm.xlu0 %7898, %v5487
    %v7900 = vpop.permute.xlu0 %7899
    %7901 = vset.pattern.permute.xlu0 0
    %7902 = vperm.xlu0 %7901, %v5488
    %v7903 = vpop.permute.xlu0 %7902
    %7904 = vset.pattern.permute.xlu0 0
    %7905 = vperm.xlu0 %7904, %v5489
    %v7906 = vpop.permute.xlu0 %7905
    %7907 = vset.pattern.permute.xlu0 0
    %7908 = vperm.xlu0 %7907, %v5490
    %v7909 = vpop.permute.xlu0 %7908
    %7910 = vset.pattern.permute.xlu0 0
    %7911 = vperm.xlu0 %7910, %v5491
    %v7912 = vpop.permute.xlu0 %7911
    %7913 = vset.pattern.permute.xlu0 0
    %7914 = vperm.xlu0 %7913, %v5492
    %v7915 = vpop.permute.xlu0 %7914
    %7916 = vset.pattern.permute.xlu0 0
    %7917 = vperm.xlu0 %7916, %v5493
    %v7918 = vpop.permute.xlu0 %7917
    %7919 = vset.pattern.permute.xlu0 0
    %7920 = vperm.xlu0 %7919, %v5494
    %v7921 = vpop.permute.xlu0 %7920
    %7922 = vset.pattern.permute.xlu0 0
    %7923 = vperm.xlu0 %7922, %v5495
    %v7924 = vpop.permute.xlu0 %7923
    %7925 = vset.pattern.permute.xlu0 0
    %7926 = vperm.xlu0 %7925, %v5496
    %v7927 = vpop.permute.xlu0 %7926
    %7928 = vset.pattern.permute.xlu0 0
    %7929 = vperm.xlu0 %7928, %v5497
    %v7930 = vpop.permute.xlu0 %7929
    %7931 = vset.pattern.permute.xlu0 0
    %7932 = vperm.xlu0 %7931, %v5498
    %v7933 = vpop.permute.xlu0 %7932
    %7934 = vset.pattern.permute.xlu0 0
    %7935 = vperm.xlu0 %7934, %v5499
    %v7936 = vpop.permute.xlu0 %7935
    %7937 = vset.pattern.permute.xlu0 0
    %7938 = vperm.xlu0 %7937, %v5500
    %v7939 = vpop.permute.xlu0 %7938
    %7940 = vset.pattern.permute.xlu0 0
    %7941 = vperm.xlu0 %7940, %v5502
    %v7942 = vpop.permute.xlu0 %7941
    %7943 = vset.pattern.permute.xlu0 0
    %7944 = vperm.xlu0 %7943, %v5503
    %v7945 = vpop.permute.xlu0 %7944
    %7946 = vset.pattern.permute.xlu0 0
    %7947 = vperm.xlu0 %7946, %v5504
    %v7948 = vpop.permute.xlu0 %7947
    %7949 = vset.pattern.permute.xlu0 0
    %7950 = vperm.xlu0 %7949, %v5505
    %v7951 = vpop.permute.xlu0 %7950
    %7952 = vset.pattern.permute.xlu0 0
    %7953 = vperm.xlu0 %7952, %v5506
    %v7954 = vpop.permute.xlu0 %7953
    %7955 = vset.pattern.permute.xlu0 0
    %7956 = vperm.xlu0 %7955, %v5507
    %v7957 = vpop.permute.xlu0 %7956
    %7958 = vset.pattern.permute.xlu0 0
    %7959 = vperm.xlu0 %7958, %v5508
    %v7960 = vpop.permute.xlu0 %7959
    %7961 = vset.pattern.permute.xlu0 0
    %7962 = vperm.xlu0 %7961, %v5509
    %v7963 = vpop.permute.xlu0 %7962
    %7964 = vset.pattern.permute.xlu0 0
    %7965 = vperm.xlu0 %7964, %v5510
    %v7966 = vpop.permute.xlu0 %7965
    %7967 = vset.pattern.permute.xlu0 0
    %7968 = vperm.xlu0 %7967, %v5511
    %v7969 = vpop.permute.xlu0 %7968
    %7970 = vset.pattern.permute.xlu0 0
    %7971 = vperm.xlu0 %7970, %v5512
    %v7972 = vpop.permute.xlu0 %7971
    %7973 = vset.pattern.permute.xlu0 0
    %7974 = vperm.xlu0 %7973, %v5513
    %v7975 = vpop.permute.xlu0 %7974
    %7976 = vset.pattern.permute.xlu0 0
    %7977 = vperm.xlu0 %7976, %v5514
    %v7978 = vpop.permute.xlu0 %7977
    %7979 = vset.pattern.permute.xlu0 0
    %7980 = vperm.xlu0 %7979, %v5515
    %v7981 = vpop.permute.xlu0 %7980
    %7982 = vset.pattern.permute.xlu0 0
    %7983 = vperm.xlu0 %7982, %v5516
    %v7984 = vpop.permute.xlu0 %7983
    %7985 = vset.pattern.permute.xlu0 0
    %7986 = vperm.xlu0 %7985, %v5517
    %v7987 = vpop.permute.xlu0 %7986
    %7988 = vset.pattern.permute.xlu0 0
    %7989 = vperm.xlu0 %7988, %v5519
    %v7990 = vpop.permute.xlu0 %7989
    %7991 = vset.pattern.permute.xlu0 0
    %7992 = vperm.xlu0 %7991, %v5520
    %v7993 = vpop.permute.xlu0 %7992
    %7994 = vset.pattern.permute.xlu0 0
    %7995 = vperm.xlu0 %7994, %v5521
    %v7996 = vpop.permute.xlu0 %7995
    %7997 = vset.pattern.permute.xlu0 0
    %7998 = vperm.xlu0 %7997, %v5522
    %v7999 = vpop.permute.xlu0 %7998
    %8000 = vset.pattern.permute.xlu0 0
    %8001 = vperm.xlu0 %8000, %v5523
    %v8002 = vpop.permute.xlu0 %8001
    %8003 = vset.pattern.permute.xlu0 0
    %8004 = vperm.xlu0 %8003, %v5524
    %v8005 = vpop.permute.xlu0 %8004
    %8006 = vset.pattern.permute.xlu0 0
    %8007 = vperm.xlu0 %8006, %v5525
    %v8008 = vpop.permute.xlu0 %8007
    %8009 = vset.pattern.permute.xlu0 0
    %8010 = vperm.xlu0 %8009, %v5526
    %v8011 = vpop.permute.xlu0 %8010
    %8012 = vset.pattern.permute.xlu0 0
    %8013 = vperm.xlu0 %8012, %v5527
    %v8014 = vpop.permute.xlu0 %8013
    %8015 = vset.pattern.permute.xlu0 0
    %8016 = vperm.xlu0 %8015, %v5528
    %v8017 = vpop.permute.xlu0 %8016
    %8018 = vset.pattern.permute.xlu0 0
    %8019 = vperm.xlu0 %8018, %v5529
    %v8020 = vpop.permute.xlu0 %8019
    %8021 = vset.pattern.permute.xlu0 0
    %8022 = vperm.xlu0 %8021, %v5530
    %v8023 = vpop.permute.xlu0 %8022
    %8024 = vset.pattern.permute.xlu0 0
    %8025 = vperm.xlu0 %8024, %v5531
    %v8026 = vpop.permute.xlu0 %8025
    %8027 = vset.pattern.permute.xlu0 0
    %8028 = vperm.xlu0 %8027, %v5532
    %v8029 = vpop.permute.xlu0 %8028
    %8030 = vset.pattern.permute.xlu0 0
    %8031 = vperm.xlu0 %8030, %v5533
    %v8032 = vpop.permute.xlu0 %8031
    %8033 = vset.pattern.permute.xlu0 0
    %8034 = vperm.xlu0 %8033, %v5534
    %v8035 = vpop.permute.xlu0 %8034
    %8036 = vset.pattern.permute.xlu0 0
    %8037 = vperm.xlu0 %8036, %v5536
    %v8038 = vpop.permute.xlu0 %8037
    %8039 = vset.pattern.permute.xlu0 0
    %8040 = vperm.xlu0 %8039, %v5537
    %v8041 = vpop.permute.xlu0 %8040
    %8042 = vset.pattern.permute.xlu0 0
    %8043 = vperm.xlu0 %8042, %v5538
    %v8044 = vpop.permute.xlu0 %8043
    %8045 = vset.pattern.permute.xlu0 0
    %8046 = vperm.xlu0 %8045, %v5539
    %v8047 = vpop.permute.xlu0 %8046
    %8048 = vset.pattern.permute.xlu0 0
    %8049 = vperm.xlu0 %8048, %v5540
    %v8050 = vpop.permute.xlu0 %8049
    %8051 = vset.pattern.permute.xlu0 0
    %8052 = vperm.xlu0 %8051, %v5541
    %v8053 = vpop.permute.xlu0 %8052
    %8054 = vset.pattern.permute.xlu0 0
    %8055 = vperm.xlu0 %8054, %v5542
    %v8056 = vpop.permute.xlu0 %8055
    %8057 = vset.pattern.permute.xlu0 0
    %8058 = vperm.xlu0 %8057, %v5543
    %v8059 = vpop.permute.xlu0 %8058
    %8060 = vset.pattern.permute.xlu0 0
    %8061 = vperm.xlu0 %8060, %v5544
    %v8062 = vpop.permute.xlu0 %8061
    %8063 = vset.pattern.permute.xlu0 0
    %8064 = vperm.xlu0 %8063, %v5545
    %v8065 = vpop.permute.xlu0 %8064
    %8066 = vset.pattern.permute.xlu0 0
    %8067 = vperm.xlu0 %8066, %v5546
    %v8068 = vpop.permute.xlu0 %8067
    %8069 = vset.pattern.permute.xlu0 0
    %8070 = vperm.xlu0 %8069, %v5547
    %v8071 = vpop.permute.xlu0 %8070
    %8072 = vset.pattern.permute.xlu0 0
    %8073 = vperm.xlu0 %8072, %v5548
    %v8074 = vpop.permute.xlu0 %8073
    %8075 = vset.pattern.permute.xlu0 0
    %8076 = vperm.xlu0 %8075, %v5549
    %v8077 = vpop.permute.xlu0 %8076
    %8078 = vset.pattern.permute.xlu0 0
    %8079 = vperm.xlu0 %8078, %v5550
    %v8080 = vpop.permute.xlu0 %8079
    %8081 = vset.pattern.permute.xlu0 0
    %8082 = vperm.xlu0 %8081, %v5551
    %v8083 = vpop.permute.xlu0 %8082
    %8084 = vset.pattern.permute.xlu0 0
    %8085 = vperm.xlu0 %8084, %v5553
    %v8086 = vpop.permute.xlu0 %8085
    %8087 = vset.pattern.permute.xlu0 0
    %8088 = vperm.xlu0 %8087, %v5554
    %v8089 = vpop.permute.xlu0 %8088
    %8090 = vset.pattern.permute.xlu0 0
    %8091 = vperm.xlu0 %8090, %v5555
    %v8092 = vpop.permute.xlu0 %8091
    %8093 = vset.pattern.permute.xlu0 0
    %8094 = vperm.xlu0 %8093, %v5556
    %v8095 = vpop.permute.xlu0 %8094
    %8096 = vset.pattern.permute.xlu0 0
    %8097 = vperm.xlu0 %8096, %v5557
    %v8098 = vpop.permute.xlu0 %8097
    %8099 = vset.pattern.permute.xlu0 0
    %8100 = vperm.xlu0 %8099, %v5558
    %v8101 = vpop.permute.xlu0 %8100
    %8102 = vset.pattern.permute.xlu0 0
    %8103 = vperm.xlu0 %8102, %v5559
    %v8104 = vpop.permute.xlu0 %8103
    %8105 = vset.pattern.permute.xlu0 0
    %8106 = vperm.xlu0 %8105, %v5560
    %v8107 = vpop.permute.xlu0 %8106
    %8108 = vset.pattern.permute.xlu0 0
    %8109 = vperm.xlu0 %8108, %v5561
    %v8110 = vpop.permute.xlu0 %8109
    %8111 = vset.pattern.permute.xlu0 0
    %8112 = vperm.xlu0 %8111, %v5562
    %v8113 = vpop.permute.xlu0 %8112
    %8114 = vset.pattern.permute.xlu0 0
    %8115 = vperm.xlu0 %8114, %v5563
    %v8116 = vpop.permute.xlu0 %8115
    %8117 = vset.pattern.permute.xlu0 0
    %8118 = vperm.xlu0 %8117, %v5564
    %v8119 = vpop.permute.xlu0 %8118
    %8120 = vset.pattern.permute.xlu0 0
    %8121 = vperm.xlu0 %8120, %v5565
    %v8122 = vpop.permute.xlu0 %8121
    %8123 = vset.pattern.permute.xlu0 0
    %8124 = vperm.xlu0 %8123, %v5566
    %v8125 = vpop.permute.xlu0 %8124
    %8126 = vset.pattern.permute.xlu0 0
    %8127 = vperm.xlu0 %8126, %v5567
    %v8128 = vpop.permute.xlu0 %8127
    %8129 = vset.pattern.permute.xlu0 0
    %8130 = vperm.xlu0 %8129, %v5568
    %v8131 = vpop.permute.xlu0 %8130
    %8132 = vset.pattern.permute.xlu0 0
    %8133 = vperm.xlu0 %8132, %v5570
    %v8134 = vpop.permute.xlu0 %8133
    %8135 = vset.pattern.permute.xlu0 0
    %8136 = vperm.xlu0 %8135, %v5571
    %v8137 = vpop.permute.xlu0 %8136
    %8138 = vset.pattern.permute.xlu0 0
    %8139 = vperm.xlu0 %8138, %v5572
    %v8140 = vpop.permute.xlu0 %8139
    %8141 = vset.pattern.permute.xlu0 0
    %8142 = vperm.xlu0 %8141, %v5573
    %v8143 = vpop.permute.xlu0 %8142
    %8144 = vset.pattern.permute.xlu0 0
    %8145 = vperm.xlu0 %8144, %v5574
    %v8146 = vpop.permute.xlu0 %8145
    %8147 = vset.pattern.permute.xlu0 0
    %8148 = vperm.xlu0 %8147, %v5575
    %v8149 = vpop.permute.xlu0 %8148
    %8150 = vset.pattern.permute.xlu0 0
    %8151 = vperm.xlu0 %8150, %v5576
    %v8152 = vpop.permute.xlu0 %8151
    %8153 = vset.pattern.permute.xlu0 0
    %8154 = vperm.xlu0 %8153, %v5577
    %v8155 = vpop.permute.xlu0 %8154
    %8156 = vset.pattern.permute.xlu0 0
    %8157 = vperm.xlu0 %8156, %v5578
    %v8158 = vpop.permute.xlu0 %8157
    %8159 = vset.pattern.permute.xlu0 0
    %8160 = vperm.xlu0 %8159, %v5579
    %v8161 = vpop.permute.xlu0 %8160
    %8162 = vset.pattern.permute.xlu0 0
    %8163 = vperm.xlu0 %8162, %v5580
    %v8164 = vpop.permute.xlu0 %8163
    %8165 = vset.pattern.permute.xlu0 0
    %8166 = vperm.xlu0 %8165, %v5581
    %v8167 = vpop.permute.xlu0 %8166
    %8168 = vset.pattern.permute.xlu0 0
    %8169 = vperm.xlu0 %8168, %v5582
    %v8170 = vpop.permute.xlu0 %8169
    %8171 = vset.pattern.permute.xlu0 0
    %8172 = vperm.xlu0 %8171, %v5583
    %v8173 = vpop.permute.xlu0 %8172
    %8174 = vset.pattern.permute.xlu0 0
    %8175 = vperm.xlu0 %8174, %v5584
    %v8176 = vpop.permute.xlu0 %8175
    %8177 = vset.pattern.permute.xlu0 0
    %8178 = vperm.xlu0 %8177, %v5585
    %v8179 = vpop.permute.xlu0 %8178
    %8180 = vset.pattern.permute.xlu0 0
    %8181 = vperm.xlu0 %8180, %v5587
    %v8182 = vpop.permute.xlu0 %8181
    %8183 = vset.pattern.permute.xlu0 0
    %8184 = vperm.xlu0 %8183, %v5588
    %v8185 = vpop.permute.xlu0 %8184
    %8186 = vset.pattern.permute.xlu0 0
    %8187 = vperm.xlu0 %8186, %v5589
    %v8188 = vpop.permute.xlu0 %8187
    %8189 = vset.pattern.permute.xlu0 0
    %8190 = vperm.xlu0 %8189, %v5590
    %v8191 = vpop.permute.xlu0 %8190
    %8192 = vset.pattern.permute.xlu0 0
    %8193 = vperm.xlu0 %8192, %v5591
    %v8194 = vpop.permute.xlu0 %8193
    %8195 = vset.pattern.permute.xlu0 0
    %8196 = vperm.xlu0 %8195, %v5592
    %v8197 = vpop.permute.xlu0 %8196
    %8198 = vset.pattern.permute.xlu0 0
    %8199 = vperm.xlu0 %8198, %v5593
    %v8200 = vpop.permute.xlu0 %8199
    %8201 = vset.pattern.permute.xlu0 0
    %8202 = vperm.xlu0 %8201, %v5594
    %v8203 = vpop.permute.xlu0 %8202
    %8204 = vset.pattern.permute.xlu0 0
    %8205 = vperm.xlu0 %8204, %v5595
    %v8206 = vpop.permute.xlu0 %8205
    %8207 = vset.pattern.permute.xlu0 0
    %8208 = vperm.xlu0 %8207, %v5596
    %v8209 = vpop.permute.xlu0 %8208
    %8210 = vset.pattern.permute.xlu0 0
    %8211 = vperm.xlu0 %8210, %v5597
    %v8212 = vpop.permute.xlu0 %8211
    %8213 = vset.pattern.permute.xlu0 0
    %8214 = vperm.xlu0 %8213, %v5598
    %v8215 = vpop.permute.xlu0 %8214
    %8216 = vset.pattern.permute.xlu0 0
    %8217 = vperm.xlu0 %8216, %v5599
    %v8218 = vpop.permute.xlu0 %8217
    %8219 = vset.pattern.permute.xlu0 0
    %8220 = vperm.xlu0 %8219, %v5600
    %v8221 = vpop.permute.xlu0 %8220
    %8222 = vset.pattern.permute.xlu0 0
    %8223 = vperm.xlu0 %8222, %v5601
    %v8224 = vpop.permute.xlu0 %8223
    %8225 = vset.pattern.permute.xlu0 0
    %8226 = vperm.xlu0 %8225, %v5602
    %v8227 = vpop.permute.xlu0 %8226
    %8228 = vset.pattern.permute.xlu0 0
    %8229 = vperm.xlu0 %8228, %v5604
    %v8230 = vpop.permute.xlu0 %8229
    %8231 = vset.pattern.permute.xlu0 0
    %8232 = vperm.xlu0 %8231, %v5605
    %v8233 = vpop.permute.xlu0 %8232
    %8234 = vset.pattern.permute.xlu0 0
    %8235 = vperm.xlu0 %8234, %v5606
    %v8236 = vpop.permute.xlu0 %8235
    %8237 = vset.pattern.permute.xlu0 0
    %8238 = vperm.xlu0 %8237, %v5607
    %v8239 = vpop.permute.xlu0 %8238
    %8240 = vset.pattern.permute.xlu0 0
    %8241 = vperm.xlu0 %8240, %v5608
    %v8242 = vpop.permute.xlu0 %8241
    %8243 = vset.pattern.permute.xlu0 0
    %8244 = vperm.xlu0 %8243, %v5609
    %v8245 = vpop.permute.xlu0 %8244
    %8246 = vset.pattern.permute.xlu0 0
    %8247 = vperm.xlu0 %8246, %v5610
    %v8248 = vpop.permute.xlu0 %8247
    %8249 = vset.pattern.permute.xlu0 0
    %8250 = vperm.xlu0 %8249, %v5611
    %v8251 = vpop.permute.xlu0 %8250
    %8252 = vset.pattern.permute.xlu0 0
    %8253 = vperm.xlu0 %8252, %v5612
    %v8254 = vpop.permute.xlu0 %8253
    %8255 = vset.pattern.permute.xlu0 0
    %8256 = vperm.xlu0 %8255, %v5613
    %v8257 = vpop.permute.xlu0 %8256
    %8258 = vset.pattern.permute.xlu0 0
    %8259 = vperm.xlu0 %8258, %v5614
    %v8260 = vpop.permute.xlu0 %8259
    %8261 = vset.pattern.permute.xlu0 0
    %8262 = vperm.xlu0 %8261, %v5615
    %v8263 = vpop.permute.xlu0 %8262
    %8264 = vset.pattern.permute.xlu0 0
    %8265 = vperm.xlu0 %8264, %v5616
    %v8266 = vpop.permute.xlu0 %8265
    %8267 = vset.pattern.permute.xlu0 0
    %8268 = vperm.xlu0 %8267, %v5617
    %v8269 = vpop.permute.xlu0 %8268
    %8270 = vset.pattern.permute.xlu0 0
    %8271 = vperm.xlu0 %8270, %v5618
    %v8272 = vpop.permute.xlu0 %8271
    %8273 = vset.pattern.permute.xlu0 0
    %8274 = vperm.xlu0 %8273, %v5619
    %v8275 = vpop.permute.xlu0 %8274
    %v8276 = vlaneseq
    %v8277 = vshrl.u32 %v8276, 7
    %v8278 = vsub.s32 %v2389, %v8277
    %v8279 = vrot.slane %v7894, %v8278
    %v8280 = vlaneseq
    %v8281 = vshrl.u32 %v8280, 7
    %v8282 = vsub.s32 %v2394, %v8281
    %v8283 = vrot.slane %v7897, %v8282
    %v8284 = vsel %vm2399, %v8283, %v8279
    %v8285 = vlaneseq
    %v8286 = vshrl.u32 %v8285, 7
    %v8287 = vsub.s32 %v2401, %v8286
    %v8288 = vrot.slane %v7900, %v8287
    %v8289 = vsel %vm2406, %v8288, %v8284
    %v8290 = vlaneseq
    %v8291 = vshrl.u32 %v8290, 7
    %v8292 = vsub.s32 %v2408, %v8291
    %v8293 = vrot.slane %v7903, %v8292
    %v8294 = vsel %vm2413, %v8293, %v8289
    %v8295 = vlaneseq
    %v8296 = vshrl.u32 %v8295, 7
    %v8297 = vsub.s32 %v2415, %v8296
    %v8298 = vrot.slane %v7906, %v8297
    %v8299 = vsel %vm2420, %v8298, %v8294
    %v8300 = vlaneseq
    %v8301 = vshrl.u32 %v8300, 7
    %v8302 = vsub.s32 %v2422, %v8301
    %v8303 = vrot.slane %v7909, %v8302
    %v8304 = vsel %vm2427, %v8303, %v8299
    %v8305 = vlaneseq
    %v8306 = vshrl.u32 %v8305, 7
    %v8307 = vsub.s32 %v2429, %v8306
    %v8308 = vrot.slane %v7912, %v8307
    %v8309 = vsel %vm2434, %v8308, %v8304
    %v8310 = vlaneseq
    %v8311 = vshrl.u32 %v8310, 7
    %v8312 = vsub.s32 %v2436, %v8311
    %v8313 = vrot.slane %v7915, %v8312
    %v8314 = vsel %vm2441, %v8313, %v8309
    %v8315 = vlaneseq
    %v8316 = vshrl.u32 %v8315, 7
    %v8317 = vsub.s32 %v2443, %v8316
    %v8318 = vrot.slane %v7918, %v8317
    %v8319 = vsel %vm2448, %v8318, %v8314
    %v8320 = vlaneseq
    %v8321 = vshrl.u32 %v8320, 7
    %v8322 = vsub.s32 %v2450, %v8321
    %v8323 = vrot.slane %v7921, %v8322
    %v8324 = vsel %vm2455, %v8323, %v8319
    %v8325 = vlaneseq
    %v8326 = vshrl.u32 %v8325, 7
    %v8327 = vsub.s32 %v2457, %v8326
    %v8328 = vrot.slane %v7924, %v8327
    %v8329 = vsel %vm2462, %v8328, %v8324
    %v8330 = vlaneseq
    %v8331 = vshrl.u32 %v8330, 7
    %v8332 = vsub.s32 %v2464, %v8331
    %v8333 = vrot.slane %v7927, %v8332
    %v8334 = vsel %vm2469, %v8333, %v8329
    %v8335 = vlaneseq
    %v8336 = vshrl.u32 %v8335, 7
    %v8337 = vsub.s32 %v2471, %v8336
    %v8338 = vrot.slane %v7930, %v8337
    %v8339 = vsel %vm2476, %v8338, %v8334
    %v8340 = vlaneseq
    %v8341 = vshrl.u32 %v8340, 7
    %v8342 = vsub.s32 %v2478, %v8341
    %v8343 = vrot.slane %v7933, %v8342
    %v8344 = vsel %vm2483, %v8343, %v8339
    %v8345 = vlaneseq
    %v8346 = vshrl.u32 %v8345, 7
    %v8347 = vsub.s32 %v2485, %v8346
    %v8348 = vrot.slane %v7936, %v8347
    %v8349 = vsel %vm2490, %v8348, %v8344
    %v8350 = vlaneseq
    %v8351 = vshrl.u32 %v8350, 7
    %v8352 = vsub.s32 %v2492, %v8351
    %v8353 = vrot.slane %v7939, %v8352
    %v8354 = vsel %vm2497, %v8353, %v8349
    %v8355 = vlaneseq
    %v8356 = vshrl.u32 %v8355, 7
    %v8357 = vsub.s32 %v2389, %v8356
    %v8358 = vrot.slane %v7942, %v8357
    %v8359 = vlaneseq
    %v8360 = vshrl.u32 %v8359, 7
    %v8361 = vsub.s32 %v2394, %v8360
    %v8362 = vrot.slane %v7945, %v8361
    %v8363 = vsel %vm2399, %v8362, %v8358
    %v8364 = vlaneseq
    %v8365 = vshrl.u32 %v8364, 7
    %v8366 = vsub.s32 %v2401, %v8365
    %v8367 = vrot.slane %v7948, %v8366
    %v8368 = vsel %vm2406, %v8367, %v8363
    %v8369 = vlaneseq
    %v8370 = vshrl.u32 %v8369, 7
    %v8371 = vsub.s32 %v2408, %v8370
    %v8372 = vrot.slane %v7951, %v8371
    %v8373 = vsel %vm2413, %v8372, %v8368
    %v8374 = vlaneseq
    %v8375 = vshrl.u32 %v8374, 7
    %v8376 = vsub.s32 %v2415, %v8375
    %v8377 = vrot.slane %v7954, %v8376
    %v8378 = vsel %vm2420, %v8377, %v8373
    %v8379 = vlaneseq
    %v8380 = vshrl.u32 %v8379, 7
    %v8381 = vsub.s32 %v2422, %v8380
    %v8382 = vrot.slane %v7957, %v8381
    %v8383 = vsel %vm2427, %v8382, %v8378
    %v8384 = vlaneseq
    %v8385 = vshrl.u32 %v8384, 7
    %v8386 = vsub.s32 %v2429, %v8385
    %v8387 = vrot.slane %v7960, %v8386
    %v8388 = vsel %vm2434, %v8387, %v8383
    %v8389 = vlaneseq
    %v8390 = vshrl.u32 %v8389, 7
    %v8391 = vsub.s32 %v2436, %v8390
    %v8392 = vrot.slane %v7963, %v8391
    %v8393 = vsel %vm2441, %v8392, %v8388
    %v8394 = vlaneseq
    %v8395 = vshrl.u32 %v8394, 7
    %v8396 = vsub.s32 %v2443, %v8395
    %v8397 = vrot.slane %v7966, %v8396
    %v8398 = vsel %vm2448, %v8397, %v8393
    %v8399 = vlaneseq
    %v8400 = vshrl.u32 %v8399, 7
    %v8401 = vsub.s32 %v2450, %v8400
    %v8402 = vrot.slane %v7969, %v8401
    %v8403 = vsel %vm2455, %v8402, %v8398
    %v8404 = vlaneseq
    %v8405 = vshrl.u32 %v8404, 7
    %v8406 = vsub.s32 %v2457, %v8405
    %v8407 = vrot.slane %v7972, %v8406
    %v8408 = vsel %vm2462, %v8407, %v8403
    %v8409 = vlaneseq
    %v8410 = vshrl.u32 %v8409, 7
    %v8411 = vsub.s32 %v2464, %v8410
    %v8412 = vrot.slane %v7975, %v8411
    %v8413 = vsel %vm2469, %v8412, %v8408
    %v8414 = vlaneseq
    %v8415 = vshrl.u32 %v8414, 7
    %v8416 = vsub.s32 %v2471, %v8415
    %v8417 = vrot.slane %v7978, %v8416
    %v8418 = vsel %vm2476, %v8417, %v8413
    %v8419 = vlaneseq
    %v8420 = vshrl.u32 %v8419, 7
    %v8421 = vsub.s32 %v2478, %v8420
    %v8422 = vrot.slane %v7981, %v8421
    %v8423 = vsel %vm2483, %v8422, %v8418
    %v8424 = vlaneseq
    %v8425 = vshrl.u32 %v8424, 7
    %v8426 = vsub.s32 %v2485, %v8425
    %v8427 = vrot.slane %v7984, %v8426
    %v8428 = vsel %vm2490, %v8427, %v8423
    %v8429 = vlaneseq
    %v8430 = vshrl.u32 %v8429, 7
    %v8431 = vsub.s32 %v2492, %v8430
    %v8432 = vrot.slane %v7987, %v8431
    %v8433 = vsel %vm2497, %v8432, %v8428
    %v8434 = vlaneseq
    %v8435 = vshrl.u32 %v8434, 7
    %v8436 = vsub.s32 %v2389, %v8435
    %v8437 = vrot.slane %v7990, %v8436
    %v8438 = vlaneseq
    %v8439 = vshrl.u32 %v8438, 7
    %v8440 = vsub.s32 %v2394, %v8439
    %v8441 = vrot.slane %v7993, %v8440
    %v8442 = vsel %vm2399, %v8441, %v8437
    %v8443 = vlaneseq
    %v8444 = vshrl.u32 %v8443, 7
    %v8445 = vsub.s32 %v2401, %v8444
    %v8446 = vrot.slane %v7996, %v8445
    %v8447 = vsel %vm2406, %v8446, %v8442
    %v8448 = vlaneseq
    %v8449 = vshrl.u32 %v8448, 7
    %v8450 = vsub.s32 %v2408, %v8449
    %v8451 = vrot.slane %v7999, %v8450
    %v8452 = vsel %vm2413, %v8451, %v8447
    %v8453 = vlaneseq
    %v8454 = vshrl.u32 %v8453, 7
    %v8455 = vsub.s32 %v2415, %v8454
    %v8456 = vrot.slane %v8002, %v8455
    %v8457 = vsel %vm2420, %v8456, %v8452
    %v8458 = vlaneseq
    %v8459 = vshrl.u32 %v8458, 7
    %v8460 = vsub.s32 %v2422, %v8459
    %v8461 = vrot.slane %v8005, %v8460
    %v8462 = vsel %vm2427, %v8461, %v8457
    %v8463 = vlaneseq
    %v8464 = vshrl.u32 %v8463, 7
    %v8465 = vsub.s32 %v2429, %v8464
    %v8466 = vrot.slane %v8008, %v8465
    %v8467 = vsel %vm2434, %v8466, %v8462
    %v8468 = vlaneseq
    %v8469 = vshrl.u32 %v8468, 7
    %v8470 = vsub.s32 %v2436, %v8469
    %v8471 = vrot.slane %v8011, %v8470
    %v8472 = vsel %vm2441, %v8471, %v8467
    %v8473 = vlaneseq
    %v8474 = vshrl.u32 %v8473, 7
    %v8475 = vsub.s32 %v2443, %v8474
    %v8476 = vrot.slane %v8014, %v8475
    %v8477 = vsel %vm2448, %v8476, %v8472
    %v8478 = vlaneseq
    %v8479 = vshrl.u32 %v8478, 7
    %v8480 = vsub.s32 %v2450, %v8479
    %v8481 = vrot.slane %v8017, %v8480
    %v8482 = vsel %vm2455, %v8481, %v8477
    %v8483 = vlaneseq
    %v8484 = vshrl.u32 %v8483, 7
    %v8485 = vsub.s32 %v2457, %v8484
    %v8486 = vrot.slane %v8020, %v8485
    %v8487 = vsel %vm2462, %v8486, %v8482
    %v8488 = vlaneseq
    %v8489 = vshrl.u32 %v8488, 7
    %v8490 = vsub.s32 %v2464, %v8489
    %v8491 = vrot.slane %v8023, %v8490
    %v8492 = vsel %vm2469, %v8491, %v8487
    %v8493 = vlaneseq
    %v8494 = vshrl.u32 %v8493, 7
    %v8495 = vsub.s32 %v2471, %v8494
    %v8496 = vrot.slane %v8026, %v8495
    %v8497 = vsel %vm2476, %v8496, %v8492
    %v8498 = vlaneseq
    %v8499 = vshrl.u32 %v8498, 7
    %v8500 = vsub.s32 %v2478, %v8499
    %v8501 = vrot.slane %v8029, %v8500
    %v8502 = vsel %vm2483, %v8501, %v8497
    %v8503 = vlaneseq
    %v8504 = vshrl.u32 %v8503, 7
    %v8505 = vsub.s32 %v2485, %v8504
    %v8506 = vrot.slane %v8032, %v8505
    %v8507 = vsel %vm2490, %v8506, %v8502
    %v8508 = vlaneseq
    %v8509 = vshrl.u32 %v8508, 7
    %v8510 = vsub.s32 %v2492, %v8509
    %v8511 = vrot.slane %v8035, %v8510
    %v8512 = vsel %vm2497, %v8511, %v8507
    %v8513 = vlaneseq
    %v8514 = vshrl.u32 %v8513, 7
    %v8515 = vsub.s32 %v2389, %v8514
    %v8516 = vrot.slane %v8038, %v8515
    %v8517 = vlaneseq
    %v8518 = vshrl.u32 %v8517, 7
    %v8519 = vsub.s32 %v2394, %v8518
    %v8520 = vrot.slane %v8041, %v8519
    %v8521 = vsel %vm2399, %v8520, %v8516
    %v8522 = vlaneseq
    %v8523 = vshrl.u32 %v8522, 7
    %v8524 = vsub.s32 %v2401, %v8523
    %v8525 = vrot.slane %v8044, %v8524
    %v8526 = vsel %vm2406, %v8525, %v8521
    %v8527 = vlaneseq
    %v8528 = vshrl.u32 %v8527, 7
    %v8529 = vsub.s32 %v2408, %v8528
    %v8530 = vrot.slane %v8047, %v8529
    %v8531 = vsel %vm2413, %v8530, %v8526
    %v8532 = vlaneseq
    %v8533 = vshrl.u32 %v8532, 7
    %v8534 = vsub.s32 %v2415, %v8533
    %v8535 = vrot.slane %v8050, %v8534
    %v8536 = vsel %vm2420, %v8535, %v8531
    %v8537 = vlaneseq
    %v8538 = vshrl.u32 %v8537, 7
    %v8539 = vsub.s32 %v2422, %v8538
    %v8540 = vrot.slane %v8053, %v8539
    %v8541 = vsel %vm2427, %v8540, %v8536
    %v8542 = vlaneseq
    %v8543 = vshrl.u32 %v8542, 7
    %v8544 = vsub.s32 %v2429, %v8543
    %v8545 = vrot.slane %v8056, %v8544
    %v8546 = vsel %vm2434, %v8545, %v8541
    %v8547 = vlaneseq
    %v8548 = vshrl.u32 %v8547, 7
    %v8549 = vsub.s32 %v2436, %v8548
    %v8550 = vrot.slane %v8059, %v8549
    %v8551 = vsel %vm2441, %v8550, %v8546
    %v8552 = vlaneseq
    %v8553 = vshrl.u32 %v8552, 7
    %v8554 = vsub.s32 %v2443, %v8553
    %v8555 = vrot.slane %v8062, %v8554
    %v8556 = vsel %vm2448, %v8555, %v8551
    %v8557 = vlaneseq
    %v8558 = vshrl.u32 %v8557, 7
    %v8559 = vsub.s32 %v2450, %v8558
    %v8560 = vrot.slane %v8065, %v8559
    %v8561 = vsel %vm2455, %v8560, %v8556
    %v8562 = vlaneseq
    %v8563 = vshrl.u32 %v8562, 7
    %v8564 = vsub.s32 %v2457, %v8563
    %v8565 = vrot.slane %v8068, %v8564
    %v8566 = vsel %vm2462, %v8565, %v8561
    %v8567 = vlaneseq
    %v8568 = vshrl.u32 %v8567, 7
    %v8569 = vsub.s32 %v2464, %v8568
    %v8570 = vrot.slane %v8071, %v8569
    %v8571 = vsel %vm2469, %v8570, %v8566
    %v8572 = vlaneseq
    %v8573 = vshrl.u32 %v8572, 7
    %v8574 = vsub.s32 %v2471, %v8573
    %v8575 = vrot.slane %v8074, %v8574
    %v8576 = vsel %vm2476, %v8575, %v8571
    %v8577 = vlaneseq
    %v8578 = vshrl.u32 %v8577, 7
    %v8579 = vsub.s32 %v2478, %v8578
    %v8580 = vrot.slane %v8077, %v8579
    %v8581 = vsel %vm2483, %v8580, %v8576
    %v8582 = vlaneseq
    %v8583 = vshrl.u32 %v8582, 7
    %v8584 = vsub.s32 %v2485, %v8583
    %v8585 = vrot.slane %v8080, %v8584
    %v8586 = vsel %vm2490, %v8585, %v8581
    %v8587 = vlaneseq
    %v8588 = vshrl.u32 %v8587, 7
    %v8589 = vsub.s32 %v2492, %v8588
    %v8590 = vrot.slane %v8083, %v8589
    %v8591 = vsel %vm2497, %v8590, %v8586
    %v8592 = vlaneseq
    %v8593 = vshrl.u32 %v8592, 7
    %v8594 = vsub.s32 %v2389, %v8593
    %v8595 = vrot.slane %v8086, %v8594
    %v8596 = vlaneseq
    %v8597 = vshrl.u32 %v8596, 7
    %v8598 = vsub.s32 %v2394, %v8597
    %v8599 = vrot.slane %v8089, %v8598
    %v8600 = vsel %vm2399, %v8599, %v8595
    %v8601 = vlaneseq
    %v8602 = vshrl.u32 %v8601, 7
    %v8603 = vsub.s32 %v2401, %v8602
    %v8604 = vrot.slane %v8092, %v8603
    %v8605 = vsel %vm2406, %v8604, %v8600
    %v8606 = vlaneseq
    %v8607 = vshrl.u32 %v8606, 7
    %v8608 = vsub.s32 %v2408, %v8607
    %v8609 = vrot.slane %v8095, %v8608
    %v8610 = vsel %vm2413, %v8609, %v8605
    %v8611 = vlaneseq
    %v8612 = vshrl.u32 %v8611, 7
    %v8613 = vsub.s32 %v2415, %v8612
    %v8614 = vrot.slane %v8098, %v8613
    %v8615 = vsel %vm2420, %v8614, %v8610
    %v8616 = vlaneseq
    %v8617 = vshrl.u32 %v8616, 7
    %v8618 = vsub.s32 %v2422, %v8617
    %v8619 = vrot.slane %v8101, %v8618
    %v8620 = vsel %vm2427, %v8619, %v8615
    %v8621 = vlaneseq
    %v8622 = vshrl.u32 %v8621, 7
    %v8623 = vsub.s32 %v2429, %v8622
    %v8624 = vrot.slane %v8104, %v8623
    %v8625 = vsel %vm2434, %v8624, %v8620
    %v8626 = vlaneseq
    %v8627 = vshrl.u32 %v8626, 7
    %v8628 = vsub.s32 %v2436, %v8627
    %v8629 = vrot.slane %v8107, %v8628
    %v8630 = vsel %vm2441, %v8629, %v8625
    %v8631 = vlaneseq
    %v8632 = vshrl.u32 %v8631, 7
    %v8633 = vsub.s32 %v2443, %v8632
    %v8634 = vrot.slane %v8110, %v8633
    %v8635 = vsel %vm2448, %v8634, %v8630
    %v8636 = vlaneseq
    %v8637 = vshrl.u32 %v8636, 7
    %v8638 = vsub.s32 %v2450, %v8637
    %v8639 = vrot.slane %v8113, %v8638
    %v8640 = vsel %vm2455, %v8639, %v8635
    %v8641 = vlaneseq
    %v8642 = vshrl.u32 %v8641, 7
    %v8643 = vsub.s32 %v2457, %v8642
    %v8644 = vrot.slane %v8116, %v8643
    %v8645 = vsel %vm2462, %v8644, %v8640
    %v8646 = vlaneseq
    %v8647 = vshrl.u32 %v8646, 7
    %v8648 = vsub.s32 %v2464, %v8647
    %v8649 = vrot.slane %v8119, %v8648
    %v8650 = vsel %vm2469, %v8649, %v8645
    %v8651 = vlaneseq
    %v8652 = vshrl.u32 %v8651, 7
    %v8653 = vsub.s32 %v2471, %v8652
    %v8654 = vrot.slane %v8122, %v8653
    %v8655 = vsel %vm2476, %v8654, %v8650
    %v8656 = vlaneseq
    %v8657 = vshrl.u32 %v8656, 7
    %v8658 = vsub.s32 %v2478, %v8657
    %v8659 = vrot.slane %v8125, %v8658
    %v8660 = vsel %vm2483, %v8659, %v8655
    %v8661 = vlaneseq
    %v8662 = vshrl.u32 %v8661, 7
    %v8663 = vsub.s32 %v2485, %v8662
    %v8664 = vrot.slane %v8128, %v8663
    %v8665 = vsel %vm2490, %v8664, %v8660
    %v8666 = vlaneseq
    %v8667 = vshrl.u32 %v8666, 7
    %v8668 = vsub.s32 %v2492, %v8667
    %v8669 = vrot.slane %v8131, %v8668
    %v8670 = vsel %vm2497, %v8669, %v8665
    %v8671 = vlaneseq
    %v8672 = vshrl.u32 %v8671, 7
    %v8673 = vsub.s32 %v2389, %v8672
    %v8674 = vrot.slane %v8134, %v8673
    %v8675 = vlaneseq
    %v8676 = vshrl.u32 %v8675, 7
    %v8677 = vsub.s32 %v2394, %v8676
    %v8678 = vrot.slane %v8137, %v8677
    %v8679 = vsel %vm2399, %v8678, %v8674
    %v8680 = vlaneseq
    %v8681 = vshrl.u32 %v8680, 7
    %v8682 = vsub.s32 %v2401, %v8681
    %v8683 = vrot.slane %v8140, %v8682
    %v8684 = vsel %vm2406, %v8683, %v8679
    %v8685 = vlaneseq
    %v8686 = vshrl.u32 %v8685, 7
    %v8687 = vsub.s32 %v2408, %v8686
    %v8688 = vrot.slane %v8143, %v8687
    %v8689 = vsel %vm2413, %v8688, %v8684
    %v8690 = vlaneseq
    %v8691 = vshrl.u32 %v8690, 7
    %v8692 = vsub.s32 %v2415, %v8691
    %v8693 = vrot.slane %v8146, %v8692
    %v8694 = vsel %vm2420, %v8693, %v8689
    %v8695 = vlaneseq
    %v8696 = vshrl.u32 %v8695, 7
    %v8697 = vsub.s32 %v2422, %v8696
    %v8698 = vrot.slane %v8149, %v8697
    %v8699 = vsel %vm2427, %v8698, %v8694
    %v8700 = vlaneseq
    %v8701 = vshrl.u32 %v8700, 7
    %v8702 = vsub.s32 %v2429, %v8701
    %v8703 = vrot.slane %v8152, %v8702
    %v8704 = vsel %vm2434, %v8703, %v8699
    %v8705 = vlaneseq
    %v8706 = vshrl.u32 %v8705, 7
    %v8707 = vsub.s32 %v2436, %v8706
    %v8708 = vrot.slane %v8155, %v8707
    %v8709 = vsel %vm2441, %v8708, %v8704
    %v8710 = vlaneseq
    %v8711 = vshrl.u32 %v8710, 7
    %v8712 = vsub.s32 %v2443, %v8711
    %v8713 = vrot.slane %v8158, %v8712
    %v8714 = vsel %vm2448, %v8713, %v8709
    %v8715 = vlaneseq
    %v8716 = vshrl.u32 %v8715, 7
    %v8717 = vsub.s32 %v2450, %v8716
    %v8718 = vrot.slane %v8161, %v8717
    %v8719 = vsel %vm2455, %v8718, %v8714
    %v8720 = vlaneseq
    %v8721 = vshrl.u32 %v8720, 7
    %v8722 = vsub.s32 %v2457, %v8721
    %v8723 = vrot.slane %v8164, %v8722
    %v8724 = vsel %vm2462, %v8723, %v8719
    %v8725 = vlaneseq
    %v8726 = vshrl.u32 %v8725, 7
    %v8727 = vsub.s32 %v2464, %v8726
    %v8728 = vrot.slane %v8167, %v8727
    %v8729 = vsel %vm2469, %v8728, %v8724
    %v8730 = vlaneseq
    %v8731 = vshrl.u32 %v8730, 7
    %v8732 = vsub.s32 %v2471, %v8731
    %v8733 = vrot.slane %v8170, %v8732
    %v8734 = vsel %vm2476, %v8733, %v8729
    %v8735 = vlaneseq
    %v8736 = vshrl.u32 %v8735, 7
    %v8737 = vsub.s32 %v2478, %v8736
    %v8738 = vrot.slane %v8173, %v8737
    %v8739 = vsel %vm2483, %v8738, %v8734
    %v8740 = vlaneseq
    %v8741 = vshrl.u32 %v8740, 7
    %v8742 = vsub.s32 %v2485, %v8741
    %v8743 = vrot.slane %v8176, %v8742
    %v8744 = vsel %vm2490, %v8743, %v8739
    %v8745 = vlaneseq
    %v8746 = vshrl.u32 %v8745, 7
    %v8747 = vsub.s32 %v2492, %v8746
    %v8748 = vrot.slane %v8179, %v8747
    %v8749 = vsel %vm2497, %v8748, %v8744
    %v8750 = vlaneseq
    %v8751 = vshrl.u32 %v8750, 7
    %v8752 = vsub.s32 %v2389, %v8751
    %v8753 = vrot.slane %v8182, %v8752
    %v8754 = vlaneseq
    %v8755 = vshrl.u32 %v8754, 7
    %v8756 = vsub.s32 %v2394, %v8755
    %v8757 = vrot.slane %v8185, %v8756
    %v8758 = vsel %vm2399, %v8757, %v8753
    %v8759 = vlaneseq
    %v8760 = vshrl.u32 %v8759, 7
    %v8761 = vsub.s32 %v2401, %v8760
    %v8762 = vrot.slane %v8188, %v8761
    %v8763 = vsel %vm2406, %v8762, %v8758
    %v8764 = vlaneseq
    %v8765 = vshrl.u32 %v8764, 7
    %v8766 = vsub.s32 %v2408, %v8765
    %v8767 = vrot.slane %v8191, %v8766
    %v8768 = vsel %vm2413, %v8767, %v8763
    %v8769 = vlaneseq
    %v8770 = vshrl.u32 %v8769, 7
    %v8771 = vsub.s32 %v2415, %v8770
    %v8772 = vrot.slane %v8194, %v8771
    %v8773 = vsel %vm2420, %v8772, %v8768
    %v8774 = vlaneseq
    %v8775 = vshrl.u32 %v8774, 7
    %v8776 = vsub.s32 %v2422, %v8775
    %v8777 = vrot.slane %v8197, %v8776
    %v8778 = vsel %vm2427, %v8777, %v8773
    %v8779 = vlaneseq
    %v8780 = vshrl.u32 %v8779, 7
    %v8781 = vsub.s32 %v2429, %v8780
    %v8782 = vrot.slane %v8200, %v8781
    %v8783 = vsel %vm2434, %v8782, %v8778
    %v8784 = vlaneseq
    %v8785 = vshrl.u32 %v8784, 7
    %v8786 = vsub.s32 %v2436, %v8785
    %v8787 = vrot.slane %v8203, %v8786
    %v8788 = vsel %vm2441, %v8787, %v8783
    %v8789 = vlaneseq
    %v8790 = vshrl.u32 %v8789, 7
    %v8791 = vsub.s32 %v2443, %v8790
    %v8792 = vrot.slane %v8206, %v8791
    %v8793 = vsel %vm2448, %v8792, %v8788
    %v8794 = vlaneseq
    %v8795 = vshrl.u32 %v8794, 7
    %v8796 = vsub.s32 %v2450, %v8795
    %v8797 = vrot.slane %v8209, %v8796
    %v8798 = vsel %vm2455, %v8797, %v8793
    %v8799 = vlaneseq
    %v8800 = vshrl.u32 %v8799, 7
    %v8801 = vsub.s32 %v2457, %v8800
    %v8802 = vrot.slane %v8212, %v8801
    %v8803 = vsel %vm2462, %v8802, %v8798
    %v8804 = vlaneseq
    %v8805 = vshrl.u32 %v8804, 7
    %v8806 = vsub.s32 %v2464, %v8805
    %v8807 = vrot.slane %v8215, %v8806
    %v8808 = vsel %vm2469, %v8807, %v8803
    %v8809 = vlaneseq
    %v8810 = vshrl.u32 %v8809, 7
    %v8811 = vsub.s32 %v2471, %v8810
    %v8812 = vrot.slane %v8218, %v8811
    %v8813 = vsel %vm2476, %v8812, %v8808
    %v8814 = vlaneseq
    %v8815 = vshrl.u32 %v8814, 7
    %v8816 = vsub.s32 %v2478, %v8815
    %v8817 = vrot.slane %v8221, %v8816
    %v8818 = vsel %vm2483, %v8817, %v8813
    %v8819 = vlaneseq
    %v8820 = vshrl.u32 %v8819, 7
    %v8821 = vsub.s32 %v2485, %v8820
    %v8822 = vrot.slane %v8224, %v8821
    %v8823 = vsel %vm2490, %v8822, %v8818
    %v8824 = vlaneseq
    %v8825 = vshrl.u32 %v8824, 7
    %v8826 = vsub.s32 %v2492, %v8825
    %v8827 = vrot.slane %v8227, %v8826
    %v8828 = vsel %vm2497, %v8827, %v8823
    %v8829 = vlaneseq
    %v8830 = vshrl.u32 %v8829, 7
    %v8831 = vsub.s32 %v2389, %v8830
    %v8832 = vrot.slane %v8230, %v8831
    %v8833 = vlaneseq
    %v8834 = vshrl.u32 %v8833, 7
    %v8835 = vsub.s32 %v2394, %v8834
    %v8836 = vrot.slane %v8233, %v8835
    %v8837 = vsel %vm2399, %v8836, %v8832
    %v8838 = vlaneseq
    %v8839 = vshrl.u32 %v8838, 7
    %v8840 = vsub.s32 %v2401, %v8839
    %v8841 = vrot.slane %v8236, %v8840
    %v8842 = vsel %vm2406, %v8841, %v8837
    %v8843 = vlaneseq
    %v8844 = vshrl.u32 %v8843, 7
    %v8845 = vsub.s32 %v2408, %v8844
    %v8846 = vrot.slane %v8239, %v8845
    %v8847 = vsel %vm2413, %v8846, %v8842
    %v8848 = vlaneseq
    %v8849 = vshrl.u32 %v8848, 7
    %v8850 = vsub.s32 %v2415, %v8849
    %v8851 = vrot.slane %v8242, %v8850
    %v8852 = vsel %vm2420, %v8851, %v8847
    %v8853 = vlaneseq
    %v8854 = vshrl.u32 %v8853, 7
    %v8855 = vsub.s32 %v2422, %v8854
    %v8856 = vrot.slane %v8245, %v8855
    %v8857 = vsel %vm2427, %v8856, %v8852
    %v8858 = vlaneseq
    %v8859 = vshrl.u32 %v8858, 7
    %v8860 = vsub.s32 %v2429, %v8859
    %v8861 = vrot.slane %v8248, %v8860
    %v8862 = vsel %vm2434, %v8861, %v8857
    %v8863 = vlaneseq
    %v8864 = vshrl.u32 %v8863, 7
    %v8865 = vsub.s32 %v2436, %v8864
    %v8866 = vrot.slane %v8251, %v8865
    %v8867 = vsel %vm2441, %v8866, %v8862
    %v8868 = vlaneseq
    %v8869 = vshrl.u32 %v8868, 7
    %v8870 = vsub.s32 %v2443, %v8869
    %v8871 = vrot.slane %v8254, %v8870
    %v8872 = vsel %vm2448, %v8871, %v8867
    %v8873 = vlaneseq
    %v8874 = vshrl.u32 %v8873, 7
    %v8875 = vsub.s32 %v2450, %v8874
    %v8876 = vrot.slane %v8257, %v8875
    %v8877 = vsel %vm2455, %v8876, %v8872
    %v8878 = vlaneseq
    %v8879 = vshrl.u32 %v8878, 7
    %v8880 = vsub.s32 %v2457, %v8879
    %v8881 = vrot.slane %v8260, %v8880
    %v8882 = vsel %vm2462, %v8881, %v8877
    %v8883 = vlaneseq
    %v8884 = vshrl.u32 %v8883, 7
    %v8885 = vsub.s32 %v2464, %v8884
    %v8886 = vrot.slane %v8263, %v8885
    %v8887 = vsel %vm2469, %v8886, %v8882
    %v8888 = vlaneseq
    %v8889 = vshrl.u32 %v8888, 7
    %v8890 = vsub.s32 %v2471, %v8889
    %v8891 = vrot.slane %v8266, %v8890
    %v8892 = vsel %vm2476, %v8891, %v8887
    %v8893 = vlaneseq
    %v8894 = vshrl.u32 %v8893, 7
    %v8895 = vsub.s32 %v2478, %v8894
    %v8896 = vrot.slane %v8269, %v8895
    %v8897 = vsel %vm2483, %v8896, %v8892
    %v8898 = vlaneseq
    %v8899 = vshrl.u32 %v8898, 7
    %v8900 = vsub.s32 %v2485, %v8899
    %v8901 = vrot.slane %v8272, %v8900
    %v8902 = vsel %vm2490, %v8901, %v8897
    %v8903 = vlaneseq
    %v8904 = vshrl.u32 %v8903, 7
    %v8905 = vsub.s32 %v2492, %v8904
    %v8906 = vrot.slane %v8275, %v8905
    %v8907 = vsel %vm2497, %v8906, %v8902
    %v8908 = vsel %vm3052, %v8433, %v8354
    %v8909 = vsel %vm3054, %v8512, %v8908
    %v8910 = vsel %vm3056, %v8591, %v8909
    %v8911 = vsel %vm3058, %v8670, %v8910
    %v8912 = vsel %vm3060, %v8749, %v8911
    %v8913 = vsel %vm3062, %v8828, %v8912
    %v8914 = vsel %vm3064, %v8907, %v8913
    %8916 = vst [vmem:[#allocation4] sm:$0xff] %v8914
    %v8917 = vadd.f32 %v124, %v8914
    %8918 = vst [vmem:[#allocation6] sm:$0xff] %v8917
    // Predicated region
    $region38: #{tpu_custom_call.1} parent=1 // pred_check
      _
    $region39: #{tpu_custom_call.1} parent=1 // pred_check_branch
      %8920 = sbr.rel (0) target = $region41
    $region40: #{tpu_custom_call.1} parent=1 // pred_region
      %s8922 = ssub.s32 128, 128
      %8923 = vsyncadd [#allocation3], %s8922
      %s8925 = sshll.u32 [#allocation2], 4
      %s8926 = int_to_ptr.vmem [resolvable:$true] %s8925
      %8928 = dma.vmem_to_hbm [thread:$0]  %s8926, 128, %s9, [#allocation3]
    $region41: #{tpu_custom_call.1} parent=1 // pred_fallthru
      _
    // Predicated region
    $region42: #{tpu_custom_call.1} parent=1 // pred_check
      _
    $region43: #{tpu_custom_call.1} parent=1 // pred_check_branch
      %8930 = sbr.rel (0) target = $region45
    $region44: #{tpu_custom_call.1} parent=1 // pred_region
      %s8932 = ssub.s32 128, 128
      %8933 = vsyncadd [#allocation5], %s8932
      %s8935 = sshll.u32 [#allocation4], 4
      %s8936 = int_to_ptr.vmem [resolvable:$true] %s8935
      %8938 = dma.vmem_to_hbm [thread:$0]  %s8936, 128, %s10, [#allocation5]
    $region45: #{tpu_custom_call.1} parent=1 // pred_fallthru
      _
    // Predicated region
    $region46: #{tpu_custom_call.1} parent=1 // pred_check
      _
    $region47: #{tpu_custom_call.1} parent=1 // pred_check_branch
      %8940 = sbr.rel (0) target = $region49
    $region48: #{tpu_custom_call.1} parent=1 // pred_region
      %s8942 = ssub.s32 128, 128
      %8943 = vsyncadd [#allocation5], %s8942
      %s8945 = sshll.u32 [#allocation6], 4
      %s8946 = int_to_ptr.vmem [resolvable:$true] %s8945
      %8948 = dma.vmem_to_hbm [thread:$0]  %s8946, 128, %s11, [#allocation5]
    $region49: #{tpu_custom_call.1} parent=1 // pred_fallthru
      _
    // Predicated region
    $region50: #{tpu_custom_call.1} parent=1 // pred_check
      _
    $region51: #{tpu_custom_call.1} parent=1 // pred_check_branch
      %8950 = sbr.rel (0) target = $region53
    $region52: #{tpu_custom_call.1} parent=1 // pred_region
      %8951 = dma.done [#allocation3], 128
    $region53: #{tpu_custom_call.1} parent=1 // pred_fallthru
      _
    // Predicated region
    $region54: #{tpu_custom_call.1} parent=1 // pred_check
      _
    $region55: #{tpu_custom_call.1} parent=1 // pred_check_branch
      %8953 = sbr.rel (0) target = $region57
    $region56: #{tpu_custom_call.1} parent=1 // pred_region
      %8954 = dma.done [#allocation5], 128
    $region57: #{tpu_custom_call.1} parent=1 // pred_fallthru
      _
    // Predicated region
    $region58: #{tpu_custom_call.1} parent=1 // pred_check
      _
    $region59: #{tpu_custom_call.1} parent=1 // pred_check_branch
      %8956 = sbr.rel (0) target = $region61
    $region60: #{tpu_custom_call.1} parent=1 // pred_region
      %8957 = dma.done [#allocation5], 128
    $region61: #{tpu_custom_call.1} parent=1 // pred_fallthru
      _
    %8958 = vsyncpa [#allocation3], 1
    %8959 = vsyncpa [#allocation5], 1

</llo_original>
